<compile_context>
chip_gen: v7x
topology: tpu7x:2x2x1
jax: 0.10.0
libtpu: 0.0.40
codegen_flags: <defaults>
</compile_context>

<pallas_src>
import numpy as np
import jax
import jax.numpy as jnp
from jax import lax
from jax.experimental import pallas as pl
from jax.experimental.pallas import tpu as pltpu

H   = 128   # LSTM hidden size (config['hidden_size'])
FC1 = 64
FC2 = 32
OUT = 1     # config['output_size']


def _w_spec(shape):
    """Full-array BlockSpec: weight resident in VMEM, same block every step."""
    n = len(shape)
    return pl.BlockSpec(shape, lambda i, _n=n: (0,) * _n)


def pinn_kernel(x_ref,                 # [Bt, T]   raw inputs, batch-major
                wih0_ref, b0_ref,      # [1, 4H]   layer-0 input proj row + bias
                whh0_ref,              # [H, 4H]   W_hh_l0 (transposed, permuted)
                w1cat_ref, b1_ref,     # [2H, 4H], [1, 4H]  [W_ih_l1; W_hh_l1]
                fw1_ref, fb1_ref,      # fc[0]
                fw2_ref, fb2_ref,      # fc[2]
                fw3_ref, fb3_ref,      # fc[4]
                out_ref,               # [Bt, 1]
                hcat_s, c0_s, c1_s):   # [Bt, 2H], [Bt, H], [Bt, H]
    Bt, T = x_ref.shape

    # init recurrent state for this batch tile (hcat = [h0 | h1])
    hcat_s[...] = jnp.zeros_like(hcat_s)
    c0_s[...] = jnp.zeros_like(c0_s)
    c1_s[...] = jnp.zeros_like(c1_s)

    x_all = x_ref[...]                 # [Bt, T] — tiny (T ~ 15)

    def cell(gates, c_prev):
        # permuted gate layout (i, f, o, g): one contiguous sigmoid, one tanh
        ifo = jax.nn.sigmoid(gates[:, 0:3 * H])
        g = jnp.tanh(gates[:, 3 * H:4 * H])
        i = ifo[:, 0:H]
        f = ifo[:, H:2 * H]
        o = ifo[:, 2 * H:3 * H]
        c = f * c_prev + i * g
        h = o * jnp.tanh(c)
        return h, c

    def step(t, carry):
        # extract x[:, t] as a [Bt, 1] column (masked select + small lane reduce)
        lane = lax.broadcasted_iota(jnp.int32, (Bt, T), 1)
        x_t = jnp.sum(jnp.where(lane == t, x_all, 0.0), axis=1, keepdims=True)

        # ---- LSTM layer 0: rank-1 input projection (VPU) + recurrence (MXU)
        g0 = (x_t * wih0_ref[...] + b0_ref[...]
              + jnp.dot(hcat_s[:, 0:H], whh0_ref[...],
                        preferred_element_type=jnp.float32))
        h0, c0 = cell(g0, c0_s[...])
        c0_s[...] = c0
        hcat_s[:, 0:H] = h0            # hcat now = [h0_t | h1_{t-1}]

        # ---- LSTM layer 1 (eval mode -> no dropout): fused K=2H matmul
        g1 = (jnp.dot(hcat_s[...], w1cat_ref[...],
                      preferred_element_type=jnp.float32) + b1_ref[...])
        h1, c1 = cell(g1, c1_s[...])
        c1_s[...] = c1
        hcat_s[:, H:2 * H] = h1
        return carry

    # unroll short sequences fully; partial unroll for long ones
    lax.fori_loop(0, T, step, 0, unroll=True if T <= 16 else 4)

    # ---- MLP head on the last hidden state of the top LSTM layer
    z = jnp.dot(hcat_s[:, H:2 * H], fw1_ref[...],
                preferred_element_type=jnp.float32) + fb1_ref[...]
    z = jnp.where(z > 0, z, 0.1 * z)                      # LeakyReLU(0.1)
    z = jnp.dot(z, fw2_ref[...], preferred_element_type=jnp.float32) + fb2_ref[...]
    z = jnp.where(z > 0, z, 0.1 * z)
    z = jnp.dot(z, fw3_ref[...], preferred_element_type=jnp.float32) + fb3_ref[...]
    out_ref[...] = z.astype(out_ref.dtype)


# PyTorch gate order (i, f, g, o) -> kernel gate order (i, f, o, g)
_GATE_PERM = np.concatenate([np.arange(0, H), np.arange(H, 2 * H),
                             np.arange(3 * H, 4 * H), np.arange(2 * H, 3 * H)])


def _pick_b_tile(B):
    """Batch tile: fill the MXU for big batches, >=2 grid steps for medium ones."""
    Bp8 = ((B + 7) // 8) * 8
    if Bp8 >= 256:
        return 128                      # large batch: 128 MXU rows, grid >= 2
    if Bp8 >= 128:
        return ((Bp8 // 2 + 7) // 8) * 8  # medium: 2 grid steps (v7x megacore)
    return Bp8                          # tiny batch: single tile, minimal padding


def pinn_forward(x, params, *, b_tile=None):
    """Eval-mode forward pass. x: [B, T] float32 -> pred_current [B, 1]."""
    (wih0, whh0, b0, wih1, whh1, b1,
     fw1, fb1, fw2, fb2, fw3, fb3) = params
    B, T = x.shape

    if b_tile is None:
        b_tile = _pick_b_tile(B)
    Bp = ((B + b_tile - 1) // b_tile) * b_tile
    xp = jnp.pad(x, ((0, Bp - B), (0, 0)))          # batch-major [Bp, T]

    # layout plumbing: gate-column permutation + layer-1 weight row-concat
    wih0p = wih0[:, _GATE_PERM]
    b0p   = b0[:, _GATE_PERM]
    whh0p = whh0[:, _GATE_PERM]
    w1cat = jnp.concatenate([wih1[:, _GATE_PERM], whh1[:, _GATE_PERM]], axis=0)
    b1p   = b1[:, _GATE_PERM]

    out = pl.pallas_call(
        pinn_kernel,
        out_shape=jax.ShapeDtypeStruct((Bp, OUT), jnp.float32),
        grid=(Bp // b_tile,),
        in_specs=[
            pl.BlockSpec((b_tile, T), lambda i: (i, 0)),   # x (batch tile)
            _w_spec((1, 4 * H)), _w_spec((1, 4 * H)),      # wih0, b0
            _w_spec((H, 4 * H)),                           # whh0
            _w_spec((2 * H, 4 * H)), _w_spec((1, 4 * H)),  # w1cat, b1
            _w_spec((H, FC1)), _w_spec((1, FC1)),
            _w_spec((FC1, FC2)), _w_spec((1, FC2)),
            _w_spec((FC2, OUT)), _w_spec((1, OUT)),
        ],
        out_specs=pl.BlockSpec((b_tile, OUT), lambda i: (i, 0)),
        scratch_shapes=[pltpu.VMEM((b_tile, 2 * H), jnp.float32),   # [h0 | h1]
                        pltpu.VMEM((b_tile, H), jnp.float32),       # c0
                        pltpu.VMEM((b_tile, H), jnp.float32)],      # c1
        compiler_params=pltpu.CompilerParams(
            dimension_semantics=("parallel",)),
    )(xp, wih0p, b0p, whh0p, w1cat, b1p,
      fw1, fb1, fw2, fb2, fw3, fb3)
    return out[:B]


def make_params(key):
    """Deterministic parameters matching nn.LSTM(1,128,2)+fc shapes (transposed)."""
    ks = jax.random.split(key, 14)
    u = lambda k, shape, s: jax.random.uniform(k, shape, jnp.float32, -s, s)
    bl = 1.0 / np.sqrt(H)
    wih0 = u(ks[0], (1, 4 * H), bl)                       # weight_ih_l0.T  [1, 4H]
    whh0 = u(ks[1], (H, 4 * H), bl)                       # weight_hh_l0.T  [H, 4H]
    b0   = u(ks[2], (1, 4 * H), bl) + u(ks[3], (1, 4 * H), bl)   # b_ih + b_hh
    wih1 = u(ks[4], (H, 4 * H), bl)                       # weight_ih_l1.T
    whh1 = u(ks[5], (H, 4 * H), bl)                       # weight_hh_l1.T
    b1   = u(ks[6], (1, 4 * H), bl) + u(ks[7], (1, 4 * H), bl)
    fw1  = u(ks[8],  (H, FC1), 1.0 / np.sqrt(H))
    fb1  = u(ks[9],  (1, FC1), 1.0 / np.sqrt(H))
    fw2  = u(ks[10], (FC1, FC2), 1.0 / np.sqrt(FC1))
    fb2  = u(ks[11], (1, FC2), 1.0 / np.sqrt(FC1))
    fw3  = u(ks[12], (FC2, OUT), 1.0 / np.sqrt(FC2))
    fb3  = u(ks[13], (1, OUT), 1.0 / np.sqrt(FC2))
    return (wih0, whh0, b0, wih1, whh1, b1, fw1, fb1, fw2, fb2, fw3, fb3)


def ref_forward(x, params):
    """Pure-JAX reference of the same eval-mode forward pass (PyTorch layout)."""
    wih0, whh0, b0, wih1, whh1, b1, fw1, fb1, fw2, fb2, fw3, fb3 = params
    B, T = x.shape

    def cell(gates, c_prev):
        i = jax.nn.sigmoid(gates[:, 0:H]); f = jax.nn.sigmoid(gates[:, H:2 * H])
        g = jnp.tanh(gates[:, 2 * H:3 * H]); o = jax.nn.sigmoid(gates[:, 3 * H:])
        c = f * c_prev + i * g
        return o * jnp.tanh(c), c

    h0 = c0 = h1 = c1 = jnp.zeros((B, H), jnp.float32)
    for t in range(T):
        xt = x[:, t:t + 1]
        h0, c0 = cell(xt * wih0 + h0 @ whh0 + b0, c0)
        h1, c1 = cell(h0 @ wih1 + h1 @ whh1 + b1, c1)
    z = h1 @ fw1 + fb1
    z = jnp.where(z > 0, z, 0.1 * z)
    z = z @ fw2 + fb2
    z = jnp.where(z > 0, z, 0.1 * z)
    return z @ fw3 + fb3


if __name__ == "__main__":
    key = jax.random.PRNGKey(0)
    kx, kg, kp = jax.random.split(key, 3)

    B, T = 2, 8
    x = jax.random.normal(kx, (B, T), jnp.float32)
    gap_hist = jax.random.uniform(kg, (B, T), jnp.float32) + 1.0  # unused in eval path
    params = make_params(kp)

    out = jax.block_until_ready(pinn_forward(x, params))
    ref = ref_forward(x, params)
    np.testing.assert_allclose(np.asarray(out), np.asarray(ref),
                               rtol=1e-4, atol=1e-5)
    assert out.shape == (B, OUT)

    # second check: padded batch + multi-tile "parallel" grid axis
    B2 = 20
    x2 = jax.random.normal(jax.random.PRNGKey(1), (B2, T), jnp.float32)
    out2 = jax.block_until_ready(pinn_forward(x2, params, b_tile=8))
    np.testing.assert_allclose(np.asarray(out2),
                               np.asarray(ref_forward(x2, params)),
                               rtol=1e-4, atol=1e-5)

    print("KERNEL_OK")
</pallas_src>

<mosaic_0001>
module attributes {stable_mosaic.version = 11 : i64} {
  func.func @pinn_kernel(%arg0: i32, %arg1: memref<8x8xf32, #tpu.memory_space<vmem>>, %arg2: memref<1x512xf32, #tpu.memory_space<vmem>>, %arg3: memref<1x512xf32, #tpu.memory_space<vmem>>, %arg4: memref<128x512xf32, #tpu.memory_space<vmem>>, %arg5: memref<256x512xf32, #tpu.memory_space<vmem>>, %arg6: memref<1x512xf32, #tpu.memory_space<vmem>>, %arg7: memref<128x64xf32, #tpu.memory_space<vmem>>, %arg8: memref<1x64xf32, #tpu.memory_space<vmem>>, %arg9: memref<64x32xf32, #tpu.memory_space<vmem>>, %arg10: memref<1x32xf32, #tpu.memory_space<vmem>>, %arg11: memref<32x1xf32, #tpu.memory_space<vmem>>, %arg12: memref<1x1xf32, #tpu.memory_space<vmem>>, %arg13: memref<8x1xf32, #tpu.memory_space<vmem>>, %arg14: memref<8x256xf32, #tpu.memory_space<vmem>>, %arg15: memref<8x128xf32, #tpu.memory_space<vmem>>, %arg16: memref<8x128xf32, #tpu.memory_space<vmem>>) attributes {dimension_semantics = [#tpu.dimension_semantics<parallel>], iteration_bounds = array<i64: 1>, scalar_prefetch = 0 : i64, scratch_operands = 3 : i64, tpu.core_type = #tpu.core_type<tc>, window_params = [{transform_indices = @transform_0, window_bounds = array<i64: 8, 8>}, {pipeline_mode = #tpu.pipeline_mode<synchronous>, transform_indices = @transform_1, window_bounds = array<i64: 1, 512>}, {pipeline_mode = #tpu.pipeline_mode<synchronous>, transform_indices = @transform_2, window_bounds = array<i64: 1, 512>}, {pipeline_mode = #tpu.pipeline_mode<synchronous>, transform_indices = @transform_3, window_bounds = array<i64: 128, 512>}, {pipeline_mode = #tpu.pipeline_mode<synchronous>, transform_indices = @transform_4, window_bounds = array<i64: 256, 512>}, {pipeline_mode = #tpu.pipeline_mode<synchronous>, transform_indices = @transform_5, window_bounds = array<i64: 1, 512>}, {pipeline_mode = #tpu.pipeline_mode<synchronous>, transform_indices = @transform_6, window_bounds = array<i64: 128, 64>}, {pipeline_mode = #tpu.pipeline_mode<synchronous>, transform_indices = @transform_7, window_bounds = array<i64: 1, 64>}, {pipeline_mode = #tpu.pipeline_mode<synchronous>, transform_indices = @transform_8, window_bounds = array<i64: 64, 32>}, {pipeline_mode = #tpu.pipeline_mode<synchronous>, transform_indices = @transform_9, window_bounds = array<i64: 1, 32>}, {pipeline_mode = #tpu.pipeline_mode<synchronous>, transform_indices = @transform_10, window_bounds = array<i64: 32, 1>}, {pipeline_mode = #tpu.pipeline_mode<synchronous>, transform_indices = @transform_11, window_bounds = array<i64: 1, 1>}, {transform_indices = @transform_12, window_bounds = array<i64: 8, 1>}]} {
    %cst = arith.constant 0.000000e+00 : f32
    %0 = vector.broadcast %cst : f32 to vector<8x256xf32>
    %c0 = arith.constant 0 : index
    %c0_0 = arith.constant 0 : index
    %1 = vector.load %arg14[%c0, %c0_0] : memref<8x256xf32, #tpu.memory_space<vmem>>, vector<8x256xf32>
    tpu.vector_store %arg14[%c0, %c0_0], %0 {strides = array<i32>} : memref<8x256xf32, #tpu.memory_space<vmem>>, vector<8x256xf32>,
    %cst_1 = arith.constant 0.000000e+00 : f32
    %2 = vector.broadcast %cst_1 : f32 to vector<8x128xf32>
    %c0_2 = arith.constant 0 : index
    %c0_3 = arith.constant 0 : index
    %3 = vector.load %arg15[%c0_2, %c0_3] : memref<8x128xf32, #tpu.memory_space<vmem>>, vector<8x128xf32>
    tpu.vector_store %arg15[%c0_2, %c0_3], %2 {strides = array<i32>} : memref<8x128xf32, #tpu.memory_space<vmem>>, vector<8x128xf32>,
    %cst_4 = arith.constant 0.000000e+00 : f32
    %4 = vector.broadcast %cst_4 : f32 to vector<8x128xf32>
    %c0_5 = arith.constant 0 : index
    %c0_6 = arith.constant 0 : index
    %5 = vector.load %arg16[%c0_5, %c0_6] : memref<8x128xf32, #tpu.memory_space<vmem>>, vector<8x128xf32>
    tpu.vector_store %arg16[%c0_5, %c0_6], %4 {strides = array<i32>} : memref<8x128xf32, #tpu.memory_space<vmem>>, vector<8x128xf32>,
    %c0_7 = arith.constant 0 : index
    %c0_8 = arith.constant 0 : index
    %6 = vector.load %arg1[%c0_7, %c0_8] : memref<8x8xf32, #tpu.memory_space<vmem>>, vector<8x8xf32>
    %c0_i32 = arith.constant 0 : i32
    %7 = tpu.iota {dimensions = array<i32: 1>} : vector<8x8xi32>
    %8 = vector.broadcast %c0_i32 : i32 to vector<8x8xi32>
    %9 = arith.cmpi eq, %7, %8 : vector<8x8xi32>
    %cst_9 = arith.constant 0.000000e+00 : f32
    %10 = vector.broadcast %cst_9 : f32 to vector<8x8xf32>
    %11 = arith.select %9, %6, %10 : vector<8x8xi1>, vector<8x8xf32>
    %cst_10 = arith.constant dense<0.000000e+00> : vector<8xf32>
    %12 = vector.multi_reduction <add>, %11, %cst_10 [1] : vector<8x8xf32> to vector<8xf32>
    %13 = vector.shape_cast %12 : vector<8xf32> to vector<8x1xf32>
    %c0_11 = arith.constant 0 : index
    %c0_12 = arith.constant 0 : index
    %14 = vector.load %arg2[%c0_11, %c0_12] : memref<1x512xf32, #tpu.memory_space<vmem>>, vector<1x512xf32>
    %15 = vector.broadcast %13 : vector<8x1xf32> to vector<8x512xf32>
    %16 = vector.broadcast %14 : vector<1x512xf32> to vector<8x512xf32>
    %17 = arith.mulf %15, %16 : vector<8x512xf32>
    %c0_13 = arith.constant 0 : index
    %c0_14 = arith.constant 0 : index
    %18 = vector.load %arg3[%c0_13, %c0_14] : memref<1x512xf32, #tpu.memory_space<vmem>>, vector<1x512xf32>
    %19 = vector.broadcast %18 : vector<1x512xf32> to vector<8x512xf32>
    %20 = arith.addf %17, %19 : vector<8x512xf32>
    %c0_15 = arith.constant 0 : index
    %c0_16 = arith.constant 0 : index
    %21 = vector.load %arg14[%c0_15, %c0_16] : memref<8x256xf32, #tpu.memory_space<vmem>>, vector<8x128xf32>
    %c0_17 = arith.constant 0 : index
    %c0_18 = arith.constant 0 : index
    %22 = vector.load %arg4[%c0_17, %c0_18] : memref<128x512xf32, #tpu.memory_space<vmem>>, vector<128x512xf32>
    %cst_19 = arith.constant dense<0.000000e+00> : vector<8x512xf32>
    %23 = tpu.matmul %21, %22, %cst_19 {dimension_numbers = #tpu.dot_dimension_numbers<[1], [0], [0], [1], [0, 0, 1, 1], [], []>} : vector<8x128xf32>, vector<128x512xf32>, vector<8x512xf32> -> vector<8x512xf32>
    %24 = arith.addf %20, %23 : vector<8x512xf32>
    %c0_20 = arith.constant 0 : index
    %c0_21 = arith.constant 0 : index
    %25 = vector.load %arg15[%c0_20, %c0_21] : memref<8x128xf32, #tpu.memory_space<vmem>>, vector<8x128xf32>
    %26 = vector.extract_strided_slice %24 {offsets = [0, 0], sizes = [8, 384], strides = [1, 1]} : vector<8x512xf32> to vector<8x384xf32>
    %27 = arith.negf %26 : vector<8x384xf32>
    %28 = math.exp %27 : vector<8x384xf32>
    %cst_22 = arith.constant 1.000000e+00 : f32
    %29 = vector.broadcast %cst_22 : f32 to vector<8x384xf32>
    %30 = arith.addf %29, %28 : vector<8x384xf32>
    %31 = arith.divf %29, %30 : vector<8x384xf32>
    %32 = vector.extract_strided_slice %24 {offsets = [0, 384], sizes = [8, 128], strides = [1, 1]} : vector<8x512xf32> to vector<8x128xf32>
    %33 = math.tanh %32 : vector<8x128xf32>
    %34 = vector.extract_strided_slice %31 {offsets = [0, 0], sizes = [8, 128], strides = [1, 1]} : vector<8x384xf32> to vector<8x128xf32>
    %35 = vector.extract_strided_slice %31 {offsets = [0, 128], sizes = [8, 128], strides = [1, 1]} : vector<8x384xf32> to vector<8x128xf32>
    %36 = vector.extract_strided_slice %31 {offsets = [0, 256], sizes = [8, 128], strides = [1, 1]} : vector<8x384xf32> to vector<8x128xf32>
    %37 = arith.mulf %35, %25 : vector<8x128xf32>
    %38 = arith.mulf %34, %33 : vector<8x128xf32>
    %39 = arith.addf %37, %38 : vector<8x128xf32>
    %40 = math.tanh %39 : vector<8x128xf32>
    %41 = arith.mulf %36, %40 : vector<8x128xf32>
    %c0_23 = arith.constant 0 : index
    %c0_24 = arith.constant 0 : index
    %42 = vector.load %arg15[%c0_23, %c0_24] : memref<8x128xf32, #tpu.memory_space<vmem>>, vector<8x128xf32>
    tpu.vector_store %arg15[%c0_23, %c0_24], %39 {strides = array<i32>} : memref<8x128xf32, #tpu.memory_space<vmem>>, vector<8x128xf32>,
    %c0_25 = arith.constant 0 : index
    %c0_26 = arith.constant 0 : index
    %43 = vector.load %arg14[%c0_25, %c0_26] : memref<8x256xf32, #tpu.memory_space<vmem>>, vector<8x128xf32>
    tpu.vector_store %arg14[%c0_25, %c0_26], %41 {strides = array<i32>} : memref<8x256xf32, #tpu.memory_space<vmem>>, vector<8x128xf32>,
    %c0_27 = arith.constant 0 : index
    %c0_28 = arith.constant 0 : index
    %44 = vector.load %arg14[%c0_27, %c0_28] : memref<8x256xf32, #tpu.memory_space<vmem>>, vector<8x256xf32>
    %c0_29 = arith.constant 0 : index
    %c0_30 = arith.constant 0 : index
    %45 = vector.load %arg5[%c0_29, %c0_30] : memref<256x512xf32, #tpu.memory_space<vmem>>, vector<256x512xf32>
    %cst_31 = arith.constant dense<0.000000e+00> : vector<8x512xf32>
    %46 = tpu.matmul %44, %45, %cst_31 {dimension_numbers = #tpu.dot_dimension_numbers<[1], [0], [0], [1], [0, 0, 1, 1], [], []>} : vector<8x256xf32>, vector<256x512xf32>, vector<8x512xf32> -> vector<8x512xf32>
    %c0_32 = arith.constant 0 : index
    %c0_33 = arith.constant 0 : index
    %47 = vector.load %arg6[%c0_32, %c0_33] : memref<1x512xf32, #tpu.memory_space<vmem>>, vector<1x512xf32>
    %48 = vector.broadcast %47 : vector<1x512xf32> to vector<8x512xf32>
    %49 = arith.addf %46, %48 : vector<8x512xf32>
    %c0_34 = arith.constant 0 : index
    %c0_35 = arith.constant 0 : index
    %50 = vector.load %arg16[%c0_34, %c0_35] : memref<8x128xf32, #tpu.memory_space<vmem>>, vector<8x128xf32>
    %51 = vector.extract_strided_slice %49 {offsets = [0, 0], sizes = [8, 384], strides = [1, 1]} : vector<8x512xf32> to vector<8x384xf32>
    %52 = arith.negf %51 : vector<8x384xf32>
    %53 = math.exp %52 : vector<8x384xf32>
    %cst_36 = arith.constant 1.000000e+00 : f32
    %54 = vector.broadcast %cst_36 : f32 to vector<8x384xf32>
    %55 = arith.addf %54, %53 : vector<8x384xf32>
    %56 = arith.divf %54, %55 : vector<8x384xf32>
    %57 = vector.extract_strided_slice %49 {offsets = [0, 384], sizes = [8, 128], strides = [1, 1]} : vector<8x512xf32> to vector<8x128xf32>
    %58 = math.tanh %57 : vector<8x128xf32>
    %59 = vector.extract_strided_slice %56 {offsets = [0, 0], sizes = [8, 128], strides = [1, 1]} : vector<8x384xf32> to vector<8x128xf32>
    %60 = vector.extract_strided_slice %56 {offsets = [0, 128], sizes = [8, 128], strides = [1, 1]} : vector<8x384xf32> to vector<8x128xf32>
    %61 = vector.extract_strided_slice %56 {offsets = [0, 256], sizes = [8, 128], strides = [1, 1]} : vector<8x384xf32> to vector<8x128xf32>
    %62 = arith.mulf %60, %50 : vector<8x128xf32>
    %63 = arith.mulf %59, %58 : vector<8x128xf32>
    %64 = arith.addf %62, %63 : vector<8x128xf32>
    %65 = math.tanh %64 : vector<8x128xf32>
    %66 = arith.mulf %61, %65 : vector<8x128xf32>
    %c0_37 = arith.constant 0 : index
    %c0_38 = arith.constant 0 : index
    %67 = vector.load %arg16[%c0_37, %c0_38] : memref<8x128xf32, #tpu.memory_space<vmem>>, vector<8x128xf32>
    tpu.vector_store %arg16[%c0_37, %c0_38], %64 {strides = array<i32>} : memref<8x128xf32, #tpu.memory_space<vmem>>, vector<8x128xf32>,
    %c0_39 = arith.constant 0 : index
    %c128 = arith.constant 128 : index
    %68 = vector.load %arg14[%c0_39, %c128] : memref<8x256xf32, #tpu.memory_space<vmem>>, vector<8x128xf32>
    tpu.vector_store %arg14[%c0_39, %c128], %66 {strides = array<i32>} : memref<8x256xf32, #tpu.memory_space<vmem>>, vector<8x128xf32>,
    %c1_i32 = arith.constant 1 : i32
    %69 = tpu.iota {dimensions = array<i32: 1>} : vector<8x8xi32>
    %70 = vector.broadcast %c1_i32 : i32 to vector<8x8xi32>
    %71 = arith.cmpi eq, %69, %70 : vector<8x8xi32>
    %cst_40 = arith.constant 0.000000e+00 : f32
    %72 = vector.broadcast %cst_40 : f32 to vector<8x8xf32>
    %73 = arith.select %71, %6, %72 : vector<8x8xi1>, vector<8x8xf32>
    %cst_41 = arith.constant dense<0.000000e+00> : vector<8xf32>
    %74 = vector.multi_reduction <add>, %73, %cst_41 [1] : vector<8x8xf32> to vector<8xf32>
    %75 = vector.shape_cast %74 : vector<8xf32> to vector<8x1xf32>
    %c0_42 = arith.constant 0 : index
    %c0_43 = arith.constant 0 : index
    %76 = vector.load %arg2[%c0_42, %c0_43] : memref<1x512xf32, #tpu.memory_space<vmem>>, vector<1x512xf32>
    %77 = vector.broadcast %75 : vector<8x1xf32> to vector<8x512xf32>
    %78 = vector.broadcast %76 : vector<1x512xf32> to vector<8x512xf32>
    %79 = arith.mulf %77, %78 : vector<8x512xf32>
    %c0_44 = arith.constant 0 : index
    %c0_45 = arith.constant 0 : index
    %80 = vector.load %arg3[%c0_44, %c0_45] : memref<1x512xf32, #tpu.memory_space<vmem>>, vector<1x512xf32>
    %81 = vector.broadcast %80 : vector<1x512xf32> to vector<8x512xf32>
    %82 = arith.addf %79, %81 : vector<8x512xf32>
    %c0_46 = arith.constant 0 : index
    %c0_47 = arith.constant 0 : index
    %83 = vector.load %arg14[%c0_46, %c0_47] : memref<8x256xf32, #tpu.memory_space<vmem>>, vector<8x128xf32>
    %c0_48 = arith.constant 0 : index
    %c0_49 = arith.constant 0 : index
    %84 = vector.load %arg4[%c0_48, %c0_49] : memref<128x512xf32, #tpu.memory_space<vmem>>, vector<128x512xf32>
    %cst_50 = arith.constant dense<0.000000e+00> : vector<8x512xf32>
    %85 = tpu.matmul %83, %84, %cst_50 {dimension_numbers = #tpu.dot_dimension_numbers<[1], [0], [0], [1], [0, 0, 1, 1], [], []>} : vector<8x128xf32>, vector<128x512xf32>, vector<8x512xf32> -> vector<8x512xf32>
    %86 = arith.addf %82, %85 : vector<8x512xf32>
    %c0_51 = arith.constant 0 : index
    %c0_52 = arith.constant 0 : index
    %87 = vector.load %arg15[%c0_51, %c0_52] : memref<8x128xf32, #tpu.memory_space<vmem>>, vector<8x128xf32>
    %88 = vector.extract_strided_slice %86 {offsets = [0, 0], sizes = [8, 384], strides = [1, 1]} : vector<8x512xf32> to vector<8x384xf32>
    %89 = arith.negf %88 : vector<8x384xf32>
    %90 = math.exp %89 : vector<8x384xf32>
    %cst_53 = arith.constant 1.000000e+00 : f32
    %91 = vector.broadcast %cst_53 : f32 to vector<8x384xf32>
    %92 = arith.addf %91, %90 : vector<8x384xf32>
    %93 = arith.divf %91, %92 : vector<8x384xf32>
    %94 = vector.extract_strided_slice %86 {offsets = [0, 384], sizes = [8, 128], strides = [1, 1]} : vector<8x512xf32> to vector<8x128xf32>
    %95 = math.tanh %94 : vector<8x128xf32>
    %96 = vector.extract_strided_slice %93 {offsets = [0, 0], sizes = [8, 128], strides = [1, 1]} : vector<8x384xf32> to vector<8x128xf32>
    %97 = vector.extract_strided_slice %93 {offsets = [0, 128], sizes = [8, 128], strides = [1, 1]} : vector<8x384xf32> to vector<8x128xf32>
    %98 = vector.extract_strided_slice %93 {offsets = [0, 256], sizes = [8, 128], strides = [1, 1]} : vector<8x384xf32> to vector<8x128xf32>
    %99 = arith.mulf %97, %87 : vector<8x128xf32>
    %100 = arith.mulf %96, %95 : vector<8x128xf32>
    %101 = arith.addf %99, %100 : vector<8x128xf32>
    %102 = math.tanh %101 : vector<8x128xf32>
    %103 = arith.mulf %98, %102 : vector<8x128xf32>
    %c0_54 = arith.constant 0 : index
    %c0_55 = arith.constant 0 : index
    %104 = vector.load %arg15[%c0_54, %c0_55] : memref<8x128xf32, #tpu.memory_space<vmem>>, vector<8x128xf32>
    tpu.vector_store %arg15[%c0_54, %c0_55], %101 {strides = array<i32>} : memref<8x128xf32, #tpu.memory_space<vmem>>, vector<8x128xf32>,
    %c0_56 = arith.constant 0 : index
    %c0_57 = arith.constant 0 : index
    %105 = vector.load %arg14[%c0_56, %c0_57] : memref<8x256xf32, #tpu.memory_space<vmem>>, vector<8x128xf32>
    tpu.vector_store %arg14[%c0_56, %c0_57], %103 {strides = array<i32>} : memref<8x256xf32, #tpu.memory_space<vmem>>, vector<8x128xf32>,
    %c0_58 = arith.constant 0 : index
    %c0_59 = arith.constant 0 : index
    %106 = vector.load %arg14[%c0_58, %c0_59] : memref<8x256xf32, #tpu.memory_space<vmem>>, vector<8x256xf32>
    %c0_60 = arith.constant 0 : index
    %c0_61 = arith.constant 0 : index
    %107 = vector.load %arg5[%c0_60, %c0_61] : memref<256x512xf32, #tpu.memory_space<vmem>>, vector<256x512xf32>
    %cst_62 = arith.constant dense<0.000000e+00> : vector<8x512xf32>
    %108 = tpu.matmul %106, %107, %cst_62 {dimension_numbers = #tpu.dot_dimension_numbers<[1], [0], [0], [1], [0, 0, 1, 1], [], []>} : vector<8x256xf32>, vector<256x512xf32>, vector<8x512xf32> -> vector<8x512xf32>
    %c0_63 = arith.constant 0 : index
    %c0_64 = arith.constant 0 : index
    %109 = vector.load %arg6[%c0_63, %c0_64] : memref<1x512xf32, #tpu.memory_space<vmem>>, vector<1x512xf32>
    %110 = vector.broadcast %109 : vector<1x512xf32> to vector<8x512xf32>
    %111 = arith.addf %108, %110 : vector<8x512xf32>
    %c0_65 = arith.constant 0 : index
    %c0_66 = arith.constant 0 : index
    %112 = vector.load %arg16[%c0_65, %c0_66] : memref<8x128xf32, #tpu.memory_space<vmem>>, vector<8x128xf32>
    %113 = vector.extract_strided_slice %111 {offsets = [0, 0], sizes = [8, 384], strides = [1, 1]} : vector<8x512xf32> to vector<8x384xf32>
    %114 = arith.negf %113 : vector<8x384xf32>
    %115 = math.exp %114 : vector<8x384xf32>
    %cst_67 = arith.constant 1.000000e+00 : f32
    %116 = vector.broadcast %cst_67 : f32 to vector<8x384xf32>
    %117 = arith.addf %116, %115 : vector<8x384xf32>
    %118 = arith.divf %116, %117 : vector<8x384xf32>
    %119 = vector.extract_strided_slice %111 {offsets = [0, 384], sizes = [8, 128], strides = [1, 1]} : vector<8x512xf32> to vector<8x128xf32>
    %120 = math.tanh %119 : vector<8x128xf32>
    %121 = vector.extract_strided_slice %118 {offsets = [0, 0], sizes = [8, 128], strides = [1, 1]} : vector<8x384xf32> to vector<8x128xf32>
    %122 = vector.extract_strided_slice %118 {offsets = [0, 128], sizes = [8, 128], strides = [1, 1]} : vector<8x384xf32> to vector<8x128xf32>
    %123 = vector.extract_strided_slice %118 {offsets = [0, 256], sizes = [8, 128], strides = [1, 1]} : vector<8x384xf32> to vector<8x128xf32>
    %124 = arith.mulf %122, %112 : vector<8x128xf32>
    %125 = arith.mulf %121, %120 : vector<8x128xf32>
    %126 = arith.addf %124, %125 : vector<8x128xf32>
    %127 = math.tanh %126 : vector<8x128xf32>
    %128 = arith.mulf %123, %127 : vector<8x128xf32>
    %c0_68 = arith.constant 0 : index
    %c0_69 = arith.constant 0 : index
    %129 = vector.load %arg16[%c0_68, %c0_69] : memref<8x128xf32, #tpu.memory_space<vmem>>, vector<8x128xf32>
    tpu.vector_store %arg16[%c0_68, %c0_69], %126 {strides = array<i32>} : memref<8x128xf32, #tpu.memory_space<vmem>>, vector<8x128xf32>,
    %c0_70 = arith.constant 0 : index
    %c128_71 = arith.constant 128 : index
    %130 = vector.load %arg14[%c0_70, %c128_71] : memref<8x256xf32, #tpu.memory_space<vmem>>, vector<8x128xf32>
    tpu.vector_store %arg14[%c0_70, %c128_71], %128 {strides = array<i32>} : memref<8x256xf32, #tpu.memory_space<vmem>>, vector<8x128xf32>,
    %c2_i32 = arith.constant 2 : i32
    %131 = tpu.iota {dimensions = array<i32: 1>} : vector<8x8xi32>
    %132 = vector.broadcast %c2_i32 : i32 to vector<8x8xi32>
    %133 = arith.cmpi eq, %131, %132 : vector<8x8xi32>
    %cst_72 = arith.constant 0.000000e+00 : f32
    %134 = vector.broadcast %cst_72 : f32 to vector<8x8xf32>
    %135 = arith.select %133, %6, %134 : vector<8x8xi1>, vector<8x8xf32>
    %cst_73 = arith.constant dense<0.000000e+00> : vector<8xf32>
    %136 = vector.multi_reduction <add>, %135, %cst_73 [1] : vector<8x8xf32> to vector<8xf32>
    %137 = vector.shape_cast %136 : vector<8xf32> to vector<8x1xf32>
    %c0_74 = arith.constant 0 : index
    %c0_75 = arith.constant 0 : index
    %138 = vector.load %arg2[%c0_74, %c0_75] : memref<1x512xf32, #tpu.memory_space<vmem>>, vector<1x512xf32>
    %139 = vector.broadcast %137 : vector<8x1xf32> to vector<8x512xf32>
    %140 = vector.broadcast %138 : vector<1x512xf32> to vector<8x512xf32>
    %141 = arith.mulf %139, %140 : vector<8x512xf32>
    %c0_76 = arith.constant 0 : index
    %c0_77 = arith.constant 0 : index
    %142 = vector.load %arg3[%c0_76, %c0_77] : memref<1x512xf32, #tpu.memory_space<vmem>>, vector<1x512xf32>
    %143 = vector.broadcast %142 : vector<1x512xf32> to vector<8x512xf32>
    %144 = arith.addf %141, %143 : vector<8x512xf32>
    %c0_78 = arith.constant 0 : index
    %c0_79 = arith.constant 0 : index
    %145 = vector.load %arg14[%c0_78, %c0_79] : memref<8x256xf32, #tpu.memory_space<vmem>>, vector<8x128xf32>
    %c0_80 = arith.constant 0 : index
    %c0_81 = arith.constant 0 : index
    %146 = vector.load %arg4[%c0_80, %c0_81] : memref<128x512xf32, #tpu.memory_space<vmem>>, vector<128x512xf32>
    %cst_82 = arith.constant dense<0.000000e+00> : vector<8x512xf32>
    %147 = tpu.matmul %145, %146, %cst_82 {dimension_numbers = #tpu.dot_dimension_numbers<[1], [0], [0], [1], [0, 0, 1, 1], [], []>} : vector<8x128xf32>, vector<128x512xf32>, vector<8x512xf32> -> vector<8x512xf32>
    %148 = arith.addf %144, %147 : vector<8x512xf32>
    %c0_83 = arith.constant 0 : index
    %c0_84 = arith.constant 0 : index
    %149 = vector.load %arg15[%c0_83, %c0_84] : memref<8x128xf32, #tpu.memory_space<vmem>>, vector<8x128xf32>
    %150 = vector.extract_strided_slice %148 {offsets = [0, 0], sizes = [8, 384], strides = [1, 1]} : vector<8x512xf32> to vector<8x384xf32>
    %151 = arith.negf %150 : vector<8x384xf32>
    %152 = math.exp %151 : vector<8x384xf32>
    %cst_85 = arith.constant 1.000000e+00 : f32
    %153 = vector.broadcast %cst_85 : f32 to vector<8x384xf32>
    %154 = arith.addf %153, %152 : vector<8x384xf32>
    %155 = arith.divf %153, %154 : vector<8x384xf32>
    %156 = vector.extract_strided_slice %148 {offsets = [0, 384], sizes = [8, 128], strides = [1, 1]} : vector<8x512xf32> to vector<8x128xf32>
    %157 = math.tanh %156 : vector<8x128xf32>
    %158 = vector.extract_strided_slice %155 {offsets = [0, 0], sizes = [8, 128], strides = [1, 1]} : vector<8x384xf32> to vector<8x128xf32>
    %159 = vector.extract_strided_slice %155 {offsets = [0, 128], sizes = [8, 128], strides = [1, 1]} : vector<8x384xf32> to vector<8x128xf32>
    %160 = vector.extract_strided_slice %155 {offsets = [0, 256], sizes = [8, 128], strides = [1, 1]} : vector<8x384xf32> to vector<8x128xf32>
    %161 = arith.mulf %159, %149 : vector<8x128xf32>
    %162 = arith.mulf %158, %157 : vector<8x128xf32>
    %163 = arith.addf %161, %162 : vector<8x128xf32>
    %164 = math.tanh %163 : vector<8x128xf32>
    %165 = arith.mulf %160, %164 : vector<8x128xf32>
    %c0_86 = arith.constant 0 : index
    %c0_87 = arith.constant 0 : index
    %166 = vector.load %arg15[%c0_86, %c0_87] : memref<8x128xf32, #tpu.memory_space<vmem>>, vector<8x128xf32>
    tpu.vector_store %arg15[%c0_86, %c0_87], %163 {strides = array<i32>} : memref<8x128xf32, #tpu.memory_space<vmem>>, vector<8x128xf32>,
    %c0_88 = arith.constant 0 : index
    %c0_89 = arith.constant 0 : index
    %167 = vector.load %arg14[%c0_88, %c0_89] : memref<8x256xf32, #tpu.memory_space<vmem>>, vector<8x128xf32>
    tpu.vector_store %arg14[%c0_88, %c0_89], %165 {strides = array<i32>} : memref<8x256xf32, #tpu.memory_space<vmem>>, vector<8x128xf32>,
    %c0_90 = arith.constant 0 : index
    %c0_91 = arith.constant 0 : index
    %168 = vector.load %arg14[%c0_90, %c0_91] : memref<8x256xf32, #tpu.memory_space<vmem>>, vector<8x256xf32>
    %c0_92 = arith.constant 0 : index
    %c0_93 = arith.constant 0 : index
    %169 = vector.load %arg5[%c0_92, %c0_93] : memref<256x512xf32, #tpu.memory_space<vmem>>, vector<256x512xf32>
    %cst_94 = arith.constant dense<0.000000e+00> : vector<8x512xf32>
    %170 = tpu.matmul %168, %169, %cst_94 {dimension_numbers = #tpu.dot_dimension_numbers<[1], [0], [0], [1], [0, 0, 1, 1], [], []>} : vector<8x256xf32>, vector<256x512xf32>, vector<8x512xf32> -> vector<8x512xf32>
    %c0_95 = arith.constant 0 : index
    %c0_96 = arith.constant 0 : index
    %171 = vector.load %arg6[%c0_95, %c0_96] : memref<1x512xf32, #tpu.memory_space<vmem>>, vector<1x512xf32>
    %172 = vector.broadcast %171 : vector<1x512xf32> to vector<8x512xf32>
    %173 = arith.addf %170, %172 : vector<8x512xf32>
    %c0_97 = arith.constant 0 : index
    %c0_98 = arith.constant 0 : index
    %174 = vector.load %arg16[%c0_97, %c0_98] : memref<8x128xf32, #tpu.memory_space<vmem>>, vector<8x128xf32>
    %175 = vector.extract_strided_slice %173 {offsets = [0, 0], sizes = [8, 384], strides = [1, 1]} : vector<8x512xf32> to vector<8x384xf32>
    %176 = arith.negf %175 : vector<8x384xf32>
    %177 = math.exp %176 : vector<8x384xf32>
    %cst_99 = arith.constant 1.000000e+00 : f32
    %178 = vector.broadcast %cst_99 : f32 to vector<8x384xf32>
    %179 = arith.addf %178, %177 : vector<8x384xf32>
    %180 = arith.divf %178, %179 : vector<8x384xf32>
    %181 = vector.extract_strided_slice %173 {offsets = [0, 384], sizes = [8, 128], strides = [1, 1]} : vector<8x512xf32> to vector<8x128xf32>
    %182 = math.tanh %181 : vector<8x128xf32>
    %183 = vector.extract_strided_slice %180 {offsets = [0, 0], sizes = [8, 128], strides = [1, 1]} : vector<8x384xf32> to vector<8x128xf32>
    %184 = vector.extract_strided_slice %180 {offsets = [0, 128], sizes = [8, 128], strides = [1, 1]} : vector<8x384xf32> to vector<8x128xf32>
    %185 = vector.extract_strided_slice %180 {offsets = [0, 256], sizes = [8, 128], strides = [1, 1]} : vector<8x384xf32> to vector<8x128xf32>
    %186 = arith.mulf %184, %174 : vector<8x128xf32>
    %187 = arith.mulf %183, %182 : vector<8x128xf32>
    %188 = arith.addf %186, %187 : vector<8x128xf32>
    %189 = math.tanh %188 : vector<8x128xf32>
    %190 = arith.mulf %185, %189 : vector<8x128xf32>
    %c0_100 = arith.constant 0 : index
    %c0_101 = arith.constant 0 : index
    %191 = vector.load %arg16[%c0_100, %c0_101] : memref<8x128xf32, #tpu.memory_space<vmem>>, vector<8x128xf32>
    tpu.vector_store %arg16[%c0_100, %c0_101], %188 {strides = array<i32>} : memref<8x128xf32, #tpu.memory_space<vmem>>, vector<8x128xf32>,
    %c0_102 = arith.constant 0 : index
    %c128_103 = arith.constant 128 : index
    %192 = vector.load %arg14[%c0_102, %c128_103] : memref<8x256xf32, #tpu.memory_space<vmem>>, vector<8x128xf32>
    tpu.vector_store %arg14[%c0_102, %c128_103], %190 {strides = array<i32>} : memref<8x256xf32, #tpu.memory_space<vmem>>, vector<8x128xf32>,
    %c3_i32 = arith.constant 3 : i32
    %193 = tpu.iota {dimensions = array<i32: 1>} : vector<8x8xi32>
    %194 = vector.broadcast %c3_i32 : i32 to vector<8x8xi32>
    %195 = arith.cmpi eq, %193, %194 : vector<8x8xi32>
    %cst_104 = arith.constant 0.000000e+00 : f32
    %196 = vector.broadcast %cst_104 : f32 to vector<8x8xf32>
    %197 = arith.select %195, %6, %196 : vector<8x8xi1>, vector<8x8xf32>
    %cst_105 = arith.constant dense<0.000000e+00> : vector<8xf32>
    %198 = vector.multi_reduction <add>, %197, %cst_105 [1] : vector<8x8xf32> to vector<8xf32>
    %199 = vector.shape_cast %198 : vector<8xf32> to vector<8x1xf32>
    %c0_106 = arith.constant 0 : index
    %c0_107 = arith.constant 0 : index
    %200 = vector.load %arg2[%c0_106, %c0_107] : memref<1x512xf32, #tpu.memory_space<vmem>>, vector<1x512xf32>
    %201 = vector.broadcast %199 : vector<8x1xf32> to vector<8x512xf32>
    %202 = vector.broadcast %200 : vector<1x512xf32> to vector<8x512xf32>
    %203 = arith.mulf %201, %202 : vector<8x512xf32>
    %c0_108 = arith.constant 0 : index
    %c0_109 = arith.constant 0 : index
    %204 = vector.load %arg3[%c0_108, %c0_109] : memref<1x512xf32, #tpu.memory_space<vmem>>, vector<1x512xf32>
    %205 = vector.broadcast %204 : vector<1x512xf32> to vector<8x512xf32>
    %206 = arith.addf %203, %205 : vector<8x512xf32>
    %c0_110 = arith.constant 0 : index
    %c0_111 = arith.constant 0 : index
    %207 = vector.load %arg14[%c0_110, %c0_111] : memref<8x256xf32, #tpu.memory_space<vmem>>, vector<8x128xf32>
    %c0_112 = arith.constant 0 : index
    %c0_113 = arith.constant 0 : index
    %208 = vector.load %arg4[%c0_112, %c0_113] : memref<128x512xf32, #tpu.memory_space<vmem>>, vector<128x512xf32>
    %cst_114 = arith.constant dense<0.000000e+00> : vector<8x512xf32>
    %209 = tpu.matmul %207, %208, %cst_114 {dimension_numbers = #tpu.dot_dimension_numbers<[1], [0], [0], [1], [0, 0, 1, 1], [], []>} : vector<8x128xf32>, vector<128x512xf32>, vector<8x512xf32> -> vector<8x512xf32>
    %210 = arith.addf %206, %209 : vector<8x512xf32>
    %c0_115 = arith.constant 0 : index
    %c0_116 = arith.constant 0 : index
    %211 = vector.load %arg15[%c0_115, %c0_116] : memref<8x128xf32, #tpu.memory_space<vmem>>, vector<8x128xf32>
    %212 = vector.extract_strided_slice %210 {offsets = [0, 0], sizes = [8, 384], strides = [1, 1]} : vector<8x512xf32> to vector<8x384xf32>
    %213 = arith.negf %212 : vector<8x384xf32>
    %214 = math.exp %213 : vector<8x384xf32>
    %cst_117 = arith.constant 1.000000e+00 : f32
    %215 = vector.broadcast %cst_117 : f32 to vector<8x384xf32>
    %216 = arith.addf %215, %214 : vector<8x384xf32>
    %217 = arith.divf %215, %216 : vector<8x384xf32>
    %218 = vector.extract_strided_slice %210 {offsets = [0, 384], sizes = [8, 128], strides = [1, 1]} : vector<8x512xf32> to vector<8x128xf32>
    %219 = math.tanh %218 : vector<8x128xf32>
    %220 = vector.extract_strided_slice %217 {offsets = [0, 0], sizes = [8, 128], strides = [1, 1]} : vector<8x384xf32> to vector<8x128xf32>
    %221 = vector.extract_strided_slice %217 {offsets = [0, 128], sizes = [8, 128], strides = [1, 1]} : vector<8x384xf32> to vector<8x128xf32>
    %222 = vector.extract_strided_slice %217 {offsets = [0, 256], sizes = [8, 128], strides = [1, 1]} : vector<8x384xf32> to vector<8x128xf32>
    %223 = arith.mulf %221, %211 : vector<8x128xf32>
    %224 = arith.mulf %220, %219 : vector<8x128xf32>
    %225 = arith.addf %223, %224 : vector<8x128xf32>
    %226 = math.tanh %225 : vector<8x128xf32>
    %227 = arith.mulf %222, %226 : vector<8x128xf32>
    %c0_118 = arith.constant 0 : index
    %c0_119 = arith.constant 0 : index
    %228 = vector.load %arg15[%c0_118, %c0_119] : memref<8x128xf32, #tpu.memory_space<vmem>>, vector<8x128xf32>
    tpu.vector_store %arg15[%c0_118, %c0_119], %225 {strides = array<i32>} : memref<8x128xf32, #tpu.memory_space<vmem>>, vector<8x128xf32>,
    %c0_120 = arith.constant 0 : index
    %c0_121 = arith.constant 0 : index
    %229 = vector.load %arg14[%c0_120, %c0_121] : memref<8x256xf32, #tpu.memory_space<vmem>>, vector<8x128xf32>
    tpu.vector_store %arg14[%c0_120, %c0_121], %227 {strides = array<i32>} : memref<8x256xf32, #tpu.memory_space<vmem>>, vector<8x128xf32>,
    %c0_122 = arith.constant 0 : index
    %c0_123 = arith.constant 0 : index
    %230 = vector.load %arg14[%c0_122, %c0_123] : memref<8x256xf32, #tpu.memory_space<vmem>>, vector<8x256xf32>
    %c0_124 = arith.constant 0 : index
    %c0_125 = arith.constant 0 : index
    %231 = vector.load %arg5[%c0_124, %c0_125] : memref<256x512xf32, #tpu.memory_space<vmem>>, vector<256x512xf32>
    %cst_126 = arith.constant dense<0.000000e+00> : vector<8x512xf32>
    %232 = tpu.matmul %230, %231, %cst_126 {dimension_numbers = #tpu.dot_dimension_numbers<[1], [0], [0], [1], [0, 0, 1, 1], [], []>} : vector<8x256xf32>, vector<256x512xf32>, vector<8x512xf32> -> vector<8x512xf32>
    %c0_127 = arith.constant 0 : index
    %c0_128 = arith.constant 0 : index
    %233 = vector.load %arg6[%c0_127, %c0_128] : memref<1x512xf32, #tpu.memory_space<vmem>>, vector<1x512xf32>
    %234 = vector.broadcast %233 : vector<1x512xf32> to vector<8x512xf32>
    %235 = arith.addf %232, %234 : vector<8x512xf32>
    %c0_129 = arith.constant 0 : index
    %c0_130 = arith.constant 0 : index
    %236 = vector.load %arg16[%c0_129, %c0_130] : memref<8x128xf32, #tpu.memory_space<vmem>>, vector<8x128xf32>
    %237 = vector.extract_strided_slice %235 {offsets = [0, 0], sizes = [8, 384], strides = [1, 1]} : vector<8x512xf32> to vector<8x384xf32>
    %238 = arith.negf %237 : vector<8x384xf32>
    %239 = math.exp %238 : vector<8x384xf32>
    %cst_131 = arith.constant 1.000000e+00 : f32
    %240 = vector.broadcast %cst_131 : f32 to vector<8x384xf32>
    %241 = arith.addf %240, %239 : vector<8x384xf32>
    %242 = arith.divf %240, %241 : vector<8x384xf32>
    %243 = vector.extract_strided_slice %235 {offsets = [0, 384], sizes = [8, 128], strides = [1, 1]} : vector<8x512xf32> to vector<8x128xf32>
    %244 = math.tanh %243 : vector<8x128xf32>
    %245 = vector.extract_strided_slice %242 {offsets = [0, 0], sizes = [8, 128], strides = [1, 1]} : vector<8x384xf32> to vector<8x128xf32>
    %246 = vector.extract_strided_slice %242 {offsets = [0, 128], sizes = [8, 128], strides = [1, 1]} : vector<8x384xf32> to vector<8x128xf32>
    %247 = vector.extract_strided_slice %242 {offsets = [0, 256], sizes = [8, 128], strides = [1, 1]} : vector<8x384xf32> to vector<8x128xf32>
    %248 = arith.mulf %246, %236 : vector<8x128xf32>
    %249 = arith.mulf %245, %244 : vector<8x128xf32>
    %250 = arith.addf %248, %249 : vector<8x128xf32>
    %251 = math.tanh %250 : vector<8x128xf32>
    %252 = arith.mulf %247, %251 : vector<8x128xf32>
    %c0_132 = arith.constant 0 : index
    %c0_133 = arith.constant 0 : index
    %253 = vector.load %arg16[%c0_132, %c0_133] : memref<8x128xf32, #tpu.memory_space<vmem>>, vector<8x128xf32>
    tpu.vector_store %arg16[%c0_132, %c0_133], %250 {strides = array<i32>} : memref<8x128xf32, #tpu.memory_space<vmem>>, vector<8x128xf32>,
    %c0_134 = arith.constant 0 : index
    %c128_135 = arith.constant 128 : index
    %254 = vector.load %arg14[%c0_134, %c128_135] : memref<8x256xf32, #tpu.memory_space<vmem>>, vector<8x128xf32>
    tpu.vector_store %arg14[%c0_134, %c128_135], %252 {strides = array<i32>} : memref<8x256xf32, #tpu.memory_space<vmem>>, vector<8x128xf32>,
    %c4_i32 = arith.constant 4 : i32
    %255 = tpu.iota {dimensions = array<i32: 1>} : vector<8x8xi32>
    %256 = vector.broadcast %c4_i32 : i32 to vector<8x8xi32>
    %257 = arith.cmpi eq, %255, %256 : vector<8x8xi32>
    %cst_136 = arith.constant 0.000000e+00 : f32
    %258 = vector.broadcast %cst_136 : f32 to vector<8x8xf32>
    %259 = arith.select %257, %6, %258 : vector<8x8xi1>, vector<8x8xf32>
    %cst_137 = arith.constant dense<0.000000e+00> : vector<8xf32>
    %260 = vector.multi_reduction <add>, %259, %cst_137 [1] : vector<8x8xf32> to vector<8xf32>
    %261 = vector.shape_cast %260 : vector<8xf32> to vector<8x1xf32>
    %c0_138 = arith.constant 0 : index
    %c0_139 = arith.constant 0 : index
    %262 = vector.load %arg2[%c0_138, %c0_139] : memref<1x512xf32, #tpu.memory_space<vmem>>, vector<1x512xf32>
    %263 = vector.broadcast %261 : vector<8x1xf32> to vector<8x512xf32>
    %264 = vector.broadcast %262 : vector<1x512xf32> to vector<8x512xf32>
    %265 = arith.mulf %263, %264 : vector<8x512xf32>
    %c0_140 = arith.constant 0 : index
    %c0_141 = arith.constant 0 : index
    %266 = vector.load %arg3[%c0_140, %c0_141] : memref<1x512xf32, #tpu.memory_space<vmem>>, vector<1x512xf32>
    %267 = vector.broadcast %266 : vector<1x512xf32> to vector<8x512xf32>
    %268 = arith.addf %265, %267 : vector<8x512xf32>
    %c0_142 = arith.constant 0 : index
    %c0_143 = arith.constant 0 : index
    %269 = vector.load %arg14[%c0_142, %c0_143] : memref<8x256xf32, #tpu.memory_space<vmem>>, vector<8x128xf32>
    %c0_144 = arith.constant 0 : index
    %c0_145 = arith.constant 0 : index
    %270 = vector.load %arg4[%c0_144, %c0_145] : memref<128x512xf32, #tpu.memory_space<vmem>>, vector<128x512xf32>
    %cst_146 = arith.constant dense<0.000000e+00> : vector<8x512xf32>
    %271 = tpu.matmul %269, %270, %cst_146 {dimension_numbers = #tpu.dot_dimension_numbers<[1], [0], [0], [1], [0, 0, 1, 1], [], []>} : vector<8x128xf32>, vector<128x512xf32>, vector<8x512xf32> -> vector<8x512xf32>
    %272 = arith.addf %268, %271 : vector<8x512xf32>
    %c0_147 = arith.constant 0 : index
    %c0_148 = arith.constant 0 : index
    %273 = vector.load %arg15[%c0_147, %c0_148] : memref<8x128xf32, #tpu.memory_space<vmem>>, vector<8x128xf32>
    %274 = vector.extract_strided_slice %272 {offsets = [0, 0], sizes = [8, 384], strides = [1, 1]} : vector<8x512xf32> to vector<8x384xf32>
    %275 = arith.negf %274 : vector<8x384xf32>
    %276 = math.exp %275 : vector<8x384xf32>
    %cst_149 = arith.constant 1.000000e+00 : f32
    %277 = vector.broadcast %cst_149 : f32 to vector<8x384xf32>
    %278 = arith.addf %277, %276 : vector<8x384xf32>
    %279 = arith.divf %277, %278 : vector<8x384xf32>
    %280 = vector.extract_strided_slice %272 {offsets = [0, 384], sizes = [8, 128], strides = [1, 1]} : vector<8x512xf32> to vector<8x128xf32>
    %281 = math.tanh %280 : vector<8x128xf32>
    %282 = vector.extract_strided_slice %279 {offsets = [0, 0], sizes = [8, 128], strides = [1, 1]} : vector<8x384xf32> to vector<8x128xf32>
    %283 = vector.extract_strided_slice %279 {offsets = [0, 128], sizes = [8, 128], strides = [1, 1]} : vector<8x384xf32> to vector<8x128xf32>
    %284 = vector.extract_strided_slice %279 {offsets = [0, 256], sizes = [8, 128], strides = [1, 1]} : vector<8x384xf32> to vector<8x128xf32>
    %285 = arith.mulf %283, %273 : vector<8x128xf32>
    %286 = arith.mulf %282, %281 : vector<8x128xf32>
    %287 = arith.addf %285, %286 : vector<8x128xf32>
    %288 = math.tanh %287 : vector<8x128xf32>
    %289 = arith.mulf %284, %288 : vector<8x128xf32>
    %c0_150 = arith.constant 0 : index
    %c0_151 = arith.constant 0 : index
    %290 = vector.load %arg15[%c0_150, %c0_151] : memref<8x128xf32, #tpu.memory_space<vmem>>, vector<8x128xf32>
    tpu.vector_store %arg15[%c0_150, %c0_151], %287 {strides = array<i32>} : memref<8x128xf32, #tpu.memory_space<vmem>>, vector<8x128xf32>,
    %c0_152 = arith.constant 0 : index
    %c0_153 = arith.constant 0 : index
    %291 = vector.load %arg14[%c0_152, %c0_153] : memref<8x256xf32, #tpu.memory_space<vmem>>, vector<8x128xf32>
    tpu.vector_store %arg14[%c0_152, %c0_153], %289 {strides = array<i32>} : memref<8x256xf32, #tpu.memory_space<vmem>>, vector<8x128xf32>,
    %c0_154 = arith.constant 0 : index
    %c0_155 = arith.constant 0 : index
    %292 = vector.load %arg14[%c0_154, %c0_155] : memref<8x256xf32, #tpu.memory_space<vmem>>, vector<8x256xf32>
    %c0_156 = arith.constant 0 : index
    %c0_157 = arith.constant 0 : index
    %293 = vector.load %arg5[%c0_156, %c0_157] : memref<256x512xf32, #tpu.memory_space<vmem>>, vector<256x512xf32>
    %cst_158 = arith.constant dense<0.000000e+00> : vector<8x512xf32>
    %294 = tpu.matmul %292, %293, %cst_158 {dimension_numbers = #tpu.dot_dimension_numbers<[1], [0], [0], [1], [0, 0, 1, 1], [], []>} : vector<8x256xf32>, vector<256x512xf32>, vector<8x512xf32> -> vector<8x512xf32>
    %c0_159 = arith.constant 0 : index
    %c0_160 = arith.constant 0 : index
    %295 = vector.load %arg6[%c0_159, %c0_160] : memref<1x512xf32, #tpu.memory_space<vmem>>, vector<1x512xf32>
    %296 = vector.broadcast %295 : vector<1x512xf32> to vector<8x512xf32>
    %297 = arith.addf %294, %296 : vector<8x512xf32>
    %c0_161 = arith.constant 0 : index
    %c0_162 = arith.constant 0 : index
    %298 = vector.load %arg16[%c0_161, %c0_162] : memref<8x128xf32, #tpu.memory_space<vmem>>, vector<8x128xf32>
    %299 = vector.extract_strided_slice %297 {offsets = [0, 0], sizes = [8, 384], strides = [1, 1]} : vector<8x512xf32> to vector<8x384xf32>
    %300 = arith.negf %299 : vector<8x384xf32>
    %301 = math.exp %300 : vector<8x384xf32>
    %cst_163 = arith.constant 1.000000e+00 : f32
    %302 = vector.broadcast %cst_163 : f32 to vector<8x384xf32>
    %303 = arith.addf %302, %301 : vector<8x384xf32>
    %304 = arith.divf %302, %303 : vector<8x384xf32>
    %305 = vector.extract_strided_slice %297 {offsets = [0, 384], sizes = [8, 128], strides = [1, 1]} : vector<8x512xf32> to vector<8x128xf32>
    %306 = math.tanh %305 : vector<8x128xf32>
    %307 = vector.extract_strided_slice %304 {offsets = [0, 0], sizes = [8, 128], strides = [1, 1]} : vector<8x384xf32> to vector<8x128xf32>
    %308 = vector.extract_strided_slice %304 {offsets = [0, 128], sizes = [8, 128], strides = [1, 1]} : vector<8x384xf32> to vector<8x128xf32>
    %309 = vector.extract_strided_slice %304 {offsets = [0, 256], sizes = [8, 128], strides = [1, 1]} : vector<8x384xf32> to vector<8x128xf32>
    %310 = arith.mulf %308, %298 : vector<8x128xf32>
    %311 = arith.mulf %307, %306 : vector<8x128xf32>
    %312 = arith.addf %310, %311 : vector<8x128xf32>
    %313 = math.tanh %312 : vector<8x128xf32>
    %314 = arith.mulf %309, %313 : vector<8x128xf32>
    %c0_164 = arith.constant 0 : index
    %c0_165 = arith.constant 0 : index
    %315 = vector.load %arg16[%c0_164, %c0_165] : memref<8x128xf32, #tpu.memory_space<vmem>>, vector<8x128xf32>
    tpu.vector_store %arg16[%c0_164, %c0_165], %312 {strides = array<i32>} : memref<8x128xf32, #tpu.memory_space<vmem>>, vector<8x128xf32>,
    %c0_166 = arith.constant 0 : index
    %c128_167 = arith.constant 128 : index
    %316 = vector.load %arg14[%c0_166, %c128_167] : memref<8x256xf32, #tpu.memory_space<vmem>>, vector<8x128xf32>
    tpu.vector_store %arg14[%c0_166, %c128_167], %314 {strides = array<i32>} : memref<8x256xf32, #tpu.memory_space<vmem>>, vector<8x128xf32>,
    %c5_i32 = arith.constant 5 : i32
    %317 = tpu.iota {dimensions = array<i32: 1>} : vector<8x8xi32>
    %318 = vector.broadcast %c5_i32 : i32 to vector<8x8xi32>
    %319 = arith.cmpi eq, %317, %318 : vector<8x8xi32>
    %cst_168 = arith.constant 0.000000e+00 : f32
    %320 = vector.broadcast %cst_168 : f32 to vector<8x8xf32>
    %321 = arith.select %319, %6, %320 : vector<8x8xi1>, vector<8x8xf32>
    %cst_169 = arith.constant dense<0.000000e+00> : vector<8xf32>
    %322 = vector.multi_reduction <add>, %321, %cst_169 [1] : vector<8x8xf32> to vector<8xf32>
    %323 = vector.shape_cast %322 : vector<8xf32> to vector<8x1xf32>
    %c0_170 = arith.constant 0 : index
    %c0_171 = arith.constant 0 : index
    %324 = vector.load %arg2[%c0_170, %c0_171] : memref<1x512xf32, #tpu.memory_space<vmem>>, vector<1x512xf32>
    %325 = vector.broadcast %323 : vector<8x1xf32> to vector<8x512xf32>
    %326 = vector.broadcast %324 : vector<1x512xf32> to vector<8x512xf32>
    %327 = arith.mulf %325, %326 : vector<8x512xf32>
    %c0_172 = arith.constant 0 : index
    %c0_173 = arith.constant 0 : index
    %328 = vector.load %arg3[%c0_172, %c0_173] : memref<1x512xf32, #tpu.memory_space<vmem>>, vector<1x512xf32>
    %329 = vector.broadcast %328 : vector<1x512xf32> to vector<8x512xf32>
    %330 = arith.addf %327, %329 : vector<8x512xf32>
    %c0_174 = arith.constant 0 : index
    %c0_175 = arith.constant 0 : index
    %331 = vector.load %arg14[%c0_174, %c0_175] : memref<8x256xf32, #tpu.memory_space<vmem>>, vector<8x128xf32>
    %c0_176 = arith.constant 0 : index
    %c0_177 = arith.constant 0 : index
    %332 = vector.load %arg4[%c0_176, %c0_177] : memref<128x512xf32, #tpu.memory_space<vmem>>, vector<128x512xf32>
    %cst_178 = arith.constant dense<0.000000e+00> : vector<8x512xf32>
    %333 = tpu.matmul %331, %332, %cst_178 {dimension_numbers = #tpu.dot_dimension_numbers<[1], [0], [0], [1], [0, 0, 1, 1], [], []>} : vector<8x128xf32>, vector<128x512xf32>, vector<8x512xf32> -> vector<8x512xf32>
    %334 = arith.addf %330, %333 : vector<8x512xf32>
    %c0_179 = arith.constant 0 : index
    %c0_180 = arith.constant 0 : index
    %335 = vector.load %arg15[%c0_179, %c0_180] : memref<8x128xf32, #tpu.memory_space<vmem>>, vector<8x128xf32>
    %336 = vector.extract_strided_slice %334 {offsets = [0, 0], sizes = [8, 384], strides = [1, 1]} : vector<8x512xf32> to vector<8x384xf32>
    %337 = arith.negf %336 : vector<8x384xf32>
    %338 = math.exp %337 : vector<8x384xf32>
    %cst_181 = arith.constant 1.000000e+00 : f32
    %339 = vector.broadcast %cst_181 : f32 to vector<8x384xf32>
    %340 = arith.addf %339, %338 : vector<8x384xf32>
    %341 = arith.divf %339, %340 : vector<8x384xf32>
    %342 = vector.extract_strided_slice %334 {offsets = [0, 384], sizes = [8, 128], strides = [1, 1]} : vector<8x512xf32> to vector<8x128xf32>
    %343 = math.tanh %342 : vector<8x128xf32>
    %344 = vector.extract_strided_slice %341 {offsets = [0, 0], sizes = [8, 128], strides = [1, 1]} : vector<8x384xf32> to vector<8x128xf32>
    %345 = vector.extract_strided_slice %341 {offsets = [0, 128], sizes = [8, 128], strides = [1, 1]} : vector<8x384xf32> to vector<8x128xf32>
    %346 = vector.extract_strided_slice %341 {offsets = [0, 256], sizes = [8, 128], strides = [1, 1]} : vector<8x384xf32> to vector<8x128xf32>
    %347 = arith.mulf %345, %335 : vector<8x128xf32>
    %348 = arith.mulf %344, %343 : vector<8x128xf32>
    %349 = arith.addf %347, %348 : vector<8x128xf32>
    %350 = math.tanh %349 : vector<8x128xf32>
    %351 = arith.mulf %346, %350 : vector<8x128xf32>
    %c0_182 = arith.constant 0 : index
    %c0_183 = arith.constant 0 : index
    %352 = vector.load %arg15[%c0_182, %c0_183] : memref<8x128xf32, #tpu.memory_space<vmem>>, vector<8x128xf32>
    tpu.vector_store %arg15[%c0_182, %c0_183], %349 {strides = array<i32>} : memref<8x128xf32, #tpu.memory_space<vmem>>, vector<8x128xf32>,
    %c0_184 = arith.constant 0 : index
    %c0_185 = arith.constant 0 : index
    %353 = vector.load %arg14[%c0_184, %c0_185] : memref<8x256xf32, #tpu.memory_space<vmem>>, vector<8x128xf32>
    tpu.vector_store %arg14[%c0_184, %c0_185], %351 {strides = array<i32>} : memref<8x256xf32, #tpu.memory_space<vmem>>, vector<8x128xf32>,
    %c0_186 = arith.constant 0 : index
    %c0_187 = arith.constant 0 : index
    %354 = vector.load %arg14[%c0_186, %c0_187] : memref<8x256xf32, #tpu.memory_space<vmem>>, vector<8x256xf32>
    %c0_188 = arith.constant 0 : index
    %c0_189 = arith.constant 0 : index
    %355 = vector.load %arg5[%c0_188, %c0_189] : memref<256x512xf32, #tpu.memory_space<vmem>>, vector<256x512xf32>
    %cst_190 = arith.constant dense<0.000000e+00> : vector<8x512xf32>
    %356 = tpu.matmul %354, %355, %cst_190 {dimension_numbers = #tpu.dot_dimension_numbers<[1], [0], [0], [1], [0, 0, 1, 1], [], []>} : vector<8x256xf32>, vector<256x512xf32>, vector<8x512xf32> -> vector<8x512xf32>
    %c0_191 = arith.constant 0 : index
    %c0_192 = arith.constant 0 : index
    %357 = vector.load %arg6[%c0_191, %c0_192] : memref<1x512xf32, #tpu.memory_space<vmem>>, vector<1x512xf32>
    %358 = vector.broadcast %357 : vector<1x512xf32> to vector<8x512xf32>
    %359 = arith.addf %356, %358 : vector<8x512xf32>
    %c0_193 = arith.constant 0 : index
    %c0_194 = arith.constant 0 : index
    %360 = vector.load %arg16[%c0_193, %c0_194] : memref<8x128xf32, #tpu.memory_space<vmem>>, vector<8x128xf32>
    %361 = vector.extract_strided_slice %359 {offsets = [0, 0], sizes = [8, 384], strides = [1, 1]} : vector<8x512xf32> to vector<8x384xf32>
    %362 = arith.negf %361 : vector<8x384xf32>
    %363 = math.exp %362 : vector<8x384xf32>
    %cst_195 = arith.constant 1.000000e+00 : f32
    %364 = vector.broadcast %cst_195 : f32 to vector<8x384xf32>
    %365 = arith.addf %364, %363 : vector<8x384xf32>
    %366 = arith.divf %364, %365 : vector<8x384xf32>
    %367 = vector.extract_strided_slice %359 {offsets = [0, 384], sizes = [8, 128], strides = [1, 1]} : vector<8x512xf32> to vector<8x128xf32>
    %368 = math.tanh %367 : vector<8x128xf32>
    %369 = vector.extract_strided_slice %366 {offsets = [0, 0], sizes = [8, 128], strides = [1, 1]} : vector<8x384xf32> to vector<8x128xf32>
    %370 = vector.extract_strided_slice %366 {offsets = [0, 128], sizes = [8, 128], strides = [1, 1]} : vector<8x384xf32> to vector<8x128xf32>
    %371 = vector.extract_strided_slice %366 {offsets = [0, 256], sizes = [8, 128], strides = [1, 1]} : vector<8x384xf32> to vector<8x128xf32>
    %372 = arith.mulf %370, %360 : vector<8x128xf32>
    %373 = arith.mulf %369, %368 : vector<8x128xf32>
    %374 = arith.addf %372, %373 : vector<8x128xf32>
    %375 = math.tanh %374 : vector<8x128xf32>
    %376 = arith.mulf %371, %375 : vector<8x128xf32>
    %c0_196 = arith.constant 0 : index
    %c0_197 = arith.constant 0 : index
    %377 = vector.load %arg16[%c0_196, %c0_197] : memref<8x128xf32, #tpu.memory_space<vmem>>, vector<8x128xf32>
    tpu.vector_store %arg16[%c0_196, %c0_197], %374 {strides = array<i32>} : memref<8x128xf32, #tpu.memory_space<vmem>>, vector<8x128xf32>,
    %c0_198 = arith.constant 0 : index
    %c128_199 = arith.constant 128 : index
    %378 = vector.load %arg14[%c0_198, %c128_199] : memref<8x256xf32, #tpu.memory_space<vmem>>, vector<8x128xf32>
    tpu.vector_store %arg14[%c0_198, %c128_199], %376 {strides = array<i32>} : memref<8x256xf32, #tpu.memory_space<vmem>>, vector<8x128xf32>,
    %c6_i32 = arith.constant 6 : i32
    %379 = tpu.iota {dimensions = array<i32: 1>} : vector<8x8xi32>
    %380 = vector.broadcast %c6_i32 : i32 to vector<8x8xi32>
    %381 = arith.cmpi eq, %379, %380 : vector<8x8xi32>
    %cst_200 = arith.constant 0.000000e+00 : f32
    %382 = vector.broadcast %cst_200 : f32 to vector<8x8xf32>
    %383 = arith.select %381, %6, %382 : vector<8x8xi1>, vector<8x8xf32>
    %cst_201 = arith.constant dense<0.000000e+00> : vector<8xf32>
    %384 = vector.multi_reduction <add>, %383, %cst_201 [1] : vector<8x8xf32> to vector<8xf32>
    %385 = vector.shape_cast %384 : vector<8xf32> to vector<8x1xf32>
    %c0_202 = arith.constant 0 : index
    %c0_203 = arith.constant 0 : index
    %386 = vector.load %arg2[%c0_202, %c0_203] : memref<1x512xf32, #tpu.memory_space<vmem>>, vector<1x512xf32>
    %387 = vector.broadcast %385 : vector<8x1xf32> to vector<8x512xf32>
    %388 = vector.broadcast %386 : vector<1x512xf32> to vector<8x512xf32>
    %389 = arith.mulf %387, %388 : vector<8x512xf32>
    %c0_204 = arith.constant 0 : index
    %c0_205 = arith.constant 0 : index
    %390 = vector.load %arg3[%c0_204, %c0_205] : memref<1x512xf32, #tpu.memory_space<vmem>>, vector<1x512xf32>
    %391 = vector.broadcast %390 : vector<1x512xf32> to vector<8x512xf32>
    %392 = arith.addf %389, %391 : vector<8x512xf32>
    %c0_206 = arith.constant 0 : index
    %c0_207 = arith.constant 0 : index
    %393 = vector.load %arg14[%c0_206, %c0_207] : memref<8x256xf32, #tpu.memory_space<vmem>>, vector<8x128xf32>
    %c0_208 = arith.constant 0 : index
    %c0_209 = arith.constant 0 : index
    %394 = vector.load %arg4[%c0_208, %c0_209] : memref<128x512xf32, #tpu.memory_space<vmem>>, vector<128x512xf32>
    %cst_210 = arith.constant dense<0.000000e+00> : vector<8x512xf32>
    %395 = tpu.matmul %393, %394, %cst_210 {dimension_numbers = #tpu.dot_dimension_numbers<[1], [0], [0], [1], [0, 0, 1, 1], [], []>} : vector<8x128xf32>, vector<128x512xf32>, vector<8x512xf32> -> vector<8x512xf32>
    %396 = arith.addf %392, %395 : vector<8x512xf32>
    %c0_211 = arith.constant 0 : index
    %c0_212 = arith.constant 0 : index
    %397 = vector.load %arg15[%c0_211, %c0_212] : memref<8x128xf32, #tpu.memory_space<vmem>>, vector<8x128xf32>
    %398 = vector.extract_strided_slice %396 {offsets = [0, 0], sizes = [8, 384], strides = [1, 1]} : vector<8x512xf32> to vector<8x384xf32>
    %399 = arith.negf %398 : vector<8x384xf32>
    %400 = math.exp %399 : vector<8x384xf32>
    %cst_213 = arith.constant 1.000000e+00 : f32
    %401 = vector.broadcast %cst_213 : f32 to vector<8x384xf32>
    %402 = arith.addf %401, %400 : vector<8x384xf32>
    %403 = arith.divf %401, %402 : vector<8x384xf32>
    %404 = vector.extract_strided_slice %396 {offsets = [0, 384], sizes = [8, 128], strides = [1, 1]} : vector<8x512xf32> to vector<8x128xf32>
    %405 = math.tanh %404 : vector<8x128xf32>
    %406 = vector.extract_strided_slice %403 {offsets = [0, 0], sizes = [8, 128], strides = [1, 1]} : vector<8x384xf32> to vector<8x128xf32>
    %407 = vector.extract_strided_slice %403 {offsets = [0, 128], sizes = [8, 128], strides = [1, 1]} : vector<8x384xf32> to vector<8x128xf32>
    %408 = vector.extract_strided_slice %403 {offsets = [0, 256], sizes = [8, 128], strides = [1, 1]} : vector<8x384xf32> to vector<8x128xf32>
    %409 = arith.mulf %407, %397 : vector<8x128xf32>
    %410 = arith.mulf %406, %405 : vector<8x128xf32>
    %411 = arith.addf %409, %410 : vector<8x128xf32>
    %412 = math.tanh %411 : vector<8x128xf32>
    %413 = arith.mulf %408, %412 : vector<8x128xf32>
    %c0_214 = arith.constant 0 : index
    %c0_215 = arith.constant 0 : index
    %414 = vector.load %arg15[%c0_214, %c0_215] : memref<8x128xf32, #tpu.memory_space<vmem>>, vector<8x128xf32>
    tpu.vector_store %arg15[%c0_214, %c0_215], %411 {strides = array<i32>} : memref<8x128xf32, #tpu.memory_space<vmem>>, vector<8x128xf32>,
    %c0_216 = arith.constant 0 : index
    %c0_217 = arith.constant 0 : index
    %415 = vector.load %arg14[%c0_216, %c0_217] : memref<8x256xf32, #tpu.memory_space<vmem>>, vector<8x128xf32>
    tpu.vector_store %arg14[%c0_216, %c0_217], %413 {strides = array<i32>} : memref<8x256xf32, #tpu.memory_space<vmem>>, vector<8x128xf32>,
    %c0_218 = arith.constant 0 : index
    %c0_219 = arith.constant 0 : index
    %416 = vector.load %arg14[%c0_218, %c0_219] : memref<8x256xf32, #tpu.memory_space<vmem>>, vector<8x256xf32>
    %c0_220 = arith.constant 0 : index
    %c0_221 = arith.constant 0 : index
    %417 = vector.load %arg5[%c0_220, %c0_221] : memref<256x512xf32, #tpu.memory_space<vmem>>, vector<256x512xf32>
    %cst_222 = arith.constant dense<0.000000e+00> : vector<8x512xf32>
    %418 = tpu.matmul %416, %417, %cst_222 {dimension_numbers = #tpu.dot_dimension_numbers<[1], [0], [0], [1], [0, 0, 1, 1], [], []>} : vector<8x256xf32>, vector<256x512xf32>, vector<8x512xf32> -> vector<8x512xf32>
    %c0_223 = arith.constant 0 : index
    %c0_224 = arith.constant 0 : index
    %419 = vector.load %arg6[%c0_223, %c0_224] : memref<1x512xf32, #tpu.memory_space<vmem>>, vector<1x512xf32>
    %420 = vector.broadcast %419 : vector<1x512xf32> to vector<8x512xf32>
    %421 = arith.addf %418, %420 : vector<8x512xf32>
    %c0_225 = arith.constant 0 : index
    %c0_226 = arith.constant 0 : index
    %422 = vector.load %arg16[%c0_225, %c0_226] : memref<8x128xf32, #tpu.memory_space<vmem>>, vector<8x128xf32>
    %423 = vector.extract_strided_slice %421 {offsets = [0, 0], sizes = [8, 384], strides = [1, 1]} : vector<8x512xf32> to vector<8x384xf32>
    %424 = arith.negf %423 : vector<8x384xf32>
    %425 = math.exp %424 : vector<8x384xf32>
    %cst_227 = arith.constant 1.000000e+00 : f32
    %426 = vector.broadcast %cst_227 : f32 to vector<8x384xf32>
    %427 = arith.addf %426, %425 : vector<8x384xf32>
    %428 = arith.divf %426, %427 : vector<8x384xf32>
    %429 = vector.extract_strided_slice %421 {offsets = [0, 384], sizes = [8, 128], strides = [1, 1]} : vector<8x512xf32> to vector<8x128xf32>
    %430 = math.tanh %429 : vector<8x128xf32>
    %431 = vector.extract_strided_slice %428 {offsets = [0, 0], sizes = [8, 128], strides = [1, 1]} : vector<8x384xf32> to vector<8x128xf32>
    %432 = vector.extract_strided_slice %428 {offsets = [0, 128], sizes = [8, 128], strides = [1, 1]} : vector<8x384xf32> to vector<8x128xf32>
    %433 = vector.extract_strided_slice %428 {offsets = [0, 256], sizes = [8, 128], strides = [1, 1]} : vector<8x384xf32> to vector<8x128xf32>
    %434 = arith.mulf %432, %422 : vector<8x128xf32>
    %435 = arith.mulf %431, %430 : vector<8x128xf32>
    %436 = arith.addf %434, %435 : vector<8x128xf32>
    %437 = math.tanh %436 : vector<8x128xf32>
    %438 = arith.mulf %433, %437 : vector<8x128xf32>
    %c0_228 = arith.constant 0 : index
    %c0_229 = arith.constant 0 : index
    %439 = vector.load %arg16[%c0_228, %c0_229] : memref<8x128xf32, #tpu.memory_space<vmem>>, vector<8x128xf32>
    tpu.vector_store %arg16[%c0_228, %c0_229], %436 {strides = array<i32>} : memref<8x128xf32, #tpu.memory_space<vmem>>, vector<8x128xf32>,
    %c0_230 = arith.constant 0 : index
    %c128_231 = arith.constant 128 : index
    %440 = vector.load %arg14[%c0_230, %c128_231] : memref<8x256xf32, #tpu.memory_space<vmem>>, vector<8x128xf32>
    tpu.vector_store %arg14[%c0_230, %c128_231], %438 {strides = array<i32>} : memref<8x256xf32, #tpu.memory_space<vmem>>, vector<8x128xf32>,
    %c7_i32 = arith.constant 7 : i32
    %441 = tpu.iota {dimensions = array<i32: 1>} : vector<8x8xi32>
    %442 = vector.broadcast %c7_i32 : i32 to vector<8x8xi32>
    %443 = arith.cmpi eq, %441, %442 : vector<8x8xi32>
    %cst_232 = arith.constant 0.000000e+00 : f32
    %444 = vector.broadcast %cst_232 : f32 to vector<8x8xf32>
    %445 = arith.select %443, %6, %444 : vector<8x8xi1>, vector<8x8xf32>
    %cst_233 = arith.constant dense<0.000000e+00> : vector<8xf32>
    %446 = vector.multi_reduction <add>, %445, %cst_233 [1] : vector<8x8xf32> to vector<8xf32>
    %447 = vector.shape_cast %446 : vector<8xf32> to vector<8x1xf32>
    %c0_234 = arith.constant 0 : index
    %c0_235 = arith.constant 0 : index
    %448 = vector.load %arg2[%c0_234, %c0_235] : memref<1x512xf32, #tpu.memory_space<vmem>>, vector<1x512xf32>
    %449 = vector.broadcast %447 : vector<8x1xf32> to vector<8x512xf32>
    %450 = vector.broadcast %448 : vector<1x512xf32> to vector<8x512xf32>
    %451 = arith.mulf %449, %450 : vector<8x512xf32>
    %c0_236 = arith.constant 0 : index
    %c0_237 = arith.constant 0 : index
    %452 = vector.load %arg3[%c0_236, %c0_237] : memref<1x512xf32, #tpu.memory_space<vmem>>, vector<1x512xf32>
    %453 = vector.broadcast %452 : vector<1x512xf32> to vector<8x512xf32>
    %454 = arith.addf %451, %453 : vector<8x512xf32>
    %c0_238 = arith.constant 0 : index
    %c0_239 = arith.constant 0 : index
    %455 = vector.load %arg14[%c0_238, %c0_239] : memref<8x256xf32, #tpu.memory_space<vmem>>, vector<8x128xf32>
    %c0_240 = arith.constant 0 : index
    %c0_241 = arith.constant 0 : index
    %456 = vector.load %arg4[%c0_240, %c0_241] : memref<128x512xf32, #tpu.memory_space<vmem>>, vector<128x512xf32>
    %cst_242 = arith.constant dense<0.000000e+00> : vector<8x512xf32>
    %457 = tpu.matmul %455, %456, %cst_242 {dimension_numbers = #tpu.dot_dimension_numbers<[1], [0], [0], [1], [0, 0, 1, 1], [], []>} : vector<8x128xf32>, vector<128x512xf32>, vector<8x512xf32> -> vector<8x512xf32>
    %458 = arith.addf %454, %457 : vector<8x512xf32>
    %c0_243 = arith.constant 0 : index
    %c0_244 = arith.constant 0 : index
    %459 = vector.load %arg15[%c0_243, %c0_244] : memref<8x128xf32, #tpu.memory_space<vmem>>, vector<8x128xf32>
    %460 = vector.extract_strided_slice %458 {offsets = [0, 0], sizes = [8, 384], strides = [1, 1]} : vector<8x512xf32> to vector<8x384xf32>
    %461 = arith.negf %460 : vector<8x384xf32>
    %462 = math.exp %461 : vector<8x384xf32>
    %cst_245 = arith.constant 1.000000e+00 : f32
    %463 = vector.broadcast %cst_245 : f32 to vector<8x384xf32>
    %464 = arith.addf %463, %462 : vector<8x384xf32>
    %465 = arith.divf %463, %464 : vector<8x384xf32>
    %466 = vector.extract_strided_slice %458 {offsets = [0, 384], sizes = [8, 128], strides = [1, 1]} : vector<8x512xf32> to vector<8x128xf32>
    %467 = math.tanh %466 : vector<8x128xf32>
    %468 = vector.extract_strided_slice %465 {offsets = [0, 0], sizes = [8, 128], strides = [1, 1]} : vector<8x384xf32> to vector<8x128xf32>
    %469 = vector.extract_strided_slice %465 {offsets = [0, 128], sizes = [8, 128], strides = [1, 1]} : vector<8x384xf32> to vector<8x128xf32>
    %470 = vector.extract_strided_slice %465 {offsets = [0, 256], sizes = [8, 128], strides = [1, 1]} : vector<8x384xf32> to vector<8x128xf32>
    %471 = arith.mulf %469, %459 : vector<8x128xf32>
    %472 = arith.mulf %468, %467 : vector<8x128xf32>
    %473 = arith.addf %471, %472 : vector<8x128xf32>
    %474 = math.tanh %473 : vector<8x128xf32>
    %475 = arith.mulf %470, %474 : vector<8x128xf32>
    %c0_246 = arith.constant 0 : index
    %c0_247 = arith.constant 0 : index
    %476 = vector.load %arg15[%c0_246, %c0_247] : memref<8x128xf32, #tpu.memory_space<vmem>>, vector<8x128xf32>
    tpu.vector_store %arg15[%c0_246, %c0_247], %473 {strides = array<i32>} : memref<8x128xf32, #tpu.memory_space<vmem>>, vector<8x128xf32>,
    %c0_248 = arith.constant 0 : index
    %c0_249 = arith.constant 0 : index
    %477 = vector.load %arg14[%c0_248, %c0_249] : memref<8x256xf32, #tpu.memory_space<vmem>>, vector<8x128xf32>
    tpu.vector_store %arg14[%c0_248, %c0_249], %475 {strides = array<i32>} : memref<8x256xf32, #tpu.memory_space<vmem>>, vector<8x128xf32>,
    %c0_250 = arith.constant 0 : index
    %c0_251 = arith.constant 0 : index
    %478 = vector.load %arg14[%c0_250, %c0_251] : memref<8x256xf32, #tpu.memory_space<vmem>>, vector<8x256xf32>
    %c0_252 = arith.constant 0 : index
    %c0_253 = arith.constant 0 : index
    %479 = vector.load %arg5[%c0_252, %c0_253] : memref<256x512xf32, #tpu.memory_space<vmem>>, vector<256x512xf32>
    %cst_254 = arith.constant dense<0.000000e+00> : vector<8x512xf32>
    %480 = tpu.matmul %478, %479, %cst_254 {dimension_numbers = #tpu.dot_dimension_numbers<[1], [0], [0], [1], [0, 0, 1, 1], [], []>} : vector<8x256xf32>, vector<256x512xf32>, vector<8x512xf32> -> vector<8x512xf32>
    %c0_255 = arith.constant 0 : index
    %c0_256 = arith.constant 0 : index
    %481 = vector.load %arg6[%c0_255, %c0_256] : memref<1x512xf32, #tpu.memory_space<vmem>>, vector<1x512xf32>
    %482 = vector.broadcast %481 : vector<1x512xf32> to vector<8x512xf32>
    %483 = arith.addf %480, %482 : vector<8x512xf32>
    %c0_257 = arith.constant 0 : index
    %c0_258 = arith.constant 0 : index
    %484 = vector.load %arg16[%c0_257, %c0_258] : memref<8x128xf32, #tpu.memory_space<vmem>>, vector<8x128xf32>
    %485 = vector.extract_strided_slice %483 {offsets = [0, 0], sizes = [8, 384], strides = [1, 1]} : vector<8x512xf32> to vector<8x384xf32>
    %486 = arith.negf %485 : vector<8x384xf32>
    %487 = math.exp %486 : vector<8x384xf32>
    %cst_259 = arith.constant 1.000000e+00 : f32
    %488 = vector.broadcast %cst_259 : f32 to vector<8x384xf32>
    %489 = arith.addf %488, %487 : vector<8x384xf32>
    %490 = arith.divf %488, %489 : vector<8x384xf32>
    %491 = vector.extract_strided_slice %483 {offsets = [0, 384], sizes = [8, 128], strides = [1, 1]} : vector<8x512xf32> to vector<8x128xf32>
    %492 = math.tanh %491 : vector<8x128xf32>
    %493 = vector.extract_strided_slice %490 {offsets = [0, 0], sizes = [8, 128], strides = [1, 1]} : vector<8x384xf32> to vector<8x128xf32>
    %494 = vector.extract_strided_slice %490 {offsets = [0, 128], sizes = [8, 128], strides = [1, 1]} : vector<8x384xf32> to vector<8x128xf32>
    %495 = vector.extract_strided_slice %490 {offsets = [0, 256], sizes = [8, 128], strides = [1, 1]} : vector<8x384xf32> to vector<8x128xf32>
    %496 = arith.mulf %494, %484 : vector<8x128xf32>
    %497 = arith.mulf %493, %492 : vector<8x128xf32>
    %498 = arith.addf %496, %497 : vector<8x128xf32>
    %499 = math.tanh %498 : vector<8x128xf32>
    %500 = arith.mulf %495, %499 : vector<8x128xf32>
    %c0_260 = arith.constant 0 : index
    %c0_261 = arith.constant 0 : index
    %501 = vector.load %arg16[%c0_260, %c0_261] : memref<8x128xf32, #tpu.memory_space<vmem>>, vector<8x128xf32>
    tpu.vector_store %arg16[%c0_260, %c0_261], %498 {strides = array<i32>} : memref<8x128xf32, #tpu.memory_space<vmem>>, vector<8x128xf32>,
    %c0_262 = arith.constant 0 : index
    %c128_263 = arith.constant 128 : index
    %502 = vector.load %arg14[%c0_262, %c128_263] : memref<8x256xf32, #tpu.memory_space<vmem>>, vector<8x128xf32>
    tpu.vector_store %arg14[%c0_262, %c128_263], %500 {strides = array<i32>} : memref<8x256xf32, #tpu.memory_space<vmem>>, vector<8x128xf32>,
    %c8_i32 = arith.constant 8 : i32
    %c0_264 = arith.constant 0 : index
    %c128_265 = arith.constant 128 : index
    %503 = vector.load %arg14[%c0_264, %c128_265] : memref<8x256xf32, #tpu.memory_space<vmem>>, vector<8x128xf32>
    %c0_266 = arith.constant 0 : index
    %c0_267 = arith.constant 0 : index
    %504 = vector.load %arg7[%c0_266, %c0_267] : memref<128x64xf32, #tpu.memory_space<vmem>>, vector<128x64xf32>
    %cst_268 = arith.constant dense<0.000000e+00> : vector<8x64xf32>
    %505 = tpu.matmul %503, %504, %cst_268 {dimension_numbers = #tpu.dot_dimension_numbers<[1], [0], [0], [1], [0, 0, 1, 1], [], []>} : vector<8x128xf32>, vector<128x64xf32>, vector<8x64xf32> -> vector<8x64xf32>
    %c0_269 = arith.constant 0 : index
    %c0_270 = arith.constant 0 : index
    %506 = vector.load %arg8[%c0_269, %c0_270] : memref<1x64xf32, #tpu.memory_space<vmem>>, vector<1x64xf32>
    %507 = vector.broadcast %506 : vector<1x64xf32> to vector<8x64xf32>
    %508 = arith.addf %505, %507 : vector<8x64xf32>
    %cst_271 = arith.constant 0.000000e+00 : f32
    %509 = vector.broadcast %cst_271 : f32 to vector<8x64xf32>
    %510 = arith.cmpf ogt, %508, %509 : vector<8x64xf32>
    %cst_272 = arith.constant 1.000000e-01 : f32
    %511 = vector.broadcast %cst_272 : f32 to vector<8x64xf32>
    %512 = arith.mulf %511, %508 : vector<8x64xf32>
    %513 = arith.select %510, %508, %512 : vector<8x64xi1>, vector<8x64xf32>
    %c0_273 = arith.constant 0 : index
    %c0_274 = arith.constant 0 : index
    %514 = vector.load %arg9[%c0_273, %c0_274] : memref<64x32xf32, #tpu.memory_space<vmem>>, vector<64x32xf32>
    %cst_275 = arith.constant dense<0.000000e+00> : vector<8x32xf32>
    %515 = tpu.matmul %513, %514, %cst_275 {dimension_numbers = #tpu.dot_dimension_numbers<[1], [0], [0], [1], [0, 0, 1, 1], [], []>} : vector<8x64xf32>, vector<64x32xf32>, vector<8x32xf32> -> vector<8x32xf32>
    %c0_276 = arith.constant 0 : index
    %c0_277 = arith.constant 0 : index
    %516 = vector.load %arg10[%c0_276, %c0_277] : memref<1x32xf32, #tpu.memory_space<vmem>>, vector<1x32xf32>
    %517 = vector.broadcast %516 : vector<1x32xf32> to vector<8x32xf32>
    %518 = arith.addf %515, %517 : vector<8x32xf32>
    %cst_278 = arith.constant 0.000000e+00 : f32
    %519 = vector.broadcast %cst_278 : f32 to vector<8x32xf32>
    %520 = arith.cmpf ogt, %518, %519 : vector<8x32xf32>
    %cst_279 = arith.constant 1.000000e-01 : f32
    %521 = vector.broadcast %cst_279 : f32 to vector<8x32xf32>
    %522 = arith.mulf %521, %518 : vector<8x32xf32>
    %523 = arith.select %520, %518, %522 : vector<8x32xi1>, vector<8x32xf32>
    %c0_280 = arith.constant 0 : index
    %c0_281 = arith.constant 0 : index
    %524 = vector.load %arg11[%c0_280, %c0_281] : memref<32x1xf32, #tpu.memory_space<vmem>>, vector<32x1xf32>
    %cst_282 = arith.constant dense<0.000000e+00> : vector<8x1xf32>
    %525 = tpu.matmul %523, %524, %cst_282 {dimension_numbers = #tpu.dot_dimension_numbers<[1], [0], [0], [1], [0, 0, 1, 1], [], []>} : vector<8x32xf32>, vector<32x1xf32>, vector<8x1xf32> -> vector<8x1xf32>
    %c0_283 = arith.constant 0 : index
    %c0_284 = arith.constant 0 : index
    %526 = vector.load %arg12[%c0_283, %c0_284] : memref<1x1xf32, #tpu.memory_space<vmem>>, vector<1x1xf32>
    %527 = vector.broadcast %526 : vector<1x1xf32> to vector<8x1xf32>
    %528 = arith.addf %525, %527 : vector<8x1xf32>
    %c0_285 = arith.constant 0 : index
    %c0_286 = arith.constant 0 : index
    %529 = vector.load %arg13[%c0_285, %c0_286] : memref<8x1xf32, #tpu.memory_space<vmem>>, vector<8x1xf32>
    tpu.vector_store %arg13[%c0_285, %c0_286], %528 {strides = array<i32>} : memref<8x1xf32, #tpu.memory_space<vmem>>, vector<8x1xf32>,
    return
  }
  func.func @transform_0(%arg0: i32) -> (i32, i32) {
    %c0_i32 = arith.constant 0 : i32
    %c0_i32_0 = arith.constant 0 : i32
    return %arg0, %c0_i32 : i32, i32
  }
  func.func @transform_1(%arg0: i32) -> (i32, i32) {
    %c0_i32 = arith.constant 0 : i32
    %c0_i32_0 = arith.constant 0 : i32
    %c0_i32_1 = arith.constant 0 : i32
    return %c0_i32, %c0_i32_0 : i32, i32
  }
  func.func @transform_2(%arg0: i32) -> (i32, i32) {
    %c0_i32 = arith.constant 0 : i32
    %c0_i32_0 = arith.constant 0 : i32
    %c0_i32_1 = arith.constant 0 : i32
    return %c0_i32, %c0_i32_0 : i32, i32
  }
  func.func @transform_3(%arg0: i32) -> (i32, i32) {
    %c0_i32 = arith.constant 0 : i32
    %c0_i32_0 = arith.constant 0 : i32
    %c0_i32_1 = arith.constant 0 : i32
    return %c0_i32, %c0_i32_0 : i32, i32
  }
  func.func @transform_4(%arg0: i32) -> (i32, i32) {
    %c0_i32 = arith.constant 0 : i32
    %c0_i32_0 = arith.constant 0 : i32
    %c0_i32_1 = arith.constant 0 : i32
    return %c0_i32, %c0_i32_0 : i32, i32
  }
  func.func @transform_5(%arg0: i32) -> (i32, i32) {
    %c0_i32 = arith.constant 0 : i32
    %c0_i32_0 = arith.constant 0 : i32
    %c0_i32_1 = arith.constant 0 : i32
    return %c0_i32, %c0_i32_0 : i32, i32
  }
  func.func @transform_6(%arg0: i32) -> (i32, i32) {
    %c0_i32 = arith.constant 0 : i32
    %c0_i32_0 = arith.constant 0 : i32
    %c0_i32_1 = arith.constant 0 : i32
    return %c0_i32, %c0_i32_0 : i32, i32
  }
  func.func @transform_7(%arg0: i32) -> (i32, i32) {
    %c0_i32 = arith.constant 0 : i32
    %c0_i32_0 = arith.constant 0 : i32
    %c0_i32_1 = arith.constant 0 : i32
    return %c0_i32, %c0_i32_0 : i32, i32
  }
  func.func @transform_8(%arg0: i32) -> (i32, i32) {
    %c0_i32 = arith.constant 0 : i32
    %c0_i32_0 = arith.constant 0 : i32
    %c0_i32_1 = arith.constant 0 : i32
    return %c0_i32, %c0_i32_0 : i32, i32
  }
  func.func @transform_9(%arg0: i32) -> (i32, i32) {
    %c0_i32 = arith.constant 0 : i32
    %c0_i32_0 = arith.constant 0 : i32
    %c0_i32_1 = arith.constant 0 : i32
    return %c0_i32, %c0_i32_0 : i32, i32
  }
  func.func @transform_10(%arg0: i32) -> (i32, i32) {
    %c0_i32 = arith.constant 0 : i32
    %c0_i32_0 = arith.constant 0 : i32
    %c0_i32_1 = arith.constant 0 : i32
    return %c0_i32, %c0_i32_0 : i32, i32
  }
  func.func @transform_11(%arg0: i32) -> (i32, i32) {
    %c0_i32 = arith.constant 0 : i32
    %c0_i32_0 = arith.constant 0 : i32
    %c0_i32_1 = arith.constant 0 : i32
    return %c0_i32, %c0_i32_0 : i32, i32
  }
  func.func @transform_12(%arg0: i32) -> (i32, i32) {
    %c0_i32 = arith.constant 0 : i32
    %c0_i32_0 = arith.constant 0 : i32
    return %arg0, %c0_i32 : i32, i32
  }
}

</mosaic_0001>

<llo_original>
// kernel: tpu_custom_call.1
$region0: #{tpu_custom_call.1}
  #allocation0 [shape = 'u32[]', space=smem, size = 0x4, offset = 0x4, fixed_abs, tag = 'smem constant byte address 0x4 - core index']
  #allocation1 [shape = 'u32[144,128]{1,0:T(1,128)}', space=vmem, size = 0x12000, scoped, tag = 'internal scratch']
  #allocation2 [shape = 'f32[8,256]{1,0:T(8,128)}', space=vmem, size = 0x2000, scoped, tag = 'scratch operand']
  #allocation3 [shape = 'f32[8,128]{1,0:T(8,128)}', space=vmem, size = 0x1000, scoped, tag = 'scratch operand']
  #allocation4 [shape = 'f32[8,128]{1,0:T(8,128)}', space=vmem, size = 0x1000, scoped, tag = 'scratch operand']
  #allocation5 [shape = 'f32[1,1]{1,0:T(1,128)S(1)}', space=vmem, size = 0x200, scoped, tag = 'scoped memory for tpu_custom_call.1']
  %s0 = inlined_call_operand.vmem [shape: f32[8,8], index: 0, kind: input, shape index: {}]
  %s1 = inlined_call_operand.vmem [shape: f32[1,512], index: 1, kind: input, shape index: {}]
  %s2 = inlined_call_operand.vmem [shape: f32[1,512], index: 2, kind: input, shape index: {}]
  %s3 = inlined_call_operand.hbm [shape: f32[128,512], index: 3, kind: input, shape index: {}]
  %s4 = inlined_call_operand.hbm [shape: f32[256,512], index: 4, kind: input, shape index: {}]
  %s5 = inlined_call_operand.vmem [shape: f32[1,512], index: 5, kind: input, shape index: {}]
  %s6 = inlined_call_operand.vmem [shape: f32[128,64], index: 6, kind: input, shape index: {}]
  %s7 = inlined_call_operand.vmem [shape: f32[1,64], index: 7, kind: input, shape index: {}]
  %s8 = inlined_call_operand.vmem [shape: f32[64,32], index: 8, kind: input, shape index: {}]
  %s9 = inlined_call_operand.vmem [shape: f32[1,32], index: 9, kind: input, shape index: {}]
  %s10 = inlined_call_operand.vmem [shape: f32[32,1], index: 10, kind: input, shape index: {}]
  %s11 = inlined_call_operand.<no memory space> [shape: f32[1,1], index: 11, kind: input, shape index: {}]
  %s12 = inlined_call_operand.vmem [shape: f32[8,1], index: 12, kind: output, shape index: {}]
  %s13 = sld [smem:[#allocation0]]
  $region66: #{tpu_custom_call.1} parent=0
    _
  %s15 = ssub.s32 1, %s13
  %s16 = scalar_select 0, %s15, %s13
  %v17 = vstv %s11
  %18 = vst [vmem:[#allocation5] sm:$0x1] %v17
  $region1: #{tpu_custom_call.1} parent=0
    #allocation6 [shape = 'u8[262144]{0}', space=vmem, size = 0x40000, scoped, tag = 'input window, operand 3, single buffered']
    #allocation7 [shape = 's32[1]{0}', space=sflag, size = 0x4, scoped, tag = 'scoped memory for tpu_custom_call.1']
    #allocation8 [shape = 'u8[524288]{0}', space=vmem, size = 0x80000, scoped, tag = 'input window, operand 4, single buffered']
    #allocation9 [shape = 's32[1]{0}', space=sflag, size = 0x4, scoped, tag = 'scoped memory for tpu_custom_call.1']
    %19 = vsyncpa [#allocation7], 0
    %20 = vsyncpa [#allocation9], 0
    // Predicated region
    $region2: #{tpu_custom_call.1} parent=1 // pred_check
      _
    $region3: #{tpu_custom_call.1} parent=1 // pred_check_branch
      %22 = sbr.rel (0) target = $region5
    $region4: #{tpu_custom_call.1} parent=1 // pred_region
      _
    $region5: #{tpu_custom_call.1} parent=1 // pred_fallthru
      _
    // Predicated region
    $region6: #{tpu_custom_call.1} parent=1 // pred_check
      _
    $region7: #{tpu_custom_call.1} parent=1 // pred_check_branch
      %24 = sbr.rel (0) target = $region9
    $region8: #{tpu_custom_call.1} parent=1 // pred_region
      _
    $region9: #{tpu_custom_call.1} parent=1 // pred_fallthru
      _
    // Predicated region
    $region10: #{tpu_custom_call.1} parent=1 // pred_check
      _
    $region11: #{tpu_custom_call.1} parent=1 // pred_check_branch
      %26 = sbr.rel (0) target = $region13
    $region12: #{tpu_custom_call.1} parent=1 // pred_region
      _
    $region13: #{tpu_custom_call.1} parent=1 // pred_fallthru
      _
    // Predicated region
    $region14: #{tpu_custom_call.1} parent=1 // pred_check
      _
    $region15: #{tpu_custom_call.1} parent=1 // pred_check_branch
      %28 = sbr.rel (0) target = $region17
    $region16: #{tpu_custom_call.1} parent=1 // pred_region
      %s30 = ssub.s32 8192, 8192
      %31 = vsyncadd [#allocation7], %s30
      %s32 = sshll.u32 [#allocation6], 4
      %s33 = int_to_ptr.vmem [resolvable:$true] %s32
      %38 = dma.hbm_to_vmem [thread:$0]  %s3, 8192, %s33, [#allocation7], 512, 512, 32
    $region17: #{tpu_custom_call.1} parent=1 // pred_fallthru
      _
    // Predicated region
    $region18: #{tpu_custom_call.1} parent=1 // pred_check
      _
    $region19: #{tpu_custom_call.1} parent=1 // pred_check_branch
      %40 = sbr.rel (0) target = $region21
    $region20: #{tpu_custom_call.1} parent=1 // pred_region
      %s42 = ssub.s32 16384, 16384
      %43 = vsyncadd [#allocation9], %s42
      %s44 = sshll.u32 [#allocation8], 4
      %s45 = int_to_ptr.vmem [resolvable:$true] %s44
      %50 = dma.hbm_to_vmem [thread:$0]  %s4, 16384, %s45, [#allocation9], 512, 512, 32
    $region21: #{tpu_custom_call.1} parent=1 // pred_fallthru
      _
    // Predicated region
    $region22: #{tpu_custom_call.1} parent=1 // pred_check
      _
    $region23: #{tpu_custom_call.1} parent=1 // pred_check_branch
      %52 = sbr.rel (0) target = $region25
    $region24: #{tpu_custom_call.1} parent=1 // pred_region
      _
    $region25: #{tpu_custom_call.1} parent=1 // pred_fallthru
      _
    // Predicated region
    $region26: #{tpu_custom_call.1} parent=1 // pred_check
      _
    $region27: #{tpu_custom_call.1} parent=1 // pred_check_branch
      %54 = sbr.rel (0) target = $region29
    $region28: #{tpu_custom_call.1} parent=1 // pred_region
      _
    $region29: #{tpu_custom_call.1} parent=1 // pred_fallthru
      _
    // Predicated region
    $region30: #{tpu_custom_call.1} parent=1 // pred_check
      _
    $region31: #{tpu_custom_call.1} parent=1 // pred_check_branch
      %56 = sbr.rel (0) target = $region33
    $region32: #{tpu_custom_call.1} parent=1 // pred_region
      _
    $region33: #{tpu_custom_call.1} parent=1 // pred_fallthru
      _
    // Predicated region
    $region34: #{tpu_custom_call.1} parent=1 // pred_check
      _
    $region35: #{tpu_custom_call.1} parent=1 // pred_check_branch
      %58 = sbr.rel (0) target = $region37
    $region36: #{tpu_custom_call.1} parent=1 // pred_region
      _
    $region37: #{tpu_custom_call.1} parent=1 // pred_fallthru
      _
    // Predicated region
    $region38: #{tpu_custom_call.1} parent=1 // pred_check
      _
    $region39: #{tpu_custom_call.1} parent=1 // pred_check_branch
      %60 = sbr.rel (0) target = $region41
    $region40: #{tpu_custom_call.1} parent=1 // pred_region
      _
    $region41: #{tpu_custom_call.1} parent=1 // pred_fallthru
      _
    // Predicated region
    $region42: #{tpu_custom_call.1} parent=1 // pred_check
      _
    $region43: #{tpu_custom_call.1} parent=1 // pred_check_branch
      %62 = sbr.rel (0) target = $region45
    $region44: #{tpu_custom_call.1} parent=1 // pred_region
      _
    $region45: #{tpu_custom_call.1} parent=1 // pred_fallthru
      _
    // Predicated region
    $region46: #{tpu_custom_call.1} parent=1 // pred_check
      _
    $region47: #{tpu_custom_call.1} parent=1 // pred_check_branch
      %64 = sbr.rel (0) target = $region49
    $region48: #{tpu_custom_call.1} parent=1 // pred_region
      _
    $region49: #{tpu_custom_call.1} parent=1 // pred_fallthru
      _
    // Predicated region
    $region50: #{tpu_custom_call.1} parent=1 // pred_check
      _
    $region51: #{tpu_custom_call.1} parent=1 // pred_check_branch
      %66 = sbr.rel (0) target = $region53
    $region52: #{tpu_custom_call.1} parent=1 // pred_region
      %67 = dma.done [#allocation7], 8192
    $region53: #{tpu_custom_call.1} parent=1 // pred_fallthru
      _
    // Predicated region
    $region54: #{tpu_custom_call.1} parent=1 // pred_check
      _
    $region55: #{tpu_custom_call.1} parent=1 // pred_check_branch
      %69 = sbr.rel (0) target = $region57
    $region56: #{tpu_custom_call.1} parent=1 // pred_region
      %70 = dma.done [#allocation9], 16384
    $region57: #{tpu_custom_call.1} parent=1 // pred_fallthru
      _
    %71 = vst [vmem:[#allocation2] sm:$0xff] 0.0
    %72 = vst [vmem:[#allocation2 + $0x8] sm:$0xff] 0.0
    %73 = vst [vmem:[#allocation3] sm:$0xff] 0.0
    %74 = vst [vmem:[#allocation4] sm:$0xff] 0.0
    %v75 = vld [vmem:[%s0] sm:$0xff]
    %v76 = vlaneseq
    %v77 = vand.u32 %v76, 127
    %vm78 = vcmp.eq.s32.totalorder %v77, 0
    %v79 = vsel %vm78, %v75, 0.0
    %vm80 = vcmask 64512
    %v81 = vsel %vm80, %v79, 0.0
    %82 = vadd.xlane.f32.xlu0 %v81
    %v83 = vpop.xlane.xlu0 %82
    %v84 = vld [vmem:[%s1] sm:$0xf]
    %v86 = vlaneseq
    %v87 = vshrl.u32 %v86, 7
    %v88 = vsub.s32 0, %v87
    %v89 = vrot.slane %v84, %v88
    %v90 = vlaneseq
    %v91 = vshrl.u32 %v90, 7
    %v92 = vsub.s32 1, %v91
    %v93 = vrot.slane %v84, %v92
    %v94 = vlaneseq
    %v95 = vshrl.u32 %v94, 7
    %v96 = vsub.s32 2, %v95
    %v97 = vrot.slane %v84, %v96
    %v98 = vlaneseq
    %v99 = vshrl.u32 %v98, 7
    %v100 = vsub.s32 3, %v99
    %v101 = vrot.slane %v84, %v100
    %v106 = vmul.f32 %v83, %v89
    %v107 = vmul.f32 %v83, %v93
    %v108 = vmul.f32 %v83, %v97
    %v109 = vmul.f32 %v83, %v101
    %v110 = vld [vmem:[%s2] sm:$0xf]
    %v112 = vlaneseq
    %v113 = vshrl.u32 %v112, 7
    %v114 = vsub.s32 0, %v113
    %v115 = vrot.slane %v110, %v114
    %v116 = vlaneseq
    %v117 = vshrl.u32 %v116, 7
    %v118 = vsub.s32 1, %v117
    %v119 = vrot.slane %v110, %v118
    %v120 = vlaneseq
    %v121 = vshrl.u32 %v120, 7
    %v122 = vsub.s32 2, %v121
    %v123 = vrot.slane %v110, %v122
    %v124 = vlaneseq
    %v125 = vshrl.u32 %v124, 7
    %v126 = vsub.s32 3, %v125
    %v127 = vrot.slane %v110, %v126
    %v132 = vadd.f32 %v106, %v115
    %v133 = vadd.f32 %v107, %v119
    %v134 = vadd.f32 %v108, %v123
    %v135 = vadd.f32 %v109, %v127
    %v136 = vld [vmem:[#allocation2] sm:$0xff]
    %v137 = vld [vmem:[#allocation6] sm:$0xff]
    %v138 = vld [vmem:[#allocation6 + $0x8] sm:$0xff]
    %v139 = vld [vmem:[#allocation6 + $0x10] sm:$0xff]
    %v140 = vld [vmem:[#allocation6 + $0x18] sm:$0xff]
    %v141 = vld [vmem:[#allocation6 + $0x20] sm:$0xff]
    %v142 = vld [vmem:[#allocation6 + $0x28] sm:$0xff]
    %v143 = vld [vmem:[#allocation6 + $0x30] sm:$0xff]
    %v144 = vld [vmem:[#allocation6 + $0x38] sm:$0xff]
    %v145 = vld [vmem:[#allocation6 + $0x40] sm:$0xff]
    %v146 = vld [vmem:[#allocation6 + $0x48] sm:$0xff]
    %v147 = vld [vmem:[#allocation6 + $0x50] sm:$0xff]
    %v148 = vld [vmem:[#allocation6 + $0x58] sm:$0xff]
    %v149 = vld [vmem:[#allocation6 + $0x60] sm:$0xff]
    %v150 = vld [vmem:[#allocation6 + $0x68] sm:$0xff]
    %v151 = vld [vmem:[#allocation6 + $0x70] sm:$0xff]
    %v152 = vld [vmem:[#allocation6 + $0x78] sm:$0xff]
    %v153 = vld [vmem:[#allocation6 + $0x80] sm:$0xff]
    %v154 = vld [vmem:[#allocation6 + $0x88] sm:$0xff]
    %v155 = vld [vmem:[#allocation6 + $0x90] sm:$0xff]
    %v156 = vld [vmem:[#allocation6 + $0x98] sm:$0xff]
    %v157 = vld [vmem:[#allocation6 + $0xa0] sm:$0xff]
    %v158 = vld [vmem:[#allocation6 + $0xa8] sm:$0xff]
    %v159 = vld [vmem:[#allocation6 + $0xb0] sm:$0xff]
    %v160 = vld [vmem:[#allocation6 + $0xb8] sm:$0xff]
    %v161 = vld [vmem:[#allocation6 + $0xc0] sm:$0xff]
    %v162 = vld [vmem:[#allocation6 + $0xc8] sm:$0xff]
    %v163 = vld [vmem:[#allocation6 + $0xd0] sm:$0xff]
    %v164 = vld [vmem:[#allocation6 + $0xd8] sm:$0xff]
    %v165 = vld [vmem:[#allocation6 + $0xe0] sm:$0xff]
    %v166 = vld [vmem:[#allocation6 + $0xe8] sm:$0xff]
    %v167 = vld [vmem:[#allocation6 + $0xf0] sm:$0xff]
    %v168 = vld [vmem:[#allocation6 + $0xf8] sm:$0xff]
    %v169 = vld [vmem:[#allocation6 + $0x100] sm:$0xff]
    %v170 = vld [vmem:[#allocation6 + $0x108] sm:$0xff]
    %v171 = vld [vmem:[#allocation6 + $0x110] sm:$0xff]
    %v172 = vld [vmem:[#allocation6 + $0x118] sm:$0xff]
    %v173 = vld [vmem:[#allocation6 + $0x120] sm:$0xff]
    %v174 = vld [vmem:[#allocation6 + $0x128] sm:$0xff]
    %v175 = vld [vmem:[#allocation6 + $0x130] sm:$0xff]
    %v176 = vld [vmem:[#allocation6 + $0x138] sm:$0xff]
    %v177 = vld [vmem:[#allocation6 + $0x140] sm:$0xff]
    %v178 = vld [vmem:[#allocation6 + $0x148] sm:$0xff]
    %v179 = vld [vmem:[#allocation6 + $0x150] sm:$0xff]
    %v180 = vld [vmem:[#allocation6 + $0x158] sm:$0xff]
    %v181 = vld [vmem:[#allocation6 + $0x160] sm:$0xff]
    %v182 = vld [vmem:[#allocation6 + $0x168] sm:$0xff]
    %v183 = vld [vmem:[#allocation6 + $0x170] sm:$0xff]
    %v184 = vld [vmem:[#allocation6 + $0x178] sm:$0xff]
    %v185 = vld [vmem:[#allocation6 + $0x180] sm:$0xff]
    %v186 = vld [vmem:[#allocation6 + $0x188] sm:$0xff]
    %v187 = vld [vmem:[#allocation6 + $0x190] sm:$0xff]
    %v188 = vld [vmem:[#allocation6 + $0x198] sm:$0xff]
    %v189 = vld [vmem:[#allocation6 + $0x1a0] sm:$0xff]
    %v190 = vld [vmem:[#allocation6 + $0x1a8] sm:$0xff]
    %v191 = vld [vmem:[#allocation6 + $0x1b0] sm:$0xff]
    %v192 = vld [vmem:[#allocation6 + $0x1b8] sm:$0xff]
    %v193 = vld [vmem:[#allocation6 + $0x1c0] sm:$0xff]
    %v194 = vld [vmem:[#allocation6 + $0x1c8] sm:$0xff]
    %v195 = vld [vmem:[#allocation6 + $0x1d0] sm:$0xff]
    %v196 = vld [vmem:[#allocation6 + $0x1d8] sm:$0xff]
    %v197 = vld [vmem:[#allocation6 + $0x1e0] sm:$0xff]
    %v198 = vld [vmem:[#allocation6 + $0x1e8] sm:$0xff]
    %v199 = vld [vmem:[#allocation6 + $0x1f0] sm:$0xff]
    %v200 = vld [vmem:[#allocation6 + $0x1f8] sm:$0xff]
    %201 = vmatprep.subr.mxu0 %v138
    %202 = vmatpush1.msra.mxu0 %v137
    %203 = vmatprep.subr.mxu0 %v142
    %204 = vmatpush1.msra.mxu0 %v141
    %205 = vmatprep.subr.mxu0 %v146
    %206 = vmatpush1.msra.mxu0 %v145
    %207 = vmatprep.subr.mxu0 %v150
    %208 = vmatpush1.msra.mxu0 %v149
    %209 = vmatprep.subr.mxu0 %v154
    %210 = vmatpush1.msra.mxu0 %v153
    %211 = vmatprep.subr.mxu0 %v158
    %212 = vmatpush1.msra.mxu0 %v157
    %213 = vmatprep.subr.mxu0 %v162
    %214 = vmatpush1.msra.mxu0 %v161
    %215 = vmatprep.subr.mxu0 %v166
    %216 = vmatpush1.msra.mxu0 %v165
    %217 = vmatprep.subr.mxu0 %v170
    %218 = vmatpush1.msra.mxu0 %v169
    %219 = vmatprep.subr.mxu0 %v174
    %220 = vmatpush1.msra.mxu0 %v173
    %221 = vmatprep.subr.mxu0 %v178
    %222 = vmatpush1.msra.mxu0 %v177
    %223 = vmatprep.subr.mxu0 %v182
    %224 = vmatpush1.msra.mxu0 %v181
    %225 = vmatprep.subr.mxu0 %v186
    %226 = vmatpush1.msra.mxu0 %v185
    %227 = vmatprep.subr.mxu0 %v190
    %228 = vmatpush1.msra.mxu0 %v189
    %229 = vmatprep.subr.mxu0 %v194
    %230 = vmatpush1.msra.mxu0 %v193
    %231 = vmatprep.subr.mxu0 %v198
    %232 = vmatpush1.msra.mxu0 %v197
    %233 = vmatprep.subr.mxu0 0.0
    %234 = vmatpush1.msra.mxu0 0.0
    %235 = vmatprep.subr.mxu0 0.0
    %236 = vmatpush1.msra.mxu0 0.0
    %237 = vmatprep.subr.mxu0 0.0
    %238 = vmatpush1.msra.mxu0 0.0
    %239 = vmatprep.subr.mxu0 0.0
    %240 = vmatpush1.msra.mxu0 0.0
    %241 = vmatprep.subr.mxu0 0.0
    %242 = vmatpush1.msra.mxu0 0.0
    %243 = vmatprep.subr.mxu0 0.0
    %244 = vmatpush1.msra.mxu0 0.0
    %245 = vmatprep.subr.mxu0 0.0
    %246 = vmatpush1.msra.mxu0 0.0
    %247 = vmatprep.subr.mxu0 0.0
    %248 = vmatpush1.msra.mxu0 0.0
    %249 = vmatprep.subr.mxu0 0.0
    %250 = vmatpush1.msra.mxu0 0.0
    %251 = vmatprep.subr.mxu0 0.0
    %252 = vmatpush1.msra.mxu0 0.0
    %253 = vmatprep.subr.mxu0 0.0
    %254 = vmatpush1.msra.mxu0 0.0
    %255 = vmatprep.subr.mxu0 0.0
    %256 = vmatpush1.msra.mxu0 0.0
    %257 = vmatprep.subr.mxu0 0.0
    %258 = vmatpush1.msra.mxu0 0.0
    %259 = vmatprep.subr.mxu0 0.0
    %260 = vmatpush1.msra.mxu0 0.0
    %261 = vmatprep.subr.mxu0 0.0
    %262 = vmatpush1.msra.mxu0 0.0
    %263 = vmatprep.subr.mxu0 0.0
    %264 = vmatpush1.msra.mxu0 0.0
    %265 = vmatprep.mubr.f32.mxu0 0.0
    %266 = vmatmul.mubr.f32.gmra.mrb[0].mxu0 %v136
    %v267 = vpop.f32.mrb[0].mxu0
    %v268 = vadd.f32 0.0, %v267
    %v269 = vpop.f32.mrb[0].mxu0
    %v270 = vadd.f32 0.0, %v269
    %271 = vdwg.mxu0
    %272 = vmatprep.subr.mxu0 %v140
    %273 = vmatpush1.msra.mxu0 %v139
    %274 = vmatprep.subr.mxu0 %v144
    %275 = vmatpush1.msra.mxu0 %v143
    %276 = vmatprep.subr.mxu0 %v148
    %277 = vmatpush1.msra.mxu0 %v147
    %278 = vmatprep.subr.mxu0 %v152
    %279 = vmatpush1.msra.mxu0 %v151
    %280 = vmatprep.subr.mxu0 %v156
    %281 = vmatpush1.msra.mxu0 %v155
    %282 = vmatprep.subr.mxu0 %v160
    %283 = vmatpush1.msra.mxu0 %v159
    %284 = vmatprep.subr.mxu0 %v164
    %285 = vmatpush1.msra.mxu0 %v163
    %286 = vmatprep.subr.mxu0 %v168
    %287 = vmatpush1.msra.mxu0 %v167
    %288 = vmatprep.subr.mxu0 %v172
    %289 = vmatpush1.msra.mxu0 %v171
    %290 = vmatprep.subr.mxu0 %v176
    %291 = vmatpush1.msra.mxu0 %v175
    %292 = vmatprep.subr.mxu0 %v180
    %293 = vmatpush1.msra.mxu0 %v179
    %294 = vmatprep.subr.mxu0 %v184
    %295 = vmatpush1.msra.mxu0 %v183
    %296 = vmatprep.subr.mxu0 %v188
    %297 = vmatpush1.msra.mxu0 %v187
    %298 = vmatprep.subr.mxu0 %v192
    %299 = vmatpush1.msra.mxu0 %v191
    %300 = vmatprep.subr.mxu0 %v196
    %301 = vmatpush1.msra.mxu0 %v195
    %302 = vmatprep.subr.mxu0 %v200
    %303 = vmatpush1.msra.mxu0 %v199
    %304 = vmatprep.subr.mxu0 0.0
    %305 = vmatpush1.msra.mxu0 0.0
    %306 = vmatprep.subr.mxu0 0.0
    %307 = vmatpush1.msra.mxu0 0.0
    %308 = vmatprep.subr.mxu0 0.0
    %309 = vmatpush1.msra.mxu0 0.0
    %310 = vmatprep.subr.mxu0 0.0
    %311 = vmatpush1.msra.mxu0 0.0
    %312 = vmatprep.subr.mxu0 0.0
    %313 = vmatpush1.msra.mxu0 0.0
    %314 = vmatprep.subr.mxu0 0.0
    %315 = vmatpush1.msra.mxu0 0.0
    %316 = vmatprep.subr.mxu0 0.0
    %317 = vmatpush1.msra.mxu0 0.0
    %318 = vmatprep.subr.mxu0 0.0
    %319 = vmatpush1.msra.mxu0 0.0
    %320 = vmatprep.subr.mxu0 0.0
    %321 = vmatpush1.msra.mxu0 0.0
    %322 = vmatprep.subr.mxu0 0.0
    %323 = vmatpush1.msra.mxu0 0.0
    %324 = vmatprep.subr.mxu0 0.0
    %325 = vmatpush1.msra.mxu0 0.0
    %326 = vmatprep.subr.mxu0 0.0
    %327 = vmatpush1.msra.mxu0 0.0
    %328 = vmatprep.subr.mxu0 0.0
    %329 = vmatpush1.msra.mxu0 0.0
    %330 = vmatprep.subr.mxu0 0.0
    %331 = vmatpush1.msra.mxu0 0.0
    %332 = vmatprep.subr.mxu0 0.0
    %333 = vmatpush1.msra.mxu0 0.0
    %334 = vmatprep.subr.mxu0 0.0
    %335 = vmatpush1.msra.mxu0 0.0
    %336 = vmatprep.mubr.f32.mxu0 0.0
    %337 = vmatmul.mubr.f32.gmra.mrb[0].mxu0 %v136
    %v338 = vpop.f32.mrb[0].mxu0
    %v339 = vadd.f32 0.0, %v338
    %v340 = vpop.f32.mrb[0].mxu0
    %v341 = vadd.f32 0.0, %v340
    %342 = vdwg.mxu0
    %v343 = vadd.f32 %v132, %v268
    %v344 = vadd.f32 %v133, %v270
    %v345 = vadd.f32 %v134, %v339
    %v346 = vadd.f32 %v135, %v341
    %v347 = vld [vmem:[#allocation3] sm:$0xff]
    %v348 = vxor.u32 %v343, 2147483648
    %v349 = vxor.u32 %v344, 2147483648
    %v350 = vxor.u32 %v345, 2147483648
    %v351 = vmul.f32 %v348, 1.442695
    %v352 = vpow.pop %v351
    %v353 = vmul.f32 %v349, 1.442695
    %v354 = vpow.pop %v353
    %v355 = vmul.f32 %v350, 1.442695
    %v356 = vpow.pop %v355
    %v357 = vadd.f32 %v352, 1.0
    %v358 = vadd.f32 %v354, 1.0
    %v359 = vadd.f32 %v356, 1.0
    %v360 = vrcp.pop %v357
    %v361 = vmul.f32 1.0, %v360
    %v362 = vrcp.pop %v358
    %v363 = vmul.f32 1.0, %v362
    %v364 = vrcp.pop %v359
    %v365 = vmul.f32 1.0, %v364
    %v366 = vtanh.pop %v346
    %v367 = vmul.f32 %v363, %v347
    %v368 = vmul.f32 %v361, %v366
    %v369 = vadd.f32 %v367, %v368
    %v370 = vtanh.pop %v369
    %v371 = vmul.f32 %v365, %v370
    %372 = vst [vmem:[#allocation3] sm:$0xff] %v369
    %373 = vst [vmem:[#allocation2] sm:$0xff] %v371
    %v374 = vld [vmem:[#allocation2] sm:$0xff]
    %v375 = vld [vmem:[#allocation2 + $0x8] sm:$0xff]
    %v376 = vld [vmem:[#allocation8] sm:$0xff]
    %v377 = vld [vmem:[#allocation8 + $0x8] sm:$0xff]
    %v378 = vld [vmem:[#allocation8 + $0x10] sm:$0xff]
    %v379 = vld [vmem:[#allocation8 + $0x18] sm:$0xff]
    %v380 = vld [vmem:[#allocation8 + $0x20] sm:$0xff]
    %v381 = vld [vmem:[#allocation8 + $0x28] sm:$0xff]
    %v382 = vld [vmem:[#allocation8 + $0x30] sm:$0xff]
    %v383 = vld [vmem:[#allocation8 + $0x38] sm:$0xff]
    %v384 = vld [vmem:[#allocation8 + $0x40] sm:$0xff]
    %v385 = vld [vmem:[#allocation8 + $0x48] sm:$0xff]
    %v386 = vld [vmem:[#allocation8 + $0x50] sm:$0xff]
    %v387 = vld [vmem:[#allocation8 + $0x58] sm:$0xff]
    %v388 = vld [vmem:[#allocation8 + $0x60] sm:$0xff]
    %v389 = vld [vmem:[#allocation8 + $0x68] sm:$0xff]
    %v390 = vld [vmem:[#allocation8 + $0x70] sm:$0xff]
    %v391 = vld [vmem:[#allocation8 + $0x78] sm:$0xff]
    %v392 = vld [vmem:[#allocation8 + $0x80] sm:$0xff]
    %v393 = vld [vmem:[#allocation8 + $0x88] sm:$0xff]
    %v394 = vld [vmem:[#allocation8 + $0x90] sm:$0xff]
    %v395 = vld [vmem:[#allocation8 + $0x98] sm:$0xff]
    %v396 = vld [vmem:[#allocation8 + $0xa0] sm:$0xff]
    %v397 = vld [vmem:[#allocation8 + $0xa8] sm:$0xff]
    %v398 = vld [vmem:[#allocation8 + $0xb0] sm:$0xff]
    %v399 = vld [vmem:[#allocation8 + $0xb8] sm:$0xff]
    %v400 = vld [vmem:[#allocation8 + $0xc0] sm:$0xff]
    %v401 = vld [vmem:[#allocation8 + $0xc8] sm:$0xff]
    %v402 = vld [vmem:[#allocation8 + $0xd0] sm:$0xff]
    %v403 = vld [vmem:[#allocation8 + $0xd8] sm:$0xff]
    %v404 = vld [vmem:[#allocation8 + $0xe0] sm:$0xff]
    %v405 = vld [vmem:[#allocation8 + $0xe8] sm:$0xff]
    %v406 = vld [vmem:[#allocation8 + $0xf0] sm:$0xff]
    %v407 = vld [vmem:[#allocation8 + $0xf8] sm:$0xff]
    %v408 = vld [vmem:[#allocation8 + $0x100] sm:$0xff]
    %v409 = vld [vmem:[#allocation8 + $0x108] sm:$0xff]
    %v410 = vld [vmem:[#allocation8 + $0x110] sm:$0xff]
    %v411 = vld [vmem:[#allocation8 + $0x118] sm:$0xff]
    %v412 = vld [vmem:[#allocation8 + $0x120] sm:$0xff]
    %v413 = vld [vmem:[#allocation8 + $0x128] sm:$0xff]
    %v414 = vld [vmem:[#allocation8 + $0x130] sm:$0xff]
    %v415 = vld [vmem:[#allocation8 + $0x138] sm:$0xff]
    %v416 = vld [vmem:[#allocation8 + $0x140] sm:$0xff]
    %v417 = vld [vmem:[#allocation8 + $0x148] sm:$0xff]
    %v418 = vld [vmem:[#allocation8 + $0x150] sm:$0xff]
    %v419 = vld [vmem:[#allocation8 + $0x158] sm:$0xff]
    %v420 = vld [vmem:[#allocation8 + $0x160] sm:$0xff]
    %v421 = vld [vmem:[#allocation8 + $0x168] sm:$0xff]
    %v422 = vld [vmem:[#allocation8 + $0x170] sm:$0xff]
    %v423 = vld [vmem:[#allocation8 + $0x178] sm:$0xff]
    %v424 = vld [vmem:[#allocation8 + $0x180] sm:$0xff]
    %v425 = vld [vmem:[#allocation8 + $0x188] sm:$0xff]
    %v426 = vld [vmem:[#allocation8 + $0x190] sm:$0xff]
    %v427 = vld [vmem:[#allocation8 + $0x198] sm:$0xff]
    %v428 = vld [vmem:[#allocation8 + $0x1a0] sm:$0xff]
    %v429 = vld [vmem:[#allocation8 + $0x1a8] sm:$0xff]
    %v430 = vld [vmem:[#allocation8 + $0x1b0] sm:$0xff]
    %v431 = vld [vmem:[#allocation8 + $0x1b8] sm:$0xff]
    %v432 = vld [vmem:[#allocation8 + $0x1c0] sm:$0xff]
    %v433 = vld [vmem:[#allocation8 + $0x1c8] sm:$0xff]
    %v434 = vld [vmem:[#allocation8 + $0x1d0] sm:$0xff]
    %v435 = vld [vmem:[#allocation8 + $0x1d8] sm:$0xff]
    %v436 = vld [vmem:[#allocation8 + $0x1e0] sm:$0xff]
    %v437 = vld [vmem:[#allocation8 + $0x1e8] sm:$0xff]
    %v438 = vld [vmem:[#allocation8 + $0x1f0] sm:$0xff]
    %v439 = vld [vmem:[#allocation8 + $0x1f8] sm:$0xff]
    %v440 = vld [vmem:[#allocation8 + $0x200] sm:$0xff]
    %v441 = vld [vmem:[#allocation8 + $0x208] sm:$0xff]
    %v442 = vld [vmem:[#allocation8 + $0x210] sm:$0xff]
    %v443 = vld [vmem:[#allocation8 + $0x218] sm:$0xff]
    %v444 = vld [vmem:[#allocation8 + $0x220] sm:$0xff]
    %v445 = vld [vmem:[#allocation8 + $0x228] sm:$0xff]
    %v446 = vld [vmem:[#allocation8 + $0x230] sm:$0xff]
    %v447 = vld [vmem:[#allocation8 + $0x238] sm:$0xff]
    %v448 = vld [vmem:[#allocation8 + $0x240] sm:$0xff]
    %v449 = vld [vmem:[#allocation8 + $0x248] sm:$0xff]
    %v450 = vld [vmem:[#allocation8 + $0x250] sm:$0xff]
    %v451 = vld [vmem:[#allocation8 + $0x258] sm:$0xff]
    %v452 = vld [vmem:[#allocation8 + $0x260] sm:$0xff]
    %v453 = vld [vmem:[#allocation8 + $0x268] sm:$0xff]
    %v454 = vld [vmem:[#allocation8 + $0x270] sm:$0xff]
    %v455 = vld [vmem:[#allocation8 + $0x278] sm:$0xff]
    %v456 = vld [vmem:[#allocation8 + $0x280] sm:$0xff]
    %v457 = vld [vmem:[#allocation8 + $0x288] sm:$0xff]
    %v458 = vld [vmem:[#allocation8 + $0x290] sm:$0xff]
    %v459 = vld [vmem:[#allocation8 + $0x298] sm:$0xff]
    %v460 = vld [vmem:[#allocation8 + $0x2a0] sm:$0xff]
    %v461 = vld [vmem:[#allocation8 + $0x2a8] sm:$0xff]
    %v462 = vld [vmem:[#allocation8 + $0x2b0] sm:$0xff]
    %v463 = vld [vmem:[#allocation8 + $0x2b8] sm:$0xff]
    %v464 = vld [vmem:[#allocation8 + $0x2c0] sm:$0xff]
    %v465 = vld [vmem:[#allocation8 + $0x2c8] sm:$0xff]
    %v466 = vld [vmem:[#allocation8 + $0x2d0] sm:$0xff]
    %v467 = vld [vmem:[#allocation8 + $0x2d8] sm:$0xff]
    %v468 = vld [vmem:[#allocation8 + $0x2e0] sm:$0xff]
    %v469 = vld [vmem:[#allocation8 + $0x2e8] sm:$0xff]
    %v470 = vld [vmem:[#allocation8 + $0x2f0] sm:$0xff]
    %v471 = vld [vmem:[#allocation8 + $0x2f8] sm:$0xff]
    %v472 = vld [vmem:[#allocation8 + $0x300] sm:$0xff]
    %v473 = vld [vmem:[#allocation8 + $0x308] sm:$0xff]
    %v474 = vld [vmem:[#allocation8 + $0x310] sm:$0xff]
    %v475 = vld [vmem:[#allocation8 + $0x318] sm:$0xff]
    %v476 = vld [vmem:[#allocation8 + $0x320] sm:$0xff]
    %v477 = vld [vmem:[#allocation8 + $0x328] sm:$0xff]
    %v478 = vld [vmem:[#allocation8 + $0x330] sm:$0xff]
    %v479 = vld [vmem:[#allocation8 + $0x338] sm:$0xff]
    %v480 = vld [vmem:[#allocation8 + $0x340] sm:$0xff]
    %v481 = vld [vmem:[#allocation8 + $0x348] sm:$0xff]
    %v482 = vld [vmem:[#allocation8 + $0x350] sm:$0xff]
    %v483 = vld [vmem:[#allocation8 + $0x358] sm:$0xff]
    %v484 = vld [vmem:[#allocation8 + $0x360] sm:$0xff]
    %v485 = vld [vmem:[#allocation8 + $0x368] sm:$0xff]
    %v486 = vld [vmem:[#allocation8 + $0x370] sm:$0xff]
    %v487 = vld [vmem:[#allocation8 + $0x378] sm:$0xff]
    %v488 = vld [vmem:[#allocation8 + $0x380] sm:$0xff]
    %v489 = vld [vmem:[#allocation8 + $0x388] sm:$0xff]
    %v490 = vld [vmem:[#allocation8 + $0x390] sm:$0xff]
    %v491 = vld [vmem:[#allocation8 + $0x398] sm:$0xff]
    %v492 = vld [vmem:[#allocation8 + $0x3a0] sm:$0xff]
    %v493 = vld [vmem:[#allocation8 + $0x3a8] sm:$0xff]
    %v494 = vld [vmem:[#allocation8 + $0x3b0] sm:$0xff]
    %v495 = vld [vmem:[#allocation8 + $0x3b8] sm:$0xff]
    %v496 = vld [vmem:[#allocation8 + $0x3c0] sm:$0xff]
    %v497 = vld [vmem:[#allocation8 + $0x3c8] sm:$0xff]
    %v498 = vld [vmem:[#allocation8 + $0x3d0] sm:$0xff]
    %v499 = vld [vmem:[#allocation8 + $0x3d8] sm:$0xff]
    %v500 = vld [vmem:[#allocation8 + $0x3e0] sm:$0xff]
    %v501 = vld [vmem:[#allocation8 + $0x3e8] sm:$0xff]
    %v502 = vld [vmem:[#allocation8 + $0x3f0] sm:$0xff]
    %v503 = vld [vmem:[#allocation8 + $0x3f8] sm:$0xff]
    %v504 = vld [vmem:[%s5] sm:$0xf]
    %v506 = vlaneseq
    %v507 = vshrl.u32 %v506, 7
    %v508 = vsub.s32 0, %v507
    %v509 = vrot.slane %v504, %v508
    %v510 = vlaneseq
    %v511 = vshrl.u32 %v510, 7
    %v512 = vsub.s32 1, %v511
    %v513 = vrot.slane %v504, %v512
    %v514 = vlaneseq
    %v515 = vshrl.u32 %v514, 7
    %v516 = vsub.s32 2, %v515
    %v517 = vrot.slane %v504, %v516
    %v518 = vlaneseq
    %v519 = vshrl.u32 %v518, 7
    %v520 = vsub.s32 3, %v519
    %v521 = vrot.slane %v504, %v520
    %526 = vmatprep.subr.mxu0 %v377
    %527 = vmatpush1.msra.mxu0 %v376
    %528 = vmatprep.subr.mxu0 %v381
    %529 = vmatpush1.msra.mxu0 %v380
    %530 = vmatprep.subr.mxu0 %v385
    %531 = vmatpush1.msra.mxu0 %v384
    %532 = vmatprep.subr.mxu0 %v389
    %533 = vmatpush1.msra.mxu0 %v388
    %534 = vmatprep.subr.mxu0 %v393
    %535 = vmatpush1.msra.mxu0 %v392
    %536 = vmatprep.subr.mxu0 %v397
    %537 = vmatpush1.msra.mxu0 %v396
    %538 = vmatprep.subr.mxu0 %v401
    %539 = vmatpush1.msra.mxu0 %v400
    %540 = vmatprep.subr.mxu0 %v405
    %541 = vmatpush1.msra.mxu0 %v404
    %542 = vmatprep.subr.mxu0 %v409
    %543 = vmatpush1.msra.mxu0 %v408
    %544 = vmatprep.subr.mxu0 %v413
    %545 = vmatpush1.msra.mxu0 %v412
    %546 = vmatprep.subr.mxu0 %v417
    %547 = vmatpush1.msra.mxu0 %v416
    %548 = vmatprep.subr.mxu0 %v421
    %549 = vmatpush1.msra.mxu0 %v420
    %550 = vmatprep.subr.mxu0 %v425
    %551 = vmatpush1.msra.mxu0 %v424
    %552 = vmatprep.subr.mxu0 %v429
    %553 = vmatpush1.msra.mxu0 %v428
    %554 = vmatprep.subr.mxu0 %v433
    %555 = vmatpush1.msra.mxu0 %v432
    %556 = vmatprep.subr.mxu0 %v437
    %557 = vmatpush1.msra.mxu0 %v436
    %558 = vmatprep.subr.mxu0 %v441
    %559 = vmatpush1.msra.mxu0 %v440
    %560 = vmatprep.subr.mxu0 %v445
    %561 = vmatpush1.msra.mxu0 %v444
    %562 = vmatprep.subr.mxu0 %v449
    %563 = vmatpush1.msra.mxu0 %v448
    %564 = vmatprep.subr.mxu0 %v453
    %565 = vmatpush1.msra.mxu0 %v452
    %566 = vmatprep.subr.mxu0 %v457
    %567 = vmatpush1.msra.mxu0 %v456
    %568 = vmatprep.subr.mxu0 %v461
    %569 = vmatpush1.msra.mxu0 %v460
    %570 = vmatprep.subr.mxu0 %v465
    %571 = vmatpush1.msra.mxu0 %v464
    %572 = vmatprep.subr.mxu0 %v469
    %573 = vmatpush1.msra.mxu0 %v468
    %574 = vmatprep.subr.mxu0 %v473
    %575 = vmatpush1.msra.mxu0 %v472
    %576 = vmatprep.subr.mxu0 %v477
    %577 = vmatpush1.msra.mxu0 %v476
    %578 = vmatprep.subr.mxu0 %v481
    %579 = vmatpush1.msra.mxu0 %v480
    %580 = vmatprep.subr.mxu0 %v485
    %581 = vmatpush1.msra.mxu0 %v484
    %582 = vmatprep.subr.mxu0 %v489
    %583 = vmatpush1.msra.mxu0 %v488
    %584 = vmatprep.subr.mxu0 %v493
    %585 = vmatpush1.msra.mxu0 %v492
    %586 = vmatprep.subr.mxu0 %v497
    %587 = vmatpush1.msra.mxu0 %v496
    %588 = vmatprep.subr.mxu0 %v501
    %589 = vmatpush1.msra.mxu0 %v500
    %590 = vmatprep.mubr.f32.mxu0 %v375
    %591 = vmatmul.mubr.f32.gmra.mrb[0].mxu0 %v374
    %v592 = vpop.f32.mrb[0].mxu0
    %v593 = vadd.f32 %v509, %v592
    %v594 = vpop.f32.mrb[0].mxu0
    %v595 = vadd.f32 %v513, %v594
    %596 = vdwg.mxu0
    %597 = vmatprep.subr.mxu0 %v379
    %598 = vmatpush1.msra.mxu0 %v378
    %599 = vmatprep.subr.mxu0 %v383
    %600 = vmatpush1.msra.mxu0 %v382
    %601 = vmatprep.subr.mxu0 %v387
    %602 = vmatpush1.msra.mxu0 %v386
    %603 = vmatprep.subr.mxu0 %v391
    %604 = vmatpush1.msra.mxu0 %v390
    %605 = vmatprep.subr.mxu0 %v395
    %606 = vmatpush1.msra.mxu0 %v394
    %607 = vmatprep.subr.mxu0 %v399
    %608 = vmatpush1.msra.mxu0 %v398
    %609 = vmatprep.subr.mxu0 %v403
    %610 = vmatpush1.msra.mxu0 %v402
    %611 = vmatprep.subr.mxu0 %v407
    %612 = vmatpush1.msra.mxu0 %v406
    %613 = vmatprep.subr.mxu0 %v411
    %614 = vmatpush1.msra.mxu0 %v410
    %615 = vmatprep.subr.mxu0 %v415
    %616 = vmatpush1.msra.mxu0 %v414
    %617 = vmatprep.subr.mxu0 %v419
    %618 = vmatpush1.msra.mxu0 %v418
    %619 = vmatprep.subr.mxu0 %v423
    %620 = vmatpush1.msra.mxu0 %v422
    %621 = vmatprep.subr.mxu0 %v427
    %622 = vmatpush1.msra.mxu0 %v426
    %623 = vmatprep.subr.mxu0 %v431
    %624 = vmatpush1.msra.mxu0 %v430
    %625 = vmatprep.subr.mxu0 %v435
    %626 = vmatpush1.msra.mxu0 %v434
    %627 = vmatprep.subr.mxu0 %v439
    %628 = vmatpush1.msra.mxu0 %v438
    %629 = vmatprep.subr.mxu0 %v443
    %630 = vmatpush1.msra.mxu0 %v442
    %631 = vmatprep.subr.mxu0 %v447
    %632 = vmatpush1.msra.mxu0 %v446
    %633 = vmatprep.subr.mxu0 %v451
    %634 = vmatpush1.msra.mxu0 %v450
    %635 = vmatprep.subr.mxu0 %v455
    %636 = vmatpush1.msra.mxu0 %v454
    %637 = vmatprep.subr.mxu0 %v459
    %638 = vmatpush1.msra.mxu0 %v458
    %639 = vmatprep.subr.mxu0 %v463
    %640 = vmatpush1.msra.mxu0 %v462
    %641 = vmatprep.subr.mxu0 %v467
    %642 = vmatpush1.msra.mxu0 %v466
    %643 = vmatprep.subr.mxu0 %v471
    %644 = vmatpush1.msra.mxu0 %v470
    %645 = vmatprep.subr.mxu0 %v475
    %646 = vmatpush1.msra.mxu0 %v474
    %647 = vmatprep.subr.mxu0 %v479
    %648 = vmatpush1.msra.mxu0 %v478
    %649 = vmatprep.subr.mxu0 %v483
    %650 = vmatpush1.msra.mxu0 %v482
    %651 = vmatprep.subr.mxu0 %v487
    %652 = vmatpush1.msra.mxu0 %v486
    %653 = vmatprep.subr.mxu0 %v491
    %654 = vmatpush1.msra.mxu0 %v490
    %655 = vmatprep.subr.mxu0 %v495
    %656 = vmatpush1.msra.mxu0 %v494
    %657 = vmatprep.subr.mxu0 %v499
    %658 = vmatpush1.msra.mxu0 %v498
    %659 = vmatprep.subr.mxu0 %v503
    %660 = vmatpush1.msra.mxu0 %v502
    %661 = vmatprep.mubr.f32.mxu0 %v375
    %662 = vmatmul.mubr.f32.gmra.mrb[0].mxu0 %v374
    %v663 = vpop.f32.mrb[0].mxu0
    %v664 = vadd.f32 %v517, %v663
    %v665 = vpop.f32.mrb[0].mxu0
    %v666 = vadd.f32 %v521, %v665
    %667 = vdwg.mxu0
    %v668 = vld [vmem:[#allocation4] sm:$0xff]
    %v669 = vxor.u32 %v593, 2147483648
    %v670 = vxor.u32 %v595, 2147483648
    %v671 = vxor.u32 %v664, 2147483648
    %v672 = vmul.f32 %v669, 1.442695
    %v673 = vpow.pop %v672
    %v674 = vmul.f32 %v670, 1.442695
    %v675 = vpow.pop %v674
    %v676 = vmul.f32 %v671, 1.442695
    %v677 = vpow.pop %v676
    %v678 = vadd.f32 %v673, 1.0
    %v679 = vadd.f32 %v675, 1.0
    %v680 = vadd.f32 %v677, 1.0
    %v681 = vrcp.pop %v678
    %v682 = vmul.f32 1.0, %v681
    %v683 = vrcp.pop %v679
    %v684 = vmul.f32 1.0, %v683
    %v685 = vrcp.pop %v680
    %v686 = vmul.f32 1.0, %v685
    %v687 = vtanh.pop %v666
    %v688 = vmul.f32 %v684, %v668
    %v689 = vmul.f32 %v682, %v687
    %v690 = vadd.f32 %v688, %v689
    %v691 = vtanh.pop %v690
    %v692 = vmul.f32 %v686, %v691
    %693 = vst [vmem:[#allocation4] sm:$0xff] %v690
    %694 = vst [vmem:[#allocation2 + $0x8] sm:$0xff] %v692
    %vm695 = vcmp.eq.s32.totalorder %v77, 1
    %v696 = vsel %vm695, %v75, 0.0
    %v697 = vsel %vm80, %v696, 0.0
    %698 = vadd.xlane.f32.xlu0 %v697
    %v699 = vpop.xlane.xlu0 %698
    %v700 = vld [vmem:[%s1] sm:$0xf]
    %v702 = vlaneseq
    %v703 = vshrl.u32 %v702, 7
    %v704 = vsub.s32 0, %v703
    %v705 = vrot.slane %v700, %v704
    %v706 = vlaneseq
    %v707 = vshrl.u32 %v706, 7
    %v708 = vsub.s32 1, %v707
    %v709 = vrot.slane %v700, %v708
    %v710 = vlaneseq
    %v711 = vshrl.u32 %v710, 7
    %v712 = vsub.s32 2, %v711
    %v713 = vrot.slane %v700, %v712
    %v714 = vlaneseq
    %v715 = vshrl.u32 %v714, 7
    %v716 = vsub.s32 3, %v715
    %v717 = vrot.slane %v700, %v716
    %v722 = vmul.f32 %v699, %v705
    %v723 = vmul.f32 %v699, %v709
    %v724 = vmul.f32 %v699, %v713
    %v725 = vmul.f32 %v699, %v717
    %v726 = vld [vmem:[%s2] sm:$0xf]
    %v728 = vlaneseq
    %v729 = vshrl.u32 %v728, 7
    %v730 = vsub.s32 0, %v729
    %v731 = vrot.slane %v726, %v730
    %v732 = vlaneseq
    %v733 = vshrl.u32 %v732, 7
    %v734 = vsub.s32 1, %v733
    %v735 = vrot.slane %v726, %v734
    %v736 = vlaneseq
    %v737 = vshrl.u32 %v736, 7
    %v738 = vsub.s32 2, %v737
    %v739 = vrot.slane %v726, %v738
    %v740 = vlaneseq
    %v741 = vshrl.u32 %v740, 7
    %v742 = vsub.s32 3, %v741
    %v743 = vrot.slane %v726, %v742
    %v748 = vadd.f32 %v722, %v731
    %v749 = vadd.f32 %v723, %v735
    %v750 = vadd.f32 %v724, %v739
    %v751 = vadd.f32 %v725, %v743
    %v752 = vld [vmem:[#allocation2] sm:$0xff]
    %v753 = vld [vmem:[#allocation6] sm:$0xff]
    %v754 = vld [vmem:[#allocation6 + $0x8] sm:$0xff]
    %v755 = vld [vmem:[#allocation6 + $0x10] sm:$0xff]
    %v756 = vld [vmem:[#allocation6 + $0x18] sm:$0xff]
    %v757 = vld [vmem:[#allocation6 + $0x20] sm:$0xff]
    %v758 = vld [vmem:[#allocation6 + $0x28] sm:$0xff]
    %v759 = vld [vmem:[#allocation6 + $0x30] sm:$0xff]
    %v760 = vld [vmem:[#allocation6 + $0x38] sm:$0xff]
    %v761 = vld [vmem:[#allocation6 + $0x40] sm:$0xff]
    %v762 = vld [vmem:[#allocation6 + $0x48] sm:$0xff]
    %v763 = vld [vmem:[#allocation6 + $0x50] sm:$0xff]
    %v764 = vld [vmem:[#allocation6 + $0x58] sm:$0xff]
    %v765 = vld [vmem:[#allocation6 + $0x60] sm:$0xff]
    %v766 = vld [vmem:[#allocation6 + $0x68] sm:$0xff]
    %v767 = vld [vmem:[#allocation6 + $0x70] sm:$0xff]
    %v768 = vld [vmem:[#allocation6 + $0x78] sm:$0xff]
    %v769 = vld [vmem:[#allocation6 + $0x80] sm:$0xff]
    %v770 = vld [vmem:[#allocation6 + $0x88] sm:$0xff]
    %v771 = vld [vmem:[#allocation6 + $0x90] sm:$0xff]
    %v772 = vld [vmem:[#allocation6 + $0x98] sm:$0xff]
    %v773 = vld [vmem:[#allocation6 + $0xa0] sm:$0xff]
    %v774 = vld [vmem:[#allocation6 + $0xa8] sm:$0xff]
    %v775 = vld [vmem:[#allocation6 + $0xb0] sm:$0xff]
    %v776 = vld [vmem:[#allocation6 + $0xb8] sm:$0xff]
    %v777 = vld [vmem:[#allocation6 + $0xc0] sm:$0xff]
    %v778 = vld [vmem:[#allocation6 + $0xc8] sm:$0xff]
    %v779 = vld [vmem:[#allocation6 + $0xd0] sm:$0xff]
    %v780 = vld [vmem:[#allocation6 + $0xd8] sm:$0xff]
    %v781 = vld [vmem:[#allocation6 + $0xe0] sm:$0xff]
    %v782 = vld [vmem:[#allocation6 + $0xe8] sm:$0xff]
    %v783 = vld [vmem:[#allocation6 + $0xf0] sm:$0xff]
    %v784 = vld [vmem:[#allocation6 + $0xf8] sm:$0xff]
    %v785 = vld [vmem:[#allocation6 + $0x100] sm:$0xff]
    %v786 = vld [vmem:[#allocation6 + $0x108] sm:$0xff]
    %v787 = vld [vmem:[#allocation6 + $0x110] sm:$0xff]
    %v788 = vld [vmem:[#allocation6 + $0x118] sm:$0xff]
    %v789 = vld [vmem:[#allocation6 + $0x120] sm:$0xff]
    %v790 = vld [vmem:[#allocation6 + $0x128] sm:$0xff]
    %v791 = vld [vmem:[#allocation6 + $0x130] sm:$0xff]
    %v792 = vld [vmem:[#allocation6 + $0x138] sm:$0xff]
    %v793 = vld [vmem:[#allocation6 + $0x140] sm:$0xff]
    %v794 = vld [vmem:[#allocation6 + $0x148] sm:$0xff]
    %v795 = vld [vmem:[#allocation6 + $0x150] sm:$0xff]
    %v796 = vld [vmem:[#allocation6 + $0x158] sm:$0xff]
    %v797 = vld [vmem:[#allocation6 + $0x160] sm:$0xff]
    %v798 = vld [vmem:[#allocation6 + $0x168] sm:$0xff]
    %v799 = vld [vmem:[#allocation6 + $0x170] sm:$0xff]
    %v800 = vld [vmem:[#allocation6 + $0x178] sm:$0xff]
    %v801 = vld [vmem:[#allocation6 + $0x180] sm:$0xff]
    %v802 = vld [vmem:[#allocation6 + $0x188] sm:$0xff]
    %v803 = vld [vmem:[#allocation6 + $0x190] sm:$0xff]
    %v804 = vld [vmem:[#allocation6 + $0x198] sm:$0xff]
    %v805 = vld [vmem:[#allocation6 + $0x1a0] sm:$0xff]
    %v806 = vld [vmem:[#allocation6 + $0x1a8] sm:$0xff]
    %v807 = vld [vmem:[#allocation6 + $0x1b0] sm:$0xff]
    %v808 = vld [vmem:[#allocation6 + $0x1b8] sm:$0xff]
    %v809 = vld [vmem:[#allocation6 + $0x1c0] sm:$0xff]
    %v810 = vld [vmem:[#allocation6 + $0x1c8] sm:$0xff]
    %v811 = vld [vmem:[#allocation6 + $0x1d0] sm:$0xff]
    %v812 = vld [vmem:[#allocation6 + $0x1d8] sm:$0xff]
    %v813 = vld [vmem:[#allocation6 + $0x1e0] sm:$0xff]
    %v814 = vld [vmem:[#allocation6 + $0x1e8] sm:$0xff]
    %v815 = vld [vmem:[#allocation6 + $0x1f0] sm:$0xff]
    %v816 = vld [vmem:[#allocation6 + $0x1f8] sm:$0xff]
    %817 = vmatprep.subr.mxu0 %v754
    %818 = vmatpush1.msra.mxu0 %v753
    %819 = vmatprep.subr.mxu0 %v758
    %820 = vmatpush1.msra.mxu0 %v757
    %821 = vmatprep.subr.mxu0 %v762
    %822 = vmatpush1.msra.mxu0 %v761
    %823 = vmatprep.subr.mxu0 %v766
    %824 = vmatpush1.msra.mxu0 %v765
    %825 = vmatprep.subr.mxu0 %v770
    %826 = vmatpush1.msra.mxu0 %v769
    %827 = vmatprep.subr.mxu0 %v774
    %828 = vmatpush1.msra.mxu0 %v773
    %829 = vmatprep.subr.mxu0 %v778
    %830 = vmatpush1.msra.mxu0 %v777
    %831 = vmatprep.subr.mxu0 %v782
    %832 = vmatpush1.msra.mxu0 %v781
    %833 = vmatprep.subr.mxu0 %v786
    %834 = vmatpush1.msra.mxu0 %v785
    %835 = vmatprep.subr.mxu0 %v790
    %836 = vmatpush1.msra.mxu0 %v789
    %837 = vmatprep.subr.mxu0 %v794
    %838 = vmatpush1.msra.mxu0 %v793
    %839 = vmatprep.subr.mxu0 %v798
    %840 = vmatpush1.msra.mxu0 %v797
    %841 = vmatprep.subr.mxu0 %v802
    %842 = vmatpush1.msra.mxu0 %v801
    %843 = vmatprep.subr.mxu0 %v806
    %844 = vmatpush1.msra.mxu0 %v805
    %845 = vmatprep.subr.mxu0 %v810
    %846 = vmatpush1.msra.mxu0 %v809
    %847 = vmatprep.subr.mxu0 %v814
    %848 = vmatpush1.msra.mxu0 %v813
    %849 = vmatprep.subr.mxu0 0.0
    %850 = vmatpush1.msra.mxu0 0.0
    %851 = vmatprep.subr.mxu0 0.0
    %852 = vmatpush1.msra.mxu0 0.0
    %853 = vmatprep.subr.mxu0 0.0
    %854 = vmatpush1.msra.mxu0 0.0
    %855 = vmatprep.subr.mxu0 0.0
    %856 = vmatpush1.msra.mxu0 0.0
    %857 = vmatprep.subr.mxu0 0.0
    %858 = vmatpush1.msra.mxu0 0.0
    %859 = vmatprep.subr.mxu0 0.0
    %860 = vmatpush1.msra.mxu0 0.0
    %861 = vmatprep.subr.mxu0 0.0
    %862 = vmatpush1.msra.mxu0 0.0
    %863 = vmatprep.subr.mxu0 0.0
    %864 = vmatpush1.msra.mxu0 0.0
    %865 = vmatprep.subr.mxu0 0.0
    %866 = vmatpush1.msra.mxu0 0.0
    %867 = vmatprep.subr.mxu0 0.0
    %868 = vmatpush1.msra.mxu0 0.0
    %869 = vmatprep.subr.mxu0 0.0
    %870 = vmatpush1.msra.mxu0 0.0
    %871 = vmatprep.subr.mxu0 0.0
    %872 = vmatpush1.msra.mxu0 0.0
    %873 = vmatprep.subr.mxu0 0.0
    %874 = vmatpush1.msra.mxu0 0.0
    %875 = vmatprep.subr.mxu0 0.0
    %876 = vmatpush1.msra.mxu0 0.0
    %877 = vmatprep.subr.mxu0 0.0
    %878 = vmatpush1.msra.mxu0 0.0
    %879 = vmatprep.subr.mxu0 0.0
    %880 = vmatpush1.msra.mxu0 0.0
    %881 = vmatprep.mubr.f32.mxu0 0.0
    %882 = vmatmul.mubr.f32.gmra.mrb[0].mxu0 %v752
    %v883 = vpop.f32.mrb[0].mxu0
    %v884 = vadd.f32 0.0, %v883
    %v885 = vpop.f32.mrb[0].mxu0
    %v886 = vadd.f32 0.0, %v885
    %887 = vdwg.mxu0
    %888 = vmatprep.subr.mxu0 %v756
    %889 = vmatpush1.msra.mxu0 %v755
    %890 = vmatprep.subr.mxu0 %v760
    %891 = vmatpush1.msra.mxu0 %v759
    %892 = vmatprep.subr.mxu0 %v764
    %893 = vmatpush1.msra.mxu0 %v763
    %894 = vmatprep.subr.mxu0 %v768
    %895 = vmatpush1.msra.mxu0 %v767
    %896 = vmatprep.subr.mxu0 %v772
    %897 = vmatpush1.msra.mxu0 %v771
    %898 = vmatprep.subr.mxu0 %v776
    %899 = vmatpush1.msra.mxu0 %v775
    %900 = vmatprep.subr.mxu0 %v780
    %901 = vmatpush1.msra.mxu0 %v779
    %902 = vmatprep.subr.mxu0 %v784
    %903 = vmatpush1.msra.mxu0 %v783
    %904 = vmatprep.subr.mxu0 %v788
    %905 = vmatpush1.msra.mxu0 %v787
    %906 = vmatprep.subr.mxu0 %v792
    %907 = vmatpush1.msra.mxu0 %v791
    %908 = vmatprep.subr.mxu0 %v796
    %909 = vmatpush1.msra.mxu0 %v795
    %910 = vmatprep.subr.mxu0 %v800
    %911 = vmatpush1.msra.mxu0 %v799
    %912 = vmatprep.subr.mxu0 %v804
    %913 = vmatpush1.msra.mxu0 %v803
    %914 = vmatprep.subr.mxu0 %v808
    %915 = vmatpush1.msra.mxu0 %v807
    %916 = vmatprep.subr.mxu0 %v812
    %917 = vmatpush1.msra.mxu0 %v811
    %918 = vmatprep.subr.mxu0 %v816
    %919 = vmatpush1.msra.mxu0 %v815
    %920 = vmatprep.subr.mxu0 0.0
    %921 = vmatpush1.msra.mxu0 0.0
    %922 = vmatprep.subr.mxu0 0.0
    %923 = vmatpush1.msra.mxu0 0.0
    %924 = vmatprep.subr.mxu0 0.0
    %925 = vmatpush1.msra.mxu0 0.0
    %926 = vmatprep.subr.mxu0 0.0
    %927 = vmatpush1.msra.mxu0 0.0
    %928 = vmatprep.subr.mxu0 0.0
    %929 = vmatpush1.msra.mxu0 0.0
    %930 = vmatprep.subr.mxu0 0.0
    %931 = vmatpush1.msra.mxu0 0.0
    %932 = vmatprep.subr.mxu0 0.0
    %933 = vmatpush1.msra.mxu0 0.0
    %934 = vmatprep.subr.mxu0 0.0
    %935 = vmatpush1.msra.mxu0 0.0
    %936 = vmatprep.subr.mxu0 0.0
    %937 = vmatpush1.msra.mxu0 0.0
    %938 = vmatprep.subr.mxu0 0.0
    %939 = vmatpush1.msra.mxu0 0.0
    %940 = vmatprep.subr.mxu0 0.0
    %941 = vmatpush1.msra.mxu0 0.0
    %942 = vmatprep.subr.mxu0 0.0
    %943 = vmatpush1.msra.mxu0 0.0
    %944 = vmatprep.subr.mxu0 0.0
    %945 = vmatpush1.msra.mxu0 0.0
    %946 = vmatprep.subr.mxu0 0.0
    %947 = vmatpush1.msra.mxu0 0.0
    %948 = vmatprep.subr.mxu0 0.0
    %949 = vmatpush1.msra.mxu0 0.0
    %950 = vmatprep.subr.mxu0 0.0
    %951 = vmatpush1.msra.mxu0 0.0
    %952 = vmatprep.mubr.f32.mxu0 0.0
    %953 = vmatmul.mubr.f32.gmra.mrb[0].mxu0 %v752
    %v954 = vpop.f32.mrb[0].mxu0
    %v955 = vadd.f32 0.0, %v954
    %v956 = vpop.f32.mrb[0].mxu0
    %v957 = vadd.f32 0.0, %v956
    %958 = vdwg.mxu0
    %v959 = vadd.f32 %v748, %v884
    %v960 = vadd.f32 %v749, %v886
    %v961 = vadd.f32 %v750, %v955
    %v962 = vadd.f32 %v751, %v957
    %v963 = vld [vmem:[#allocation3] sm:$0xff]
    %v964 = vxor.u32 %v959, 2147483648
    %v965 = vxor.u32 %v960, 2147483648
    %v966 = vxor.u32 %v961, 2147483648
    %v967 = vmul.f32 %v964, 1.442695
    %v968 = vpow.pop %v967
    %v969 = vmul.f32 %v965, 1.442695
    %v970 = vpow.pop %v969
    %v971 = vmul.f32 %v966, 1.442695
    %v972 = vpow.pop %v971
    %v973 = vadd.f32 %v968, 1.0
    %v974 = vadd.f32 %v970, 1.0
    %v975 = vadd.f32 %v972, 1.0
    %v976 = vrcp.pop %v973
    %v977 = vmul.f32 1.0, %v976
    %v978 = vrcp.pop %v974
    %v979 = vmul.f32 1.0, %v978
    %v980 = vrcp.pop %v975
    %v981 = vmul.f32 1.0, %v980
    %v982 = vtanh.pop %v962
    %v983 = vmul.f32 %v979, %v963
    %v984 = vmul.f32 %v977, %v982
    %v985 = vadd.f32 %v983, %v984
    %v986 = vtanh.pop %v985
    %v987 = vmul.f32 %v981, %v986
    %988 = vst [vmem:[#allocation3] sm:$0xff] %v985
    %989 = vst [vmem:[#allocation2] sm:$0xff] %v987
    %v990 = vld [vmem:[#allocation2] sm:$0xff]
    %v991 = vld [vmem:[#allocation2 + $0x8] sm:$0xff]
    %v992 = vld [vmem:[#allocation8] sm:$0xff]
    %v993 = vld [vmem:[#allocation8 + $0x8] sm:$0xff]
    %v994 = vld [vmem:[#allocation8 + $0x10] sm:$0xff]
    %v995 = vld [vmem:[#allocation8 + $0x18] sm:$0xff]
    %v996 = vld [vmem:[#allocation8 + $0x20] sm:$0xff]
    %v997 = vld [vmem:[#allocation8 + $0x28] sm:$0xff]
    %v998 = vld [vmem:[#allocation8 + $0x30] sm:$0xff]
    %v999 = vld [vmem:[#allocation8 + $0x38] sm:$0xff]
    %v1000 = vld [vmem:[#allocation8 + $0x40] sm:$0xff]
    %v1001 = vld [vmem:[#allocation8 + $0x48] sm:$0xff]
    %v1002 = vld [vmem:[#allocation8 + $0x50] sm:$0xff]
    %v1003 = vld [vmem:[#allocation8 + $0x58] sm:$0xff]
    %v1004 = vld [vmem:[#allocation8 + $0x60] sm:$0xff]
    %v1005 = vld [vmem:[#allocation8 + $0x68] sm:$0xff]
    %v1006 = vld [vmem:[#allocation8 + $0x70] sm:$0xff]
    %v1007 = vld [vmem:[#allocation8 + $0x78] sm:$0xff]
    %v1008 = vld [vmem:[#allocation8 + $0x80] sm:$0xff]
    %v1009 = vld [vmem:[#allocation8 + $0x88] sm:$0xff]
    %v1010 = vld [vmem:[#allocation8 + $0x90] sm:$0xff]
    %v1011 = vld [vmem:[#allocation8 + $0x98] sm:$0xff]
    %v1012 = vld [vmem:[#allocation8 + $0xa0] sm:$0xff]
    %v1013 = vld [vmem:[#allocation8 + $0xa8] sm:$0xff]
    %v1014 = vld [vmem:[#allocation8 + $0xb0] sm:$0xff]
    %v1015 = vld [vmem:[#allocation8 + $0xb8] sm:$0xff]
    %v1016 = vld [vmem:[#allocation8 + $0xc0] sm:$0xff]
    %v1017 = vld [vmem:[#allocation8 + $0xc8] sm:$0xff]
    %v1018 = vld [vmem:[#allocation8 + $0xd0] sm:$0xff]
    %v1019 = vld [vmem:[#allocation8 + $0xd8] sm:$0xff]
    %v1020 = vld [vmem:[#allocation8 + $0xe0] sm:$0xff]
    %v1021 = vld [vmem:[#allocation8 + $0xe8] sm:$0xff]
    %v1022 = vld [vmem:[#allocation8 + $0xf0] sm:$0xff]
    %v1023 = vld [vmem:[#allocation8 + $0xf8] sm:$0xff]
    %v1024 = vld [vmem:[#allocation8 + $0x100] sm:$0xff]
    %v1025 = vld [vmem:[#allocation8 + $0x108] sm:$0xff]
    %v1026 = vld [vmem:[#allocation8 + $0x110] sm:$0xff]
    %v1027 = vld [vmem:[#allocation8 + $0x118] sm:$0xff]
    %v1028 = vld [vmem:[#allocation8 + $0x120] sm:$0xff]
    %v1029 = vld [vmem:[#allocation8 + $0x128] sm:$0xff]
    %v1030 = vld [vmem:[#allocation8 + $0x130] sm:$0xff]
    %v1031 = vld [vmem:[#allocation8 + $0x138] sm:$0xff]
    %v1032 = vld [vmem:[#allocation8 + $0x140] sm:$0xff]
    %v1033 = vld [vmem:[#allocation8 + $0x148] sm:$0xff]
    %v1034 = vld [vmem:[#allocation8 + $0x150] sm:$0xff]
    %v1035 = vld [vmem:[#allocation8 + $0x158] sm:$0xff]
    %v1036 = vld [vmem:[#allocation8 + $0x160] sm:$0xff]
    %v1037 = vld [vmem:[#allocation8 + $0x168] sm:$0xff]
    %v1038 = vld [vmem:[#allocation8 + $0x170] sm:$0xff]
    %v1039 = vld [vmem:[#allocation8 + $0x178] sm:$0xff]
    %v1040 = vld [vmem:[#allocation8 + $0x180] sm:$0xff]
    %v1041 = vld [vmem:[#allocation8 + $0x188] sm:$0xff]
    %v1042 = vld [vmem:[#allocation8 + $0x190] sm:$0xff]
    %v1043 = vld [vmem:[#allocation8 + $0x198] sm:$0xff]
    %v1044 = vld [vmem:[#allocation8 + $0x1a0] sm:$0xff]
    %v1045 = vld [vmem:[#allocation8 + $0x1a8] sm:$0xff]
    %v1046 = vld [vmem:[#allocation8 + $0x1b0] sm:$0xff]
    %v1047 = vld [vmem:[#allocation8 + $0x1b8] sm:$0xff]
    %v1048 = vld [vmem:[#allocation8 + $0x1c0] sm:$0xff]
    %v1049 = vld [vmem:[#allocation8 + $0x1c8] sm:$0xff]
    %v1050 = vld [vmem:[#allocation8 + $0x1d0] sm:$0xff]
    %v1051 = vld [vmem:[#allocation8 + $0x1d8] sm:$0xff]
    %v1052 = vld [vmem:[#allocation8 + $0x1e0] sm:$0xff]
    %v1053 = vld [vmem:[#allocation8 + $0x1e8] sm:$0xff]
    %v1054 = vld [vmem:[#allocation8 + $0x1f0] sm:$0xff]
    %v1055 = vld [vmem:[#allocation8 + $0x1f8] sm:$0xff]
    %v1056 = vld [vmem:[#allocation8 + $0x200] sm:$0xff]
    %v1057 = vld [vmem:[#allocation8 + $0x208] sm:$0xff]
    %v1058 = vld [vmem:[#allocation8 + $0x210] sm:$0xff]
    %v1059 = vld [vmem:[#allocation8 + $0x218] sm:$0xff]
    %v1060 = vld [vmem:[#allocation8 + $0x220] sm:$0xff]
    %v1061 = vld [vmem:[#allocation8 + $0x228] sm:$0xff]
    %v1062 = vld [vmem:[#allocation8 + $0x230] sm:$0xff]
    %v1063 = vld [vmem:[#allocation8 + $0x238] sm:$0xff]
    %v1064 = vld [vmem:[#allocation8 + $0x240] sm:$0xff]
    %v1065 = vld [vmem:[#allocation8 + $0x248] sm:$0xff]
    %v1066 = vld [vmem:[#allocation8 + $0x250] sm:$0xff]
    %v1067 = vld [vmem:[#allocation8 + $0x258] sm:$0xff]
    %v1068 = vld [vmem:[#allocation8 + $0x260] sm:$0xff]
    %v1069 = vld [vmem:[#allocation8 + $0x268] sm:$0xff]
    %v1070 = vld [vmem:[#allocation8 + $0x270] sm:$0xff]
    %v1071 = vld [vmem:[#allocation8 + $0x278] sm:$0xff]
    %v1072 = vld [vmem:[#allocation8 + $0x280] sm:$0xff]
    %v1073 = vld [vmem:[#allocation8 + $0x288] sm:$0xff]
    %v1074 = vld [vmem:[#allocation8 + $0x290] sm:$0xff]
    %v1075 = vld [vmem:[#allocation8 + $0x298] sm:$0xff]
    %v1076 = vld [vmem:[#allocation8 + $0x2a0] sm:$0xff]
    %v1077 = vld [vmem:[#allocation8 + $0x2a8] sm:$0xff]
    %v1078 = vld [vmem:[#allocation8 + $0x2b0] sm:$0xff]
    %v1079 = vld [vmem:[#allocation8 + $0x2b8] sm:$0xff]
    %v1080 = vld [vmem:[#allocation8 + $0x2c0] sm:$0xff]
    %v1081 = vld [vmem:[#allocation8 + $0x2c8] sm:$0xff]
    %v1082 = vld [vmem:[#allocation8 + $0x2d0] sm:$0xff]
    %v1083 = vld [vmem:[#allocation8 + $0x2d8] sm:$0xff]
    %v1084 = vld [vmem:[#allocation8 + $0x2e0] sm:$0xff]
    %v1085 = vld [vmem:[#allocation8 + $0x2e8] sm:$0xff]
    %v1086 = vld [vmem:[#allocation8 + $0x2f0] sm:$0xff]
    %v1087 = vld [vmem:[#allocation8 + $0x2f8] sm:$0xff]
    %v1088 = vld [vmem:[#allocation8 + $0x300] sm:$0xff]
    %v1089 = vld [vmem:[#allocation8 + $0x308] sm:$0xff]
    %v1090 = vld [vmem:[#allocation8 + $0x310] sm:$0xff]
    %v1091 = vld [vmem:[#allocation8 + $0x318] sm:$0xff]
    %v1092 = vld [vmem:[#allocation8 + $0x320] sm:$0xff]
    %v1093 = vld [vmem:[#allocation8 + $0x328] sm:$0xff]
    %v1094 = vld [vmem:[#allocation8 + $0x330] sm:$0xff]
    %v1095 = vld [vmem:[#allocation8 + $0x338] sm:$0xff]
    %v1096 = vld [vmem:[#allocation8 + $0x340] sm:$0xff]
    %v1097 = vld [vmem:[#allocation8 + $0x348] sm:$0xff]
    %v1098 = vld [vmem:[#allocation8 + $0x350] sm:$0xff]
    %v1099 = vld [vmem:[#allocation8 + $0x358] sm:$0xff]
    %v1100 = vld [vmem:[#allocation8 + $0x360] sm:$0xff]
    %v1101 = vld [vmem:[#allocation8 + $0x368] sm:$0xff]
    %v1102 = vld [vmem:[#allocation8 + $0x370] sm:$0xff]
    %v1103 = vld [vmem:[#allocation8 + $0x378] sm:$0xff]
    %v1104 = vld [vmem:[#allocation8 + $0x380] sm:$0xff]
    %v1105 = vld [vmem:[#allocation8 + $0x388] sm:$0xff]
    %v1106 = vld [vmem:[#allocation8 + $0x390] sm:$0xff]
    %v1107 = vld [vmem:[#allocation8 + $0x398] sm:$0xff]
    %v1108 = vld [vmem:[#allocation8 + $0x3a0] sm:$0xff]
    %v1109 = vld [vmem:[#allocation8 + $0x3a8] sm:$0xff]
    %v1110 = vld [vmem:[#allocation8 + $0x3b0] sm:$0xff]
    %v1111 = vld [vmem:[#allocation8 + $0x3b8] sm:$0xff]
    %v1112 = vld [vmem:[#allocation8 + $0x3c0] sm:$0xff]
    %v1113 = vld [vmem:[#allocation8 + $0x3c8] sm:$0xff]
    %v1114 = vld [vmem:[#allocation8 + $0x3d0] sm:$0xff]
    %v1115 = vld [vmem:[#allocation8 + $0x3d8] sm:$0xff]
    %v1116 = vld [vmem:[#allocation8 + $0x3e0] sm:$0xff]
    %v1117 = vld [vmem:[#allocation8 + $0x3e8] sm:$0xff]
    %v1118 = vld [vmem:[#allocation8 + $0x3f0] sm:$0xff]
    %v1119 = vld [vmem:[#allocation8 + $0x3f8] sm:$0xff]
    %v1120 = vld [vmem:[%s5] sm:$0xf]
    %v1122 = vlaneseq
    %v1123 = vshrl.u32 %v1122, 7
    %v1124 = vsub.s32 0, %v1123
    %v1125 = vrot.slane %v1120, %v1124
    %v1126 = vlaneseq
    %v1127 = vshrl.u32 %v1126, 7
    %v1128 = vsub.s32 1, %v1127
    %v1129 = vrot.slane %v1120, %v1128
    %v1130 = vlaneseq
    %v1131 = vshrl.u32 %v1130, 7
    %v1132 = vsub.s32 2, %v1131
    %v1133 = vrot.slane %v1120, %v1132
    %v1134 = vlaneseq
    %v1135 = vshrl.u32 %v1134, 7
    %v1136 = vsub.s32 3, %v1135
    %v1137 = vrot.slane %v1120, %v1136
    %1142 = vmatprep.subr.mxu0 %v993
    %1143 = vmatpush1.msra.mxu0 %v992
    %1144 = vmatprep.subr.mxu0 %v997
    %1145 = vmatpush1.msra.mxu0 %v996
    %1146 = vmatprep.subr.mxu0 %v1001
    %1147 = vmatpush1.msra.mxu0 %v1000
    %1148 = vmatprep.subr.mxu0 %v1005
    %1149 = vmatpush1.msra.mxu0 %v1004
    %1150 = vmatprep.subr.mxu0 %v1009
    %1151 = vmatpush1.msra.mxu0 %v1008
    %1152 = vmatprep.subr.mxu0 %v1013
    %1153 = vmatpush1.msra.mxu0 %v1012
    %1154 = vmatprep.subr.mxu0 %v1017
    %1155 = vmatpush1.msra.mxu0 %v1016
    %1156 = vmatprep.subr.mxu0 %v1021
    %1157 = vmatpush1.msra.mxu0 %v1020
    %1158 = vmatprep.subr.mxu0 %v1025
    %1159 = vmatpush1.msra.mxu0 %v1024
    %1160 = vmatprep.subr.mxu0 %v1029
    %1161 = vmatpush1.msra.mxu0 %v1028
    %1162 = vmatprep.subr.mxu0 %v1033
    %1163 = vmatpush1.msra.mxu0 %v1032
    %1164 = vmatprep.subr.mxu0 %v1037
    %1165 = vmatpush1.msra.mxu0 %v1036
    %1166 = vmatprep.subr.mxu0 %v1041
    %1167 = vmatpush1.msra.mxu0 %v1040
    %1168 = vmatprep.subr.mxu0 %v1045
    %1169 = vmatpush1.msra.mxu0 %v1044
    %1170 = vmatprep.subr.mxu0 %v1049
    %1171 = vmatpush1.msra.mxu0 %v1048
    %1172 = vmatprep.subr.mxu0 %v1053
    %1173 = vmatpush1.msra.mxu0 %v1052
    %1174 = vmatprep.subr.mxu0 %v1057
    %1175 = vmatpush1.msra.mxu0 %v1056
    %1176 = vmatprep.subr.mxu0 %v1061
    %1177 = vmatpush1.msra.mxu0 %v1060
    %1178 = vmatprep.subr.mxu0 %v1065
    %1179 = vmatpush1.msra.mxu0 %v1064
    %1180 = vmatprep.subr.mxu0 %v1069
    %1181 = vmatpush1.msra.mxu0 %v1068
    %1182 = vmatprep.subr.mxu0 %v1073
    %1183 = vmatpush1.msra.mxu0 %v1072
    %1184 = vmatprep.subr.mxu0 %v1077
    %1185 = vmatpush1.msra.mxu0 %v1076
    %1186 = vmatprep.subr.mxu0 %v1081
    %1187 = vmatpush1.msra.mxu0 %v1080
    %1188 = vmatprep.subr.mxu0 %v1085
    %1189 = vmatpush1.msra.mxu0 %v1084
    %1190 = vmatprep.subr.mxu0 %v1089
    %1191 = vmatpush1.msra.mxu0 %v1088
    %1192 = vmatprep.subr.mxu0 %v1093
    %1193 = vmatpush1.msra.mxu0 %v1092
    %1194 = vmatprep.subr.mxu0 %v1097
    %1195 = vmatpush1.msra.mxu0 %v1096
    %1196 = vmatprep.subr.mxu0 %v1101
    %1197 = vmatpush1.msra.mxu0 %v1100
    %1198 = vmatprep.subr.mxu0 %v1105
    %1199 = vmatpush1.msra.mxu0 %v1104
    %1200 = vmatprep.subr.mxu0 %v1109
    %1201 = vmatpush1.msra.mxu0 %v1108
    %1202 = vmatprep.subr.mxu0 %v1113
    %1203 = vmatpush1.msra.mxu0 %v1112
    %1204 = vmatprep.subr.mxu0 %v1117
    %1205 = vmatpush1.msra.mxu0 %v1116
    %1206 = vmatprep.mubr.f32.mxu0 %v991
    %1207 = vmatmul.mubr.f32.gmra.mrb[0].mxu0 %v990
    %v1208 = vpop.f32.mrb[0].mxu0
    %v1209 = vadd.f32 %v1125, %v1208
    %v1210 = vpop.f32.mrb[0].mxu0
    %v1211 = vadd.f32 %v1129, %v1210
    %1212 = vdwg.mxu0
    %1213 = vmatprep.subr.mxu0 %v995
    %1214 = vmatpush1.msra.mxu0 %v994
    %1215 = vmatprep.subr.mxu0 %v999
    %1216 = vmatpush1.msra.mxu0 %v998
    %1217 = vmatprep.subr.mxu0 %v1003
    %1218 = vmatpush1.msra.mxu0 %v1002
    %1219 = vmatprep.subr.mxu0 %v1007
    %1220 = vmatpush1.msra.mxu0 %v1006
    %1221 = vmatprep.subr.mxu0 %v1011
    %1222 = vmatpush1.msra.mxu0 %v1010
    %1223 = vmatprep.subr.mxu0 %v1015
    %1224 = vmatpush1.msra.mxu0 %v1014
    %1225 = vmatprep.subr.mxu0 %v1019
    %1226 = vmatpush1.msra.mxu0 %v1018
    %1227 = vmatprep.subr.mxu0 %v1023
    %1228 = vmatpush1.msra.mxu0 %v1022
    %1229 = vmatprep.subr.mxu0 %v1027
    %1230 = vmatpush1.msra.mxu0 %v1026
    %1231 = vmatprep.subr.mxu0 %v1031
    %1232 = vmatpush1.msra.mxu0 %v1030
    %1233 = vmatprep.subr.mxu0 %v1035
    %1234 = vmatpush1.msra.mxu0 %v1034
    %1235 = vmatprep.subr.mxu0 %v1039
    %1236 = vmatpush1.msra.mxu0 %v1038
    %1237 = vmatprep.subr.mxu0 %v1043
    %1238 = vmatpush1.msra.mxu0 %v1042
    %1239 = vmatprep.subr.mxu0 %v1047
    %1240 = vmatpush1.msra.mxu0 %v1046
    %1241 = vmatprep.subr.mxu0 %v1051
    %1242 = vmatpush1.msra.mxu0 %v1050
    %1243 = vmatprep.subr.mxu0 %v1055
    %1244 = vmatpush1.msra.mxu0 %v1054
    %1245 = vmatprep.subr.mxu0 %v1059
    %1246 = vmatpush1.msra.mxu0 %v1058
    %1247 = vmatprep.subr.mxu0 %v1063
    %1248 = vmatpush1.msra.mxu0 %v1062
    %1249 = vmatprep.subr.mxu0 %v1067
    %1250 = vmatpush1.msra.mxu0 %v1066
    %1251 = vmatprep.subr.mxu0 %v1071
    %1252 = vmatpush1.msra.mxu0 %v1070
    %1253 = vmatprep.subr.mxu0 %v1075
    %1254 = vmatpush1.msra.mxu0 %v1074
    %1255 = vmatprep.subr.mxu0 %v1079
    %1256 = vmatpush1.msra.mxu0 %v1078
    %1257 = vmatprep.subr.mxu0 %v1083
    %1258 = vmatpush1.msra.mxu0 %v1082
    %1259 = vmatprep.subr.mxu0 %v1087
    %1260 = vmatpush1.msra.mxu0 %v1086
    %1261 = vmatprep.subr.mxu0 %v1091
    %1262 = vmatpush1.msra.mxu0 %v1090
    %1263 = vmatprep.subr.mxu0 %v1095
    %1264 = vmatpush1.msra.mxu0 %v1094
    %1265 = vmatprep.subr.mxu0 %v1099
    %1266 = vmatpush1.msra.mxu0 %v1098
    %1267 = vmatprep.subr.mxu0 %v1103
    %1268 = vmatpush1.msra.mxu0 %v1102
    %1269 = vmatprep.subr.mxu0 %v1107
    %1270 = vmatpush1.msra.mxu0 %v1106
    %1271 = vmatprep.subr.mxu0 %v1111
    %1272 = vmatpush1.msra.mxu0 %v1110
    %1273 = vmatprep.subr.mxu0 %v1115
    %1274 = vmatpush1.msra.mxu0 %v1114
    %1275 = vmatprep.subr.mxu0 %v1119
    %1276 = vmatpush1.msra.mxu0 %v1118
    %1277 = vmatprep.mubr.f32.mxu0 %v991
    %1278 = vmatmul.mubr.f32.gmra.mrb[0].mxu0 %v990
    %v1279 = vpop.f32.mrb[0].mxu0
    %v1280 = vadd.f32 %v1133, %v1279
    %v1281 = vpop.f32.mrb[0].mxu0
    %v1282 = vadd.f32 %v1137, %v1281
    %1283 = vdwg.mxu0
    %v1284 = vld [vmem:[#allocation4] sm:$0xff]
    %v1285 = vxor.u32 %v1209, 2147483648
    %v1286 = vxor.u32 %v1211, 2147483648
    %v1287 = vxor.u32 %v1280, 2147483648
    %v1288 = vmul.f32 %v1285, 1.442695
    %v1289 = vpow.pop %v1288
    %v1290 = vmul.f32 %v1286, 1.442695
    %v1291 = vpow.pop %v1290
    %v1292 = vmul.f32 %v1287, 1.442695
    %v1293 = vpow.pop %v1292
    %v1294 = vadd.f32 %v1289, 1.0
    %v1295 = vadd.f32 %v1291, 1.0
    %v1296 = vadd.f32 %v1293, 1.0
    %v1297 = vrcp.pop %v1294
    %v1298 = vmul.f32 1.0, %v1297
    %v1299 = vrcp.pop %v1295
    %v1300 = vmul.f32 1.0, %v1299
    %v1301 = vrcp.pop %v1296
    %v1302 = vmul.f32 1.0, %v1301
    %v1303 = vtanh.pop %v1282
    %v1304 = vmul.f32 %v1300, %v1284
    %v1305 = vmul.f32 %v1298, %v1303
    %v1306 = vadd.f32 %v1304, %v1305
    %v1307 = vtanh.pop %v1306
    %v1308 = vmul.f32 %v1302, %v1307
    %1309 = vst [vmem:[#allocation4] sm:$0xff] %v1306
    %1310 = vst [vmem:[#allocation2 + $0x8] sm:$0xff] %v1308
    %vm1311 = vcmp.eq.s32.totalorder %v77, 2
    %v1312 = vsel %vm1311, %v75, 0.0
    %v1313 = vsel %vm80, %v1312, 0.0
    %1314 = vadd.xlane.f32.xlu0 %v1313
    %v1315 = vpop.xlane.xlu0 %1314
    %v1316 = vld [vmem:[%s1] sm:$0xf]
    %v1318 = vlaneseq
    %v1319 = vshrl.u32 %v1318, 7
    %v1320 = vsub.s32 0, %v1319
    %v1321 = vrot.slane %v1316, %v1320
    %v1322 = vlaneseq
    %v1323 = vshrl.u32 %v1322, 7
    %v1324 = vsub.s32 1, %v1323
    %v1325 = vrot.slane %v1316, %v1324
    %v1326 = vlaneseq
    %v1327 = vshrl.u32 %v1326, 7
    %v1328 = vsub.s32 2, %v1327
    %v1329 = vrot.slane %v1316, %v1328
    %v1330 = vlaneseq
    %v1331 = vshrl.u32 %v1330, 7
    %v1332 = vsub.s32 3, %v1331
    %v1333 = vrot.slane %v1316, %v1332
    %v1338 = vmul.f32 %v1315, %v1321
    %v1339 = vmul.f32 %v1315, %v1325
    %v1340 = vmul.f32 %v1315, %v1329
    %v1341 = vmul.f32 %v1315, %v1333
    %v1342 = vld [vmem:[%s2] sm:$0xf]
    %v1344 = vlaneseq
    %v1345 = vshrl.u32 %v1344, 7
    %v1346 = vsub.s32 0, %v1345
    %v1347 = vrot.slane %v1342, %v1346
    %v1348 = vlaneseq
    %v1349 = vshrl.u32 %v1348, 7
    %v1350 = vsub.s32 1, %v1349
    %v1351 = vrot.slane %v1342, %v1350
    %v1352 = vlaneseq
    %v1353 = vshrl.u32 %v1352, 7
    %v1354 = vsub.s32 2, %v1353
    %v1355 = vrot.slane %v1342, %v1354
    %v1356 = vlaneseq
    %v1357 = vshrl.u32 %v1356, 7
    %v1358 = vsub.s32 3, %v1357
    %v1359 = vrot.slane %v1342, %v1358
    %v1364 = vadd.f32 %v1338, %v1347
    %v1365 = vadd.f32 %v1339, %v1351
    %v1366 = vadd.f32 %v1340, %v1355
    %v1367 = vadd.f32 %v1341, %v1359
    %v1368 = vld [vmem:[#allocation2] sm:$0xff]
    %v1369 = vld [vmem:[#allocation6] sm:$0xff]
    %v1370 = vld [vmem:[#allocation6 + $0x8] sm:$0xff]
    %v1371 = vld [vmem:[#allocation6 + $0x10] sm:$0xff]
    %v1372 = vld [vmem:[#allocation6 + $0x18] sm:$0xff]
    %v1373 = vld [vmem:[#allocation6 + $0x20] sm:$0xff]
    %v1374 = vld [vmem:[#allocation6 + $0x28] sm:$0xff]
    %v1375 = vld [vmem:[#allocation6 + $0x30] sm:$0xff]
    %v1376 = vld [vmem:[#allocation6 + $0x38] sm:$0xff]
    %v1377 = vld [vmem:[#allocation6 + $0x40] sm:$0xff]
    %v1378 = vld [vmem:[#allocation6 + $0x48] sm:$0xff]
    %v1379 = vld [vmem:[#allocation6 + $0x50] sm:$0xff]
    %v1380 = vld [vmem:[#allocation6 + $0x58] sm:$0xff]
    %v1381 = vld [vmem:[#allocation6 + $0x60] sm:$0xff]
    %v1382 = vld [vmem:[#allocation6 + $0x68] sm:$0xff]
    %v1383 = vld [vmem:[#allocation6 + $0x70] sm:$0xff]
    %v1384 = vld [vmem:[#allocation6 + $0x78] sm:$0xff]
    %v1385 = vld [vmem:[#allocation6 + $0x80] sm:$0xff]
    %v1386 = vld [vmem:[#allocation6 + $0x88] sm:$0xff]
    %v1387 = vld [vmem:[#allocation6 + $0x90] sm:$0xff]
    %v1388 = vld [vmem:[#allocation6 + $0x98] sm:$0xff]
    %v1389 = vld [vmem:[#allocation6 + $0xa0] sm:$0xff]
    %v1390 = vld [vmem:[#allocation6 + $0xa8] sm:$0xff]
    %v1391 = vld [vmem:[#allocation6 + $0xb0] sm:$0xff]
    %v1392 = vld [vmem:[#allocation6 + $0xb8] sm:$0xff]
    %v1393 = vld [vmem:[#allocation6 + $0xc0] sm:$0xff]
    %v1394 = vld [vmem:[#allocation6 + $0xc8] sm:$0xff]
    %v1395 = vld [vmem:[#allocation6 + $0xd0] sm:$0xff]
    %v1396 = vld [vmem:[#allocation6 + $0xd8] sm:$0xff]
    %v1397 = vld [vmem:[#allocation6 + $0xe0] sm:$0xff]
    %v1398 = vld [vmem:[#allocation6 + $0xe8] sm:$0xff]
    %v1399 = vld [vmem:[#allocation6 + $0xf0] sm:$0xff]
    %v1400 = vld [vmem:[#allocation6 + $0xf8] sm:$0xff]
    %v1401 = vld [vmem:[#allocation6 + $0x100] sm:$0xff]
    %v1402 = vld [vmem:[#allocation6 + $0x108] sm:$0xff]
    %v1403 = vld [vmem:[#allocation6 + $0x110] sm:$0xff]
    %v1404 = vld [vmem:[#allocation6 + $0x118] sm:$0xff]
    %v1405 = vld [vmem:[#allocation6 + $0x120] sm:$0xff]
    %v1406 = vld [vmem:[#allocation6 + $0x128] sm:$0xff]
    %v1407 = vld [vmem:[#allocation6 + $0x130] sm:$0xff]
    %v1408 = vld [vmem:[#allocation6 + $0x138] sm:$0xff]
    %v1409 = vld [vmem:[#allocation6 + $0x140] sm:$0xff]
    %v1410 = vld [vmem:[#allocation6 + $0x148] sm:$0xff]
    %v1411 = vld [vmem:[#allocation6 + $0x150] sm:$0xff]
    %v1412 = vld [vmem:[#allocation6 + $0x158] sm:$0xff]
    %v1413 = vld [vmem:[#allocation6 + $0x160] sm:$0xff]
    %v1414 = vld [vmem:[#allocation6 + $0x168] sm:$0xff]
    %v1415 = vld [vmem:[#allocation6 + $0x170] sm:$0xff]
    %v1416 = vld [vmem:[#allocation6 + $0x178] sm:$0xff]
    %v1417 = vld [vmem:[#allocation6 + $0x180] sm:$0xff]
    %v1418 = vld [vmem:[#allocation6 + $0x188] sm:$0xff]
    %v1419 = vld [vmem:[#allocation6 + $0x190] sm:$0xff]
    %v1420 = vld [vmem:[#allocation6 + $0x198] sm:$0xff]
    %v1421 = vld [vmem:[#allocation6 + $0x1a0] sm:$0xff]
    %v1422 = vld [vmem:[#allocation6 + $0x1a8] sm:$0xff]
    %v1423 = vld [vmem:[#allocation6 + $0x1b0] sm:$0xff]
    %v1424 = vld [vmem:[#allocation6 + $0x1b8] sm:$0xff]
    %v1425 = vld [vmem:[#allocation6 + $0x1c0] sm:$0xff]
    %v1426 = vld [vmem:[#allocation6 + $0x1c8] sm:$0xff]
    %v1427 = vld [vmem:[#allocation6 + $0x1d0] sm:$0xff]
    %v1428 = vld [vmem:[#allocation6 + $0x1d8] sm:$0xff]
    %v1429 = vld [vmem:[#allocation6 + $0x1e0] sm:$0xff]
    %v1430 = vld [vmem:[#allocation6 + $0x1e8] sm:$0xff]
    %v1431 = vld [vmem:[#allocation6 + $0x1f0] sm:$0xff]
    %v1432 = vld [vmem:[#allocation6 + $0x1f8] sm:$0xff]
    %1433 = vmatprep.subr.mxu0 %v1370
    %1434 = vmatpush1.msra.mxu0 %v1369
    %1435 = vmatprep.subr.mxu0 %v1374
    %1436 = vmatpush1.msra.mxu0 %v1373
    %1437 = vmatprep.subr.mxu0 %v1378
    %1438 = vmatpush1.msra.mxu0 %v1377
    %1439 = vmatprep.subr.mxu0 %v1382
    %1440 = vmatpush1.msra.mxu0 %v1381
    %1441 = vmatprep.subr.mxu0 %v1386
    %1442 = vmatpush1.msra.mxu0 %v1385
    %1443 = vmatprep.subr.mxu0 %v1390
    %1444 = vmatpush1.msra.mxu0 %v1389
    %1445 = vmatprep.subr.mxu0 %v1394
    %1446 = vmatpush1.msra.mxu0 %v1393
    %1447 = vmatprep.subr.mxu0 %v1398
    %1448 = vmatpush1.msra.mxu0 %v1397
    %1449 = vmatprep.subr.mxu0 %v1402
    %1450 = vmatpush1.msra.mxu0 %v1401
    %1451 = vmatprep.subr.mxu0 %v1406
    %1452 = vmatpush1.msra.mxu0 %v1405
    %1453 = vmatprep.subr.mxu0 %v1410
    %1454 = vmatpush1.msra.mxu0 %v1409
    %1455 = vmatprep.subr.mxu0 %v1414
    %1456 = vmatpush1.msra.mxu0 %v1413
    %1457 = vmatprep.subr.mxu0 %v1418
    %1458 = vmatpush1.msra.mxu0 %v1417
    %1459 = vmatprep.subr.mxu0 %v1422
    %1460 = vmatpush1.msra.mxu0 %v1421
    %1461 = vmatprep.subr.mxu0 %v1426
    %1462 = vmatpush1.msra.mxu0 %v1425
    %1463 = vmatprep.subr.mxu0 %v1430
    %1464 = vmatpush1.msra.mxu0 %v1429
    %1465 = vmatprep.subr.mxu0 0.0
    %1466 = vmatpush1.msra.mxu0 0.0
    %1467 = vmatprep.subr.mxu0 0.0
    %1468 = vmatpush1.msra.mxu0 0.0
    %1469 = vmatprep.subr.mxu0 0.0
    %1470 = vmatpush1.msra.mxu0 0.0
    %1471 = vmatprep.subr.mxu0 0.0
    %1472 = vmatpush1.msra.mxu0 0.0
    %1473 = vmatprep.subr.mxu0 0.0
    %1474 = vmatpush1.msra.mxu0 0.0
    %1475 = vmatprep.subr.mxu0 0.0
    %1476 = vmatpush1.msra.mxu0 0.0
    %1477 = vmatprep.subr.mxu0 0.0
    %1478 = vmatpush1.msra.mxu0 0.0
    %1479 = vmatprep.subr.mxu0 0.0
    %1480 = vmatpush1.msra.mxu0 0.0
    %1481 = vmatprep.subr.mxu0 0.0
    %1482 = vmatpush1.msra.mxu0 0.0
    %1483 = vmatprep.subr.mxu0 0.0
    %1484 = vmatpush1.msra.mxu0 0.0
    %1485 = vmatprep.subr.mxu0 0.0
    %1486 = vmatpush1.msra.mxu0 0.0
    %1487 = vmatprep.subr.mxu0 0.0
    %1488 = vmatpush1.msra.mxu0 0.0
    %1489 = vmatprep.subr.mxu0 0.0
    %1490 = vmatpush1.msra.mxu0 0.0
    %1491 = vmatprep.subr.mxu0 0.0
    %1492 = vmatpush1.msra.mxu0 0.0
    %1493 = vmatprep.subr.mxu0 0.0
    %1494 = vmatpush1.msra.mxu0 0.0
    %1495 = vmatprep.subr.mxu0 0.0
    %1496 = vmatpush1.msra.mxu0 0.0
    %1497 = vmatprep.mubr.f32.mxu0 0.0
    %1498 = vmatmul.mubr.f32.gmra.mrb[0].mxu0 %v1368
    %v1499 = vpop.f32.mrb[0].mxu0
    %v1500 = vadd.f32 0.0, %v1499
    %v1501 = vpop.f32.mrb[0].mxu0
    %v1502 = vadd.f32 0.0, %v1501
    %1503 = vdwg.mxu0
    %1504 = vmatprep.subr.mxu0 %v1372
    %1505 = vmatpush1.msra.mxu0 %v1371
    %1506 = vmatprep.subr.mxu0 %v1376
    %1507 = vmatpush1.msra.mxu0 %v1375
    %1508 = vmatprep.subr.mxu0 %v1380
    %1509 = vmatpush1.msra.mxu0 %v1379
    %1510 = vmatprep.subr.mxu0 %v1384
    %1511 = vmatpush1.msra.mxu0 %v1383
    %1512 = vmatprep.subr.mxu0 %v1388
    %1513 = vmatpush1.msra.mxu0 %v1387
    %1514 = vmatprep.subr.mxu0 %v1392
    %1515 = vmatpush1.msra.mxu0 %v1391
    %1516 = vmatprep.subr.mxu0 %v1396
    %1517 = vmatpush1.msra.mxu0 %v1395
    %1518 = vmatprep.subr.mxu0 %v1400
    %1519 = vmatpush1.msra.mxu0 %v1399
    %1520 = vmatprep.subr.mxu0 %v1404
    %1521 = vmatpush1.msra.mxu0 %v1403
    %1522 = vmatprep.subr.mxu0 %v1408
    %1523 = vmatpush1.msra.mxu0 %v1407
    %1524 = vmatprep.subr.mxu0 %v1412
    %1525 = vmatpush1.msra.mxu0 %v1411
    %1526 = vmatprep.subr.mxu0 %v1416
    %1527 = vmatpush1.msra.mxu0 %v1415
    %1528 = vmatprep.subr.mxu0 %v1420
    %1529 = vmatpush1.msra.mxu0 %v1419
    %1530 = vmatprep.subr.mxu0 %v1424
    %1531 = vmatpush1.msra.mxu0 %v1423
    %1532 = vmatprep.subr.mxu0 %v1428
    %1533 = vmatpush1.msra.mxu0 %v1427
    %1534 = vmatprep.subr.mxu0 %v1432
    %1535 = vmatpush1.msra.mxu0 %v1431
    %1536 = vmatprep.subr.mxu0 0.0
    %1537 = vmatpush1.msra.mxu0 0.0
    %1538 = vmatprep.subr.mxu0 0.0
    %1539 = vmatpush1.msra.mxu0 0.0
    %1540 = vmatprep.subr.mxu0 0.0
    %1541 = vmatpush1.msra.mxu0 0.0
    %1542 = vmatprep.subr.mxu0 0.0
    %1543 = vmatpush1.msra.mxu0 0.0
    %1544 = vmatprep.subr.mxu0 0.0
    %1545 = vmatpush1.msra.mxu0 0.0
    %1546 = vmatprep.subr.mxu0 0.0
    %1547 = vmatpush1.msra.mxu0 0.0
    %1548 = vmatprep.subr.mxu0 0.0
    %1549 = vmatpush1.msra.mxu0 0.0
    %1550 = vmatprep.subr.mxu0 0.0
    %1551 = vmatpush1.msra.mxu0 0.0
    %1552 = vmatprep.subr.mxu0 0.0
    %1553 = vmatpush1.msra.mxu0 0.0
    %1554 = vmatprep.subr.mxu0 0.0
    %1555 = vmatpush1.msra.mxu0 0.0
    %1556 = vmatprep.subr.mxu0 0.0
    %1557 = vmatpush1.msra.mxu0 0.0
    %1558 = vmatprep.subr.mxu0 0.0
    %1559 = vmatpush1.msra.mxu0 0.0
    %1560 = vmatprep.subr.mxu0 0.0
    %1561 = vmatpush1.msra.mxu0 0.0
    %1562 = vmatprep.subr.mxu0 0.0
    %1563 = vmatpush1.msra.mxu0 0.0
    %1564 = vmatprep.subr.mxu0 0.0
    %1565 = vmatpush1.msra.mxu0 0.0
    %1566 = vmatprep.subr.mxu0 0.0
    %1567 = vmatpush1.msra.mxu0 0.0
    %1568 = vmatprep.mubr.f32.mxu0 0.0
    %1569 = vmatmul.mubr.f32.gmra.mrb[0].mxu0 %v1368
    %v1570 = vpop.f32.mrb[0].mxu0
    %v1571 = vadd.f32 0.0, %v1570
    %v1572 = vpop.f32.mrb[0].mxu0
    %v1573 = vadd.f32 0.0, %v1572
    %1574 = vdwg.mxu0
    %v1575 = vadd.f32 %v1364, %v1500
    %v1576 = vadd.f32 %v1365, %v1502
    %v1577 = vadd.f32 %v1366, %v1571
    %v1578 = vadd.f32 %v1367, %v1573
    %v1579 = vld [vmem:[#allocation3] sm:$0xff]
    %v1580 = vxor.u32 %v1575, 2147483648
    %v1581 = vxor.u32 %v1576, 2147483648
    %v1582 = vxor.u32 %v1577, 2147483648
    %v1583 = vmul.f32 %v1580, 1.442695
    %v1584 = vpow.pop %v1583
    %v1585 = vmul.f32 %v1581, 1.442695
    %v1586 = vpow.pop %v1585
    %v1587 = vmul.f32 %v1582, 1.442695
    %v1588 = vpow.pop %v1587
    %v1589 = vadd.f32 %v1584, 1.0
    %v1590 = vadd.f32 %v1586, 1.0
    %v1591 = vadd.f32 %v1588, 1.0
    %v1592 = vrcp.pop %v1589
    %v1593 = vmul.f32 1.0, %v1592
    %v1594 = vrcp.pop %v1590
    %v1595 = vmul.f32 1.0, %v1594
    %v1596 = vrcp.pop %v1591
    %v1597 = vmul.f32 1.0, %v1596
    %v1598 = vtanh.pop %v1578
    %v1599 = vmul.f32 %v1595, %v1579
    %v1600 = vmul.f32 %v1593, %v1598
    %v1601 = vadd.f32 %v1599, %v1600
    %v1602 = vtanh.pop %v1601
    %v1603 = vmul.f32 %v1597, %v1602
    %1604 = vst [vmem:[#allocation3] sm:$0xff] %v1601
    %1605 = vst [vmem:[#allocation2] sm:$0xff] %v1603
    %v1606 = vld [vmem:[#allocation2] sm:$0xff]
    %v1607 = vld [vmem:[#allocation2 + $0x8] sm:$0xff]
    %v1608 = vld [vmem:[#allocation8] sm:$0xff]
    %v1609 = vld [vmem:[#allocation8 + $0x8] sm:$0xff]
    %v1610 = vld [vmem:[#allocation8 + $0x10] sm:$0xff]
    %v1611 = vld [vmem:[#allocation8 + $0x18] sm:$0xff]
    %v1612 = vld [vmem:[#allocation8 + $0x20] sm:$0xff]
    %v1613 = vld [vmem:[#allocation8 + $0x28] sm:$0xff]
    %v1614 = vld [vmem:[#allocation8 + $0x30] sm:$0xff]
    %v1615 = vld [vmem:[#allocation8 + $0x38] sm:$0xff]
    %v1616 = vld [vmem:[#allocation8 + $0x40] sm:$0xff]
    %v1617 = vld [vmem:[#allocation8 + $0x48] sm:$0xff]
    %v1618 = vld [vmem:[#allocation8 + $0x50] sm:$0xff]
    %v1619 = vld [vmem:[#allocation8 + $0x58] sm:$0xff]
    %v1620 = vld [vmem:[#allocation8 + $0x60] sm:$0xff]
    %v1621 = vld [vmem:[#allocation8 + $0x68] sm:$0xff]
    %v1622 = vld [vmem:[#allocation8 + $0x70] sm:$0xff]
    %v1623 = vld [vmem:[#allocation8 + $0x78] sm:$0xff]
    %v1624 = vld [vmem:[#allocation8 + $0x80] sm:$0xff]
    %v1625 = vld [vmem:[#allocation8 + $0x88] sm:$0xff]
    %v1626 = vld [vmem:[#allocation8 + $0x90] sm:$0xff]
    %v1627 = vld [vmem:[#allocation8 + $0x98] sm:$0xff]
    %v1628 = vld [vmem:[#allocation8 + $0xa0] sm:$0xff]
    %v1629 = vld [vmem:[#allocation8 + $0xa8] sm:$0xff]
    %v1630 = vld [vmem:[#allocation8 + $0xb0] sm:$0xff]
    %v1631 = vld [vmem:[#allocation8 + $0xb8] sm:$0xff]
    %v1632 = vld [vmem:[#allocation8 + $0xc0] sm:$0xff]
    %v1633 = vld [vmem:[#allocation8 + $0xc8] sm:$0xff]
    %v1634 = vld [vmem:[#allocation8 + $0xd0] sm:$0xff]
    %v1635 = vld [vmem:[#allocation8 + $0xd8] sm:$0xff]
    %v1636 = vld [vmem:[#allocation8 + $0xe0] sm:$0xff]
    %v1637 = vld [vmem:[#allocation8 + $0xe8] sm:$0xff]
    %v1638 = vld [vmem:[#allocation8 + $0xf0] sm:$0xff]
    %v1639 = vld [vmem:[#allocation8 + $0xf8] sm:$0xff]
    %v1640 = vld [vmem:[#allocation8 + $0x100] sm:$0xff]
    %v1641 = vld [vmem:[#allocation8 + $0x108] sm:$0xff]
    %v1642 = vld [vmem:[#allocation8 + $0x110] sm:$0xff]
    %v1643 = vld [vmem:[#allocation8 + $0x118] sm:$0xff]
    %v1644 = vld [vmem:[#allocation8 + $0x120] sm:$0xff]
    %v1645 = vld [vmem:[#allocation8 + $0x128] sm:$0xff]
    %v1646 = vld [vmem:[#allocation8 + $0x130] sm:$0xff]
    %v1647 = vld [vmem:[#allocation8 + $0x138] sm:$0xff]
    %v1648 = vld [vmem:[#allocation8 + $0x140] sm:$0xff]
    %v1649 = vld [vmem:[#allocation8 + $0x148] sm:$0xff]
    %v1650 = vld [vmem:[#allocation8 + $0x150] sm:$0xff]
    %v1651 = vld [vmem:[#allocation8 + $0x158] sm:$0xff]
    %v1652 = vld [vmem:[#allocation8 + $0x160] sm:$0xff]
    %v1653 = vld [vmem:[#allocation8 + $0x168] sm:$0xff]
    %v1654 = vld [vmem:[#allocation8 + $0x170] sm:$0xff]
    %v1655 = vld [vmem:[#allocation8 + $0x178] sm:$0xff]
    %v1656 = vld [vmem:[#allocation8 + $0x180] sm:$0xff]
    %v1657 = vld [vmem:[#allocation8 + $0x188] sm:$0xff]
    %v1658 = vld [vmem:[#allocation8 + $0x190] sm:$0xff]
    %v1659 = vld [vmem:[#allocation8 + $0x198] sm:$0xff]
    %v1660 = vld [vmem:[#allocation8 + $0x1a0] sm:$0xff]
    %v1661 = vld [vmem:[#allocation8 + $0x1a8] sm:$0xff]
    %v1662 = vld [vmem:[#allocation8 + $0x1b0] sm:$0xff]
    %v1663 = vld [vmem:[#allocation8 + $0x1b8] sm:$0xff]
    %v1664 = vld [vmem:[#allocation8 + $0x1c0] sm:$0xff]
    %v1665 = vld [vmem:[#allocation8 + $0x1c8] sm:$0xff]
    %v1666 = vld [vmem:[#allocation8 + $0x1d0] sm:$0xff]
    %v1667 = vld [vmem:[#allocation8 + $0x1d8] sm:$0xff]
    %v1668 = vld [vmem:[#allocation8 + $0x1e0] sm:$0xff]
    %v1669 = vld [vmem:[#allocation8 + $0x1e8] sm:$0xff]
    %v1670 = vld [vmem:[#allocation8 + $0x1f0] sm:$0xff]
    %v1671 = vld [vmem:[#allocation8 + $0x1f8] sm:$0xff]
    %v1672 = vld [vmem:[#allocation8 + $0x200] sm:$0xff]
    %v1673 = vld [vmem:[#allocation8 + $0x208] sm:$0xff]
    %v1674 = vld [vmem:[#allocation8 + $0x210] sm:$0xff]
    %v1675 = vld [vmem:[#allocation8 + $0x218] sm:$0xff]
    %v1676 = vld [vmem:[#allocation8 + $0x220] sm:$0xff]
    %v1677 = vld [vmem:[#allocation8 + $0x228] sm:$0xff]
    %v1678 = vld [vmem:[#allocation8 + $0x230] sm:$0xff]
    %v1679 = vld [vmem:[#allocation8 + $0x238] sm:$0xff]
    %v1680 = vld [vmem:[#allocation8 + $0x240] sm:$0xff]
    %v1681 = vld [vmem:[#allocation8 + $0x248] sm:$0xff]
    %v1682 = vld [vmem:[#allocation8 + $0x250] sm:$0xff]
    %v1683 = vld [vmem:[#allocation8 + $0x258] sm:$0xff]
    %v1684 = vld [vmem:[#allocation8 + $0x260] sm:$0xff]
    %v1685 = vld [vmem:[#allocation8 + $0x268] sm:$0xff]
    %v1686 = vld [vmem:[#allocation8 + $0x270] sm:$0xff]
    %v1687 = vld [vmem:[#allocation8 + $0x278] sm:$0xff]
    %v1688 = vld [vmem:[#allocation8 + $0x280] sm:$0xff]
    %v1689 = vld [vmem:[#allocation8 + $0x288] sm:$0xff]
    %v1690 = vld [vmem:[#allocation8 + $0x290] sm:$0xff]
    %v1691 = vld [vmem:[#allocation8 + $0x298] sm:$0xff]
    %v1692 = vld [vmem:[#allocation8 + $0x2a0] sm:$0xff]
    %v1693 = vld [vmem:[#allocation8 + $0x2a8] sm:$0xff]
    %v1694 = vld [vmem:[#allocation8 + $0x2b0] sm:$0xff]
    %v1695 = vld [vmem:[#allocation8 + $0x2b8] sm:$0xff]
    %v1696 = vld [vmem:[#allocation8 + $0x2c0] sm:$0xff]
    %v1697 = vld [vmem:[#allocation8 + $0x2c8] sm:$0xff]
    %v1698 = vld [vmem:[#allocation8 + $0x2d0] sm:$0xff]
    %v1699 = vld [vmem:[#allocation8 + $0x2d8] sm:$0xff]
    %v1700 = vld [vmem:[#allocation8 + $0x2e0] sm:$0xff]
    %v1701 = vld [vmem:[#allocation8 + $0x2e8] sm:$0xff]
    %v1702 = vld [vmem:[#allocation8 + $0x2f0] sm:$0xff]
    %v1703 = vld [vmem:[#allocation8 + $0x2f8] sm:$0xff]
    %v1704 = vld [vmem:[#allocation8 + $0x300] sm:$0xff]
    %v1705 = vld [vmem:[#allocation8 + $0x308] sm:$0xff]
    %v1706 = vld [vmem:[#allocation8 + $0x310] sm:$0xff]
    %v1707 = vld [vmem:[#allocation8 + $0x318] sm:$0xff]
    %v1708 = vld [vmem:[#allocation8 + $0x320] sm:$0xff]
    %v1709 = vld [vmem:[#allocation8 + $0x328] sm:$0xff]
    %v1710 = vld [vmem:[#allocation8 + $0x330] sm:$0xff]
    %v1711 = vld [vmem:[#allocation8 + $0x338] sm:$0xff]
    %v1712 = vld [vmem:[#allocation8 + $0x340] sm:$0xff]
    %v1713 = vld [vmem:[#allocation8 + $0x348] sm:$0xff]
    %v1714 = vld [vmem:[#allocation8 + $0x350] sm:$0xff]
    %v1715 = vld [vmem:[#allocation8 + $0x358] sm:$0xff]
    %v1716 = vld [vmem:[#allocation8 + $0x360] sm:$0xff]
    %v1717 = vld [vmem:[#allocation8 + $0x368] sm:$0xff]
    %v1718 = vld [vmem:[#allocation8 + $0x370] sm:$0xff]
    %v1719 = vld [vmem:[#allocation8 + $0x378] sm:$0xff]
    %v1720 = vld [vmem:[#allocation8 + $0x380] sm:$0xff]
    %v1721 = vld [vmem:[#allocation8 + $0x388] sm:$0xff]
    %v1722 = vld [vmem:[#allocation8 + $0x390] sm:$0xff]
    %v1723 = vld [vmem:[#allocation8 + $0x398] sm:$0xff]
    %v1724 = vld [vmem:[#allocation8 + $0x3a0] sm:$0xff]
    %v1725 = vld [vmem:[#allocation8 + $0x3a8] sm:$0xff]
    %v1726 = vld [vmem:[#allocation8 + $0x3b0] sm:$0xff]
    %v1727 = vld [vmem:[#allocation8 + $0x3b8] sm:$0xff]
    %v1728 = vld [vmem:[#allocation8 + $0x3c0] sm:$0xff]
    %v1729 = vld [vmem:[#allocation8 + $0x3c8] sm:$0xff]
    %v1730 = vld [vmem:[#allocation8 + $0x3d0] sm:$0xff]
    %v1731 = vld [vmem:[#allocation8 + $0x3d8] sm:$0xff]
    %v1732 = vld [vmem:[#allocation8 + $0x3e0] sm:$0xff]
    %v1733 = vld [vmem:[#allocation8 + $0x3e8] sm:$0xff]
    %v1734 = vld [vmem:[#allocation8 + $0x3f0] sm:$0xff]
    %v1735 = vld [vmem:[#allocation8 + $0x3f8] sm:$0xff]
    %v1736 = vld [vmem:[%s5] sm:$0xf]
    %v1738 = vlaneseq
    %v1739 = vshrl.u32 %v1738, 7
    %v1740 = vsub.s32 0, %v1739
    %v1741 = vrot.slane %v1736, %v1740
    %v1742 = vlaneseq
    %v1743 = vshrl.u32 %v1742, 7
    %v1744 = vsub.s32 1, %v1743
    %v1745 = vrot.slane %v1736, %v1744
    %v1746 = vlaneseq
    %v1747 = vshrl.u32 %v1746, 7
    %v1748 = vsub.s32 2, %v1747
    %v1749 = vrot.slane %v1736, %v1748
    %v1750 = vlaneseq
    %v1751 = vshrl.u32 %v1750, 7
    %v1752 = vsub.s32 3, %v1751
    %v1753 = vrot.slane %v1736, %v1752
    %1758 = vmatprep.subr.mxu0 %v1609
    %1759 = vmatpush1.msra.mxu0 %v1608
    %1760 = vmatprep.subr.mxu0 %v1613
    %1761 = vmatpush1.msra.mxu0 %v1612
    %1762 = vmatprep.subr.mxu0 %v1617
    %1763 = vmatpush1.msra.mxu0 %v1616
    %1764 = vmatprep.subr.mxu0 %v1621
    %1765 = vmatpush1.msra.mxu0 %v1620
    %1766 = vmatprep.subr.mxu0 %v1625
    %1767 = vmatpush1.msra.mxu0 %v1624
    %1768 = vmatprep.subr.mxu0 %v1629
    %1769 = vmatpush1.msra.mxu0 %v1628
    %1770 = vmatprep.subr.mxu0 %v1633
    %1771 = vmatpush1.msra.mxu0 %v1632
    %1772 = vmatprep.subr.mxu0 %v1637
    %1773 = vmatpush1.msra.mxu0 %v1636
    %1774 = vmatprep.subr.mxu0 %v1641
    %1775 = vmatpush1.msra.mxu0 %v1640
    %1776 = vmatprep.subr.mxu0 %v1645
    %1777 = vmatpush1.msra.mxu0 %v1644
    %1778 = vmatprep.subr.mxu0 %v1649
    %1779 = vmatpush1.msra.mxu0 %v1648
    %1780 = vmatprep.subr.mxu0 %v1653
    %1781 = vmatpush1.msra.mxu0 %v1652
    %1782 = vmatprep.subr.mxu0 %v1657
    %1783 = vmatpush1.msra.mxu0 %v1656
    %1784 = vmatprep.subr.mxu0 %v1661
    %1785 = vmatpush1.msra.mxu0 %v1660
    %1786 = vmatprep.subr.mxu0 %v1665
    %1787 = vmatpush1.msra.mxu0 %v1664
    %1788 = vmatprep.subr.mxu0 %v1669
    %1789 = vmatpush1.msra.mxu0 %v1668
    %1790 = vmatprep.subr.mxu0 %v1673
    %1791 = vmatpush1.msra.mxu0 %v1672
    %1792 = vmatprep.subr.mxu0 %v1677
    %1793 = vmatpush1.msra.mxu0 %v1676
    %1794 = vmatprep.subr.mxu0 %v1681
    %1795 = vmatpush1.msra.mxu0 %v1680
    %1796 = vmatprep.subr.mxu0 %v1685
    %1797 = vmatpush1.msra.mxu0 %v1684
    %1798 = vmatprep.subr.mxu0 %v1689
    %1799 = vmatpush1.msra.mxu0 %v1688
    %1800 = vmatprep.subr.mxu0 %v1693
    %1801 = vmatpush1.msra.mxu0 %v1692
    %1802 = vmatprep.subr.mxu0 %v1697
    %1803 = vmatpush1.msra.mxu0 %v1696
    %1804 = vmatprep.subr.mxu0 %v1701
    %1805 = vmatpush1.msra.mxu0 %v1700
    %1806 = vmatprep.subr.mxu0 %v1705
    %1807 = vmatpush1.msra.mxu0 %v1704
    %1808 = vmatprep.subr.mxu0 %v1709
    %1809 = vmatpush1.msra.mxu0 %v1708
    %1810 = vmatprep.subr.mxu0 %v1713
    %1811 = vmatpush1.msra.mxu0 %v1712
    %1812 = vmatprep.subr.mxu0 %v1717
    %1813 = vmatpush1.msra.mxu0 %v1716
    %1814 = vmatprep.subr.mxu0 %v1721
    %1815 = vmatpush1.msra.mxu0 %v1720
    %1816 = vmatprep.subr.mxu0 %v1725
    %1817 = vmatpush1.msra.mxu0 %v1724
    %1818 = vmatprep.subr.mxu0 %v1729
    %1819 = vmatpush1.msra.mxu0 %v1728
    %1820 = vmatprep.subr.mxu0 %v1733
    %1821 = vmatpush1.msra.mxu0 %v1732
    %1822 = vmatprep.mubr.f32.mxu0 %v1607
    %1823 = vmatmul.mubr.f32.gmra.mrb[0].mxu0 %v1606
    %v1824 = vpop.f32.mrb[0].mxu0
    %v1825 = vadd.f32 %v1741, %v1824
    %v1826 = vpop.f32.mrb[0].mxu0
    %v1827 = vadd.f32 %v1745, %v1826
    %1828 = vdwg.mxu0
    %1829 = vmatprep.subr.mxu0 %v1611
    %1830 = vmatpush1.msra.mxu0 %v1610
    %1831 = vmatprep.subr.mxu0 %v1615
    %1832 = vmatpush1.msra.mxu0 %v1614
    %1833 = vmatprep.subr.mxu0 %v1619
    %1834 = vmatpush1.msra.mxu0 %v1618
    %1835 = vmatprep.subr.mxu0 %v1623
    %1836 = vmatpush1.msra.mxu0 %v1622
    %1837 = vmatprep.subr.mxu0 %v1627
    %1838 = vmatpush1.msra.mxu0 %v1626
    %1839 = vmatprep.subr.mxu0 %v1631
    %1840 = vmatpush1.msra.mxu0 %v1630
    %1841 = vmatprep.subr.mxu0 %v1635
    %1842 = vmatpush1.msra.mxu0 %v1634
    %1843 = vmatprep.subr.mxu0 %v1639
    %1844 = vmatpush1.msra.mxu0 %v1638
    %1845 = vmatprep.subr.mxu0 %v1643
    %1846 = vmatpush1.msra.mxu0 %v1642
    %1847 = vmatprep.subr.mxu0 %v1647
    %1848 = vmatpush1.msra.mxu0 %v1646
    %1849 = vmatprep.subr.mxu0 %v1651
    %1850 = vmatpush1.msra.mxu0 %v1650
    %1851 = vmatprep.subr.mxu0 %v1655
    %1852 = vmatpush1.msra.mxu0 %v1654
    %1853 = vmatprep.subr.mxu0 %v1659
    %1854 = vmatpush1.msra.mxu0 %v1658
    %1855 = vmatprep.subr.mxu0 %v1663
    %1856 = vmatpush1.msra.mxu0 %v1662
    %1857 = vmatprep.subr.mxu0 %v1667
    %1858 = vmatpush1.msra.mxu0 %v1666
    %1859 = vmatprep.subr.mxu0 %v1671
    %1860 = vmatpush1.msra.mxu0 %v1670
    %1861 = vmatprep.subr.mxu0 %v1675
    %1862 = vmatpush1.msra.mxu0 %v1674
    %1863 = vmatprep.subr.mxu0 %v1679
    %1864 = vmatpush1.msra.mxu0 %v1678
    %1865 = vmatprep.subr.mxu0 %v1683
    %1866 = vmatpush1.msra.mxu0 %v1682
    %1867 = vmatprep.subr.mxu0 %v1687
    %1868 = vmatpush1.msra.mxu0 %v1686
    %1869 = vmatprep.subr.mxu0 %v1691
    %1870 = vmatpush1.msra.mxu0 %v1690
    %1871 = vmatprep.subr.mxu0 %v1695
    %1872 = vmatpush1.msra.mxu0 %v1694
    %1873 = vmatprep.subr.mxu0 %v1699
    %1874 = vmatpush1.msra.mxu0 %v1698
    %1875 = vmatprep.subr.mxu0 %v1703
    %1876 = vmatpush1.msra.mxu0 %v1702
    %1877 = vmatprep.subr.mxu0 %v1707
    %1878 = vmatpush1.msra.mxu0 %v1706
    %1879 = vmatprep.subr.mxu0 %v1711
    %1880 = vmatpush1.msra.mxu0 %v1710
    %1881 = vmatprep.subr.mxu0 %v1715
    %1882 = vmatpush1.msra.mxu0 %v1714
    %1883 = vmatprep.subr.mxu0 %v1719
    %1884 = vmatpush1.msra.mxu0 %v1718
    %1885 = vmatprep.subr.mxu0 %v1723
    %1886 = vmatpush1.msra.mxu0 %v1722
    %1887 = vmatprep.subr.mxu0 %v1727
    %1888 = vmatpush1.msra.mxu0 %v1726
    %1889 = vmatprep.subr.mxu0 %v1731
    %1890 = vmatpush1.msra.mxu0 %v1730
    %1891 = vmatprep.subr.mxu0 %v1735
    %1892 = vmatpush1.msra.mxu0 %v1734
    %1893 = vmatprep.mubr.f32.mxu0 %v1607
    %1894 = vmatmul.mubr.f32.gmra.mrb[0].mxu0 %v1606
    %v1895 = vpop.f32.mrb[0].mxu0
    %v1896 = vadd.f32 %v1749, %v1895
    %v1897 = vpop.f32.mrb[0].mxu0
    %v1898 = vadd.f32 %v1753, %v1897
    %1899 = vdwg.mxu0
    %v1900 = vld [vmem:[#allocation4] sm:$0xff]
    %v1901 = vxor.u32 %v1825, 2147483648
    %v1902 = vxor.u32 %v1827, 2147483648
    %v1903 = vxor.u32 %v1896, 2147483648
    %v1904 = vmul.f32 %v1901, 1.442695
    %v1905 = vpow.pop %v1904
    %v1906 = vmul.f32 %v1902, 1.442695
    %v1907 = vpow.pop %v1906
    %v1908 = vmul.f32 %v1903, 1.442695
    %v1909 = vpow.pop %v1908
    %v1910 = vadd.f32 %v1905, 1.0
    %v1911 = vadd.f32 %v1907, 1.0
    %v1912 = vadd.f32 %v1909, 1.0
    %v1913 = vrcp.pop %v1910
    %v1914 = vmul.f32 1.0, %v1913
    %v1915 = vrcp.pop %v1911
    %v1916 = vmul.f32 1.0, %v1915
    %v1917 = vrcp.pop %v1912
    %v1918 = vmul.f32 1.0, %v1917
    %v1919 = vtanh.pop %v1898
    %v1920 = vmul.f32 %v1916, %v1900
    %v1921 = vmul.f32 %v1914, %v1919
    %v1922 = vadd.f32 %v1920, %v1921
    %v1923 = vtanh.pop %v1922
    %v1924 = vmul.f32 %v1918, %v1923
    %1925 = vst [vmem:[#allocation4] sm:$0xff] %v1922
    %1926 = vst [vmem:[#allocation2 + $0x8] sm:$0xff] %v1924
    %vm1927 = vcmp.eq.s32.totalorder %v77, 3
    %v1928 = vsel %vm1927, %v75, 0.0
    %v1929 = vsel %vm80, %v1928, 0.0
    %1930 = vadd.xlane.f32.xlu0 %v1929
    %v1931 = vpop.xlane.xlu0 %1930
    %v1932 = vld [vmem:[%s1] sm:$0xf]
    %v1934 = vlaneseq
    %v1935 = vshrl.u32 %v1934, 7
    %v1936 = vsub.s32 0, %v1935
    %v1937 = vrot.slane %v1932, %v1936
    %v1938 = vlaneseq
    %v1939 = vshrl.u32 %v1938, 7
    %v1940 = vsub.s32 1, %v1939
    %v1941 = vrot.slane %v1932, %v1940
    %v1942 = vlaneseq
    %v1943 = vshrl.u32 %v1942, 7
    %v1944 = vsub.s32 2, %v1943
    %v1945 = vrot.slane %v1932, %v1944
    %v1946 = vlaneseq
    %v1947 = vshrl.u32 %v1946, 7
    %v1948 = vsub.s32 3, %v1947
    %v1949 = vrot.slane %v1932, %v1948
    %v1954 = vmul.f32 %v1931, %v1937
    %v1955 = vmul.f32 %v1931, %v1941
    %v1956 = vmul.f32 %v1931, %v1945
    %v1957 = vmul.f32 %v1931, %v1949
    %v1958 = vld [vmem:[%s2] sm:$0xf]
    %v1960 = vlaneseq
    %v1961 = vshrl.u32 %v1960, 7
    %v1962 = vsub.s32 0, %v1961
    %v1963 = vrot.slane %v1958, %v1962
    %v1964 = vlaneseq
    %v1965 = vshrl.u32 %v1964, 7
    %v1966 = vsub.s32 1, %v1965
    %v1967 = vrot.slane %v1958, %v1966
    %v1968 = vlaneseq
    %v1969 = vshrl.u32 %v1968, 7
    %v1970 = vsub.s32 2, %v1969
    %v1971 = vrot.slane %v1958, %v1970
    %v1972 = vlaneseq
    %v1973 = vshrl.u32 %v1972, 7
    %v1974 = vsub.s32 3, %v1973
    %v1975 = vrot.slane %v1958, %v1974
    %v1980 = vadd.f32 %v1954, %v1963
    %v1981 = vadd.f32 %v1955, %v1967
    %v1982 = vadd.f32 %v1956, %v1971
    %v1983 = vadd.f32 %v1957, %v1975
    %v1984 = vld [vmem:[#allocation2] sm:$0xff]
    %v1985 = vld [vmem:[#allocation6] sm:$0xff]
    %v1986 = vld [vmem:[#allocation6 + $0x8] sm:$0xff]
    %v1987 = vld [vmem:[#allocation6 + $0x10] sm:$0xff]
    %v1988 = vld [vmem:[#allocation6 + $0x18] sm:$0xff]
    %v1989 = vld [vmem:[#allocation6 + $0x20] sm:$0xff]
    %v1990 = vld [vmem:[#allocation6 + $0x28] sm:$0xff]
    %v1991 = vld [vmem:[#allocation6 + $0x30] sm:$0xff]
    %v1992 = vld [vmem:[#allocation6 + $0x38] sm:$0xff]
    %v1993 = vld [vmem:[#allocation6 + $0x40] sm:$0xff]
    %v1994 = vld [vmem:[#allocation6 + $0x48] sm:$0xff]
    %v1995 = vld [vmem:[#allocation6 + $0x50] sm:$0xff]
    %v1996 = vld [vmem:[#allocation6 + $0x58] sm:$0xff]
    %v1997 = vld [vmem:[#allocation6 + $0x60] sm:$0xff]
    %v1998 = vld [vmem:[#allocation6 + $0x68] sm:$0xff]
    %v1999 = vld [vmem:[#allocation6 + $0x70] sm:$0xff]
    %v2000 = vld [vmem:[#allocation6 + $0x78] sm:$0xff]
    %v2001 = vld [vmem:[#allocation6 + $0x80] sm:$0xff]
    %v2002 = vld [vmem:[#allocation6 + $0x88] sm:$0xff]
    %v2003 = vld [vmem:[#allocation6 + $0x90] sm:$0xff]
    %v2004 = vld [vmem:[#allocation6 + $0x98] sm:$0xff]
    %v2005 = vld [vmem:[#allocation6 + $0xa0] sm:$0xff]
    %v2006 = vld [vmem:[#allocation6 + $0xa8] sm:$0xff]
    %v2007 = vld [vmem:[#allocation6 + $0xb0] sm:$0xff]
    %v2008 = vld [vmem:[#allocation6 + $0xb8] sm:$0xff]
    %v2009 = vld [vmem:[#allocation6 + $0xc0] sm:$0xff]
    %v2010 = vld [vmem:[#allocation6 + $0xc8] sm:$0xff]
    %v2011 = vld [vmem:[#allocation6 + $0xd0] sm:$0xff]
    %v2012 = vld [vmem:[#allocation6 + $0xd8] sm:$0xff]
    %v2013 = vld [vmem:[#allocation6 + $0xe0] sm:$0xff]
    %v2014 = vld [vmem:[#allocation6 + $0xe8] sm:$0xff]
    %v2015 = vld [vmem:[#allocation6 + $0xf0] sm:$0xff]
    %v2016 = vld [vmem:[#allocation6 + $0xf8] sm:$0xff]
    %v2017 = vld [vmem:[#allocation6 + $0x100] sm:$0xff]
    %v2018 = vld [vmem:[#allocation6 + $0x108] sm:$0xff]
    %v2019 = vld [vmem:[#allocation6 + $0x110] sm:$0xff]
    %v2020 = vld [vmem:[#allocation6 + $0x118] sm:$0xff]
    %v2021 = vld [vmem:[#allocation6 + $0x120] sm:$0xff]
    %v2022 = vld [vmem:[#allocation6 + $0x128] sm:$0xff]
    %v2023 = vld [vmem:[#allocation6 + $0x130] sm:$0xff]
    %v2024 = vld [vmem:[#allocation6 + $0x138] sm:$0xff]
    %v2025 = vld [vmem:[#allocation6 + $0x140] sm:$0xff]
    %v2026 = vld [vmem:[#allocation6 + $0x148] sm:$0xff]
    %v2027 = vld [vmem:[#allocation6 + $0x150] sm:$0xff]
    %v2028 = vld [vmem:[#allocation6 + $0x158] sm:$0xff]
    %v2029 = vld [vmem:[#allocation6 + $0x160] sm:$0xff]
    %v2030 = vld [vmem:[#allocation6 + $0x168] sm:$0xff]
    %v2031 = vld [vmem:[#allocation6 + $0x170] sm:$0xff]
    %v2032 = vld [vmem:[#allocation6 + $0x178] sm:$0xff]
    %v2033 = vld [vmem:[#allocation6 + $0x180] sm:$0xff]
    %v2034 = vld [vmem:[#allocation6 + $0x188] sm:$0xff]
    %v2035 = vld [vmem:[#allocation6 + $0x190] sm:$0xff]
    %v2036 = vld [vmem:[#allocation6 + $0x198] sm:$0xff]
    %v2037 = vld [vmem:[#allocation6 + $0x1a0] sm:$0xff]
    %v2038 = vld [vmem:[#allocation6 + $0x1a8] sm:$0xff]
    %v2039 = vld [vmem:[#allocation6 + $0x1b0] sm:$0xff]
    %v2040 = vld [vmem:[#allocation6 + $0x1b8] sm:$0xff]
    %v2041 = vld [vmem:[#allocation6 + $0x1c0] sm:$0xff]
    %v2042 = vld [vmem:[#allocation6 + $0x1c8] sm:$0xff]
    %v2043 = vld [vmem:[#allocation6 + $0x1d0] sm:$0xff]
    %v2044 = vld [vmem:[#allocation6 + $0x1d8] sm:$0xff]
    %v2045 = vld [vmem:[#allocation6 + $0x1e0] sm:$0xff]
    %v2046 = vld [vmem:[#allocation6 + $0x1e8] sm:$0xff]
    %v2047 = vld [vmem:[#allocation6 + $0x1f0] sm:$0xff]
    %v2048 = vld [vmem:[#allocation6 + $0x1f8] sm:$0xff]
    %2049 = vmatprep.subr.mxu0 %v1986
    %2050 = vmatpush1.msra.mxu0 %v1985
    %2051 = vmatprep.subr.mxu0 %v1990
    %2052 = vmatpush1.msra.mxu0 %v1989
    %2053 = vmatprep.subr.mxu0 %v1994
    %2054 = vmatpush1.msra.mxu0 %v1993
    %2055 = vmatprep.subr.mxu0 %v1998
    %2056 = vmatpush1.msra.mxu0 %v1997
    %2057 = vmatprep.subr.mxu0 %v2002
    %2058 = vmatpush1.msra.mxu0 %v2001
    %2059 = vmatprep.subr.mxu0 %v2006
    %2060 = vmatpush1.msra.mxu0 %v2005
    %2061 = vmatprep.subr.mxu0 %v2010
    %2062 = vmatpush1.msra.mxu0 %v2009
    %2063 = vmatprep.subr.mxu0 %v2014
    %2064 = vmatpush1.msra.mxu0 %v2013
    %2065 = vmatprep.subr.mxu0 %v2018
    %2066 = vmatpush1.msra.mxu0 %v2017
    %2067 = vmatprep.subr.mxu0 %v2022
    %2068 = vmatpush1.msra.mxu0 %v2021
    %2069 = vmatprep.subr.mxu0 %v2026
    %2070 = vmatpush1.msra.mxu0 %v2025
    %2071 = vmatprep.subr.mxu0 %v2030
    %2072 = vmatpush1.msra.mxu0 %v2029
    %2073 = vmatprep.subr.mxu0 %v2034
    %2074 = vmatpush1.msra.mxu0 %v2033
    %2075 = vmatprep.subr.mxu0 %v2038
    %2076 = vmatpush1.msra.mxu0 %v2037
    %2077 = vmatprep.subr.mxu0 %v2042
    %2078 = vmatpush1.msra.mxu0 %v2041
    %2079 = vmatprep.subr.mxu0 %v2046
    %2080 = vmatpush1.msra.mxu0 %v2045
    %2081 = vmatprep.subr.mxu0 0.0
    %2082 = vmatpush1.msra.mxu0 0.0
    %2083 = vmatprep.subr.mxu0 0.0
    %2084 = vmatpush1.msra.mxu0 0.0
    %2085 = vmatprep.subr.mxu0 0.0
    %2086 = vmatpush1.msra.mxu0 0.0
    %2087 = vmatprep.subr.mxu0 0.0
    %2088 = vmatpush1.msra.mxu0 0.0
    %2089 = vmatprep.subr.mxu0 0.0
    %2090 = vmatpush1.msra.mxu0 0.0
    %2091 = vmatprep.subr.mxu0 0.0
    %2092 = vmatpush1.msra.mxu0 0.0
    %2093 = vmatprep.subr.mxu0 0.0
    %2094 = vmatpush1.msra.mxu0 0.0
    %2095 = vmatprep.subr.mxu0 0.0
    %2096 = vmatpush1.msra.mxu0 0.0
    %2097 = vmatprep.subr.mxu0 0.0
    %2098 = vmatpush1.msra.mxu0 0.0
    %2099 = vmatprep.subr.mxu0 0.0
    %2100 = vmatpush1.msra.mxu0 0.0
    %2101 = vmatprep.subr.mxu0 0.0
    %2102 = vmatpush1.msra.mxu0 0.0
    %2103 = vmatprep.subr.mxu0 0.0
    %2104 = vmatpush1.msra.mxu0 0.0
    %2105 = vmatprep.subr.mxu0 0.0
    %2106 = vmatpush1.msra.mxu0 0.0
    %2107 = vmatprep.subr.mxu0 0.0
    %2108 = vmatpush1.msra.mxu0 0.0
    %2109 = vmatprep.subr.mxu0 0.0
    %2110 = vmatpush1.msra.mxu0 0.0
    %2111 = vmatprep.subr.mxu0 0.0
    %2112 = vmatpush1.msra.mxu0 0.0
    %2113 = vmatprep.mubr.f32.mxu0 0.0
    %2114 = vmatmul.mubr.f32.gmra.mrb[0].mxu0 %v1984
    %v2115 = vpop.f32.mrb[0].mxu0
    %v2116 = vadd.f32 0.0, %v2115
    %v2117 = vpop.f32.mrb[0].mxu0
    %v2118 = vadd.f32 0.0, %v2117
    %2119 = vdwg.mxu0
    %2120 = vmatprep.subr.mxu0 %v1988
    %2121 = vmatpush1.msra.mxu0 %v1987
    %2122 = vmatprep.subr.mxu0 %v1992
    %2123 = vmatpush1.msra.mxu0 %v1991
    %2124 = vmatprep.subr.mxu0 %v1996
    %2125 = vmatpush1.msra.mxu0 %v1995
    %2126 = vmatprep.subr.mxu0 %v2000
    %2127 = vmatpush1.msra.mxu0 %v1999
    %2128 = vmatprep.subr.mxu0 %v2004
    %2129 = vmatpush1.msra.mxu0 %v2003
    %2130 = vmatprep.subr.mxu0 %v2008
    %2131 = vmatpush1.msra.mxu0 %v2007
    %2132 = vmatprep.subr.mxu0 %v2012
    %2133 = vmatpush1.msra.mxu0 %v2011
    %2134 = vmatprep.subr.mxu0 %v2016
    %2135 = vmatpush1.msra.mxu0 %v2015
    %2136 = vmatprep.subr.mxu0 %v2020
    %2137 = vmatpush1.msra.mxu0 %v2019
    %2138 = vmatprep.subr.mxu0 %v2024
    %2139 = vmatpush1.msra.mxu0 %v2023
    %2140 = vmatprep.subr.mxu0 %v2028
    %2141 = vmatpush1.msra.mxu0 %v2027
    %2142 = vmatprep.subr.mxu0 %v2032
    %2143 = vmatpush1.msra.mxu0 %v2031
    %2144 = vmatprep.subr.mxu0 %v2036
    %2145 = vmatpush1.msra.mxu0 %v2035
    %2146 = vmatprep.subr.mxu0 %v2040
    %2147 = vmatpush1.msra.mxu0 %v2039
    %2148 = vmatprep.subr.mxu0 %v2044
    %2149 = vmatpush1.msra.mxu0 %v2043
    %2150 = vmatprep.subr.mxu0 %v2048
    %2151 = vmatpush1.msra.mxu0 %v2047
    %2152 = vmatprep.subr.mxu0 0.0
    %2153 = vmatpush1.msra.mxu0 0.0
    %2154 = vmatprep.subr.mxu0 0.0
    %2155 = vmatpush1.msra.mxu0 0.0
    %2156 = vmatprep.subr.mxu0 0.0
    %2157 = vmatpush1.msra.mxu0 0.0
    %2158 = vmatprep.subr.mxu0 0.0
    %2159 = vmatpush1.msra.mxu0 0.0
    %2160 = vmatprep.subr.mxu0 0.0
    %2161 = vmatpush1.msra.mxu0 0.0
    %2162 = vmatprep.subr.mxu0 0.0
    %2163 = vmatpush1.msra.mxu0 0.0
    %2164 = vmatprep.subr.mxu0 0.0
    %2165 = vmatpush1.msra.mxu0 0.0
    %2166 = vmatprep.subr.mxu0 0.0
    %2167 = vmatpush1.msra.mxu0 0.0
    %2168 = vmatprep.subr.mxu0 0.0
    %2169 = vmatpush1.msra.mxu0 0.0
    %2170 = vmatprep.subr.mxu0 0.0
    %2171 = vmatpush1.msra.mxu0 0.0
    %2172 = vmatprep.subr.mxu0 0.0
    %2173 = vmatpush1.msra.mxu0 0.0
    %2174 = vmatprep.subr.mxu0 0.0
    %2175 = vmatpush1.msra.mxu0 0.0
    %2176 = vmatprep.subr.mxu0 0.0
    %2177 = vmatpush1.msra.mxu0 0.0
    %2178 = vmatprep.subr.mxu0 0.0
    %2179 = vmatpush1.msra.mxu0 0.0
    %2180 = vmatprep.subr.mxu0 0.0
    %2181 = vmatpush1.msra.mxu0 0.0
    %2182 = vmatprep.subr.mxu0 0.0
    %2183 = vmatpush1.msra.mxu0 0.0
    %2184 = vmatprep.mubr.f32.mxu0 0.0
    %2185 = vmatmul.mubr.f32.gmra.mrb[0].mxu0 %v1984
    %v2186 = vpop.f32.mrb[0].mxu0
    %v2187 = vadd.f32 0.0, %v2186
    %v2188 = vpop.f32.mrb[0].mxu0
    %v2189 = vadd.f32 0.0, %v2188
    %2190 = vdwg.mxu0
    %v2191 = vadd.f32 %v1980, %v2116
    %v2192 = vadd.f32 %v1981, %v2118
    %v2193 = vadd.f32 %v1982, %v2187
    %v2194 = vadd.f32 %v1983, %v2189
    %v2195 = vld [vmem:[#allocation3] sm:$0xff]
    %v2196 = vxor.u32 %v2191, 2147483648
    %v2197 = vxor.u32 %v2192, 2147483648
    %v2198 = vxor.u32 %v2193, 2147483648
    %v2199 = vmul.f32 %v2196, 1.442695
    %v2200 = vpow.pop %v2199
    %v2201 = vmul.f32 %v2197, 1.442695
    %v2202 = vpow.pop %v2201
    %v2203 = vmul.f32 %v2198, 1.442695
    %v2204 = vpow.pop %v2203
    %v2205 = vadd.f32 %v2200, 1.0
    %v2206 = vadd.f32 %v2202, 1.0
    %v2207 = vadd.f32 %v2204, 1.0
    %v2208 = vrcp.pop %v2205
    %v2209 = vmul.f32 1.0, %v2208
    %v2210 = vrcp.pop %v2206
    %v2211 = vmul.f32 1.0, %v2210
    %v2212 = vrcp.pop %v2207
    %v2213 = vmul.f32 1.0, %v2212
    %v2214 = vtanh.pop %v2194
    %v2215 = vmul.f32 %v2211, %v2195
    %v2216 = vmul.f32 %v2209, %v2214
    %v2217 = vadd.f32 %v2215, %v2216
    %v2218 = vtanh.pop %v2217
    %v2219 = vmul.f32 %v2213, %v2218
    %2220 = vst [vmem:[#allocation3] sm:$0xff] %v2217
    %2221 = vst [vmem:[#allocation2] sm:$0xff] %v2219
    %v2222 = vld [vmem:[#allocation2] sm:$0xff]
    %v2223 = vld [vmem:[#allocation2 + $0x8] sm:$0xff]
    %v2224 = vld [vmem:[#allocation8] sm:$0xff]
    %v2225 = vld [vmem:[#allocation8 + $0x8] sm:$0xff]
    %v2226 = vld [vmem:[#allocation8 + $0x10] sm:$0xff]
    %v2227 = vld [vmem:[#allocation8 + $0x18] sm:$0xff]
    %v2228 = vld [vmem:[#allocation8 + $0x20] sm:$0xff]
    %v2229 = vld [vmem:[#allocation8 + $0x28] sm:$0xff]
    %v2230 = vld [vmem:[#allocation8 + $0x30] sm:$0xff]
    %v2231 = vld [vmem:[#allocation8 + $0x38] sm:$0xff]
    %v2232 = vld [vmem:[#allocation8 + $0x40] sm:$0xff]
    %v2233 = vld [vmem:[#allocation8 + $0x48] sm:$0xff]
    %v2234 = vld [vmem:[#allocation8 + $0x50] sm:$0xff]
    %v2235 = vld [vmem:[#allocation8 + $0x58] sm:$0xff]
    %v2236 = vld [vmem:[#allocation8 + $0x60] sm:$0xff]
    %v2237 = vld [vmem:[#allocation8 + $0x68] sm:$0xff]
    %v2238 = vld [vmem:[#allocation8 + $0x70] sm:$0xff]
    %v2239 = vld [vmem:[#allocation8 + $0x78] sm:$0xff]
    %v2240 = vld [vmem:[#allocation8 + $0x80] sm:$0xff]
    %v2241 = vld [vmem:[#allocation8 + $0x88] sm:$0xff]
    %v2242 = vld [vmem:[#allocation8 + $0x90] sm:$0xff]
    %v2243 = vld [vmem:[#allocation8 + $0x98] sm:$0xff]
    %v2244 = vld [vmem:[#allocation8 + $0xa0] sm:$0xff]
    %v2245 = vld [vmem:[#allocation8 + $0xa8] sm:$0xff]
    %v2246 = vld [vmem:[#allocation8 + $0xb0] sm:$0xff]
    %v2247 = vld [vmem:[#allocation8 + $0xb8] sm:$0xff]
    %v2248 = vld [vmem:[#allocation8 + $0xc0] sm:$0xff]
    %v2249 = vld [vmem:[#allocation8 + $0xc8] sm:$0xff]
    %v2250 = vld [vmem:[#allocation8 + $0xd0] sm:$0xff]
    %v2251 = vld [vmem:[#allocation8 + $0xd8] sm:$0xff]
    %v2252 = vld [vmem:[#allocation8 + $0xe0] sm:$0xff]
    %v2253 = vld [vmem:[#allocation8 + $0xe8] sm:$0xff]
    %v2254 = vld [vmem:[#allocation8 + $0xf0] sm:$0xff]
    %v2255 = vld [vmem:[#allocation8 + $0xf8] sm:$0xff]
    %v2256 = vld [vmem:[#allocation8 + $0x100] sm:$0xff]
    %v2257 = vld [vmem:[#allocation8 + $0x108] sm:$0xff]
    %v2258 = vld [vmem:[#allocation8 + $0x110] sm:$0xff]
    %v2259 = vld [vmem:[#allocation8 + $0x118] sm:$0xff]
    %v2260 = vld [vmem:[#allocation8 + $0x120] sm:$0xff]
    %v2261 = vld [vmem:[#allocation8 + $0x128] sm:$0xff]
    %v2262 = vld [vmem:[#allocation8 + $0x130] sm:$0xff]
    %v2263 = vld [vmem:[#allocation8 + $0x138] sm:$0xff]
    %v2264 = vld [vmem:[#allocation8 + $0x140] sm:$0xff]
    %v2265 = vld [vmem:[#allocation8 + $0x148] sm:$0xff]
    %v2266 = vld [vmem:[#allocation8 + $0x150] sm:$0xff]
    %v2267 = vld [vmem:[#allocation8 + $0x158] sm:$0xff]
    %v2268 = vld [vmem:[#allocation8 + $0x160] sm:$0xff]
    %v2269 = vld [vmem:[#allocation8 + $0x168] sm:$0xff]
    %v2270 = vld [vmem:[#allocation8 + $0x170] sm:$0xff]
    %v2271 = vld [vmem:[#allocation8 + $0x178] sm:$0xff]
    %v2272 = vld [vmem:[#allocation8 + $0x180] sm:$0xff]
    %v2273 = vld [vmem:[#allocation8 + $0x188] sm:$0xff]
    %v2274 = vld [vmem:[#allocation8 + $0x190] sm:$0xff]
    %v2275 = vld [vmem:[#allocation8 + $0x198] sm:$0xff]
    %v2276 = vld [vmem:[#allocation8 + $0x1a0] sm:$0xff]
    %v2277 = vld [vmem:[#allocation8 + $0x1a8] sm:$0xff]
    %v2278 = vld [vmem:[#allocation8 + $0x1b0] sm:$0xff]
    %v2279 = vld [vmem:[#allocation8 + $0x1b8] sm:$0xff]
    %v2280 = vld [vmem:[#allocation8 + $0x1c0] sm:$0xff]
    %v2281 = vld [vmem:[#allocation8 + $0x1c8] sm:$0xff]
    %v2282 = vld [vmem:[#allocation8 + $0x1d0] sm:$0xff]
    %v2283 = vld [vmem:[#allocation8 + $0x1d8] sm:$0xff]
    %v2284 = vld [vmem:[#allocation8 + $0x1e0] sm:$0xff]
    %v2285 = vld [vmem:[#allocation8 + $0x1e8] sm:$0xff]
    %v2286 = vld [vmem:[#allocation8 + $0x1f0] sm:$0xff]
    %v2287 = vld [vmem:[#allocation8 + $0x1f8] sm:$0xff]
    %v2288 = vld [vmem:[#allocation8 + $0x200] sm:$0xff]
    %v2289 = vld [vmem:[#allocation8 + $0x208] sm:$0xff]
    %v2290 = vld [vmem:[#allocation8 + $0x210] sm:$0xff]
    %v2291 = vld [vmem:[#allocation8 + $0x218] sm:$0xff]
    %v2292 = vld [vmem:[#allocation8 + $0x220] sm:$0xff]
    %v2293 = vld [vmem:[#allocation8 + $0x228] sm:$0xff]
    %v2294 = vld [vmem:[#allocation8 + $0x230] sm:$0xff]
    %v2295 = vld [vmem:[#allocation8 + $0x238] sm:$0xff]
    %v2296 = vld [vmem:[#allocation8 + $0x240] sm:$0xff]
    %v2297 = vld [vmem:[#allocation8 + $0x248] sm:$0xff]
    %v2298 = vld [vmem:[#allocation8 + $0x250] sm:$0xff]
    %v2299 = vld [vmem:[#allocation8 + $0x258] sm:$0xff]
    %v2300 = vld [vmem:[#allocation8 + $0x260] sm:$0xff]
    %v2301 = vld [vmem:[#allocation8 + $0x268] sm:$0xff]
    %v2302 = vld [vmem:[#allocation8 + $0x270] sm:$0xff]
    %v2303 = vld [vmem:[#allocation8 + $0x278] sm:$0xff]
    %v2304 = vld [vmem:[#allocation8 + $0x280] sm:$0xff]
    %v2305 = vld [vmem:[#allocation8 + $0x288] sm:$0xff]
    %v2306 = vld [vmem:[#allocation8 + $0x290] sm:$0xff]
    %v2307 = vld [vmem:[#allocation8 + $0x298] sm:$0xff]
    %v2308 = vld [vmem:[#allocation8 + $0x2a0] sm:$0xff]
    %v2309 = vld [vmem:[#allocation8 + $0x2a8] sm:$0xff]
    %v2310 = vld [vmem:[#allocation8 + $0x2b0] sm:$0xff]
    %v2311 = vld [vmem:[#allocation8 + $0x2b8] sm:$0xff]
    %v2312 = vld [vmem:[#allocation8 + $0x2c0] sm:$0xff]
    %v2313 = vld [vmem:[#allocation8 + $0x2c8] sm:$0xff]
    %v2314 = vld [vmem:[#allocation8 + $0x2d0] sm:$0xff]
    %v2315 = vld [vmem:[#allocation8 + $0x2d8] sm:$0xff]
    %v2316 = vld [vmem:[#allocation8 + $0x2e0] sm:$0xff]
    %v2317 = vld [vmem:[#allocation8 + $0x2e8] sm:$0xff]
    %v2318 = vld [vmem:[#allocation8 + $0x2f0] sm:$0xff]
    %v2319 = vld [vmem:[#allocation8 + $0x2f8] sm:$0xff]
    %v2320 = vld [vmem:[#allocation8 + $0x300] sm:$0xff]
    %v2321 = vld [vmem:[#allocation8 + $0x308] sm:$0xff]
    %v2322 = vld [vmem:[#allocation8 + $0x310] sm:$0xff]
    %v2323 = vld [vmem:[#allocation8 + $0x318] sm:$0xff]
    %v2324 = vld [vmem:[#allocation8 + $0x320] sm:$0xff]
    %v2325 = vld [vmem:[#allocation8 + $0x328] sm:$0xff]
    %v2326 = vld [vmem:[#allocation8 + $0x330] sm:$0xff]
    %v2327 = vld [vmem:[#allocation8 + $0x338] sm:$0xff]
    %v2328 = vld [vmem:[#allocation8 + $0x340] sm:$0xff]
    %v2329 = vld [vmem:[#allocation8 + $0x348] sm:$0xff]
    %v2330 = vld [vmem:[#allocation8 + $0x350] sm:$0xff]
    %v2331 = vld [vmem:[#allocation8 + $0x358] sm:$0xff]
    %v2332 = vld [vmem:[#allocation8 + $0x360] sm:$0xff]
    %v2333 = vld [vmem:[#allocation8 + $0x368] sm:$0xff]
    %v2334 = vld [vmem:[#allocation8 + $0x370] sm:$0xff]
    %v2335 = vld [vmem:[#allocation8 + $0x378] sm:$0xff]
    %v2336 = vld [vmem:[#allocation8 + $0x380] sm:$0xff]
    %v2337 = vld [vmem:[#allocation8 + $0x388] sm:$0xff]
    %v2338 = vld [vmem:[#allocation8 + $0x390] sm:$0xff]
    %v2339 = vld [vmem:[#allocation8 + $0x398] sm:$0xff]
    %v2340 = vld [vmem:[#allocation8 + $0x3a0] sm:$0xff]
    %v2341 = vld [vmem:[#allocation8 + $0x3a8] sm:$0xff]
    %v2342 = vld [vmem:[#allocation8 + $0x3b0] sm:$0xff]
    %v2343 = vld [vmem:[#allocation8 + $0x3b8] sm:$0xff]
    %v2344 = vld [vmem:[#allocation8 + $0x3c0] sm:$0xff]
    %v2345 = vld [vmem:[#allocation8 + $0x3c8] sm:$0xff]
    %v2346 = vld [vmem:[#allocation8 + $0x3d0] sm:$0xff]
    %v2347 = vld [vmem:[#allocation8 + $0x3d8] sm:$0xff]
    %v2348 = vld [vmem:[#allocation8 + $0x3e0] sm:$0xff]
    %v2349 = vld [vmem:[#allocation8 + $0x3e8] sm:$0xff]
    %v2350 = vld [vmem:[#allocation8 + $0x3f0] sm:$0xff]
    %v2351 = vld [vmem:[#allocation8 + $0x3f8] sm:$0xff]
    %v2352 = vld [vmem:[%s5] sm:$0xf]
    %v2354 = vlaneseq
    %v2355 = vshrl.u32 %v2354, 7
    %v2356 = vsub.s32 0, %v2355
    %v2357 = vrot.slane %v2352, %v2356
    %v2358 = vlaneseq
    %v2359 = vshrl.u32 %v2358, 7
    %v2360 = vsub.s32 1, %v2359
    %v2361 = vrot.slane %v2352, %v2360
    %v2362 = vlaneseq
    %v2363 = vshrl.u32 %v2362, 7
    %v2364 = vsub.s32 2, %v2363
    %v2365 = vrot.slane %v2352, %v2364
    %v2366 = vlaneseq
    %v2367 = vshrl.u32 %v2366, 7
    %v2368 = vsub.s32 3, %v2367
    %v2369 = vrot.slane %v2352, %v2368
    %2374 = vmatprep.subr.mxu0 %v2225
    %2375 = vmatpush1.msra.mxu0 %v2224
    %2376 = vmatprep.subr.mxu0 %v2229
    %2377 = vmatpush1.msra.mxu0 %v2228
    %2378 = vmatprep.subr.mxu0 %v2233
    %2379 = vmatpush1.msra.mxu0 %v2232
    %2380 = vmatprep.subr.mxu0 %v2237
    %2381 = vmatpush1.msra.mxu0 %v2236
    %2382 = vmatprep.subr.mxu0 %v2241
    %2383 = vmatpush1.msra.mxu0 %v2240
    %2384 = vmatprep.subr.mxu0 %v2245
    %2385 = vmatpush1.msra.mxu0 %v2244
    %2386 = vmatprep.subr.mxu0 %v2249
    %2387 = vmatpush1.msra.mxu0 %v2248
    %2388 = vmatprep.subr.mxu0 %v2253
    %2389 = vmatpush1.msra.mxu0 %v2252
    %2390 = vmatprep.subr.mxu0 %v2257
    %2391 = vmatpush1.msra.mxu0 %v2256
    %2392 = vmatprep.subr.mxu0 %v2261
    %2393 = vmatpush1.msra.mxu0 %v2260
    %2394 = vmatprep.subr.mxu0 %v2265
    %2395 = vmatpush1.msra.mxu0 %v2264
    %2396 = vmatprep.subr.mxu0 %v2269
    %2397 = vmatpush1.msra.mxu0 %v2268
    %2398 = vmatprep.subr.mxu0 %v2273
    %2399 = vmatpush1.msra.mxu0 %v2272
    %2400 = vmatprep.subr.mxu0 %v2277
    %2401 = vmatpush1.msra.mxu0 %v2276
    %2402 = vmatprep.subr.mxu0 %v2281
    %2403 = vmatpush1.msra.mxu0 %v2280
    %2404 = vmatprep.subr.mxu0 %v2285
    %2405 = vmatpush1.msra.mxu0 %v2284
    %2406 = vmatprep.subr.mxu0 %v2289
    %2407 = vmatpush1.msra.mxu0 %v2288
    %2408 = vmatprep.subr.mxu0 %v2293
    %2409 = vmatpush1.msra.mxu0 %v2292
    %2410 = vmatprep.subr.mxu0 %v2297
    %2411 = vmatpush1.msra.mxu0 %v2296
    %2412 = vmatprep.subr.mxu0 %v2301
    %2413 = vmatpush1.msra.mxu0 %v2300
    %2414 = vmatprep.subr.mxu0 %v2305
    %2415 = vmatpush1.msra.mxu0 %v2304
    %2416 = vmatprep.subr.mxu0 %v2309
    %2417 = vmatpush1.msra.mxu0 %v2308
    %2418 = vmatprep.subr.mxu0 %v2313
    %2419 = vmatpush1.msra.mxu0 %v2312
    %2420 = vmatprep.subr.mxu0 %v2317
    %2421 = vmatpush1.msra.mxu0 %v2316
    %2422 = vmatprep.subr.mxu0 %v2321
    %2423 = vmatpush1.msra.mxu0 %v2320
    %2424 = vmatprep.subr.mxu0 %v2325
    %2425 = vmatpush1.msra.mxu0 %v2324
    %2426 = vmatprep.subr.mxu0 %v2329
    %2427 = vmatpush1.msra.mxu0 %v2328
    %2428 = vmatprep.subr.mxu0 %v2333
    %2429 = vmatpush1.msra.mxu0 %v2332
    %2430 = vmatprep.subr.mxu0 %v2337
    %2431 = vmatpush1.msra.mxu0 %v2336
    %2432 = vmatprep.subr.mxu0 %v2341
    %2433 = vmatpush1.msra.mxu0 %v2340
    %2434 = vmatprep.subr.mxu0 %v2345
    %2435 = vmatpush1.msra.mxu0 %v2344
    %2436 = vmatprep.subr.mxu0 %v2349
    %2437 = vmatpush1.msra.mxu0 %v2348
    %2438 = vmatprep.mubr.f32.mxu0 %v2223
    %2439 = vmatmul.mubr.f32.gmra.mrb[0].mxu0 %v2222
    %v2440 = vpop.f32.mrb[0].mxu0
    %v2441 = vadd.f32 %v2357, %v2440
    %v2442 = vpop.f32.mrb[0].mxu0
    %v2443 = vadd.f32 %v2361, %v2442
    %2444 = vdwg.mxu0
    %2445 = vmatprep.subr.mxu0 %v2227
    %2446 = vmatpush1.msra.mxu0 %v2226
    %2447 = vmatprep.subr.mxu0 %v2231
    %2448 = vmatpush1.msra.mxu0 %v2230
    %2449 = vmatprep.subr.mxu0 %v2235
    %2450 = vmatpush1.msra.mxu0 %v2234
    %2451 = vmatprep.subr.mxu0 %v2239
    %2452 = vmatpush1.msra.mxu0 %v2238
    %2453 = vmatprep.subr.mxu0 %v2243
    %2454 = vmatpush1.msra.mxu0 %v2242
    %2455 = vmatprep.subr.mxu0 %v2247
    %2456 = vmatpush1.msra.mxu0 %v2246
    %2457 = vmatprep.subr.mxu0 %v2251
    %2458 = vmatpush1.msra.mxu0 %v2250
    %2459 = vmatprep.subr.mxu0 %v2255
    %2460 = vmatpush1.msra.mxu0 %v2254
    %2461 = vmatprep.subr.mxu0 %v2259
    %2462 = vmatpush1.msra.mxu0 %v2258
    %2463 = vmatprep.subr.mxu0 %v2263
    %2464 = vmatpush1.msra.mxu0 %v2262
    %2465 = vmatprep.subr.mxu0 %v2267
    %2466 = vmatpush1.msra.mxu0 %v2266
    %2467 = vmatprep.subr.mxu0 %v2271
    %2468 = vmatpush1.msra.mxu0 %v2270
    %2469 = vmatprep.subr.mxu0 %v2275
    %2470 = vmatpush1.msra.mxu0 %v2274
    %2471 = vmatprep.subr.mxu0 %v2279
    %2472 = vmatpush1.msra.mxu0 %v2278
    %2473 = vmatprep.subr.mxu0 %v2283
    %2474 = vmatpush1.msra.mxu0 %v2282
    %2475 = vmatprep.subr.mxu0 %v2287
    %2476 = vmatpush1.msra.mxu0 %v2286
    %2477 = vmatprep.subr.mxu0 %v2291
    %2478 = vmatpush1.msra.mxu0 %v2290
    %2479 = vmatprep.subr.mxu0 %v2295
    %2480 = vmatpush1.msra.mxu0 %v2294
    %2481 = vmatprep.subr.mxu0 %v2299
    %2482 = vmatpush1.msra.mxu0 %v2298
    %2483 = vmatprep.subr.mxu0 %v2303
    %2484 = vmatpush1.msra.mxu0 %v2302
    %2485 = vmatprep.subr.mxu0 %v2307
    %2486 = vmatpush1.msra.mxu0 %v2306
    %2487 = vmatprep.subr.mxu0 %v2311
    %2488 = vmatpush1.msra.mxu0 %v2310
    %2489 = vmatprep.subr.mxu0 %v2315
    %2490 = vmatpush1.msra.mxu0 %v2314
    %2491 = vmatprep.subr.mxu0 %v2319
    %2492 = vmatpush1.msra.mxu0 %v2318
    %2493 = vmatprep.subr.mxu0 %v2323
    %2494 = vmatpush1.msra.mxu0 %v2322
    %2495 = vmatprep.subr.mxu0 %v2327
    %2496 = vmatpush1.msra.mxu0 %v2326
    %2497 = vmatprep.subr.mxu0 %v2331
    %2498 = vmatpush1.msra.mxu0 %v2330
    %2499 = vmatprep.subr.mxu0 %v2335
    %2500 = vmatpush1.msra.mxu0 %v2334
    %2501 = vmatprep.subr.mxu0 %v2339
    %2502 = vmatpush1.msra.mxu0 %v2338
    %2503 = vmatprep.subr.mxu0 %v2343
    %2504 = vmatpush1.msra.mxu0 %v2342
    %2505 = vmatprep.subr.mxu0 %v2347
    %2506 = vmatpush1.msra.mxu0 %v2346
    %2507 = vmatprep.subr.mxu0 %v2351
    %2508 = vmatpush1.msra.mxu0 %v2350
    %2509 = vmatprep.mubr.f32.mxu0 %v2223
    %2510 = vmatmul.mubr.f32.gmra.mrb[0].mxu0 %v2222
    %v2511 = vpop.f32.mrb[0].mxu0
    %v2512 = vadd.f32 %v2365, %v2511
    %v2513 = vpop.f32.mrb[0].mxu0
    %v2514 = vadd.f32 %v2369, %v2513
    %2515 = vdwg.mxu0
    %v2516 = vld [vmem:[#allocation4] sm:$0xff]
    %v2517 = vxor.u32 %v2441, 2147483648
    %v2518 = vxor.u32 %v2443, 2147483648
    %v2519 = vxor.u32 %v2512, 2147483648
    %v2520 = vmul.f32 %v2517, 1.442695
    %v2521 = vpow.pop %v2520
    %v2522 = vmul.f32 %v2518, 1.442695
    %v2523 = vpow.pop %v2522
    %v2524 = vmul.f32 %v2519, 1.442695
    %v2525 = vpow.pop %v2524
    %v2526 = vadd.f32 %v2521, 1.0
    %v2527 = vadd.f32 %v2523, 1.0
    %v2528 = vadd.f32 %v2525, 1.0
    %v2529 = vrcp.pop %v2526
    %v2530 = vmul.f32 1.0, %v2529
    %v2531 = vrcp.pop %v2527
    %v2532 = vmul.f32 1.0, %v2531
    %v2533 = vrcp.pop %v2528
    %v2534 = vmul.f32 1.0, %v2533
    %v2535 = vtanh.pop %v2514
    %v2536 = vmul.f32 %v2532, %v2516
    %v2537 = vmul.f32 %v2530, %v2535
    %v2538 = vadd.f32 %v2536, %v2537
    %v2539 = vtanh.pop %v2538
    %v2540 = vmul.f32 %v2534, %v2539
    %2541 = vst [vmem:[#allocation4] sm:$0xff] %v2538
    %2542 = vst [vmem:[#allocation2 + $0x8] sm:$0xff] %v2540
    %vm2543 = vcmp.eq.s32.totalorder %v77, 4
    %v2544 = vsel %vm2543, %v75, 0.0
    %v2545 = vsel %vm80, %v2544, 0.0
    %2546 = vadd.xlane.f32.xlu0 %v2545
    %v2547 = vpop.xlane.xlu0 %2546
    %v2548 = vld [vmem:[%s1] sm:$0xf]
    %v2550 = vlaneseq
    %v2551 = vshrl.u32 %v2550, 7
    %v2552 = vsub.s32 0, %v2551
    %v2553 = vrot.slane %v2548, %v2552
    %v2554 = vlaneseq
    %v2555 = vshrl.u32 %v2554, 7
    %v2556 = vsub.s32 1, %v2555
    %v2557 = vrot.slane %v2548, %v2556
    %v2558 = vlaneseq
    %v2559 = vshrl.u32 %v2558, 7
    %v2560 = vsub.s32 2, %v2559
    %v2561 = vrot.slane %v2548, %v2560
    %v2562 = vlaneseq
    %v2563 = vshrl.u32 %v2562, 7
    %v2564 = vsub.s32 3, %v2563
    %v2565 = vrot.slane %v2548, %v2564
    %v2570 = vmul.f32 %v2547, %v2553
    %v2571 = vmul.f32 %v2547, %v2557
    %v2572 = vmul.f32 %v2547, %v2561
    %v2573 = vmul.f32 %v2547, %v2565
    %v2574 = vld [vmem:[%s2] sm:$0xf]
    %v2576 = vlaneseq
    %v2577 = vshrl.u32 %v2576, 7
    %v2578 = vsub.s32 0, %v2577
    %v2579 = vrot.slane %v2574, %v2578
    %v2580 = vlaneseq
    %v2581 = vshrl.u32 %v2580, 7
    %v2582 = vsub.s32 1, %v2581
    %v2583 = vrot.slane %v2574, %v2582
    %v2584 = vlaneseq
    %v2585 = vshrl.u32 %v2584, 7
    %v2586 = vsub.s32 2, %v2585
    %v2587 = vrot.slane %v2574, %v2586
    %v2588 = vlaneseq
    %v2589 = vshrl.u32 %v2588, 7
    %v2590 = vsub.s32 3, %v2589
    %v2591 = vrot.slane %v2574, %v2590
    %v2596 = vadd.f32 %v2570, %v2579
    %v2597 = vadd.f32 %v2571, %v2583
    %v2598 = vadd.f32 %v2572, %v2587
    %v2599 = vadd.f32 %v2573, %v2591
    %v2600 = vld [vmem:[#allocation2] sm:$0xff]
    %v2601 = vld [vmem:[#allocation6] sm:$0xff]
    %v2602 = vld [vmem:[#allocation6 + $0x8] sm:$0xff]
    %v2603 = vld [vmem:[#allocation6 + $0x10] sm:$0xff]
    %v2604 = vld [vmem:[#allocation6 + $0x18] sm:$0xff]
    %v2605 = vld [vmem:[#allocation6 + $0x20] sm:$0xff]
    %v2606 = vld [vmem:[#allocation6 + $0x28] sm:$0xff]
    %v2607 = vld [vmem:[#allocation6 + $0x30] sm:$0xff]
    %v2608 = vld [vmem:[#allocation6 + $0x38] sm:$0xff]
    %v2609 = vld [vmem:[#allocation6 + $0x40] sm:$0xff]
    %v2610 = vld [vmem:[#allocation6 + $0x48] sm:$0xff]
    %v2611 = vld [vmem:[#allocation6 + $0x50] sm:$0xff]
    %v2612 = vld [vmem:[#allocation6 + $0x58] sm:$0xff]
    %v2613 = vld [vmem:[#allocation6 + $0x60] sm:$0xff]
    %v2614 = vld [vmem:[#allocation6 + $0x68] sm:$0xff]
    %v2615 = vld [vmem:[#allocation6 + $0x70] sm:$0xff]
    %v2616 = vld [vmem:[#allocation6 + $0x78] sm:$0xff]
    %v2617 = vld [vmem:[#allocation6 + $0x80] sm:$0xff]
    %v2618 = vld [vmem:[#allocation6 + $0x88] sm:$0xff]
    %v2619 = vld [vmem:[#allocation6 + $0x90] sm:$0xff]
    %v2620 = vld [vmem:[#allocation6 + $0x98] sm:$0xff]
    %v2621 = vld [vmem:[#allocation6 + $0xa0] sm:$0xff]
    %v2622 = vld [vmem:[#allocation6 + $0xa8] sm:$0xff]
    %v2623 = vld [vmem:[#allocation6 + $0xb0] sm:$0xff]
    %v2624 = vld [vmem:[#allocation6 + $0xb8] sm:$0xff]
    %v2625 = vld [vmem:[#allocation6 + $0xc0] sm:$0xff]
    %v2626 = vld [vmem:[#allocation6 + $0xc8] sm:$0xff]
    %v2627 = vld [vmem:[#allocation6 + $0xd0] sm:$0xff]
    %v2628 = vld [vmem:[#allocation6 + $0xd8] sm:$0xff]
    %v2629 = vld [vmem:[#allocation6 + $0xe0] sm:$0xff]
    %v2630 = vld [vmem:[#allocation6 + $0xe8] sm:$0xff]
    %v2631 = vld [vmem:[#allocation6 + $0xf0] sm:$0xff]
    %v2632 = vld [vmem:[#allocation6 + $0xf8] sm:$0xff]
    %v2633 = vld [vmem:[#allocation6 + $0x100] sm:$0xff]
    %v2634 = vld [vmem:[#allocation6 + $0x108] sm:$0xff]
    %v2635 = vld [vmem:[#allocation6 + $0x110] sm:$0xff]
    %v2636 = vld [vmem:[#allocation6 + $0x118] sm:$0xff]
    %v2637 = vld [vmem:[#allocation6 + $0x120] sm:$0xff]
    %v2638 = vld [vmem:[#allocation6 + $0x128] sm:$0xff]
    %v2639 = vld [vmem:[#allocation6 + $0x130] sm:$0xff]
    %v2640 = vld [vmem:[#allocation6 + $0x138] sm:$0xff]
    %v2641 = vld [vmem:[#allocation6 + $0x140] sm:$0xff]
    %v2642 = vld [vmem:[#allocation6 + $0x148] sm:$0xff]
    %v2643 = vld [vmem:[#allocation6 + $0x150] sm:$0xff]
    %v2644 = vld [vmem:[#allocation6 + $0x158] sm:$0xff]
    %v2645 = vld [vmem:[#allocation6 + $0x160] sm:$0xff]
    %v2646 = vld [vmem:[#allocation6 + $0x168] sm:$0xff]
    %v2647 = vld [vmem:[#allocation6 + $0x170] sm:$0xff]
    %v2648 = vld [vmem:[#allocation6 + $0x178] sm:$0xff]
    %v2649 = vld [vmem:[#allocation6 + $0x180] sm:$0xff]
    %v2650 = vld [vmem:[#allocation6 + $0x188] sm:$0xff]
    %v2651 = vld [vmem:[#allocation6 + $0x190] sm:$0xff]
    %v2652 = vld [vmem:[#allocation6 + $0x198] sm:$0xff]
    %v2653 = vld [vmem:[#allocation6 + $0x1a0] sm:$0xff]
    %v2654 = vld [vmem:[#allocation6 + $0x1a8] sm:$0xff]
    %v2655 = vld [vmem:[#allocation6 + $0x1b0] sm:$0xff]
    %v2656 = vld [vmem:[#allocation6 + $0x1b8] sm:$0xff]
    %v2657 = vld [vmem:[#allocation6 + $0x1c0] sm:$0xff]
    %v2658 = vld [vmem:[#allocation6 + $0x1c8] sm:$0xff]
    %v2659 = vld [vmem:[#allocation6 + $0x1d0] sm:$0xff]
    %v2660 = vld [vmem:[#allocation6 + $0x1d8] sm:$0xff]
    %v2661 = vld [vmem:[#allocation6 + $0x1e0] sm:$0xff]
    %v2662 = vld [vmem:[#allocation6 + $0x1e8] sm:$0xff]
    %v2663 = vld [vmem:[#allocation6 + $0x1f0] sm:$0xff]
    %v2664 = vld [vmem:[#allocation6 + $0x1f8] sm:$0xff]
    %2665 = vmatprep.subr.mxu0 %v2602
    %2666 = vmatpush1.msra.mxu0 %v2601
    %2667 = vmatprep.subr.mxu0 %v2606
    %2668 = vmatpush1.msra.mxu0 %v2605
    %2669 = vmatprep.subr.mxu0 %v2610
    %2670 = vmatpush1.msra.mxu0 %v2609
    %2671 = vmatprep.subr.mxu0 %v2614
    %2672 = vmatpush1.msra.mxu0 %v2613
    %2673 = vmatprep.subr.mxu0 %v2618
    %2674 = vmatpush1.msra.mxu0 %v2617
    %2675 = vmatprep.subr.mxu0 %v2622
    %2676 = vmatpush1.msra.mxu0 %v2621
    %2677 = vmatprep.subr.mxu0 %v2626
    %2678 = vmatpush1.msra.mxu0 %v2625
    %2679 = vmatprep.subr.mxu0 %v2630
    %2680 = vmatpush1.msra.mxu0 %v2629
    %2681 = vmatprep.subr.mxu0 %v2634
    %2682 = vmatpush1.msra.mxu0 %v2633
    %2683 = vmatprep.subr.mxu0 %v2638
    %2684 = vmatpush1.msra.mxu0 %v2637
    %2685 = vmatprep.subr.mxu0 %v2642
    %2686 = vmatpush1.msra.mxu0 %v2641
    %2687 = vmatprep.subr.mxu0 %v2646
    %2688 = vmatpush1.msra.mxu0 %v2645
    %2689 = vmatprep.subr.mxu0 %v2650
    %2690 = vmatpush1.msra.mxu0 %v2649
    %2691 = vmatprep.subr.mxu0 %v2654
    %2692 = vmatpush1.msra.mxu0 %v2653
    %2693 = vmatprep.subr.mxu0 %v2658
    %2694 = vmatpush1.msra.mxu0 %v2657
    %2695 = vmatprep.subr.mxu0 %v2662
    %2696 = vmatpush1.msra.mxu0 %v2661
    %2697 = vmatprep.subr.mxu0 0.0
    %2698 = vmatpush1.msra.mxu0 0.0
    %2699 = vmatprep.subr.mxu0 0.0
    %2700 = vmatpush1.msra.mxu0 0.0
    %2701 = vmatprep.subr.mxu0 0.0
    %2702 = vmatpush1.msra.mxu0 0.0
    %2703 = vmatprep.subr.mxu0 0.0
    %2704 = vmatpush1.msra.mxu0 0.0
    %2705 = vmatprep.subr.mxu0 0.0
    %2706 = vmatpush1.msra.mxu0 0.0
    %2707 = vmatprep.subr.mxu0 0.0
    %2708 = vmatpush1.msra.mxu0 0.0
    %2709 = vmatprep.subr.mxu0 0.0
    %2710 = vmatpush1.msra.mxu0 0.0
    %2711 = vmatprep.subr.mxu0 0.0
    %2712 = vmatpush1.msra.mxu0 0.0
    %2713 = vmatprep.subr.mxu0 0.0
    %2714 = vmatpush1.msra.mxu0 0.0
    %2715 = vmatprep.subr.mxu0 0.0
    %2716 = vmatpush1.msra.mxu0 0.0
    %2717 = vmatprep.subr.mxu0 0.0
    %2718 = vmatpush1.msra.mxu0 0.0
    %2719 = vmatprep.subr.mxu0 0.0
    %2720 = vmatpush1.msra.mxu0 0.0
    %2721 = vmatprep.subr.mxu0 0.0
    %2722 = vmatpush1.msra.mxu0 0.0
    %2723 = vmatprep.subr.mxu0 0.0
    %2724 = vmatpush1.msra.mxu0 0.0
    %2725 = vmatprep.subr.mxu0 0.0
    %2726 = vmatpush1.msra.mxu0 0.0
    %2727 = vmatprep.subr.mxu0 0.0
    %2728 = vmatpush1.msra.mxu0 0.0
    %2729 = vmatprep.mubr.f32.mxu0 0.0
    %2730 = vmatmul.mubr.f32.gmra.mrb[0].mxu0 %v2600
    %v2731 = vpop.f32.mrb[0].mxu0
    %v2732 = vadd.f32 0.0, %v2731
    %v2733 = vpop.f32.mrb[0].mxu0
    %v2734 = vadd.f32 0.0, %v2733
    %2735 = vdwg.mxu0
    %2736 = vmatprep.subr.mxu0 %v2604
    %2737 = vmatpush1.msra.mxu0 %v2603
    %2738 = vmatprep.subr.mxu0 %v2608
    %2739 = vmatpush1.msra.mxu0 %v2607
    %2740 = vmatprep.subr.mxu0 %v2612
    %2741 = vmatpush1.msra.mxu0 %v2611
    %2742 = vmatprep.subr.mxu0 %v2616
    %2743 = vmatpush1.msra.mxu0 %v2615
    %2744 = vmatprep.subr.mxu0 %v2620
    %2745 = vmatpush1.msra.mxu0 %v2619
    %2746 = vmatprep.subr.mxu0 %v2624
    %2747 = vmatpush1.msra.mxu0 %v2623
    %2748 = vmatprep.subr.mxu0 %v2628
    %2749 = vmatpush1.msra.mxu0 %v2627
    %2750 = vmatprep.subr.mxu0 %v2632
    %2751 = vmatpush1.msra.mxu0 %v2631
    %2752 = vmatprep.subr.mxu0 %v2636
    %2753 = vmatpush1.msra.mxu0 %v2635
    %2754 = vmatprep.subr.mxu0 %v2640
    %2755 = vmatpush1.msra.mxu0 %v2639
    %2756 = vmatprep.subr.mxu0 %v2644
    %2757 = vmatpush1.msra.mxu0 %v2643
    %2758 = vmatprep.subr.mxu0 %v2648
    %2759 = vmatpush1.msra.mxu0 %v2647
    %2760 = vmatprep.subr.mxu0 %v2652
    %2761 = vmatpush1.msra.mxu0 %v2651
    %2762 = vmatprep.subr.mxu0 %v2656
    %2763 = vmatpush1.msra.mxu0 %v2655
    %2764 = vmatprep.subr.mxu0 %v2660
    %2765 = vmatpush1.msra.mxu0 %v2659
    %2766 = vmatprep.subr.mxu0 %v2664
    %2767 = vmatpush1.msra.mxu0 %v2663
    %2768 = vmatprep.subr.mxu0 0.0
    %2769 = vmatpush1.msra.mxu0 0.0
    %2770 = vmatprep.subr.mxu0 0.0
    %2771 = vmatpush1.msra.mxu0 0.0
    %2772 = vmatprep.subr.mxu0 0.0
    %2773 = vmatpush1.msra.mxu0 0.0
    %2774 = vmatprep.subr.mxu0 0.0
    %2775 = vmatpush1.msra.mxu0 0.0
    %2776 = vmatprep.subr.mxu0 0.0
    %2777 = vmatpush1.msra.mxu0 0.0
    %2778 = vmatprep.subr.mxu0 0.0
    %2779 = vmatpush1.msra.mxu0 0.0
    %2780 = vmatprep.subr.mxu0 0.0
    %2781 = vmatpush1.msra.mxu0 0.0
    %2782 = vmatprep.subr.mxu0 0.0
    %2783 = vmatpush1.msra.mxu0 0.0
    %2784 = vmatprep.subr.mxu0 0.0
    %2785 = vmatpush1.msra.mxu0 0.0
    %2786 = vmatprep.subr.mxu0 0.0
    %2787 = vmatpush1.msra.mxu0 0.0
    %2788 = vmatprep.subr.mxu0 0.0
    %2789 = vmatpush1.msra.mxu0 0.0
    %2790 = vmatprep.subr.mxu0 0.0
    %2791 = vmatpush1.msra.mxu0 0.0
    %2792 = vmatprep.subr.mxu0 0.0
    %2793 = vmatpush1.msra.mxu0 0.0
    %2794 = vmatprep.subr.mxu0 0.0
    %2795 = vmatpush1.msra.mxu0 0.0
    %2796 = vmatprep.subr.mxu0 0.0
    %2797 = vmatpush1.msra.mxu0 0.0
    %2798 = vmatprep.subr.mxu0 0.0
    %2799 = vmatpush1.msra.mxu0 0.0
    %2800 = vmatprep.mubr.f32.mxu0 0.0
    %2801 = vmatmul.mubr.f32.gmra.mrb[0].mxu0 %v2600
    %v2802 = vpop.f32.mrb[0].mxu0
    %v2803 = vadd.f32 0.0, %v2802
    %v2804 = vpop.f32.mrb[0].mxu0
    %v2805 = vadd.f32 0.0, %v2804
    %2806 = vdwg.mxu0
    %v2807 = vadd.f32 %v2596, %v2732
    %v2808 = vadd.f32 %v2597, %v2734
    %v2809 = vadd.f32 %v2598, %v2803
    %v2810 = vadd.f32 %v2599, %v2805
    %v2811 = vld [vmem:[#allocation3] sm:$0xff]
    %v2812 = vxor.u32 %v2807, 2147483648
    %v2813 = vxor.u32 %v2808, 2147483648
    %v2814 = vxor.u32 %v2809, 2147483648
    %v2815 = vmul.f32 %v2812, 1.442695
    %v2816 = vpow.pop %v2815
    %v2817 = vmul.f32 %v2813, 1.442695
    %v2818 = vpow.pop %v2817
    %v2819 = vmul.f32 %v2814, 1.442695
    %v2820 = vpow.pop %v2819
    %v2821 = vadd.f32 %v2816, 1.0
    %v2822 = vadd.f32 %v2818, 1.0
    %v2823 = vadd.f32 %v2820, 1.0
    %v2824 = vrcp.pop %v2821
    %v2825 = vmul.f32 1.0, %v2824
    %v2826 = vrcp.pop %v2822
    %v2827 = vmul.f32 1.0, %v2826
    %v2828 = vrcp.pop %v2823
    %v2829 = vmul.f32 1.0, %v2828
    %v2830 = vtanh.pop %v2810
    %v2831 = vmul.f32 %v2827, %v2811
    %v2832 = vmul.f32 %v2825, %v2830
    %v2833 = vadd.f32 %v2831, %v2832
    %v2834 = vtanh.pop %v2833
    %v2835 = vmul.f32 %v2829, %v2834
    %2836 = vst [vmem:[#allocation3] sm:$0xff] %v2833
    %2837 = vst [vmem:[#allocation2] sm:$0xff] %v2835
    %v2838 = vld [vmem:[#allocation2] sm:$0xff]
    %v2839 = vld [vmem:[#allocation2 + $0x8] sm:$0xff]
    %v2840 = vld [vmem:[#allocation8] sm:$0xff]
    %v2841 = vld [vmem:[#allocation8 + $0x8] sm:$0xff]
    %v2842 = vld [vmem:[#allocation8 + $0x10] sm:$0xff]
    %v2843 = vld [vmem:[#allocation8 + $0x18] sm:$0xff]
    %v2844 = vld [vmem:[#allocation8 + $0x20] sm:$0xff]
    %v2845 = vld [vmem:[#allocation8 + $0x28] sm:$0xff]
    %v2846 = vld [vmem:[#allocation8 + $0x30] sm:$0xff]
    %v2847 = vld [vmem:[#allocation8 + $0x38] sm:$0xff]
    %v2848 = vld [vmem:[#allocation8 + $0x40] sm:$0xff]
    %v2849 = vld [vmem:[#allocation8 + $0x48] sm:$0xff]
    %v2850 = vld [vmem:[#allocation8 + $0x50] sm:$0xff]
    %v2851 = vld [vmem:[#allocation8 + $0x58] sm:$0xff]
    %v2852 = vld [vmem:[#allocation8 + $0x60] sm:$0xff]
    %v2853 = vld [vmem:[#allocation8 + $0x68] sm:$0xff]
    %v2854 = vld [vmem:[#allocation8 + $0x70] sm:$0xff]
    %v2855 = vld [vmem:[#allocation8 + $0x78] sm:$0xff]
    %v2856 = vld [vmem:[#allocation8 + $0x80] sm:$0xff]
    %v2857 = vld [vmem:[#allocation8 + $0x88] sm:$0xff]
    %v2858 = vld [vmem:[#allocation8 + $0x90] sm:$0xff]
    %v2859 = vld [vmem:[#allocation8 + $0x98] sm:$0xff]
    %v2860 = vld [vmem:[#allocation8 + $0xa0] sm:$0xff]
    %v2861 = vld [vmem:[#allocation8 + $0xa8] sm:$0xff]
    %v2862 = vld [vmem:[#allocation8 + $0xb0] sm:$0xff]
    %v2863 = vld [vmem:[#allocation8 + $0xb8] sm:$0xff]
    %v2864 = vld [vmem:[#allocation8 + $0xc0] sm:$0xff]
    %v2865 = vld [vmem:[#allocation8 + $0xc8] sm:$0xff]
    %v2866 = vld [vmem:[#allocation8 + $0xd0] sm:$0xff]
    %v2867 = vld [vmem:[#allocation8 + $0xd8] sm:$0xff]
    %v2868 = vld [vmem:[#allocation8 + $0xe0] sm:$0xff]
    %v2869 = vld [vmem:[#allocation8 + $0xe8] sm:$0xff]
    %v2870 = vld [vmem:[#allocation8 + $0xf0] sm:$0xff]
    %v2871 = vld [vmem:[#allocation8 + $0xf8] sm:$0xff]
    %v2872 = vld [vmem:[#allocation8 + $0x100] sm:$0xff]
    %v2873 = vld [vmem:[#allocation8 + $0x108] sm:$0xff]
    %v2874 = vld [vmem:[#allocation8 + $0x110] sm:$0xff]
    %v2875 = vld [vmem:[#allocation8 + $0x118] sm:$0xff]
    %v2876 = vld [vmem:[#allocation8 + $0x120] sm:$0xff]
    %v2877 = vld [vmem:[#allocation8 + $0x128] sm:$0xff]
    %v2878 = vld [vmem:[#allocation8 + $0x130] sm:$0xff]
    %v2879 = vld [vmem:[#allocation8 + $0x138] sm:$0xff]
    %v2880 = vld [vmem:[#allocation8 + $0x140] sm:$0xff]
    %v2881 = vld [vmem:[#allocation8 + $0x148] sm:$0xff]
    %v2882 = vld [vmem:[#allocation8 + $0x150] sm:$0xff]
    %v2883 = vld [vmem:[#allocation8 + $0x158] sm:$0xff]
    %v2884 = vld [vmem:[#allocation8 + $0x160] sm:$0xff]
    %v2885 = vld [vmem:[#allocation8 + $0x168] sm:$0xff]
    %v2886 = vld [vmem:[#allocation8 + $0x170] sm:$0xff]
    %v2887 = vld [vmem:[#allocation8 + $0x178] sm:$0xff]
    %v2888 = vld [vmem:[#allocation8 + $0x180] sm:$0xff]
    %v2889 = vld [vmem:[#allocation8 + $0x188] sm:$0xff]
    %v2890 = vld [vmem:[#allocation8 + $0x190] sm:$0xff]
    %v2891 = vld [vmem:[#allocation8 + $0x198] sm:$0xff]
    %v2892 = vld [vmem:[#allocation8 + $0x1a0] sm:$0xff]
    %v2893 = vld [vmem:[#allocation8 + $0x1a8] sm:$0xff]
    %v2894 = vld [vmem:[#allocation8 + $0x1b0] sm:$0xff]
    %v2895 = vld [vmem:[#allocation8 + $0x1b8] sm:$0xff]
    %v2896 = vld [vmem:[#allocation8 + $0x1c0] sm:$0xff]
    %v2897 = vld [vmem:[#allocation8 + $0x1c8] sm:$0xff]
    %v2898 = vld [vmem:[#allocation8 + $0x1d0] sm:$0xff]
    %v2899 = vld [vmem:[#allocation8 + $0x1d8] sm:$0xff]
    %v2900 = vld [vmem:[#allocation8 + $0x1e0] sm:$0xff]
    %v2901 = vld [vmem:[#allocation8 + $0x1e8] sm:$0xff]
    %v2902 = vld [vmem:[#allocation8 + $0x1f0] sm:$0xff]
    %v2903 = vld [vmem:[#allocation8 + $0x1f8] sm:$0xff]
    %v2904 = vld [vmem:[#allocation8 + $0x200] sm:$0xff]
    %v2905 = vld [vmem:[#allocation8 + $0x208] sm:$0xff]
    %v2906 = vld [vmem:[#allocation8 + $0x210] sm:$0xff]
    %v2907 = vld [vmem:[#allocation8 + $0x218] sm:$0xff]
    %v2908 = vld [vmem:[#allocation8 + $0x220] sm:$0xff]
    %v2909 = vld [vmem:[#allocation8 + $0x228] sm:$0xff]
    %v2910 = vld [vmem:[#allocation8 + $0x230] sm:$0xff]
    %v2911 = vld [vmem:[#allocation8 + $0x238] sm:$0xff]
    %v2912 = vld [vmem:[#allocation8 + $0x240] sm:$0xff]
    %v2913 = vld [vmem:[#allocation8 + $0x248] sm:$0xff]
    %v2914 = vld [vmem:[#allocation8 + $0x250] sm:$0xff]
    %v2915 = vld [vmem:[#allocation8 + $0x258] sm:$0xff]
    %v2916 = vld [vmem:[#allocation8 + $0x260] sm:$0xff]
    %v2917 = vld [vmem:[#allocation8 + $0x268] sm:$0xff]
    %v2918 = vld [vmem:[#allocation8 + $0x270] sm:$0xff]
    %v2919 = vld [vmem:[#allocation8 + $0x278] sm:$0xff]
    %v2920 = vld [vmem:[#allocation8 + $0x280] sm:$0xff]
    %v2921 = vld [vmem:[#allocation8 + $0x288] sm:$0xff]
    %v2922 = vld [vmem:[#allocation8 + $0x290] sm:$0xff]
    %v2923 = vld [vmem:[#allocation8 + $0x298] sm:$0xff]
    %v2924 = vld [vmem:[#allocation8 + $0x2a0] sm:$0xff]
    %v2925 = vld [vmem:[#allocation8 + $0x2a8] sm:$0xff]
    %v2926 = vld [vmem:[#allocation8 + $0x2b0] sm:$0xff]
    %v2927 = vld [vmem:[#allocation8 + $0x2b8] sm:$0xff]
    %v2928 = vld [vmem:[#allocation8 + $0x2c0] sm:$0xff]
    %v2929 = vld [vmem:[#allocation8 + $0x2c8] sm:$0xff]
    %v2930 = vld [vmem:[#allocation8 + $0x2d0] sm:$0xff]
    %v2931 = vld [vmem:[#allocation8 + $0x2d8] sm:$0xff]
    %v2932 = vld [vmem:[#allocation8 + $0x2e0] sm:$0xff]
    %v2933 = vld [vmem:[#allocation8 + $0x2e8] sm:$0xff]
    %v2934 = vld [vmem:[#allocation8 + $0x2f0] sm:$0xff]
    %v2935 = vld [vmem:[#allocation8 + $0x2f8] sm:$0xff]
    %v2936 = vld [vmem:[#allocation8 + $0x300] sm:$0xff]
    %v2937 = vld [vmem:[#allocation8 + $0x308] sm:$0xff]
    %v2938 = vld [vmem:[#allocation8 + $0x310] sm:$0xff]
    %v2939 = vld [vmem:[#allocation8 + $0x318] sm:$0xff]
    %v2940 = vld [vmem:[#allocation8 + $0x320] sm:$0xff]
    %v2941 = vld [vmem:[#allocation8 + $0x328] sm:$0xff]
    %v2942 = vld [vmem:[#allocation8 + $0x330] sm:$0xff]
    %v2943 = vld [vmem:[#allocation8 + $0x338] sm:$0xff]
    %v2944 = vld [vmem:[#allocation8 + $0x340] sm:$0xff]
    %v2945 = vld [vmem:[#allocation8 + $0x348] sm:$0xff]
    %v2946 = vld [vmem:[#allocation8 + $0x350] sm:$0xff]
    %v2947 = vld [vmem:[#allocation8 + $0x358] sm:$0xff]
    %v2948 = vld [vmem:[#allocation8 + $0x360] sm:$0xff]
    %v2949 = vld [vmem:[#allocation8 + $0x368] sm:$0xff]
    %v2950 = vld [vmem:[#allocation8 + $0x370] sm:$0xff]
    %v2951 = vld [vmem:[#allocation8 + $0x378] sm:$0xff]
    %v2952 = vld [vmem:[#allocation8 + $0x380] sm:$0xff]
    %v2953 = vld [vmem:[#allocation8 + $0x388] sm:$0xff]
    %v2954 = vld [vmem:[#allocation8 + $0x390] sm:$0xff]
    %v2955 = vld [vmem:[#allocation8 + $0x398] sm:$0xff]
    %v2956 = vld [vmem:[#allocation8 + $0x3a0] sm:$0xff]
    %v2957 = vld [vmem:[#allocation8 + $0x3a8] sm:$0xff]
    %v2958 = vld [vmem:[#allocation8 + $0x3b0] sm:$0xff]
    %v2959 = vld [vmem:[#allocation8 + $0x3b8] sm:$0xff]
    %v2960 = vld [vmem:[#allocation8 + $0x3c0] sm:$0xff]
    %v2961 = vld [vmem:[#allocation8 + $0x3c8] sm:$0xff]
    %v2962 = vld [vmem:[#allocation8 + $0x3d0] sm:$0xff]
    %v2963 = vld [vmem:[#allocation8 + $0x3d8] sm:$0xff]
    %v2964 = vld [vmem:[#allocation8 + $0x3e0] sm:$0xff]
    %v2965 = vld [vmem:[#allocation8 + $0x3e8] sm:$0xff]
    %v2966 = vld [vmem:[#allocation8 + $0x3f0] sm:$0xff]
    %v2967 = vld [vmem:[#allocation8 + $0x3f8] sm:$0xff]
    %v2968 = vld [vmem:[%s5] sm:$0xf]
    %v2970 = vlaneseq
    %v2971 = vshrl.u32 %v2970, 7
    %v2972 = vsub.s32 0, %v2971
    %v2973 = vrot.slane %v2968, %v2972
    %v2974 = vlaneseq
    %v2975 = vshrl.u32 %v2974, 7
    %v2976 = vsub.s32 1, %v2975
    %v2977 = vrot.slane %v2968, %v2976
    %v2978 = vlaneseq
    %v2979 = vshrl.u32 %v2978, 7
    %v2980 = vsub.s32 2, %v2979
    %v2981 = vrot.slane %v2968, %v2980
    %v2982 = vlaneseq
    %v2983 = vshrl.u32 %v2982, 7
    %v2984 = vsub.s32 3, %v2983
    %v2985 = vrot.slane %v2968, %v2984
    %2990 = vmatprep.subr.mxu0 %v2841
    %2991 = vmatpush1.msra.mxu0 %v2840
    %2992 = vmatprep.subr.mxu0 %v2845
    %2993 = vmatpush1.msra.mxu0 %v2844
    %2994 = vmatprep.subr.mxu0 %v2849
    %2995 = vmatpush1.msra.mxu0 %v2848
    %2996 = vmatprep.subr.mxu0 %v2853
    %2997 = vmatpush1.msra.mxu0 %v2852
    %2998 = vmatprep.subr.mxu0 %v2857
    %2999 = vmatpush1.msra.mxu0 %v2856
    %3000 = vmatprep.subr.mxu0 %v2861
    %3001 = vmatpush1.msra.mxu0 %v2860
    %3002 = vmatprep.subr.mxu0 %v2865
    %3003 = vmatpush1.msra.mxu0 %v2864
    %3004 = vmatprep.subr.mxu0 %v2869
    %3005 = vmatpush1.msra.mxu0 %v2868
    %3006 = vmatprep.subr.mxu0 %v2873
    %3007 = vmatpush1.msra.mxu0 %v2872
    %3008 = vmatprep.subr.mxu0 %v2877
    %3009 = vmatpush1.msra.mxu0 %v2876
    %3010 = vmatprep.subr.mxu0 %v2881
    %3011 = vmatpush1.msra.mxu0 %v2880
    %3012 = vmatprep.subr.mxu0 %v2885
    %3013 = vmatpush1.msra.mxu0 %v2884
    %3014 = vmatprep.subr.mxu0 %v2889
    %3015 = vmatpush1.msra.mxu0 %v2888
    %3016 = vmatprep.subr.mxu0 %v2893
    %3017 = vmatpush1.msra.mxu0 %v2892
    %3018 = vmatprep.subr.mxu0 %v2897
    %3019 = vmatpush1.msra.mxu0 %v2896
    %3020 = vmatprep.subr.mxu0 %v2901
    %3021 = vmatpush1.msra.mxu0 %v2900
    %3022 = vmatprep.subr.mxu0 %v2905
    %3023 = vmatpush1.msra.mxu0 %v2904
    %3024 = vmatprep.subr.mxu0 %v2909
    %3025 = vmatpush1.msra.mxu0 %v2908
    %3026 = vmatprep.subr.mxu0 %v2913
    %3027 = vmatpush1.msra.mxu0 %v2912
    %3028 = vmatprep.subr.mxu0 %v2917
    %3029 = vmatpush1.msra.mxu0 %v2916
    %3030 = vmatprep.subr.mxu0 %v2921
    %3031 = vmatpush1.msra.mxu0 %v2920
    %3032 = vmatprep.subr.mxu0 %v2925
    %3033 = vmatpush1.msra.mxu0 %v2924
    %3034 = vmatprep.subr.mxu0 %v2929
    %3035 = vmatpush1.msra.mxu0 %v2928
    %3036 = vmatprep.subr.mxu0 %v2933
    %3037 = vmatpush1.msra.mxu0 %v2932
    %3038 = vmatprep.subr.mxu0 %v2937
    %3039 = vmatpush1.msra.mxu0 %v2936
    %3040 = vmatprep.subr.mxu0 %v2941
    %3041 = vmatpush1.msra.mxu0 %v2940
    %3042 = vmatprep.subr.mxu0 %v2945
    %3043 = vmatpush1.msra.mxu0 %v2944
    %3044 = vmatprep.subr.mxu0 %v2949
    %3045 = vmatpush1.msra.mxu0 %v2948
    %3046 = vmatprep.subr.mxu0 %v2953
    %3047 = vmatpush1.msra.mxu0 %v2952
    %3048 = vmatprep.subr.mxu0 %v2957
    %3049 = vmatpush1.msra.mxu0 %v2956
    %3050 = vmatprep.subr.mxu0 %v2961
    %3051 = vmatpush1.msra.mxu0 %v2960
    %3052 = vmatprep.subr.mxu0 %v2965
    %3053 = vmatpush1.msra.mxu0 %v2964
    %3054 = vmatprep.mubr.f32.mxu0 %v2839
    %3055 = vmatmul.mubr.f32.gmra.mrb[0].mxu0 %v2838
    %v3056 = vpop.f32.mrb[0].mxu0
    %v3057 = vadd.f32 %v2973, %v3056
    %v3058 = vpop.f32.mrb[0].mxu0
    %v3059 = vadd.f32 %v2977, %v3058
    %3060 = vdwg.mxu0
    %3061 = vmatprep.subr.mxu0 %v2843
    %3062 = vmatpush1.msra.mxu0 %v2842
    %3063 = vmatprep.subr.mxu0 %v2847
    %3064 = vmatpush1.msra.mxu0 %v2846
    %3065 = vmatprep.subr.mxu0 %v2851
    %3066 = vmatpush1.msra.mxu0 %v2850
    %3067 = vmatprep.subr.mxu0 %v2855
    %3068 = vmatpush1.msra.mxu0 %v2854
    %3069 = vmatprep.subr.mxu0 %v2859
    %3070 = vmatpush1.msra.mxu0 %v2858
    %3071 = vmatprep.subr.mxu0 %v2863
    %3072 = vmatpush1.msra.mxu0 %v2862
    %3073 = vmatprep.subr.mxu0 %v2867
    %3074 = vmatpush1.msra.mxu0 %v2866
    %3075 = vmatprep.subr.mxu0 %v2871
    %3076 = vmatpush1.msra.mxu0 %v2870
    %3077 = vmatprep.subr.mxu0 %v2875
    %3078 = vmatpush1.msra.mxu0 %v2874
    %3079 = vmatprep.subr.mxu0 %v2879
    %3080 = vmatpush1.msra.mxu0 %v2878
    %3081 = vmatprep.subr.mxu0 %v2883
    %3082 = vmatpush1.msra.mxu0 %v2882
    %3083 = vmatprep.subr.mxu0 %v2887
    %3084 = vmatpush1.msra.mxu0 %v2886
    %3085 = vmatprep.subr.mxu0 %v2891
    %3086 = vmatpush1.msra.mxu0 %v2890
    %3087 = vmatprep.subr.mxu0 %v2895
    %3088 = vmatpush1.msra.mxu0 %v2894
    %3089 = vmatprep.subr.mxu0 %v2899
    %3090 = vmatpush1.msra.mxu0 %v2898
    %3091 = vmatprep.subr.mxu0 %v2903
    %3092 = vmatpush1.msra.mxu0 %v2902
    %3093 = vmatprep.subr.mxu0 %v2907
    %3094 = vmatpush1.msra.mxu0 %v2906
    %3095 = vmatprep.subr.mxu0 %v2911
    %3096 = vmatpush1.msra.mxu0 %v2910
    %3097 = vmatprep.subr.mxu0 %v2915
    %3098 = vmatpush1.msra.mxu0 %v2914
    %3099 = vmatprep.subr.mxu0 %v2919
    %3100 = vmatpush1.msra.mxu0 %v2918
    %3101 = vmatprep.subr.mxu0 %v2923
    %3102 = vmatpush1.msra.mxu0 %v2922
    %3103 = vmatprep.subr.mxu0 %v2927
    %3104 = vmatpush1.msra.mxu0 %v2926
    %3105 = vmatprep.subr.mxu0 %v2931
    %3106 = vmatpush1.msra.mxu0 %v2930
    %3107 = vmatprep.subr.mxu0 %v2935
    %3108 = vmatpush1.msra.mxu0 %v2934
    %3109 = vmatprep.subr.mxu0 %v2939
    %3110 = vmatpush1.msra.mxu0 %v2938
    %3111 = vmatprep.subr.mxu0 %v2943
    %3112 = vmatpush1.msra.mxu0 %v2942
    %3113 = vmatprep.subr.mxu0 %v2947
    %3114 = vmatpush1.msra.mxu0 %v2946
    %3115 = vmatprep.subr.mxu0 %v2951
    %3116 = vmatpush1.msra.mxu0 %v2950
    %3117 = vmatprep.subr.mxu0 %v2955
    %3118 = vmatpush1.msra.mxu0 %v2954
    %3119 = vmatprep.subr.mxu0 %v2959
    %3120 = vmatpush1.msra.mxu0 %v2958
    %3121 = vmatprep.subr.mxu0 %v2963
    %3122 = vmatpush1.msra.mxu0 %v2962
    %3123 = vmatprep.subr.mxu0 %v2967
    %3124 = vmatpush1.msra.mxu0 %v2966
    %3125 = vmatprep.mubr.f32.mxu0 %v2839
    %3126 = vmatmul.mubr.f32.gmra.mrb[0].mxu0 %v2838
    %v3127 = vpop.f32.mrb[0].mxu0
    %v3128 = vadd.f32 %v2981, %v3127
    %v3129 = vpop.f32.mrb[0].mxu0
    %v3130 = vadd.f32 %v2985, %v3129
    %3131 = vdwg.mxu0
    %v3132 = vld [vmem:[#allocation4] sm:$0xff]
    %v3133 = vxor.u32 %v3057, 2147483648
    %v3134 = vxor.u32 %v3059, 2147483648
    %v3135 = vxor.u32 %v3128, 2147483648
    %v3136 = vmul.f32 %v3133, 1.442695
    %v3137 = vpow.pop %v3136
    %v3138 = vmul.f32 %v3134, 1.442695
    %v3139 = vpow.pop %v3138
    %v3140 = vmul.f32 %v3135, 1.442695
    %v3141 = vpow.pop %v3140
    %v3142 = vadd.f32 %v3137, 1.0
    %v3143 = vadd.f32 %v3139, 1.0
    %v3144 = vadd.f32 %v3141, 1.0
    %v3145 = vrcp.pop %v3142
    %v3146 = vmul.f32 1.0, %v3145
    %v3147 = vrcp.pop %v3143
    %v3148 = vmul.f32 1.0, %v3147
    %v3149 = vrcp.pop %v3144
    %v3150 = vmul.f32 1.0, %v3149
    %v3151 = vtanh.pop %v3130
    %v3152 = vmul.f32 %v3148, %v3132
    %v3153 = vmul.f32 %v3146, %v3151
    %v3154 = vadd.f32 %v3152, %v3153
    %v3155 = vtanh.pop %v3154
    %v3156 = vmul.f32 %v3150, %v3155
    %3157 = vst [vmem:[#allocation4] sm:$0xff] %v3154
    %3158 = vst [vmem:[#allocation2 + $0x8] sm:$0xff] %v3156
    %vm3159 = vcmp.eq.s32.totalorder %v77, 5
    %v3160 = vsel %vm3159, %v75, 0.0
    %v3161 = vsel %vm80, %v3160, 0.0
    %3162 = vadd.xlane.f32.xlu0 %v3161
    %v3163 = vpop.xlane.xlu0 %3162
    %v3164 = vld [vmem:[%s1] sm:$0xf]
    %v3166 = vlaneseq
    %v3167 = vshrl.u32 %v3166, 7
    %v3168 = vsub.s32 0, %v3167
    %v3169 = vrot.slane %v3164, %v3168
    %v3170 = vlaneseq
    %v3171 = vshrl.u32 %v3170, 7
    %v3172 = vsub.s32 1, %v3171
    %v3173 = vrot.slane %v3164, %v3172
    %v3174 = vlaneseq
    %v3175 = vshrl.u32 %v3174, 7
    %v3176 = vsub.s32 2, %v3175
    %v3177 = vrot.slane %v3164, %v3176
    %v3178 = vlaneseq
    %v3179 = vshrl.u32 %v3178, 7
    %v3180 = vsub.s32 3, %v3179
    %v3181 = vrot.slane %v3164, %v3180
    %v3186 = vmul.f32 %v3163, %v3169
    %v3187 = vmul.f32 %v3163, %v3173
    %v3188 = vmul.f32 %v3163, %v3177
    %v3189 = vmul.f32 %v3163, %v3181
    %v3190 = vld [vmem:[%s2] sm:$0xf]
    %v3192 = vlaneseq
    %v3193 = vshrl.u32 %v3192, 7
    %v3194 = vsub.s32 0, %v3193
    %v3195 = vrot.slane %v3190, %v3194
    %v3196 = vlaneseq
    %v3197 = vshrl.u32 %v3196, 7
    %v3198 = vsub.s32 1, %v3197
    %v3199 = vrot.slane %v3190, %v3198
    %v3200 = vlaneseq
    %v3201 = vshrl.u32 %v3200, 7
    %v3202 = vsub.s32 2, %v3201
    %v3203 = vrot.slane %v3190, %v3202
    %v3204 = vlaneseq
    %v3205 = vshrl.u32 %v3204, 7
    %v3206 = vsub.s32 3, %v3205
    %v3207 = vrot.slane %v3190, %v3206
    %v3212 = vadd.f32 %v3186, %v3195
    %v3213 = vadd.f32 %v3187, %v3199
    %v3214 = vadd.f32 %v3188, %v3203
    %v3215 = vadd.f32 %v3189, %v3207
    %v3216 = vld [vmem:[#allocation2] sm:$0xff]
    %v3217 = vld [vmem:[#allocation6] sm:$0xff]
    %v3218 = vld [vmem:[#allocation6 + $0x8] sm:$0xff]
    %v3219 = vld [vmem:[#allocation6 + $0x10] sm:$0xff]
    %v3220 = vld [vmem:[#allocation6 + $0x18] sm:$0xff]
    %v3221 = vld [vmem:[#allocation6 + $0x20] sm:$0xff]
    %v3222 = vld [vmem:[#allocation6 + $0x28] sm:$0xff]
    %v3223 = vld [vmem:[#allocation6 + $0x30] sm:$0xff]
    %v3224 = vld [vmem:[#allocation6 + $0x38] sm:$0xff]
    %v3225 = vld [vmem:[#allocation6 + $0x40] sm:$0xff]
    %v3226 = vld [vmem:[#allocation6 + $0x48] sm:$0xff]
    %v3227 = vld [vmem:[#allocation6 + $0x50] sm:$0xff]
    %v3228 = vld [vmem:[#allocation6 + $0x58] sm:$0xff]
    %v3229 = vld [vmem:[#allocation6 + $0x60] sm:$0xff]
    %v3230 = vld [vmem:[#allocation6 + $0x68] sm:$0xff]
    %v3231 = vld [vmem:[#allocation6 + $0x70] sm:$0xff]
    %v3232 = vld [vmem:[#allocation6 + $0x78] sm:$0xff]
    %v3233 = vld [vmem:[#allocation6 + $0x80] sm:$0xff]
    %v3234 = vld [vmem:[#allocation6 + $0x88] sm:$0xff]
    %v3235 = vld [vmem:[#allocation6 + $0x90] sm:$0xff]
    %v3236 = vld [vmem:[#allocation6 + $0x98] sm:$0xff]
    %v3237 = vld [vmem:[#allocation6 + $0xa0] sm:$0xff]
    %v3238 = vld [vmem:[#allocation6 + $0xa8] sm:$0xff]
    %v3239 = vld [vmem:[#allocation6 + $0xb0] sm:$0xff]
    %v3240 = vld [vmem:[#allocation6 + $0xb8] sm:$0xff]
    %v3241 = vld [vmem:[#allocation6 + $0xc0] sm:$0xff]
    %v3242 = vld [vmem:[#allocation6 + $0xc8] sm:$0xff]
    %v3243 = vld [vmem:[#allocation6 + $0xd0] sm:$0xff]
    %v3244 = vld [vmem:[#allocation6 + $0xd8] sm:$0xff]
    %v3245 = vld [vmem:[#allocation6 + $0xe0] sm:$0xff]
    %v3246 = vld [vmem:[#allocation6 + $0xe8] sm:$0xff]
    %v3247 = vld [vmem:[#allocation6 + $0xf0] sm:$0xff]
    %v3248 = vld [vmem:[#allocation6 + $0xf8] sm:$0xff]
    %v3249 = vld [vmem:[#allocation6 + $0x100] sm:$0xff]
    %v3250 = vld [vmem:[#allocation6 + $0x108] sm:$0xff]
    %v3251 = vld [vmem:[#allocation6 + $0x110] sm:$0xff]
    %v3252 = vld [vmem:[#allocation6 + $0x118] sm:$0xff]
    %v3253 = vld [vmem:[#allocation6 + $0x120] sm:$0xff]
    %v3254 = vld [vmem:[#allocation6 + $0x128] sm:$0xff]
    %v3255 = vld [vmem:[#allocation6 + $0x130] sm:$0xff]
    %v3256 = vld [vmem:[#allocation6 + $0x138] sm:$0xff]
    %v3257 = vld [vmem:[#allocation6 + $0x140] sm:$0xff]
    %v3258 = vld [vmem:[#allocation6 + $0x148] sm:$0xff]
    %v3259 = vld [vmem:[#allocation6 + $0x150] sm:$0xff]
    %v3260 = vld [vmem:[#allocation6 + $0x158] sm:$0xff]
    %v3261 = vld [vmem:[#allocation6 + $0x160] sm:$0xff]
    %v3262 = vld [vmem:[#allocation6 + $0x168] sm:$0xff]
    %v3263 = vld [vmem:[#allocation6 + $0x170] sm:$0xff]
    %v3264 = vld [vmem:[#allocation6 + $0x178] sm:$0xff]
    %v3265 = vld [vmem:[#allocation6 + $0x180] sm:$0xff]
    %v3266 = vld [vmem:[#allocation6 + $0x188] sm:$0xff]
    %v3267 = vld [vmem:[#allocation6 + $0x190] sm:$0xff]
    %v3268 = vld [vmem:[#allocation6 + $0x198] sm:$0xff]
    %v3269 = vld [vmem:[#allocation6 + $0x1a0] sm:$0xff]
    %v3270 = vld [vmem:[#allocation6 + $0x1a8] sm:$0xff]
    %v3271 = vld [vmem:[#allocation6 + $0x1b0] sm:$0xff]
    %v3272 = vld [vmem:[#allocation6 + $0x1b8] sm:$0xff]
    %v3273 = vld [vmem:[#allocation6 + $0x1c0] sm:$0xff]
    %v3274 = vld [vmem:[#allocation6 + $0x1c8] sm:$0xff]
    %v3275 = vld [vmem:[#allocation6 + $0x1d0] sm:$0xff]
    %v3276 = vld [vmem:[#allocation6 + $0x1d8] sm:$0xff]
    %v3277 = vld [vmem:[#allocation6 + $0x1e0] sm:$0xff]
    %v3278 = vld [vmem:[#allocation6 + $0x1e8] sm:$0xff]
    %v3279 = vld [vmem:[#allocation6 + $0x1f0] sm:$0xff]
    %v3280 = vld [vmem:[#allocation6 + $0x1f8] sm:$0xff]
    %3281 = vmatprep.subr.mxu0 %v3218
    %3282 = vmatpush1.msra.mxu0 %v3217
    %3283 = vmatprep.subr.mxu0 %v3222
    %3284 = vmatpush1.msra.mxu0 %v3221
    %3285 = vmatprep.subr.mxu0 %v3226
    %3286 = vmatpush1.msra.mxu0 %v3225
    %3287 = vmatprep.subr.mxu0 %v3230
    %3288 = vmatpush1.msra.mxu0 %v3229
    %3289 = vmatprep.subr.mxu0 %v3234
    %3290 = vmatpush1.msra.mxu0 %v3233
    %3291 = vmatprep.subr.mxu0 %v3238
    %3292 = vmatpush1.msra.mxu0 %v3237
    %3293 = vmatprep.subr.mxu0 %v3242
    %3294 = vmatpush1.msra.mxu0 %v3241
    %3295 = vmatprep.subr.mxu0 %v3246
    %3296 = vmatpush1.msra.mxu0 %v3245
    %3297 = vmatprep.subr.mxu0 %v3250
    %3298 = vmatpush1.msra.mxu0 %v3249
    %3299 = vmatprep.subr.mxu0 %v3254
    %3300 = vmatpush1.msra.mxu0 %v3253
    %3301 = vmatprep.subr.mxu0 %v3258
    %3302 = vmatpush1.msra.mxu0 %v3257
    %3303 = vmatprep.subr.mxu0 %v3262
    %3304 = vmatpush1.msra.mxu0 %v3261
    %3305 = vmatprep.subr.mxu0 %v3266
    %3306 = vmatpush1.msra.mxu0 %v3265
    %3307 = vmatprep.subr.mxu0 %v3270
    %3308 = vmatpush1.msra.mxu0 %v3269
    %3309 = vmatprep.subr.mxu0 %v3274
    %3310 = vmatpush1.msra.mxu0 %v3273
    %3311 = vmatprep.subr.mxu0 %v3278
    %3312 = vmatpush1.msra.mxu0 %v3277
    %3313 = vmatprep.subr.mxu0 0.0
    %3314 = vmatpush1.msra.mxu0 0.0
    %3315 = vmatprep.subr.mxu0 0.0
    %3316 = vmatpush1.msra.mxu0 0.0
    %3317 = vmatprep.subr.mxu0 0.0
    %3318 = vmatpush1.msra.mxu0 0.0
    %3319 = vmatprep.subr.mxu0 0.0
    %3320 = vmatpush1.msra.mxu0 0.0
    %3321 = vmatprep.subr.mxu0 0.0
    %3322 = vmatpush1.msra.mxu0 0.0
    %3323 = vmatprep.subr.mxu0 0.0
    %3324 = vmatpush1.msra.mxu0 0.0
    %3325 = vmatprep.subr.mxu0 0.0
    %3326 = vmatpush1.msra.mxu0 0.0
    %3327 = vmatprep.subr.mxu0 0.0
    %3328 = vmatpush1.msra.mxu0 0.0
    %3329 = vmatprep.subr.mxu0 0.0
    %3330 = vmatpush1.msra.mxu0 0.0
    %3331 = vmatprep.subr.mxu0 0.0
    %3332 = vmatpush1.msra.mxu0 0.0
    %3333 = vmatprep.subr.mxu0 0.0
    %3334 = vmatpush1.msra.mxu0 0.0
    %3335 = vmatprep.subr.mxu0 0.0
    %3336 = vmatpush1.msra.mxu0 0.0
    %3337 = vmatprep.subr.mxu0 0.0
    %3338 = vmatpush1.msra.mxu0 0.0
    %3339 = vmatprep.subr.mxu0 0.0
    %3340 = vmatpush1.msra.mxu0 0.0
    %3341 = vmatprep.subr.mxu0 0.0
    %3342 = vmatpush1.msra.mxu0 0.0
    %3343 = vmatprep.subr.mxu0 0.0
    %3344 = vmatpush1.msra.mxu0 0.0
    %3345 = vmatprep.mubr.f32.mxu0 0.0
    %3346 = vmatmul.mubr.f32.gmra.mrb[0].mxu0 %v3216
    %v3347 = vpop.f32.mrb[0].mxu0
    %v3348 = vadd.f32 0.0, %v3347
    %v3349 = vpop.f32.mrb[0].mxu0
    %v3350 = vadd.f32 0.0, %v3349
    %3351 = vdwg.mxu0
    %3352 = vmatprep.subr.mxu0 %v3220
    %3353 = vmatpush1.msra.mxu0 %v3219
    %3354 = vmatprep.subr.mxu0 %v3224
    %3355 = vmatpush1.msra.mxu0 %v3223
    %3356 = vmatprep.subr.mxu0 %v3228
    %3357 = vmatpush1.msra.mxu0 %v3227
    %3358 = vmatprep.subr.mxu0 %v3232
    %3359 = vmatpush1.msra.mxu0 %v3231
    %3360 = vmatprep.subr.mxu0 %v3236
    %3361 = vmatpush1.msra.mxu0 %v3235
    %3362 = vmatprep.subr.mxu0 %v3240
    %3363 = vmatpush1.msra.mxu0 %v3239
    %3364 = vmatprep.subr.mxu0 %v3244
    %3365 = vmatpush1.msra.mxu0 %v3243
    %3366 = vmatprep.subr.mxu0 %v3248
    %3367 = vmatpush1.msra.mxu0 %v3247
    %3368 = vmatprep.subr.mxu0 %v3252
    %3369 = vmatpush1.msra.mxu0 %v3251
    %3370 = vmatprep.subr.mxu0 %v3256
    %3371 = vmatpush1.msra.mxu0 %v3255
    %3372 = vmatprep.subr.mxu0 %v3260
    %3373 = vmatpush1.msra.mxu0 %v3259
    %3374 = vmatprep.subr.mxu0 %v3264
    %3375 = vmatpush1.msra.mxu0 %v3263
    %3376 = vmatprep.subr.mxu0 %v3268
    %3377 = vmatpush1.msra.mxu0 %v3267
    %3378 = vmatprep.subr.mxu0 %v3272
    %3379 = vmatpush1.msra.mxu0 %v3271
    %3380 = vmatprep.subr.mxu0 %v3276
    %3381 = vmatpush1.msra.mxu0 %v3275
    %3382 = vmatprep.subr.mxu0 %v3280
    %3383 = vmatpush1.msra.mxu0 %v3279
    %3384 = vmatprep.subr.mxu0 0.0
    %3385 = vmatpush1.msra.mxu0 0.0
    %3386 = vmatprep.subr.mxu0 0.0
    %3387 = vmatpush1.msra.mxu0 0.0
    %3388 = vmatprep.subr.mxu0 0.0
    %3389 = vmatpush1.msra.mxu0 0.0
    %3390 = vmatprep.subr.mxu0 0.0
    %3391 = vmatpush1.msra.mxu0 0.0
    %3392 = vmatprep.subr.mxu0 0.0
    %3393 = vmatpush1.msra.mxu0 0.0
    %3394 = vmatprep.subr.mxu0 0.0
    %3395 = vmatpush1.msra.mxu0 0.0
    %3396 = vmatprep.subr.mxu0 0.0
    %3397 = vmatpush1.msra.mxu0 0.0
    %3398 = vmatprep.subr.mxu0 0.0
    %3399 = vmatpush1.msra.mxu0 0.0
    %3400 = vmatprep.subr.mxu0 0.0
    %3401 = vmatpush1.msra.mxu0 0.0
    %3402 = vmatprep.subr.mxu0 0.0
    %3403 = vmatpush1.msra.mxu0 0.0
    %3404 = vmatprep.subr.mxu0 0.0
    %3405 = vmatpush1.msra.mxu0 0.0
    %3406 = vmatprep.subr.mxu0 0.0
    %3407 = vmatpush1.msra.mxu0 0.0
    %3408 = vmatprep.subr.mxu0 0.0
    %3409 = vmatpush1.msra.mxu0 0.0
    %3410 = vmatprep.subr.mxu0 0.0
    %3411 = vmatpush1.msra.mxu0 0.0
    %3412 = vmatprep.subr.mxu0 0.0
    %3413 = vmatpush1.msra.mxu0 0.0
    %3414 = vmatprep.subr.mxu0 0.0
    %3415 = vmatpush1.msra.mxu0 0.0
    %3416 = vmatprep.mubr.f32.mxu0 0.0
    %3417 = vmatmul.mubr.f32.gmra.mrb[0].mxu0 %v3216
    %v3418 = vpop.f32.mrb[0].mxu0
    %v3419 = vadd.f32 0.0, %v3418
    %v3420 = vpop.f32.mrb[0].mxu0
    %v3421 = vadd.f32 0.0, %v3420
    %3422 = vdwg.mxu0
    %v3423 = vadd.f32 %v3212, %v3348
    %v3424 = vadd.f32 %v3213, %v3350
    %v3425 = vadd.f32 %v3214, %v3419
    %v3426 = vadd.f32 %v3215, %v3421
    %v3427 = vld [vmem:[#allocation3] sm:$0xff]
    %v3428 = vxor.u32 %v3423, 2147483648
    %v3429 = vxor.u32 %v3424, 2147483648
    %v3430 = vxor.u32 %v3425, 2147483648
    %v3431 = vmul.f32 %v3428, 1.442695
    %v3432 = vpow.pop %v3431
    %v3433 = vmul.f32 %v3429, 1.442695
    %v3434 = vpow.pop %v3433
    %v3435 = vmul.f32 %v3430, 1.442695
    %v3436 = vpow.pop %v3435
    %v3437 = vadd.f32 %v3432, 1.0
    %v3438 = vadd.f32 %v3434, 1.0
    %v3439 = vadd.f32 %v3436, 1.0
    %v3440 = vrcp.pop %v3437
    %v3441 = vmul.f32 1.0, %v3440
    %v3442 = vrcp.pop %v3438
    %v3443 = vmul.f32 1.0, %v3442
    %v3444 = vrcp.pop %v3439
    %v3445 = vmul.f32 1.0, %v3444
    %v3446 = vtanh.pop %v3426
    %v3447 = vmul.f32 %v3443, %v3427
    %v3448 = vmul.f32 %v3441, %v3446
    %v3449 = vadd.f32 %v3447, %v3448
    %v3450 = vtanh.pop %v3449
    %v3451 = vmul.f32 %v3445, %v3450
    %3452 = vst [vmem:[#allocation3] sm:$0xff] %v3449
    %3453 = vst [vmem:[#allocation2] sm:$0xff] %v3451
    %v3454 = vld [vmem:[#allocation2] sm:$0xff]
    %v3455 = vld [vmem:[#allocation2 + $0x8] sm:$0xff]
    %v3456 = vld [vmem:[#allocation8] sm:$0xff]
    %v3457 = vld [vmem:[#allocation8 + $0x8] sm:$0xff]
    %v3458 = vld [vmem:[#allocation8 + $0x10] sm:$0xff]
    %v3459 = vld [vmem:[#allocation8 + $0x18] sm:$0xff]
    %v3460 = vld [vmem:[#allocation8 + $0x20] sm:$0xff]
    %v3461 = vld [vmem:[#allocation8 + $0x28] sm:$0xff]
    %v3462 = vld [vmem:[#allocation8 + $0x30] sm:$0xff]
    %v3463 = vld [vmem:[#allocation8 + $0x38] sm:$0xff]
    %v3464 = vld [vmem:[#allocation8 + $0x40] sm:$0xff]
    %v3465 = vld [vmem:[#allocation8 + $0x48] sm:$0xff]
    %v3466 = vld [vmem:[#allocation8 + $0x50] sm:$0xff]
    %v3467 = vld [vmem:[#allocation8 + $0x58] sm:$0xff]
    %v3468 = vld [vmem:[#allocation8 + $0x60] sm:$0xff]
    %v3469 = vld [vmem:[#allocation8 + $0x68] sm:$0xff]
    %v3470 = vld [vmem:[#allocation8 + $0x70] sm:$0xff]
    %v3471 = vld [vmem:[#allocation8 + $0x78] sm:$0xff]
    %v3472 = vld [vmem:[#allocation8 + $0x80] sm:$0xff]
    %v3473 = vld [vmem:[#allocation8 + $0x88] sm:$0xff]
    %v3474 = vld [vmem:[#allocation8 + $0x90] sm:$0xff]
    %v3475 = vld [vmem:[#allocation8 + $0x98] sm:$0xff]
    %v3476 = vld [vmem:[#allocation8 + $0xa0] sm:$0xff]
    %v3477 = vld [vmem:[#allocation8 + $0xa8] sm:$0xff]
    %v3478 = vld [vmem:[#allocation8 + $0xb0] sm:$0xff]
    %v3479 = vld [vmem:[#allocation8 + $0xb8] sm:$0xff]
    %v3480 = vld [vmem:[#allocation8 + $0xc0] sm:$0xff]
    %v3481 = vld [vmem:[#allocation8 + $0xc8] sm:$0xff]
    %v3482 = vld [vmem:[#allocation8 + $0xd0] sm:$0xff]
    %v3483 = vld [vmem:[#allocation8 + $0xd8] sm:$0xff]
    %v3484 = vld [vmem:[#allocation8 + $0xe0] sm:$0xff]
    %v3485 = vld [vmem:[#allocation8 + $0xe8] sm:$0xff]
    %v3486 = vld [vmem:[#allocation8 + $0xf0] sm:$0xff]
    %v3487 = vld [vmem:[#allocation8 + $0xf8] sm:$0xff]
    %v3488 = vld [vmem:[#allocation8 + $0x100] sm:$0xff]
    %v3489 = vld [vmem:[#allocation8 + $0x108] sm:$0xff]
    %v3490 = vld [vmem:[#allocation8 + $0x110] sm:$0xff]
    %v3491 = vld [vmem:[#allocation8 + $0x118] sm:$0xff]
    %v3492 = vld [vmem:[#allocation8 + $0x120] sm:$0xff]
    %v3493 = vld [vmem:[#allocation8 + $0x128] sm:$0xff]
    %v3494 = vld [vmem:[#allocation8 + $0x130] sm:$0xff]
    %v3495 = vld [vmem:[#allocation8 + $0x138] sm:$0xff]
    %v3496 = vld [vmem:[#allocation8 + $0x140] sm:$0xff]
    %v3497 = vld [vmem:[#allocation8 + $0x148] sm:$0xff]
    %v3498 = vld [vmem:[#allocation8 + $0x150] sm:$0xff]
    %v3499 = vld [vmem:[#allocation8 + $0x158] sm:$0xff]
    %v3500 = vld [vmem:[#allocation8 + $0x160] sm:$0xff]
    %v3501 = vld [vmem:[#allocation8 + $0x168] sm:$0xff]
    %v3502 = vld [vmem:[#allocation8 + $0x170] sm:$0xff]
    %v3503 = vld [vmem:[#allocation8 + $0x178] sm:$0xff]
    %v3504 = vld [vmem:[#allocation8 + $0x180] sm:$0xff]
    %v3505 = vld [vmem:[#allocation8 + $0x188] sm:$0xff]
    %v3506 = vld [vmem:[#allocation8 + $0x190] sm:$0xff]
    %v3507 = vld [vmem:[#allocation8 + $0x198] sm:$0xff]
    %v3508 = vld [vmem:[#allocation8 + $0x1a0] sm:$0xff]
    %v3509 = vld [vmem:[#allocation8 + $0x1a8] sm:$0xff]
    %v3510 = vld [vmem:[#allocation8 + $0x1b0] sm:$0xff]
    %v3511 = vld [vmem:[#allocation8 + $0x1b8] sm:$0xff]
    %v3512 = vld [vmem:[#allocation8 + $0x1c0] sm:$0xff]
    %v3513 = vld [vmem:[#allocation8 + $0x1c8] sm:$0xff]
    %v3514 = vld [vmem:[#allocation8 + $0x1d0] sm:$0xff]
    %v3515 = vld [vmem:[#allocation8 + $0x1d8] sm:$0xff]
    %v3516 = vld [vmem:[#allocation8 + $0x1e0] sm:$0xff]
    %v3517 = vld [vmem:[#allocation8 + $0x1e8] sm:$0xff]
    %v3518 = vld [vmem:[#allocation8 + $0x1f0] sm:$0xff]
    %v3519 = vld [vmem:[#allocation8 + $0x1f8] sm:$0xff]
    %v3520 = vld [vmem:[#allocation8 + $0x200] sm:$0xff]
    %v3521 = vld [vmem:[#allocation8 + $0x208] sm:$0xff]
    %v3522 = vld [vmem:[#allocation8 + $0x210] sm:$0xff]
    %v3523 = vld [vmem:[#allocation8 + $0x218] sm:$0xff]
    %v3524 = vld [vmem:[#allocation8 + $0x220] sm:$0xff]
    %v3525 = vld [vmem:[#allocation8 + $0x228] sm:$0xff]
    %v3526 = vld [vmem:[#allocation8 + $0x230] sm:$0xff]
    %v3527 = vld [vmem:[#allocation8 + $0x238] sm:$0xff]
    %v3528 = vld [vmem:[#allocation8 + $0x240] sm:$0xff]
    %v3529 = vld [vmem:[#allocation8 + $0x248] sm:$0xff]
    %v3530 = vld [vmem:[#allocation8 + $0x250] sm:$0xff]
    %v3531 = vld [vmem:[#allocation8 + $0x258] sm:$0xff]
    %v3532 = vld [vmem:[#allocation8 + $0x260] sm:$0xff]
    %v3533 = vld [vmem:[#allocation8 + $0x268] sm:$0xff]
    %v3534 = vld [vmem:[#allocation8 + $0x270] sm:$0xff]
    %v3535 = vld [vmem:[#allocation8 + $0x278] sm:$0xff]
    %v3536 = vld [vmem:[#allocation8 + $0x280] sm:$0xff]
    %v3537 = vld [vmem:[#allocation8 + $0x288] sm:$0xff]
    %v3538 = vld [vmem:[#allocation8 + $0x290] sm:$0xff]
    %v3539 = vld [vmem:[#allocation8 + $0x298] sm:$0xff]
    %v3540 = vld [vmem:[#allocation8 + $0x2a0] sm:$0xff]
    %v3541 = vld [vmem:[#allocation8 + $0x2a8] sm:$0xff]
    %v3542 = vld [vmem:[#allocation8 + $0x2b0] sm:$0xff]
    %v3543 = vld [vmem:[#allocation8 + $0x2b8] sm:$0xff]
    %v3544 = vld [vmem:[#allocation8 + $0x2c0] sm:$0xff]
    %v3545 = vld [vmem:[#allocation8 + $0x2c8] sm:$0xff]
    %v3546 = vld [vmem:[#allocation8 + $0x2d0] sm:$0xff]
    %v3547 = vld [vmem:[#allocation8 + $0x2d8] sm:$0xff]
    %v3548 = vld [vmem:[#allocation8 + $0x2e0] sm:$0xff]
    %v3549 = vld [vmem:[#allocation8 + $0x2e8] sm:$0xff]
    %v3550 = vld [vmem:[#allocation8 + $0x2f0] sm:$0xff]
    %v3551 = vld [vmem:[#allocation8 + $0x2f8] sm:$0xff]
    %v3552 = vld [vmem:[#allocation8 + $0x300] sm:$0xff]
    %v3553 = vld [vmem:[#allocation8 + $0x308] sm:$0xff]
    %v3554 = vld [vmem:[#allocation8 + $0x310] sm:$0xff]
    %v3555 = vld [vmem:[#allocation8 + $0x318] sm:$0xff]
    %v3556 = vld [vmem:[#allocation8 + $0x320] sm:$0xff]
    %v3557 = vld [vmem:[#allocation8 + $0x328] sm:$0xff]
    %v3558 = vld [vmem:[#allocation8 + $0x330] sm:$0xff]
    %v3559 = vld [vmem:[#allocation8 + $0x338] sm:$0xff]
    %v3560 = vld [vmem:[#allocation8 + $0x340] sm:$0xff]
    %v3561 = vld [vmem:[#allocation8 + $0x348] sm:$0xff]
    %v3562 = vld [vmem:[#allocation8 + $0x350] sm:$0xff]
    %v3563 = vld [vmem:[#allocation8 + $0x358] sm:$0xff]
    %v3564 = vld [vmem:[#allocation8 + $0x360] sm:$0xff]
    %v3565 = vld [vmem:[#allocation8 + $0x368] sm:$0xff]
    %v3566 = vld [vmem:[#allocation8 + $0x370] sm:$0xff]
    %v3567 = vld [vmem:[#allocation8 + $0x378] sm:$0xff]
    %v3568 = vld [vmem:[#allocation8 + $0x380] sm:$0xff]
    %v3569 = vld [vmem:[#allocation8 + $0x388] sm:$0xff]
    %v3570 = vld [vmem:[#allocation8 + $0x390] sm:$0xff]
    %v3571 = vld [vmem:[#allocation8 + $0x398] sm:$0xff]
    %v3572 = vld [vmem:[#allocation8 + $0x3a0] sm:$0xff]
    %v3573 = vld [vmem:[#allocation8 + $0x3a8] sm:$0xff]
    %v3574 = vld [vmem:[#allocation8 + $0x3b0] sm:$0xff]
    %v3575 = vld [vmem:[#allocation8 + $0x3b8] sm:$0xff]
    %v3576 = vld [vmem:[#allocation8 + $0x3c0] sm:$0xff]
    %v3577 = vld [vmem:[#allocation8 + $0x3c8] sm:$0xff]
    %v3578 = vld [vmem:[#allocation8 + $0x3d0] sm:$0xff]
    %v3579 = vld [vmem:[#allocation8 + $0x3d8] sm:$0xff]
    %v3580 = vld [vmem:[#allocation8 + $0x3e0] sm:$0xff]
    %v3581 = vld [vmem:[#allocation8 + $0x3e8] sm:$0xff]
    %v3582 = vld [vmem:[#allocation8 + $0x3f0] sm:$0xff]
    %v3583 = vld [vmem:[#allocation8 + $0x3f8] sm:$0xff]
    %v3584 = vld [vmem:[%s5] sm:$0xf]
    %v3586 = vlaneseq
    %v3587 = vshrl.u32 %v3586, 7
    %v3588 = vsub.s32 0, %v3587
    %v3589 = vrot.slane %v3584, %v3588
    %v3590 = vlaneseq
    %v3591 = vshrl.u32 %v3590, 7
    %v3592 = vsub.s32 1, %v3591
    %v3593 = vrot.slane %v3584, %v3592
    %v3594 = vlaneseq
    %v3595 = vshrl.u32 %v3594, 7
    %v3596 = vsub.s32 2, %v3595
    %v3597 = vrot.slane %v3584, %v3596
    %v3598 = vlaneseq
    %v3599 = vshrl.u32 %v3598, 7
    %v3600 = vsub.s32 3, %v3599
    %v3601 = vrot.slane %v3584, %v3600
    %3606 = vmatprep.subr.mxu0 %v3457
    %3607 = vmatpush1.msra.mxu0 %v3456
    %3608 = vmatprep.subr.mxu0 %v3461
    %3609 = vmatpush1.msra.mxu0 %v3460
    %3610 = vmatprep.subr.mxu0 %v3465
    %3611 = vmatpush1.msra.mxu0 %v3464
    %3612 = vmatprep.subr.mxu0 %v3469
    %3613 = vmatpush1.msra.mxu0 %v3468
    %3614 = vmatprep.subr.mxu0 %v3473
    %3615 = vmatpush1.msra.mxu0 %v3472
    %3616 = vmatprep.subr.mxu0 %v3477
    %3617 = vmatpush1.msra.mxu0 %v3476
    %3618 = vmatprep.subr.mxu0 %v3481
    %3619 = vmatpush1.msra.mxu0 %v3480
    %3620 = vmatprep.subr.mxu0 %v3485
    %3621 = vmatpush1.msra.mxu0 %v3484
    %3622 = vmatprep.subr.mxu0 %v3489
    %3623 = vmatpush1.msra.mxu0 %v3488
    %3624 = vmatprep.subr.mxu0 %v3493
    %3625 = vmatpush1.msra.mxu0 %v3492
    %3626 = vmatprep.subr.mxu0 %v3497
    %3627 = vmatpush1.msra.mxu0 %v3496
    %3628 = vmatprep.subr.mxu0 %v3501
    %3629 = vmatpush1.msra.mxu0 %v3500
    %3630 = vmatprep.subr.mxu0 %v3505
    %3631 = vmatpush1.msra.mxu0 %v3504
    %3632 = vmatprep.subr.mxu0 %v3509
    %3633 = vmatpush1.msra.mxu0 %v3508
    %3634 = vmatprep.subr.mxu0 %v3513
    %3635 = vmatpush1.msra.mxu0 %v3512
    %3636 = vmatprep.subr.mxu0 %v3517
    %3637 = vmatpush1.msra.mxu0 %v3516
    %3638 = vmatprep.subr.mxu0 %v3521
    %3639 = vmatpush1.msra.mxu0 %v3520
    %3640 = vmatprep.subr.mxu0 %v3525
    %3641 = vmatpush1.msra.mxu0 %v3524
    %3642 = vmatprep.subr.mxu0 %v3529
    %3643 = vmatpush1.msra.mxu0 %v3528
    %3644 = vmatprep.subr.mxu0 %v3533
    %3645 = vmatpush1.msra.mxu0 %v3532
    %3646 = vmatprep.subr.mxu0 %v3537
    %3647 = vmatpush1.msra.mxu0 %v3536
    %3648 = vmatprep.subr.mxu0 %v3541
    %3649 = vmatpush1.msra.mxu0 %v3540
    %3650 = vmatprep.subr.mxu0 %v3545
    %3651 = vmatpush1.msra.mxu0 %v3544
    %3652 = vmatprep.subr.mxu0 %v3549
    %3653 = vmatpush1.msra.mxu0 %v3548
    %3654 = vmatprep.subr.mxu0 %v3553
    %3655 = vmatpush1.msra.mxu0 %v3552
    %3656 = vmatprep.subr.mxu0 %v3557
    %3657 = vmatpush1.msra.mxu0 %v3556
    %3658 = vmatprep.subr.mxu0 %v3561
    %3659 = vmatpush1.msra.mxu0 %v3560
    %3660 = vmatprep.subr.mxu0 %v3565
    %3661 = vmatpush1.msra.mxu0 %v3564
    %3662 = vmatprep.subr.mxu0 %v3569
    %3663 = vmatpush1.msra.mxu0 %v3568
    %3664 = vmatprep.subr.mxu0 %v3573
    %3665 = vmatpush1.msra.mxu0 %v3572
    %3666 = vmatprep.subr.mxu0 %v3577
    %3667 = vmatpush1.msra.mxu0 %v3576
    %3668 = vmatprep.subr.mxu0 %v3581
    %3669 = vmatpush1.msra.mxu0 %v3580
    %3670 = vmatprep.mubr.f32.mxu0 %v3455
    %3671 = vmatmul.mubr.f32.gmra.mrb[0].mxu0 %v3454
    %v3672 = vpop.f32.mrb[0].mxu0
    %v3673 = vadd.f32 %v3589, %v3672
    %v3674 = vpop.f32.mrb[0].mxu0
    %v3675 = vadd.f32 %v3593, %v3674
    %3676 = vdwg.mxu0
    %3677 = vmatprep.subr.mxu0 %v3459
    %3678 = vmatpush1.msra.mxu0 %v3458
    %3679 = vmatprep.subr.mxu0 %v3463
    %3680 = vmatpush1.msra.mxu0 %v3462
    %3681 = vmatprep.subr.mxu0 %v3467
    %3682 = vmatpush1.msra.mxu0 %v3466
    %3683 = vmatprep.subr.mxu0 %v3471
    %3684 = vmatpush1.msra.mxu0 %v3470
    %3685 = vmatprep.subr.mxu0 %v3475
    %3686 = vmatpush1.msra.mxu0 %v3474
    %3687 = vmatprep.subr.mxu0 %v3479
    %3688 = vmatpush1.msra.mxu0 %v3478
    %3689 = vmatprep.subr.mxu0 %v3483
    %3690 = vmatpush1.msra.mxu0 %v3482
    %3691 = vmatprep.subr.mxu0 %v3487
    %3692 = vmatpush1.msra.mxu0 %v3486
    %3693 = vmatprep.subr.mxu0 %v3491
    %3694 = vmatpush1.msra.mxu0 %v3490
    %3695 = vmatprep.subr.mxu0 %v3495
    %3696 = vmatpush1.msra.mxu0 %v3494
    %3697 = vmatprep.subr.mxu0 %v3499
    %3698 = vmatpush1.msra.mxu0 %v3498
    %3699 = vmatprep.subr.mxu0 %v3503
    %3700 = vmatpush1.msra.mxu0 %v3502
    %3701 = vmatprep.subr.mxu0 %v3507
    %3702 = vmatpush1.msra.mxu0 %v3506
    %3703 = vmatprep.subr.mxu0 %v3511
    %3704 = vmatpush1.msra.mxu0 %v3510
    %3705 = vmatprep.subr.mxu0 %v3515
    %3706 = vmatpush1.msra.mxu0 %v3514
    %3707 = vmatprep.subr.mxu0 %v3519
    %3708 = vmatpush1.msra.mxu0 %v3518
    %3709 = vmatprep.subr.mxu0 %v3523
    %3710 = vmatpush1.msra.mxu0 %v3522
    %3711 = vmatprep.subr.mxu0 %v3527
    %3712 = vmatpush1.msra.mxu0 %v3526
    %3713 = vmatprep.subr.mxu0 %v3531
    %3714 = vmatpush1.msra.mxu0 %v3530
    %3715 = vmatprep.subr.mxu0 %v3535
    %3716 = vmatpush1.msra.mxu0 %v3534
    %3717 = vmatprep.subr.mxu0 %v3539
    %3718 = vmatpush1.msra.mxu0 %v3538
    %3719 = vmatprep.subr.mxu0 %v3543
    %3720 = vmatpush1.msra.mxu0 %v3542
    %3721 = vmatprep.subr.mxu0 %v3547
    %3722 = vmatpush1.msra.mxu0 %v3546
    %3723 = vmatprep.subr.mxu0 %v3551
    %3724 = vmatpush1.msra.mxu0 %v3550
    %3725 = vmatprep.subr.mxu0 %v3555
    %3726 = vmatpush1.msra.mxu0 %v3554
    %3727 = vmatprep.subr.mxu0 %v3559
    %3728 = vmatpush1.msra.mxu0 %v3558
    %3729 = vmatprep.subr.mxu0 %v3563
    %3730 = vmatpush1.msra.mxu0 %v3562
    %3731 = vmatprep.subr.mxu0 %v3567
    %3732 = vmatpush1.msra.mxu0 %v3566
    %3733 = vmatprep.subr.mxu0 %v3571
    %3734 = vmatpush1.msra.mxu0 %v3570
    %3735 = vmatprep.subr.mxu0 %v3575
    %3736 = vmatpush1.msra.mxu0 %v3574
    %3737 = vmatprep.subr.mxu0 %v3579
    %3738 = vmatpush1.msra.mxu0 %v3578
    %3739 = vmatprep.subr.mxu0 %v3583
    %3740 = vmatpush1.msra.mxu0 %v3582
    %3741 = vmatprep.mubr.f32.mxu0 %v3455
    %3742 = vmatmul.mubr.f32.gmra.mrb[0].mxu0 %v3454
    %v3743 = vpop.f32.mrb[0].mxu0
    %v3744 = vadd.f32 %v3597, %v3743
    %v3745 = vpop.f32.mrb[0].mxu0
    %v3746 = vadd.f32 %v3601, %v3745
    %3747 = vdwg.mxu0
    %v3748 = vld [vmem:[#allocation4] sm:$0xff]
    %v3749 = vxor.u32 %v3673, 2147483648
    %v3750 = vxor.u32 %v3675, 2147483648
    %v3751 = vxor.u32 %v3744, 2147483648
    %v3752 = vmul.f32 %v3749, 1.442695
    %v3753 = vpow.pop %v3752
    %v3754 = vmul.f32 %v3750, 1.442695
    %v3755 = vpow.pop %v3754
    %v3756 = vmul.f32 %v3751, 1.442695
    %v3757 = vpow.pop %v3756
    %v3758 = vadd.f32 %v3753, 1.0
    %v3759 = vadd.f32 %v3755, 1.0
    %v3760 = vadd.f32 %v3757, 1.0
    %v3761 = vrcp.pop %v3758
    %v3762 = vmul.f32 1.0, %v3761
    %v3763 = vrcp.pop %v3759
    %v3764 = vmul.f32 1.0, %v3763
    %v3765 = vrcp.pop %v3760
    %v3766 = vmul.f32 1.0, %v3765
    %v3767 = vtanh.pop %v3746
    %v3768 = vmul.f32 %v3764, %v3748
    %v3769 = vmul.f32 %v3762, %v3767
    %v3770 = vadd.f32 %v3768, %v3769
    %v3771 = vtanh.pop %v3770
    %v3772 = vmul.f32 %v3766, %v3771
    %3773 = vst [vmem:[#allocation4] sm:$0xff] %v3770
    %3774 = vst [vmem:[#allocation2 + $0x8] sm:$0xff] %v3772
    %vm3775 = vcmp.eq.s32.totalorder %v77, 6
    %v3776 = vsel %vm3775, %v75, 0.0
    %v3777 = vsel %vm80, %v3776, 0.0
    %3778 = vadd.xlane.f32.xlu0 %v3777
    %v3779 = vpop.xlane.xlu0 %3778
    %v3780 = vld [vmem:[%s1] sm:$0xf]
    %v3782 = vlaneseq
    %v3783 = vshrl.u32 %v3782, 7
    %v3784 = vsub.s32 0, %v3783
    %v3785 = vrot.slane %v3780, %v3784
    %v3786 = vlaneseq
    %v3787 = vshrl.u32 %v3786, 7
    %v3788 = vsub.s32 1, %v3787
    %v3789 = vrot.slane %v3780, %v3788
    %v3790 = vlaneseq
    %v3791 = vshrl.u32 %v3790, 7
    %v3792 = vsub.s32 2, %v3791
    %v3793 = vrot.slane %v3780, %v3792
    %v3794 = vlaneseq
    %v3795 = vshrl.u32 %v3794, 7
    %v3796 = vsub.s32 3, %v3795
    %v3797 = vrot.slane %v3780, %v3796
    %v3802 = vmul.f32 %v3779, %v3785
    %v3803 = vmul.f32 %v3779, %v3789
    %v3804 = vmul.f32 %v3779, %v3793
    %v3805 = vmul.f32 %v3779, %v3797
    %v3806 = vld [vmem:[%s2] sm:$0xf]
    %v3808 = vlaneseq
    %v3809 = vshrl.u32 %v3808, 7
    %v3810 = vsub.s32 0, %v3809
    %v3811 = vrot.slane %v3806, %v3810
    %v3812 = vlaneseq
    %v3813 = vshrl.u32 %v3812, 7
    %v3814 = vsub.s32 1, %v3813
    %v3815 = vrot.slane %v3806, %v3814
    %v3816 = vlaneseq
    %v3817 = vshrl.u32 %v3816, 7
    %v3818 = vsub.s32 2, %v3817
    %v3819 = vrot.slane %v3806, %v3818
    %v3820 = vlaneseq
    %v3821 = vshrl.u32 %v3820, 7
    %v3822 = vsub.s32 3, %v3821
    %v3823 = vrot.slane %v3806, %v3822
    %v3828 = vadd.f32 %v3802, %v3811
    %v3829 = vadd.f32 %v3803, %v3815
    %v3830 = vadd.f32 %v3804, %v3819
    %v3831 = vadd.f32 %v3805, %v3823
    %v3832 = vld [vmem:[#allocation2] sm:$0xff]
    %v3833 = vld [vmem:[#allocation6] sm:$0xff]
    %v3834 = vld [vmem:[#allocation6 + $0x8] sm:$0xff]
    %v3835 = vld [vmem:[#allocation6 + $0x10] sm:$0xff]
    %v3836 = vld [vmem:[#allocation6 + $0x18] sm:$0xff]
    %v3837 = vld [vmem:[#allocation6 + $0x20] sm:$0xff]
    %v3838 = vld [vmem:[#allocation6 + $0x28] sm:$0xff]
    %v3839 = vld [vmem:[#allocation6 + $0x30] sm:$0xff]
    %v3840 = vld [vmem:[#allocation6 + $0x38] sm:$0xff]
    %v3841 = vld [vmem:[#allocation6 + $0x40] sm:$0xff]
    %v3842 = vld [vmem:[#allocation6 + $0x48] sm:$0xff]
    %v3843 = vld [vmem:[#allocation6 + $0x50] sm:$0xff]
    %v3844 = vld [vmem:[#allocation6 + $0x58] sm:$0xff]
    %v3845 = vld [vmem:[#allocation6 + $0x60] sm:$0xff]
    %v3846 = vld [vmem:[#allocation6 + $0x68] sm:$0xff]
    %v3847 = vld [vmem:[#allocation6 + $0x70] sm:$0xff]
    %v3848 = vld [vmem:[#allocation6 + $0x78] sm:$0xff]
    %v3849 = vld [vmem:[#allocation6 + $0x80] sm:$0xff]
    %v3850 = vld [vmem:[#allocation6 + $0x88] sm:$0xff]
    %v3851 = vld [vmem:[#allocation6 + $0x90] sm:$0xff]
    %v3852 = vld [vmem:[#allocation6 + $0x98] sm:$0xff]
    %v3853 = vld [vmem:[#allocation6 + $0xa0] sm:$0xff]
    %v3854 = vld [vmem:[#allocation6 + $0xa8] sm:$0xff]
    %v3855 = vld [vmem:[#allocation6 + $0xb0] sm:$0xff]
    %v3856 = vld [vmem:[#allocation6 + $0xb8] sm:$0xff]
    %v3857 = vld [vmem:[#allocation6 + $0xc0] sm:$0xff]
    %v3858 = vld [vmem:[#allocation6 + $0xc8] sm:$0xff]
    %v3859 = vld [vmem:[#allocation6 + $0xd0] sm:$0xff]
    %v3860 = vld [vmem:[#allocation6 + $0xd8] sm:$0xff]
    %v3861 = vld [vmem:[#allocation6 + $0xe0] sm:$0xff]
    %v3862 = vld [vmem:[#allocation6 + $0xe8] sm:$0xff]
    %v3863 = vld [vmem:[#allocation6 + $0xf0] sm:$0xff]
    %v3864 = vld [vmem:[#allocation6 + $0xf8] sm:$0xff]
    %v3865 = vld [vmem:[#allocation6 + $0x100] sm:$0xff]
    %v3866 = vld [vmem:[#allocation6 + $0x108] sm:$0xff]
    %v3867 = vld [vmem:[#allocation6 + $0x110] sm:$0xff]
    %v3868 = vld [vmem:[#allocation6 + $0x118] sm:$0xff]
    %v3869 = vld [vmem:[#allocation6 + $0x120] sm:$0xff]
    %v3870 = vld [vmem:[#allocation6 + $0x128] sm:$0xff]
    %v3871 = vld [vmem:[#allocation6 + $0x130] sm:$0xff]
    %v3872 = vld [vmem:[#allocation6 + $0x138] sm:$0xff]
    %v3873 = vld [vmem:[#allocation6 + $0x140] sm:$0xff]
    %v3874 = vld [vmem:[#allocation6 + $0x148] sm:$0xff]
    %v3875 = vld [vmem:[#allocation6 + $0x150] sm:$0xff]
    %v3876 = vld [vmem:[#allocation6 + $0x158] sm:$0xff]
    %v3877 = vld [vmem:[#allocation6 + $0x160] sm:$0xff]
    %v3878 = vld [vmem:[#allocation6 + $0x168] sm:$0xff]
    %v3879 = vld [vmem:[#allocation6 + $0x170] sm:$0xff]
    %v3880 = vld [vmem:[#allocation6 + $0x178] sm:$0xff]
    %v3881 = vld [vmem:[#allocation6 + $0x180] sm:$0xff]
    %v3882 = vld [vmem:[#allocation6 + $0x188] sm:$0xff]
    %v3883 = vld [vmem:[#allocation6 + $0x190] sm:$0xff]
    %v3884 = vld [vmem:[#allocation6 + $0x198] sm:$0xff]
    %v3885 = vld [vmem:[#allocation6 + $0x1a0] sm:$0xff]
    %v3886 = vld [vmem:[#allocation6 + $0x1a8] sm:$0xff]
    %v3887 = vld [vmem:[#allocation6 + $0x1b0] sm:$0xff]
    %v3888 = vld [vmem:[#allocation6 + $0x1b8] sm:$0xff]
    %v3889 = vld [vmem:[#allocation6 + $0x1c0] sm:$0xff]
    %v3890 = vld [vmem:[#allocation6 + $0x1c8] sm:$0xff]
    %v3891 = vld [vmem:[#allocation6 + $0x1d0] sm:$0xff]
    %v3892 = vld [vmem:[#allocation6 + $0x1d8] sm:$0xff]
    %v3893 = vld [vmem:[#allocation6 + $0x1e0] sm:$0xff]
    %v3894 = vld [vmem:[#allocation6 + $0x1e8] sm:$0xff]
    %v3895 = vld [vmem:[#allocation6 + $0x1f0] sm:$0xff]
    %v3896 = vld [vmem:[#allocation6 + $0x1f8] sm:$0xff]
    %3897 = vmatprep.subr.mxu0 %v3834
    %3898 = vmatpush1.msra.mxu0 %v3833
    %3899 = vmatprep.subr.mxu0 %v3838
    %3900 = vmatpush1.msra.mxu0 %v3837
    %3901 = vmatprep.subr.mxu0 %v3842
    %3902 = vmatpush1.msra.mxu0 %v3841
    %3903 = vmatprep.subr.mxu0 %v3846
    %3904 = vmatpush1.msra.mxu0 %v3845
    %3905 = vmatprep.subr.mxu0 %v3850
    %3906 = vmatpush1.msra.mxu0 %v3849
    %3907 = vmatprep.subr.mxu0 %v3854
    %3908 = vmatpush1.msra.mxu0 %v3853
    %3909 = vmatprep.subr.mxu0 %v3858
    %3910 = vmatpush1.msra.mxu0 %v3857
    %3911 = vmatprep.subr.mxu0 %v3862
    %3912 = vmatpush1.msra.mxu0 %v3861
    %3913 = vmatprep.subr.mxu0 %v3866
    %3914 = vmatpush1.msra.mxu0 %v3865
    %3915 = vmatprep.subr.mxu0 %v3870
    %3916 = vmatpush1.msra.mxu0 %v3869
    %3917 = vmatprep.subr.mxu0 %v3874
    %3918 = vmatpush1.msra.mxu0 %v3873
    %3919 = vmatprep.subr.mxu0 %v3878
    %3920 = vmatpush1.msra.mxu0 %v3877
    %3921 = vmatprep.subr.mxu0 %v3882
    %3922 = vmatpush1.msra.mxu0 %v3881
    %3923 = vmatprep.subr.mxu0 %v3886
    %3924 = vmatpush1.msra.mxu0 %v3885
    %3925 = vmatprep.subr.mxu0 %v3890
    %3926 = vmatpush1.msra.mxu0 %v3889
    %3927 = vmatprep.subr.mxu0 %v3894
    %3928 = vmatpush1.msra.mxu0 %v3893
    %3929 = vmatprep.subr.mxu0 0.0
    %3930 = vmatpush1.msra.mxu0 0.0
    %3931 = vmatprep.subr.mxu0 0.0
    %3932 = vmatpush1.msra.mxu0 0.0
    %3933 = vmatprep.subr.mxu0 0.0
    %3934 = vmatpush1.msra.mxu0 0.0
    %3935 = vmatprep.subr.mxu0 0.0
    %3936 = vmatpush1.msra.mxu0 0.0
    %3937 = vmatprep.subr.mxu0 0.0
    %3938 = vmatpush1.msra.mxu0 0.0
    %3939 = vmatprep.subr.mxu0 0.0
    %3940 = vmatpush1.msra.mxu0 0.0
    %3941 = vmatprep.subr.mxu0 0.0
    %3942 = vmatpush1.msra.mxu0 0.0
    %3943 = vmatprep.subr.mxu0 0.0
    %3944 = vmatpush1.msra.mxu0 0.0
    %3945 = vmatprep.subr.mxu0 0.0
    %3946 = vmatpush1.msra.mxu0 0.0
    %3947 = vmatprep.subr.mxu0 0.0
    %3948 = vmatpush1.msra.mxu0 0.0
    %3949 = vmatprep.subr.mxu0 0.0
    %3950 = vmatpush1.msra.mxu0 0.0
    %3951 = vmatprep.subr.mxu0 0.0
    %3952 = vmatpush1.msra.mxu0 0.0
    %3953 = vmatprep.subr.mxu0 0.0
    %3954 = vmatpush1.msra.mxu0 0.0
    %3955 = vmatprep.subr.mxu0 0.0
    %3956 = vmatpush1.msra.mxu0 0.0
    %3957 = vmatprep.subr.mxu0 0.0
    %3958 = vmatpush1.msra.mxu0 0.0
    %3959 = vmatprep.subr.mxu0 0.0
    %3960 = vmatpush1.msra.mxu0 0.0
    %3961 = vmatprep.mubr.f32.mxu0 0.0
    %3962 = vmatmul.mubr.f32.gmra.mrb[0].mxu0 %v3832
    %v3963 = vpop.f32.mrb[0].mxu0
    %v3964 = vadd.f32 0.0, %v3963
    %v3965 = vpop.f32.mrb[0].mxu0
    %v3966 = vadd.f32 0.0, %v3965
    %3967 = vdwg.mxu0
    %3968 = vmatprep.subr.mxu0 %v3836
    %3969 = vmatpush1.msra.mxu0 %v3835
    %3970 = vmatprep.subr.mxu0 %v3840
    %3971 = vmatpush1.msra.mxu0 %v3839
    %3972 = vmatprep.subr.mxu0 %v3844
    %3973 = vmatpush1.msra.mxu0 %v3843
    %3974 = vmatprep.subr.mxu0 %v3848
    %3975 = vmatpush1.msra.mxu0 %v3847
    %3976 = vmatprep.subr.mxu0 %v3852
    %3977 = vmatpush1.msra.mxu0 %v3851
    %3978 = vmatprep.subr.mxu0 %v3856
    %3979 = vmatpush1.msra.mxu0 %v3855
    %3980 = vmatprep.subr.mxu0 %v3860
    %3981 = vmatpush1.msra.mxu0 %v3859
    %3982 = vmatprep.subr.mxu0 %v3864
    %3983 = vmatpush1.msra.mxu0 %v3863
    %3984 = vmatprep.subr.mxu0 %v3868
    %3985 = vmatpush1.msra.mxu0 %v3867
    %3986 = vmatprep.subr.mxu0 %v3872
    %3987 = vmatpush1.msra.mxu0 %v3871
    %3988 = vmatprep.subr.mxu0 %v3876
    %3989 = vmatpush1.msra.mxu0 %v3875
    %3990 = vmatprep.subr.mxu0 %v3880
    %3991 = vmatpush1.msra.mxu0 %v3879
    %3992 = vmatprep.subr.mxu0 %v3884
    %3993 = vmatpush1.msra.mxu0 %v3883
    %3994 = vmatprep.subr.mxu0 %v3888
    %3995 = vmatpush1.msra.mxu0 %v3887
    %3996 = vmatprep.subr.mxu0 %v3892
    %3997 = vmatpush1.msra.mxu0 %v3891
    %3998 = vmatprep.subr.mxu0 %v3896
    %3999 = vmatpush1.msra.mxu0 %v3895
    %4000 = vmatprep.subr.mxu0 0.0
    %4001 = vmatpush1.msra.mxu0 0.0
    %4002 = vmatprep.subr.mxu0 0.0
    %4003 = vmatpush1.msra.mxu0 0.0
    %4004 = vmatprep.subr.mxu0 0.0
    %4005 = vmatpush1.msra.mxu0 0.0
    %4006 = vmatprep.subr.mxu0 0.0
    %4007 = vmatpush1.msra.mxu0 0.0
    %4008 = vmatprep.subr.mxu0 0.0
    %4009 = vmatpush1.msra.mxu0 0.0
    %4010 = vmatprep.subr.mxu0 0.0
    %4011 = vmatpush1.msra.mxu0 0.0
    %4012 = vmatprep.subr.mxu0 0.0
    %4013 = vmatpush1.msra.mxu0 0.0
    %4014 = vmatprep.subr.mxu0 0.0
    %4015 = vmatpush1.msra.mxu0 0.0
    %4016 = vmatprep.subr.mxu0 0.0
    %4017 = vmatpush1.msra.mxu0 0.0
    %4018 = vmatprep.subr.mxu0 0.0
    %4019 = vmatpush1.msra.mxu0 0.0
    %4020 = vmatprep.subr.mxu0 0.0
    %4021 = vmatpush1.msra.mxu0 0.0
    %4022 = vmatprep.subr.mxu0 0.0
    %4023 = vmatpush1.msra.mxu0 0.0
    %4024 = vmatprep.subr.mxu0 0.0
    %4025 = vmatpush1.msra.mxu0 0.0
    %4026 = vmatprep.subr.mxu0 0.0
    %4027 = vmatpush1.msra.mxu0 0.0
    %4028 = vmatprep.subr.mxu0 0.0
    %4029 = vmatpush1.msra.mxu0 0.0
    %4030 = vmatprep.subr.mxu0 0.0
    %4031 = vmatpush1.msra.mxu0 0.0
    %4032 = vmatprep.mubr.f32.mxu0 0.0
    %4033 = vmatmul.mubr.f32.gmra.mrb[0].mxu0 %v3832
    %v4034 = vpop.f32.mrb[0].mxu0
    %v4035 = vadd.f32 0.0, %v4034
    %v4036 = vpop.f32.mrb[0].mxu0
    %v4037 = vadd.f32 0.0, %v4036
    %4038 = vdwg.mxu0
    %v4039 = vadd.f32 %v3828, %v3964
    %v4040 = vadd.f32 %v3829, %v3966
    %v4041 = vadd.f32 %v3830, %v4035
    %v4042 = vadd.f32 %v3831, %v4037
    %v4043 = vld [vmem:[#allocation3] sm:$0xff]
    %v4044 = vxor.u32 %v4039, 2147483648
    %v4045 = vxor.u32 %v4040, 2147483648
    %v4046 = vxor.u32 %v4041, 2147483648
    %v4047 = vmul.f32 %v4044, 1.442695
    %v4048 = vpow.pop %v4047
    %v4049 = vmul.f32 %v4045, 1.442695
    %v4050 = vpow.pop %v4049
    %v4051 = vmul.f32 %v4046, 1.442695
    %v4052 = vpow.pop %v4051
    %v4053 = vadd.f32 %v4048, 1.0
    %v4054 = vadd.f32 %v4050, 1.0
    %v4055 = vadd.f32 %v4052, 1.0
    %v4056 = vrcp.pop %v4053
    %v4057 = vmul.f32 1.0, %v4056
    %v4058 = vrcp.pop %v4054
    %v4059 = vmul.f32 1.0, %v4058
    %v4060 = vrcp.pop %v4055
    %v4061 = vmul.f32 1.0, %v4060
    %v4062 = vtanh.pop %v4042
    %v4063 = vmul.f32 %v4059, %v4043
    %v4064 = vmul.f32 %v4057, %v4062
    %v4065 = vadd.f32 %v4063, %v4064
    %v4066 = vtanh.pop %v4065
    %v4067 = vmul.f32 %v4061, %v4066
    %4068 = vst [vmem:[#allocation3] sm:$0xff] %v4065
    %4069 = vst [vmem:[#allocation2] sm:$0xff] %v4067
    %v4070 = vld [vmem:[#allocation2] sm:$0xff]
    %v4071 = vld [vmem:[#allocation2 + $0x8] sm:$0xff]
    %v4072 = vld [vmem:[#allocation8] sm:$0xff]
    %v4073 = vld [vmem:[#allocation8 + $0x8] sm:$0xff]
    %v4074 = vld [vmem:[#allocation8 + $0x10] sm:$0xff]
    %v4075 = vld [vmem:[#allocation8 + $0x18] sm:$0xff]
    %v4076 = vld [vmem:[#allocation8 + $0x20] sm:$0xff]
    %v4077 = vld [vmem:[#allocation8 + $0x28] sm:$0xff]
    %v4078 = vld [vmem:[#allocation8 + $0x30] sm:$0xff]
    %v4079 = vld [vmem:[#allocation8 + $0x38] sm:$0xff]
    %v4080 = vld [vmem:[#allocation8 + $0x40] sm:$0xff]
    %v4081 = vld [vmem:[#allocation8 + $0x48] sm:$0xff]
    %v4082 = vld [vmem:[#allocation8 + $0x50] sm:$0xff]
    %v4083 = vld [vmem:[#allocation8 + $0x58] sm:$0xff]
    %v4084 = vld [vmem:[#allocation8 + $0x60] sm:$0xff]
    %v4085 = vld [vmem:[#allocation8 + $0x68] sm:$0xff]
    %v4086 = vld [vmem:[#allocation8 + $0x70] sm:$0xff]
    %v4087 = vld [vmem:[#allocation8 + $0x78] sm:$0xff]
    %v4088 = vld [vmem:[#allocation8 + $0x80] sm:$0xff]
    %v4089 = vld [vmem:[#allocation8 + $0x88] sm:$0xff]
    %v4090 = vld [vmem:[#allocation8 + $0x90] sm:$0xff]
    %v4091 = vld [vmem:[#allocation8 + $0x98] sm:$0xff]
    %v4092 = vld [vmem:[#allocation8 + $0xa0] sm:$0xff]
    %v4093 = vld [vmem:[#allocation8 + $0xa8] sm:$0xff]
    %v4094 = vld [vmem:[#allocation8 + $0xb0] sm:$0xff]
    %v4095 = vld [vmem:[#allocation8 + $0xb8] sm:$0xff]
    %v4096 = vld [vmem:[#allocation8 + $0xc0] sm:$0xff]
    %v4097 = vld [vmem:[#allocation8 + $0xc8] sm:$0xff]
    %v4098 = vld [vmem:[#allocation8 + $0xd0] sm:$0xff]
    %v4099 = vld [vmem:[#allocation8 + $0xd8] sm:$0xff]
    %v4100 = vld [vmem:[#allocation8 + $0xe0] sm:$0xff]
    %v4101 = vld [vmem:[#allocation8 + $0xe8] sm:$0xff]
    %v4102 = vld [vmem:[#allocation8 + $0xf0] sm:$0xff]
    %v4103 = vld [vmem:[#allocation8 + $0xf8] sm:$0xff]
    %v4104 = vld [vmem:[#allocation8 + $0x100] sm:$0xff]
    %v4105 = vld [vmem:[#allocation8 + $0x108] sm:$0xff]
    %v4106 = vld [vmem:[#allocation8 + $0x110] sm:$0xff]
    %v4107 = vld [vmem:[#allocation8 + $0x118] sm:$0xff]
    %v4108 = vld [vmem:[#allocation8 + $0x120] sm:$0xff]
    %v4109 = vld [vmem:[#allocation8 + $0x128] sm:$0xff]
    %v4110 = vld [vmem:[#allocation8 + $0x130] sm:$0xff]
    %v4111 = vld [vmem:[#allocation8 + $0x138] sm:$0xff]
    %v4112 = vld [vmem:[#allocation8 + $0x140] sm:$0xff]
    %v4113 = vld [vmem:[#allocation8 + $0x148] sm:$0xff]
    %v4114 = vld [vmem:[#allocation8 + $0x150] sm:$0xff]
    %v4115 = vld [vmem:[#allocation8 + $0x158] sm:$0xff]
    %v4116 = vld [vmem:[#allocation8 + $0x160] sm:$0xff]
    %v4117 = vld [vmem:[#allocation8 + $0x168] sm:$0xff]
    %v4118 = vld [vmem:[#allocation8 + $0x170] sm:$0xff]
    %v4119 = vld [vmem:[#allocation8 + $0x178] sm:$0xff]
    %v4120 = vld [vmem:[#allocation8 + $0x180] sm:$0xff]
    %v4121 = vld [vmem:[#allocation8 + $0x188] sm:$0xff]
    %v4122 = vld [vmem:[#allocation8 + $0x190] sm:$0xff]
    %v4123 = vld [vmem:[#allocation8 + $0x198] sm:$0xff]
    %v4124 = vld [vmem:[#allocation8 + $0x1a0] sm:$0xff]
    %v4125 = vld [vmem:[#allocation8 + $0x1a8] sm:$0xff]
    %v4126 = vld [vmem:[#allocation8 + $0x1b0] sm:$0xff]
    %v4127 = vld [vmem:[#allocation8 + $0x1b8] sm:$0xff]
    %v4128 = vld [vmem:[#allocation8 + $0x1c0] sm:$0xff]
    %v4129 = vld [vmem:[#allocation8 + $0x1c8] sm:$0xff]
    %v4130 = vld [vmem:[#allocation8 + $0x1d0] sm:$0xff]
    %v4131 = vld [vmem:[#allocation8 + $0x1d8] sm:$0xff]
    %v4132 = vld [vmem:[#allocation8 + $0x1e0] sm:$0xff]
    %v4133 = vld [vmem:[#allocation8 + $0x1e8] sm:$0xff]
    %v4134 = vld [vmem:[#allocation8 + $0x1f0] sm:$0xff]
    %v4135 = vld [vmem:[#allocation8 + $0x1f8] sm:$0xff]
    %v4136 = vld [vmem:[#allocation8 + $0x200] sm:$0xff]
    %v4137 = vld [vmem:[#allocation8 + $0x208] sm:$0xff]
    %v4138 = vld [vmem:[#allocation8 + $0x210] sm:$0xff]
    %v4139 = vld [vmem:[#allocation8 + $0x218] sm:$0xff]
    %v4140 = vld [vmem:[#allocation8 + $0x220] sm:$0xff]
    %v4141 = vld [vmem:[#allocation8 + $0x228] sm:$0xff]
    %v4142 = vld [vmem:[#allocation8 + $0x230] sm:$0xff]
    %v4143 = vld [vmem:[#allocation8 + $0x238] sm:$0xff]
    %v4144 = vld [vmem:[#allocation8 + $0x240] sm:$0xff]
    %v4145 = vld [vmem:[#allocation8 + $0x248] sm:$0xff]
    %v4146 = vld [vmem:[#allocation8 + $0x250] sm:$0xff]
    %v4147 = vld [vmem:[#allocation8 + $0x258] sm:$0xff]
    %v4148 = vld [vmem:[#allocation8 + $0x260] sm:$0xff]
    %v4149 = vld [vmem:[#allocation8 + $0x268] sm:$0xff]
    %v4150 = vld [vmem:[#allocation8 + $0x270] sm:$0xff]
    %v4151 = vld [vmem:[#allocation8 + $0x278] sm:$0xff]
    %v4152 = vld [vmem:[#allocation8 + $0x280] sm:$0xff]
    %v4153 = vld [vmem:[#allocation8 + $0x288] sm:$0xff]
    %v4154 = vld [vmem:[#allocation8 + $0x290] sm:$0xff]
    %v4155 = vld [vmem:[#allocation8 + $0x298] sm:$0xff]
    %v4156 = vld [vmem:[#allocation8 + $0x2a0] sm:$0xff]
    %v4157 = vld [vmem:[#allocation8 + $0x2a8] sm:$0xff]
    %v4158 = vld [vmem:[#allocation8 + $0x2b0] sm:$0xff]
    %v4159 = vld [vmem:[#allocation8 + $0x2b8] sm:$0xff]
    %v4160 = vld [vmem:[#allocation8 + $0x2c0] sm:$0xff]
    %v4161 = vld [vmem:[#allocation8 + $0x2c8] sm:$0xff]
    %v4162 = vld [vmem:[#allocation8 + $0x2d0] sm:$0xff]
    %v4163 = vld [vmem:[#allocation8 + $0x2d8] sm:$0xff]
    %v4164 = vld [vmem:[#allocation8 + $0x2e0] sm:$0xff]
    %v4165 = vld [vmem:[#allocation8 + $0x2e8] sm:$0xff]
    %v4166 = vld [vmem:[#allocation8 + $0x2f0] sm:$0xff]
    %v4167 = vld [vmem:[#allocation8 + $0x2f8] sm:$0xff]
    %v4168 = vld [vmem:[#allocation8 + $0x300] sm:$0xff]
    %v4169 = vld [vmem:[#allocation8 + $0x308] sm:$0xff]
    %v4170 = vld [vmem:[#allocation8 + $0x310] sm:$0xff]
    %v4171 = vld [vmem:[#allocation8 + $0x318] sm:$0xff]
    %v4172 = vld [vmem:[#allocation8 + $0x320] sm:$0xff]
    %v4173 = vld [vmem:[#allocation8 + $0x328] sm:$0xff]
    %v4174 = vld [vmem:[#allocation8 + $0x330] sm:$0xff]
    %v4175 = vld [vmem:[#allocation8 + $0x338] sm:$0xff]
    %v4176 = vld [vmem:[#allocation8 + $0x340] sm:$0xff]
    %v4177 = vld [vmem:[#allocation8 + $0x348] sm:$0xff]
    %v4178 = vld [vmem:[#allocation8 + $0x350] sm:$0xff]
    %v4179 = vld [vmem:[#allocation8 + $0x358] sm:$0xff]
    %v4180 = vld [vmem:[#allocation8 + $0x360] sm:$0xff]
    %v4181 = vld [vmem:[#allocation8 + $0x368] sm:$0xff]
    %v4182 = vld [vmem:[#allocation8 + $0x370] sm:$0xff]
    %v4183 = vld [vmem:[#allocation8 + $0x378] sm:$0xff]
    %v4184 = vld [vmem:[#allocation8 + $0x380] sm:$0xff]
    %v4185 = vld [vmem:[#allocation8 + $0x388] sm:$0xff]
    %v4186 = vld [vmem:[#allocation8 + $0x390] sm:$0xff]
    %v4187 = vld [vmem:[#allocation8 + $0x398] sm:$0xff]
    %v4188 = vld [vmem:[#allocation8 + $0x3a0] sm:$0xff]
    %v4189 = vld [vmem:[#allocation8 + $0x3a8] sm:$0xff]
    %v4190 = vld [vmem:[#allocation8 + $0x3b0] sm:$0xff]
    %v4191 = vld [vmem:[#allocation8 + $0x3b8] sm:$0xff]
    %v4192 = vld [vmem:[#allocation8 + $0x3c0] sm:$0xff]
    %v4193 = vld [vmem:[#allocation8 + $0x3c8] sm:$0xff]
    %v4194 = vld [vmem:[#allocation8 + $0x3d0] sm:$0xff]
    %v4195 = vld [vmem:[#allocation8 + $0x3d8] sm:$0xff]
    %v4196 = vld [vmem:[#allocation8 + $0x3e0] sm:$0xff]
    %v4197 = vld [vmem:[#allocation8 + $0x3e8] sm:$0xff]
    %v4198 = vld [vmem:[#allocation8 + $0x3f0] sm:$0xff]
    %v4199 = vld [vmem:[#allocation8 + $0x3f8] sm:$0xff]
    %v4200 = vld [vmem:[%s5] sm:$0xf]
    %v4202 = vlaneseq
    %v4203 = vshrl.u32 %v4202, 7
    %v4204 = vsub.s32 0, %v4203
    %v4205 = vrot.slane %v4200, %v4204
    %v4206 = vlaneseq
    %v4207 = vshrl.u32 %v4206, 7
    %v4208 = vsub.s32 1, %v4207
    %v4209 = vrot.slane %v4200, %v4208
    %v4210 = vlaneseq
    %v4211 = vshrl.u32 %v4210, 7
    %v4212 = vsub.s32 2, %v4211
    %v4213 = vrot.slane %v4200, %v4212
    %v4214 = vlaneseq
    %v4215 = vshrl.u32 %v4214, 7
    %v4216 = vsub.s32 3, %v4215
    %v4217 = vrot.slane %v4200, %v4216
    %4222 = vmatprep.subr.mxu0 %v4073
    %4223 = vmatpush1.msra.mxu0 %v4072
    %4224 = vmatprep.subr.mxu0 %v4077
    %4225 = vmatpush1.msra.mxu0 %v4076
    %4226 = vmatprep.subr.mxu0 %v4081
    %4227 = vmatpush1.msra.mxu0 %v4080
    %4228 = vmatprep.subr.mxu0 %v4085
    %4229 = vmatpush1.msra.mxu0 %v4084
    %4230 = vmatprep.subr.mxu0 %v4089
    %4231 = vmatpush1.msra.mxu0 %v4088
    %4232 = vmatprep.subr.mxu0 %v4093
    %4233 = vmatpush1.msra.mxu0 %v4092
    %4234 = vmatprep.subr.mxu0 %v4097
    %4235 = vmatpush1.msra.mxu0 %v4096
    %4236 = vmatprep.subr.mxu0 %v4101
    %4237 = vmatpush1.msra.mxu0 %v4100
    %4238 = vmatprep.subr.mxu0 %v4105
    %4239 = vmatpush1.msra.mxu0 %v4104
    %4240 = vmatprep.subr.mxu0 %v4109
    %4241 = vmatpush1.msra.mxu0 %v4108
    %4242 = vmatprep.subr.mxu0 %v4113
    %4243 = vmatpush1.msra.mxu0 %v4112
    %4244 = vmatprep.subr.mxu0 %v4117
    %4245 = vmatpush1.msra.mxu0 %v4116
    %4246 = vmatprep.subr.mxu0 %v4121
    %4247 = vmatpush1.msra.mxu0 %v4120
    %4248 = vmatprep.subr.mxu0 %v4125
    %4249 = vmatpush1.msra.mxu0 %v4124
    %4250 = vmatprep.subr.mxu0 %v4129
    %4251 = vmatpush1.msra.mxu0 %v4128
    %4252 = vmatprep.subr.mxu0 %v4133
    %4253 = vmatpush1.msra.mxu0 %v4132
    %4254 = vmatprep.subr.mxu0 %v4137
    %4255 = vmatpush1.msra.mxu0 %v4136
    %4256 = vmatprep.subr.mxu0 %v4141
    %4257 = vmatpush1.msra.mxu0 %v4140
    %4258 = vmatprep.subr.mxu0 %v4145
    %4259 = vmatpush1.msra.mxu0 %v4144
    %4260 = vmatprep.subr.mxu0 %v4149
    %4261 = vmatpush1.msra.mxu0 %v4148
    %4262 = vmatprep.subr.mxu0 %v4153
    %4263 = vmatpush1.msra.mxu0 %v4152
    %4264 = vmatprep.subr.mxu0 %v4157
    %4265 = vmatpush1.msra.mxu0 %v4156
    %4266 = vmatprep.subr.mxu0 %v4161
    %4267 = vmatpush1.msra.mxu0 %v4160
    %4268 = vmatprep.subr.mxu0 %v4165
    %4269 = vmatpush1.msra.mxu0 %v4164
    %4270 = vmatprep.subr.mxu0 %v4169
    %4271 = vmatpush1.msra.mxu0 %v4168
    %4272 = vmatprep.subr.mxu0 %v4173
    %4273 = vmatpush1.msra.mxu0 %v4172
    %4274 = vmatprep.subr.mxu0 %v4177
    %4275 = vmatpush1.msra.mxu0 %v4176
    %4276 = vmatprep.subr.mxu0 %v4181
    %4277 = vmatpush1.msra.mxu0 %v4180
    %4278 = vmatprep.subr.mxu0 %v4185
    %4279 = vmatpush1.msra.mxu0 %v4184
    %4280 = vmatprep.subr.mxu0 %v4189
    %4281 = vmatpush1.msra.mxu0 %v4188
    %4282 = vmatprep.subr.mxu0 %v4193
    %4283 = vmatpush1.msra.mxu0 %v4192
    %4284 = vmatprep.subr.mxu0 %v4197
    %4285 = vmatpush1.msra.mxu0 %v4196
    %4286 = vmatprep.mubr.f32.mxu0 %v4071
    %4287 = vmatmul.mubr.f32.gmra.mrb[0].mxu0 %v4070
    %v4288 = vpop.f32.mrb[0].mxu0
    %v4289 = vadd.f32 %v4205, %v4288
    %v4290 = vpop.f32.mrb[0].mxu0
    %v4291 = vadd.f32 %v4209, %v4290
    %4292 = vdwg.mxu0
    %4293 = vmatprep.subr.mxu0 %v4075
    %4294 = vmatpush1.msra.mxu0 %v4074
    %4295 = vmatprep.subr.mxu0 %v4079
    %4296 = vmatpush1.msra.mxu0 %v4078
    %4297 = vmatprep.subr.mxu0 %v4083
    %4298 = vmatpush1.msra.mxu0 %v4082
    %4299 = vmatprep.subr.mxu0 %v4087
    %4300 = vmatpush1.msra.mxu0 %v4086
    %4301 = vmatprep.subr.mxu0 %v4091
    %4302 = vmatpush1.msra.mxu0 %v4090
    %4303 = vmatprep.subr.mxu0 %v4095
    %4304 = vmatpush1.msra.mxu0 %v4094
    %4305 = vmatprep.subr.mxu0 %v4099
    %4306 = vmatpush1.msra.mxu0 %v4098
    %4307 = vmatprep.subr.mxu0 %v4103
    %4308 = vmatpush1.msra.mxu0 %v4102
    %4309 = vmatprep.subr.mxu0 %v4107
    %4310 = vmatpush1.msra.mxu0 %v4106
    %4311 = vmatprep.subr.mxu0 %v4111
    %4312 = vmatpush1.msra.mxu0 %v4110
    %4313 = vmatprep.subr.mxu0 %v4115
    %4314 = vmatpush1.msra.mxu0 %v4114
    %4315 = vmatprep.subr.mxu0 %v4119
    %4316 = vmatpush1.msra.mxu0 %v4118
    %4317 = vmatprep.subr.mxu0 %v4123
    %4318 = vmatpush1.msra.mxu0 %v4122
    %4319 = vmatprep.subr.mxu0 %v4127
    %4320 = vmatpush1.msra.mxu0 %v4126
    %4321 = vmatprep.subr.mxu0 %v4131
    %4322 = vmatpush1.msra.mxu0 %v4130
    %4323 = vmatprep.subr.mxu0 %v4135
    %4324 = vmatpush1.msra.mxu0 %v4134
    %4325 = vmatprep.subr.mxu0 %v4139
    %4326 = vmatpush1.msra.mxu0 %v4138
    %4327 = vmatprep.subr.mxu0 %v4143
    %4328 = vmatpush1.msra.mxu0 %v4142
    %4329 = vmatprep.subr.mxu0 %v4147
    %4330 = vmatpush1.msra.mxu0 %v4146
    %4331 = vmatprep.subr.mxu0 %v4151
    %4332 = vmatpush1.msra.mxu0 %v4150
    %4333 = vmatprep.subr.mxu0 %v4155
    %4334 = vmatpush1.msra.mxu0 %v4154
    %4335 = vmatprep.subr.mxu0 %v4159
    %4336 = vmatpush1.msra.mxu0 %v4158
    %4337 = vmatprep.subr.mxu0 %v4163
    %4338 = vmatpush1.msra.mxu0 %v4162
    %4339 = vmatprep.subr.mxu0 %v4167
    %4340 = vmatpush1.msra.mxu0 %v4166
    %4341 = vmatprep.subr.mxu0 %v4171
    %4342 = vmatpush1.msra.mxu0 %v4170
    %4343 = vmatprep.subr.mxu0 %v4175
    %4344 = vmatpush1.msra.mxu0 %v4174
    %4345 = vmatprep.subr.mxu0 %v4179
    %4346 = vmatpush1.msra.mxu0 %v4178
    %4347 = vmatprep.subr.mxu0 %v4183
    %4348 = vmatpush1.msra.mxu0 %v4182
    %4349 = vmatprep.subr.mxu0 %v4187
    %4350 = vmatpush1.msra.mxu0 %v4186
    %4351 = vmatprep.subr.mxu0 %v4191
    %4352 = vmatpush1.msra.mxu0 %v4190
    %4353 = vmatprep.subr.mxu0 %v4195
    %4354 = vmatpush1.msra.mxu0 %v4194
    %4355 = vmatprep.subr.mxu0 %v4199
    %4356 = vmatpush1.msra.mxu0 %v4198
    %4357 = vmatprep.mubr.f32.mxu0 %v4071
    %4358 = vmatmul.mubr.f32.gmra.mrb[0].mxu0 %v4070
    %v4359 = vpop.f32.mrb[0].mxu0
    %v4360 = vadd.f32 %v4213, %v4359
    %v4361 = vpop.f32.mrb[0].mxu0
    %v4362 = vadd.f32 %v4217, %v4361
    %4363 = vdwg.mxu0
    %v4364 = vld [vmem:[#allocation4] sm:$0xff]
    %v4365 = vxor.u32 %v4289, 2147483648
    %v4366 = vxor.u32 %v4291, 2147483648
    %v4367 = vxor.u32 %v4360, 2147483648
    %v4368 = vmul.f32 %v4365, 1.442695
    %v4369 = vpow.pop %v4368
    %v4370 = vmul.f32 %v4366, 1.442695
    %v4371 = vpow.pop %v4370
    %v4372 = vmul.f32 %v4367, 1.442695
    %v4373 = vpow.pop %v4372
    %v4374 = vadd.f32 %v4369, 1.0
    %v4375 = vadd.f32 %v4371, 1.0
    %v4376 = vadd.f32 %v4373, 1.0
    %v4377 = vrcp.pop %v4374
    %v4378 = vmul.f32 1.0, %v4377
    %v4379 = vrcp.pop %v4375
    %v4380 = vmul.f32 1.0, %v4379
    %v4381 = vrcp.pop %v4376
    %v4382 = vmul.f32 1.0, %v4381
    %v4383 = vtanh.pop %v4362
    %v4384 = vmul.f32 %v4380, %v4364
    %v4385 = vmul.f32 %v4378, %v4383
    %v4386 = vadd.f32 %v4384, %v4385
    %v4387 = vtanh.pop %v4386
    %v4388 = vmul.f32 %v4382, %v4387
    %4389 = vst [vmem:[#allocation4] sm:$0xff] %v4386
    %4390 = vst [vmem:[#allocation2 + $0x8] sm:$0xff] %v4388
    %vm4391 = vcmp.eq.s32.totalorder %v77, 7
    %v4392 = vsel %vm4391, %v75, 0.0
    %v4393 = vsel %vm80, %v4392, 0.0
    %4394 = vadd.xlane.f32.xlu0 %v4393
    %v4395 = vpop.xlane.xlu0 %4394
    %v4396 = vld [vmem:[%s1] sm:$0xf]
    %v4398 = vlaneseq
    %v4399 = vshrl.u32 %v4398, 7
    %v4400 = vsub.s32 0, %v4399
    %v4401 = vrot.slane %v4396, %v4400
    %v4402 = vlaneseq
    %v4403 = vshrl.u32 %v4402, 7
    %v4404 = vsub.s32 1, %v4403
    %v4405 = vrot.slane %v4396, %v4404
    %v4406 = vlaneseq
    %v4407 = vshrl.u32 %v4406, 7
    %v4408 = vsub.s32 2, %v4407
    %v4409 = vrot.slane %v4396, %v4408
    %v4410 = vlaneseq
    %v4411 = vshrl.u32 %v4410, 7
    %v4412 = vsub.s32 3, %v4411
    %v4413 = vrot.slane %v4396, %v4412
    %v4418 = vmul.f32 %v4395, %v4401
    %v4419 = vmul.f32 %v4395, %v4405
    %v4420 = vmul.f32 %v4395, %v4409
    %v4421 = vmul.f32 %v4395, %v4413
    %v4422 = vld [vmem:[%s2] sm:$0xf]
    %v4424 = vlaneseq
    %v4425 = vshrl.u32 %v4424, 7
    %v4426 = vsub.s32 0, %v4425
    %v4427 = vrot.slane %v4422, %v4426
    %v4428 = vlaneseq
    %v4429 = vshrl.u32 %v4428, 7
    %v4430 = vsub.s32 1, %v4429
    %v4431 = vrot.slane %v4422, %v4430
    %v4432 = vlaneseq
    %v4433 = vshrl.u32 %v4432, 7
    %v4434 = vsub.s32 2, %v4433
    %v4435 = vrot.slane %v4422, %v4434
    %v4436 = vlaneseq
    %v4437 = vshrl.u32 %v4436, 7
    %v4438 = vsub.s32 3, %v4437
    %v4439 = vrot.slane %v4422, %v4438
    %v4444 = vadd.f32 %v4418, %v4427
    %v4445 = vadd.f32 %v4419, %v4431
    %v4446 = vadd.f32 %v4420, %v4435
    %v4447 = vadd.f32 %v4421, %v4439
    %v4448 = vld [vmem:[#allocation2] sm:$0xff]
    %v4449 = vld [vmem:[#allocation6] sm:$0xff]
    %v4450 = vld [vmem:[#allocation6 + $0x8] sm:$0xff]
    %v4451 = vld [vmem:[#allocation6 + $0x10] sm:$0xff]
    %v4452 = vld [vmem:[#allocation6 + $0x18] sm:$0xff]
    %v4453 = vld [vmem:[#allocation6 + $0x20] sm:$0xff]
    %v4454 = vld [vmem:[#allocation6 + $0x28] sm:$0xff]
    %v4455 = vld [vmem:[#allocation6 + $0x30] sm:$0xff]
    %v4456 = vld [vmem:[#allocation6 + $0x38] sm:$0xff]
    %v4457 = vld [vmem:[#allocation6 + $0x40] sm:$0xff]
    %v4458 = vld [vmem:[#allocation6 + $0x48] sm:$0xff]
    %v4459 = vld [vmem:[#allocation6 + $0x50] sm:$0xff]
    %v4460 = vld [vmem:[#allocation6 + $0x58] sm:$0xff]
    %v4461 = vld [vmem:[#allocation6 + $0x60] sm:$0xff]
    %v4462 = vld [vmem:[#allocation6 + $0x68] sm:$0xff]
    %v4463 = vld [vmem:[#allocation6 + $0x70] sm:$0xff]
    %v4464 = vld [vmem:[#allocation6 + $0x78] sm:$0xff]
    %v4465 = vld [vmem:[#allocation6 + $0x80] sm:$0xff]
    %v4466 = vld [vmem:[#allocation6 + $0x88] sm:$0xff]
    %v4467 = vld [vmem:[#allocation6 + $0x90] sm:$0xff]
    %v4468 = vld [vmem:[#allocation6 + $0x98] sm:$0xff]
    %v4469 = vld [vmem:[#allocation6 + $0xa0] sm:$0xff]
    %v4470 = vld [vmem:[#allocation6 + $0xa8] sm:$0xff]
    %v4471 = vld [vmem:[#allocation6 + $0xb0] sm:$0xff]
    %v4472 = vld [vmem:[#allocation6 + $0xb8] sm:$0xff]
    %v4473 = vld [vmem:[#allocation6 + $0xc0] sm:$0xff]
    %v4474 = vld [vmem:[#allocation6 + $0xc8] sm:$0xff]
    %v4475 = vld [vmem:[#allocation6 + $0xd0] sm:$0xff]
    %v4476 = vld [vmem:[#allocation6 + $0xd8] sm:$0xff]
    %v4477 = vld [vmem:[#allocation6 + $0xe0] sm:$0xff]
    %v4478 = vld [vmem:[#allocation6 + $0xe8] sm:$0xff]
    %v4479 = vld [vmem:[#allocation6 + $0xf0] sm:$0xff]
    %v4480 = vld [vmem:[#allocation6 + $0xf8] sm:$0xff]
    %v4481 = vld [vmem:[#allocation6 + $0x100] sm:$0xff]
    %v4482 = vld [vmem:[#allocation6 + $0x108] sm:$0xff]
    %v4483 = vld [vmem:[#allocation6 + $0x110] sm:$0xff]
    %v4484 = vld [vmem:[#allocation6 + $0x118] sm:$0xff]
    %v4485 = vld [vmem:[#allocation6 + $0x120] sm:$0xff]
    %v4486 = vld [vmem:[#allocation6 + $0x128] sm:$0xff]
    %v4487 = vld [vmem:[#allocation6 + $0x130] sm:$0xff]
    %v4488 = vld [vmem:[#allocation6 + $0x138] sm:$0xff]
    %v4489 = vld [vmem:[#allocation6 + $0x140] sm:$0xff]
    %v4490 = vld [vmem:[#allocation6 + $0x148] sm:$0xff]
    %v4491 = vld [vmem:[#allocation6 + $0x150] sm:$0xff]
    %v4492 = vld [vmem:[#allocation6 + $0x158] sm:$0xff]
    %v4493 = vld [vmem:[#allocation6 + $0x160] sm:$0xff]
    %v4494 = vld [vmem:[#allocation6 + $0x168] sm:$0xff]
    %v4495 = vld [vmem:[#allocation6 + $0x170] sm:$0xff]
    %v4496 = vld [vmem:[#allocation6 + $0x178] sm:$0xff]
    %v4497 = vld [vmem:[#allocation6 + $0x180] sm:$0xff]
    %v4498 = vld [vmem:[#allocation6 + $0x188] sm:$0xff]
    %v4499 = vld [vmem:[#allocation6 + $0x190] sm:$0xff]
    %v4500 = vld [vmem:[#allocation6 + $0x198] sm:$0xff]
    %v4501 = vld [vmem:[#allocation6 + $0x1a0] sm:$0xff]
    %v4502 = vld [vmem:[#allocation6 + $0x1a8] sm:$0xff]
    %v4503 = vld [vmem:[#allocation6 + $0x1b0] sm:$0xff]
    %v4504 = vld [vmem:[#allocation6 + $0x1b8] sm:$0xff]
    %v4505 = vld [vmem:[#allocation6 + $0x1c0] sm:$0xff]
    %v4506 = vld [vmem:[#allocation6 + $0x1c8] sm:$0xff]
    %v4507 = vld [vmem:[#allocation6 + $0x1d0] sm:$0xff]
    %v4508 = vld [vmem:[#allocation6 + $0x1d8] sm:$0xff]
    %v4509 = vld [vmem:[#allocation6 + $0x1e0] sm:$0xff]
    %v4510 = vld [vmem:[#allocation6 + $0x1e8] sm:$0xff]
    %v4511 = vld [vmem:[#allocation6 + $0x1f0] sm:$0xff]
    %v4512 = vld [vmem:[#allocation6 + $0x1f8] sm:$0xff]
    %4513 = vmatprep.subr.mxu0 %v4450
    %4514 = vmatpush1.msra.mxu0 %v4449
    %4515 = vmatprep.subr.mxu0 %v4454
    %4516 = vmatpush1.msra.mxu0 %v4453
    %4517 = vmatprep.subr.mxu0 %v4458
    %4518 = vmatpush1.msra.mxu0 %v4457
    %4519 = vmatprep.subr.mxu0 %v4462
    %4520 = vmatpush1.msra.mxu0 %v4461
    %4521 = vmatprep.subr.mxu0 %v4466
    %4522 = vmatpush1.msra.mxu0 %v4465
    %4523 = vmatprep.subr.mxu0 %v4470
    %4524 = vmatpush1.msra.mxu0 %v4469
    %4525 = vmatprep.subr.mxu0 %v4474
    %4526 = vmatpush1.msra.mxu0 %v4473
    %4527 = vmatprep.subr.mxu0 %v4478
    %4528 = vmatpush1.msra.mxu0 %v4477
    %4529 = vmatprep.subr.mxu0 %v4482
    %4530 = vmatpush1.msra.mxu0 %v4481
    %4531 = vmatprep.subr.mxu0 %v4486
    %4532 = vmatpush1.msra.mxu0 %v4485
    %4533 = vmatprep.subr.mxu0 %v4490
    %4534 = vmatpush1.msra.mxu0 %v4489
    %4535 = vmatprep.subr.mxu0 %v4494
    %4536 = vmatpush1.msra.mxu0 %v4493
    %4537 = vmatprep.subr.mxu0 %v4498
    %4538 = vmatpush1.msra.mxu0 %v4497
    %4539 = vmatprep.subr.mxu0 %v4502
    %4540 = vmatpush1.msra.mxu0 %v4501
    %4541 = vmatprep.subr.mxu0 %v4506
    %4542 = vmatpush1.msra.mxu0 %v4505
    %4543 = vmatprep.subr.mxu0 %v4510
    %4544 = vmatpush1.msra.mxu0 %v4509
    %4545 = vmatprep.subr.mxu0 0.0
    %4546 = vmatpush1.msra.mxu0 0.0
    %4547 = vmatprep.subr.mxu0 0.0
    %4548 = vmatpush1.msra.mxu0 0.0
    %4549 = vmatprep.subr.mxu0 0.0
    %4550 = vmatpush1.msra.mxu0 0.0
    %4551 = vmatprep.subr.mxu0 0.0
    %4552 = vmatpush1.msra.mxu0 0.0
    %4553 = vmatprep.subr.mxu0 0.0
    %4554 = vmatpush1.msra.mxu0 0.0
    %4555 = vmatprep.subr.mxu0 0.0
    %4556 = vmatpush1.msra.mxu0 0.0
    %4557 = vmatprep.subr.mxu0 0.0
    %4558 = vmatpush1.msra.mxu0 0.0
    %4559 = vmatprep.subr.mxu0 0.0
    %4560 = vmatpush1.msra.mxu0 0.0
    %4561 = vmatprep.subr.mxu0 0.0
    %4562 = vmatpush1.msra.mxu0 0.0
    %4563 = vmatprep.subr.mxu0 0.0
    %4564 = vmatpush1.msra.mxu0 0.0
    %4565 = vmatprep.subr.mxu0 0.0
    %4566 = vmatpush1.msra.mxu0 0.0
    %4567 = vmatprep.subr.mxu0 0.0
    %4568 = vmatpush1.msra.mxu0 0.0
    %4569 = vmatprep.subr.mxu0 0.0
    %4570 = vmatpush1.msra.mxu0 0.0
    %4571 = vmatprep.subr.mxu0 0.0
    %4572 = vmatpush1.msra.mxu0 0.0
    %4573 = vmatprep.subr.mxu0 0.0
    %4574 = vmatpush1.msra.mxu0 0.0
    %4575 = vmatprep.subr.mxu0 0.0
    %4576 = vmatpush1.msra.mxu0 0.0
    %4577 = vmatprep.mubr.f32.mxu0 0.0
    %4578 = vmatmul.mubr.f32.gmra.mrb[0].mxu0 %v4448
    %v4579 = vpop.f32.mrb[0].mxu0
    %v4580 = vadd.f32 0.0, %v4579
    %v4581 = vpop.f32.mrb[0].mxu0
    %v4582 = vadd.f32 0.0, %v4581
    %4583 = vdwg.mxu0
    %4584 = vmatprep.subr.mxu0 %v4452
    %4585 = vmatpush1.msra.mxu0 %v4451
    %4586 = vmatprep.subr.mxu0 %v4456
    %4587 = vmatpush1.msra.mxu0 %v4455
    %4588 = vmatprep.subr.mxu0 %v4460
    %4589 = vmatpush1.msra.mxu0 %v4459
    %4590 = vmatprep.subr.mxu0 %v4464
    %4591 = vmatpush1.msra.mxu0 %v4463
    %4592 = vmatprep.subr.mxu0 %v4468
    %4593 = vmatpush1.msra.mxu0 %v4467
    %4594 = vmatprep.subr.mxu0 %v4472
    %4595 = vmatpush1.msra.mxu0 %v4471
    %4596 = vmatprep.subr.mxu0 %v4476
    %4597 = vmatpush1.msra.mxu0 %v4475
    %4598 = vmatprep.subr.mxu0 %v4480
    %4599 = vmatpush1.msra.mxu0 %v4479
    %4600 = vmatprep.subr.mxu0 %v4484
    %4601 = vmatpush1.msra.mxu0 %v4483
    %4602 = vmatprep.subr.mxu0 %v4488
    %4603 = vmatpush1.msra.mxu0 %v4487
    %4604 = vmatprep.subr.mxu0 %v4492
    %4605 = vmatpush1.msra.mxu0 %v4491
    %4606 = vmatprep.subr.mxu0 %v4496
    %4607 = vmatpush1.msra.mxu0 %v4495
    %4608 = vmatprep.subr.mxu0 %v4500
    %4609 = vmatpush1.msra.mxu0 %v4499
    %4610 = vmatprep.subr.mxu0 %v4504
    %4611 = vmatpush1.msra.mxu0 %v4503
    %4612 = vmatprep.subr.mxu0 %v4508
    %4613 = vmatpush1.msra.mxu0 %v4507
    %4614 = vmatprep.subr.mxu0 %v4512
    %4615 = vmatpush1.msra.mxu0 %v4511
    %4616 = vmatprep.subr.mxu0 0.0
    %4617 = vmatpush1.msra.mxu0 0.0
    %4618 = vmatprep.subr.mxu0 0.0
    %4619 = vmatpush1.msra.mxu0 0.0
    %4620 = vmatprep.subr.mxu0 0.0
    %4621 = vmatpush1.msra.mxu0 0.0
    %4622 = vmatprep.subr.mxu0 0.0
    %4623 = vmatpush1.msra.mxu0 0.0
    %4624 = vmatprep.subr.mxu0 0.0
    %4625 = vmatpush1.msra.mxu0 0.0
    %4626 = vmatprep.subr.mxu0 0.0
    %4627 = vmatpush1.msra.mxu0 0.0
    %4628 = vmatprep.subr.mxu0 0.0
    %4629 = vmatpush1.msra.mxu0 0.0
    %4630 = vmatprep.subr.mxu0 0.0
    %4631 = vmatpush1.msra.mxu0 0.0
    %4632 = vmatprep.subr.mxu0 0.0
    %4633 = vmatpush1.msra.mxu0 0.0
    %4634 = vmatprep.subr.mxu0 0.0
    %4635 = vmatpush1.msra.mxu0 0.0
    %4636 = vmatprep.subr.mxu0 0.0
    %4637 = vmatpush1.msra.mxu0 0.0
    %4638 = vmatprep.subr.mxu0 0.0
    %4639 = vmatpush1.msra.mxu0 0.0
    %4640 = vmatprep.subr.mxu0 0.0
    %4641 = vmatpush1.msra.mxu0 0.0
    %4642 = vmatprep.subr.mxu0 0.0
    %4643 = vmatpush1.msra.mxu0 0.0
    %4644 = vmatprep.subr.mxu0 0.0
    %4645 = vmatpush1.msra.mxu0 0.0
    %4646 = vmatprep.subr.mxu0 0.0
    %4647 = vmatpush1.msra.mxu0 0.0
    %4648 = vmatprep.mubr.f32.mxu0 0.0
    %4649 = vmatmul.mubr.f32.gmra.mrb[0].mxu0 %v4448
    %v4650 = vpop.f32.mrb[0].mxu0
    %v4651 = vadd.f32 0.0, %v4650
    %v4652 = vpop.f32.mrb[0].mxu0
    %v4653 = vadd.f32 0.0, %v4652
    %4654 = vdwg.mxu0
    %v4655 = vadd.f32 %v4444, %v4580
    %v4656 = vadd.f32 %v4445, %v4582
    %v4657 = vadd.f32 %v4446, %v4651
    %v4658 = vadd.f32 %v4447, %v4653
    %v4659 = vld [vmem:[#allocation3] sm:$0xff]
    %v4660 = vxor.u32 %v4655, 2147483648
    %v4661 = vxor.u32 %v4656, 2147483648
    %v4662 = vxor.u32 %v4657, 2147483648
    %v4663 = vmul.f32 %v4660, 1.442695
    %v4664 = vpow.pop %v4663
    %v4665 = vmul.f32 %v4661, 1.442695
    %v4666 = vpow.pop %v4665
    %v4667 = vmul.f32 %v4662, 1.442695
    %v4668 = vpow.pop %v4667
    %v4669 = vadd.f32 %v4664, 1.0
    %v4670 = vadd.f32 %v4666, 1.0
    %v4671 = vadd.f32 %v4668, 1.0
    %v4672 = vrcp.pop %v4669
    %v4673 = vmul.f32 1.0, %v4672
    %v4674 = vrcp.pop %v4670
    %v4675 = vmul.f32 1.0, %v4674
    %v4676 = vrcp.pop %v4671
    %v4677 = vmul.f32 1.0, %v4676
    %v4678 = vtanh.pop %v4658
    %v4679 = vmul.f32 %v4675, %v4659
    %v4680 = vmul.f32 %v4673, %v4678
    %v4681 = vadd.f32 %v4679, %v4680
    %v4682 = vtanh.pop %v4681
    %v4683 = vmul.f32 %v4677, %v4682
    %4684 = vst [vmem:[#allocation3] sm:$0xff] %v4681
    %4685 = vst [vmem:[#allocation2] sm:$0xff] %v4683
    %v4686 = vld [vmem:[#allocation2] sm:$0xff]
    %v4687 = vld [vmem:[#allocation2 + $0x8] sm:$0xff]
    %v4688 = vld [vmem:[#allocation8] sm:$0xff]
    %v4689 = vld [vmem:[#allocation8 + $0x8] sm:$0xff]
    %v4690 = vld [vmem:[#allocation8 + $0x10] sm:$0xff]
    %v4691 = vld [vmem:[#allocation8 + $0x18] sm:$0xff]
    %v4692 = vld [vmem:[#allocation8 + $0x20] sm:$0xff]
    %v4693 = vld [vmem:[#allocation8 + $0x28] sm:$0xff]
    %v4694 = vld [vmem:[#allocation8 + $0x30] sm:$0xff]
    %v4695 = vld [vmem:[#allocation8 + $0x38] sm:$0xff]
    %v4696 = vld [vmem:[#allocation8 + $0x40] sm:$0xff]
    %v4697 = vld [vmem:[#allocation8 + $0x48] sm:$0xff]
    %v4698 = vld [vmem:[#allocation8 + $0x50] sm:$0xff]
    %v4699 = vld [vmem:[#allocation8 + $0x58] sm:$0xff]
    %v4700 = vld [vmem:[#allocation8 + $0x60] sm:$0xff]
    %v4701 = vld [vmem:[#allocation8 + $0x68] sm:$0xff]
    %v4702 = vld [vmem:[#allocation8 + $0x70] sm:$0xff]
    %v4703 = vld [vmem:[#allocation8 + $0x78] sm:$0xff]
    %v4704 = vld [vmem:[#allocation8 + $0x80] sm:$0xff]
    %v4705 = vld [vmem:[#allocation8 + $0x88] sm:$0xff]
    %v4706 = vld [vmem:[#allocation8 + $0x90] sm:$0xff]
    %v4707 = vld [vmem:[#allocation8 + $0x98] sm:$0xff]
    %v4708 = vld [vmem:[#allocation8 + $0xa0] sm:$0xff]
    %v4709 = vld [vmem:[#allocation8 + $0xa8] sm:$0xff]
    %v4710 = vld [vmem:[#allocation8 + $0xb0] sm:$0xff]
    %v4711 = vld [vmem:[#allocation8 + $0xb8] sm:$0xff]
    %v4712 = vld [vmem:[#allocation8 + $0xc0] sm:$0xff]
    %v4713 = vld [vmem:[#allocation8 + $0xc8] sm:$0xff]
    %v4714 = vld [vmem:[#allocation8 + $0xd0] sm:$0xff]
    %v4715 = vld [vmem:[#allocation8 + $0xd8] sm:$0xff]
    %v4716 = vld [vmem:[#allocation8 + $0xe0] sm:$0xff]
    %v4717 = vld [vmem:[#allocation8 + $0xe8] sm:$0xff]
    %v4718 = vld [vmem:[#allocation8 + $0xf0] sm:$0xff]
    %v4719 = vld [vmem:[#allocation8 + $0xf8] sm:$0xff]
    %v4720 = vld [vmem:[#allocation8 + $0x100] sm:$0xff]
    %v4721 = vld [vmem:[#allocation8 + $0x108] sm:$0xff]
    %v4722 = vld [vmem:[#allocation8 + $0x110] sm:$0xff]
    %v4723 = vld [vmem:[#allocation8 + $0x118] sm:$0xff]
    %v4724 = vld [vmem:[#allocation8 + $0x120] sm:$0xff]
    %v4725 = vld [vmem:[#allocation8 + $0x128] sm:$0xff]
    %v4726 = vld [vmem:[#allocation8 + $0x130] sm:$0xff]
    %v4727 = vld [vmem:[#allocation8 + $0x138] sm:$0xff]
    %v4728 = vld [vmem:[#allocation8 + $0x140] sm:$0xff]
    %v4729 = vld [vmem:[#allocation8 + $0x148] sm:$0xff]
    %v4730 = vld [vmem:[#allocation8 + $0x150] sm:$0xff]
    %v4731 = vld [vmem:[#allocation8 + $0x158] sm:$0xff]
    %v4732 = vld [vmem:[#allocation8 + $0x160] sm:$0xff]
    %v4733 = vld [vmem:[#allocation8 + $0x168] sm:$0xff]
    %v4734 = vld [vmem:[#allocation8 + $0x170] sm:$0xff]
    %v4735 = vld [vmem:[#allocation8 + $0x178] sm:$0xff]
    %v4736 = vld [vmem:[#allocation8 + $0x180] sm:$0xff]
    %v4737 = vld [vmem:[#allocation8 + $0x188] sm:$0xff]
    %v4738 = vld [vmem:[#allocation8 + $0x190] sm:$0xff]
    %v4739 = vld [vmem:[#allocation8 + $0x198] sm:$0xff]
    %v4740 = vld [vmem:[#allocation8 + $0x1a0] sm:$0xff]
    %v4741 = vld [vmem:[#allocation8 + $0x1a8] sm:$0xff]
    %v4742 = vld [vmem:[#allocation8 + $0x1b0] sm:$0xff]
    %v4743 = vld [vmem:[#allocation8 + $0x1b8] sm:$0xff]
    %v4744 = vld [vmem:[#allocation8 + $0x1c0] sm:$0xff]
    %v4745 = vld [vmem:[#allocation8 + $0x1c8] sm:$0xff]
    %v4746 = vld [vmem:[#allocation8 + $0x1d0] sm:$0xff]
    %v4747 = vld [vmem:[#allocation8 + $0x1d8] sm:$0xff]
    %v4748 = vld [vmem:[#allocation8 + $0x1e0] sm:$0xff]
    %v4749 = vld [vmem:[#allocation8 + $0x1e8] sm:$0xff]
    %v4750 = vld [vmem:[#allocation8 + $0x1f0] sm:$0xff]
    %v4751 = vld [vmem:[#allocation8 + $0x1f8] sm:$0xff]
    %v4752 = vld [vmem:[#allocation8 + $0x200] sm:$0xff]
    %v4753 = vld [vmem:[#allocation8 + $0x208] sm:$0xff]
    %v4754 = vld [vmem:[#allocation8 + $0x210] sm:$0xff]
    %v4755 = vld [vmem:[#allocation8 + $0x218] sm:$0xff]
    %v4756 = vld [vmem:[#allocation8 + $0x220] sm:$0xff]
    %v4757 = vld [vmem:[#allocation8 + $0x228] sm:$0xff]
    %v4758 = vld [vmem:[#allocation8 + $0x230] sm:$0xff]
    %v4759 = vld [vmem:[#allocation8 + $0x238] sm:$0xff]
    %v4760 = vld [vmem:[#allocation8 + $0x240] sm:$0xff]
    %v4761 = vld [vmem:[#allocation8 + $0x248] sm:$0xff]
    %v4762 = vld [vmem:[#allocation8 + $0x250] sm:$0xff]
    %v4763 = vld [vmem:[#allocation8 + $0x258] sm:$0xff]
    %v4764 = vld [vmem:[#allocation8 + $0x260] sm:$0xff]
    %v4765 = vld [vmem:[#allocation8 + $0x268] sm:$0xff]
    %v4766 = vld [vmem:[#allocation8 + $0x270] sm:$0xff]
    %v4767 = vld [vmem:[#allocation8 + $0x278] sm:$0xff]
    %v4768 = vld [vmem:[#allocation8 + $0x280] sm:$0xff]
    %v4769 = vld [vmem:[#allocation8 + $0x288] sm:$0xff]
    %v4770 = vld [vmem:[#allocation8 + $0x290] sm:$0xff]
    %v4771 = vld [vmem:[#allocation8 + $0x298] sm:$0xff]
    %v4772 = vld [vmem:[#allocation8 + $0x2a0] sm:$0xff]
    %v4773 = vld [vmem:[#allocation8 + $0x2a8] sm:$0xff]
    %v4774 = vld [vmem:[#allocation8 + $0x2b0] sm:$0xff]
    %v4775 = vld [vmem:[#allocation8 + $0x2b8] sm:$0xff]
    %v4776 = vld [vmem:[#allocation8 + $0x2c0] sm:$0xff]
    %v4777 = vld [vmem:[#allocation8 + $0x2c8] sm:$0xff]
    %v4778 = vld [vmem:[#allocation8 + $0x2d0] sm:$0xff]
    %v4779 = vld [vmem:[#allocation8 + $0x2d8] sm:$0xff]
    %v4780 = vld [vmem:[#allocation8 + $0x2e0] sm:$0xff]
    %v4781 = vld [vmem:[#allocation8 + $0x2e8] sm:$0xff]
    %v4782 = vld [vmem:[#allocation8 + $0x2f0] sm:$0xff]
    %v4783 = vld [vmem:[#allocation8 + $0x2f8] sm:$0xff]
    %v4784 = vld [vmem:[#allocation8 + $0x300] sm:$0xff]
    %v4785 = vld [vmem:[#allocation8 + $0x308] sm:$0xff]
    %v4786 = vld [vmem:[#allocation8 + $0x310] sm:$0xff]
    %v4787 = vld [vmem:[#allocation8 + $0x318] sm:$0xff]
    %v4788 = vld [vmem:[#allocation8 + $0x320] sm:$0xff]
    %v4789 = vld [vmem:[#allocation8 + $0x328] sm:$0xff]
    %v4790 = vld [vmem:[#allocation8 + $0x330] sm:$0xff]
    %v4791 = vld [vmem:[#allocation8 + $0x338] sm:$0xff]
    %v4792 = vld [vmem:[#allocation8 + $0x340] sm:$0xff]
    %v4793 = vld [vmem:[#allocation8 + $0x348] sm:$0xff]
    %v4794 = vld [vmem:[#allocation8 + $0x350] sm:$0xff]
    %v4795 = vld [vmem:[#allocation8 + $0x358] sm:$0xff]
    %v4796 = vld [vmem:[#allocation8 + $0x360] sm:$0xff]
    %v4797 = vld [vmem:[#allocation8 + $0x368] sm:$0xff]
    %v4798 = vld [vmem:[#allocation8 + $0x370] sm:$0xff]
    %v4799 = vld [vmem:[#allocation8 + $0x378] sm:$0xff]
    %v4800 = vld [vmem:[#allocation8 + $0x380] sm:$0xff]
    %v4801 = vld [vmem:[#allocation8 + $0x388] sm:$0xff]
    %v4802 = vld [vmem:[#allocation8 + $0x390] sm:$0xff]
    %v4803 = vld [vmem:[#allocation8 + $0x398] sm:$0xff]
    %v4804 = vld [vmem:[#allocation8 + $0x3a0] sm:$0xff]
    %v4805 = vld [vmem:[#allocation8 + $0x3a8] sm:$0xff]
    %v4806 = vld [vmem:[#allocation8 + $0x3b0] sm:$0xff]
    %v4807 = vld [vmem:[#allocation8 + $0x3b8] sm:$0xff]
    %v4808 = vld [vmem:[#allocation8 + $0x3c0] sm:$0xff]
    %v4809 = vld [vmem:[#allocation8 + $0x3c8] sm:$0xff]
    %v4810 = vld [vmem:[#allocation8 + $0x3d0] sm:$0xff]
    %v4811 = vld [vmem:[#allocation8 + $0x3d8] sm:$0xff]
    %v4812 = vld [vmem:[#allocation8 + $0x3e0] sm:$0xff]
    %v4813 = vld [vmem:[#allocation8 + $0x3e8] sm:$0xff]
    %v4814 = vld [vmem:[#allocation8 + $0x3f0] sm:$0xff]
    %v4815 = vld [vmem:[#allocation8 + $0x3f8] sm:$0xff]
    %v4816 = vld [vmem:[%s5] sm:$0xf]
    %v4818 = vlaneseq
    %v4819 = vshrl.u32 %v4818, 7
    %v4820 = vsub.s32 0, %v4819
    %v4821 = vrot.slane %v4816, %v4820
    %v4822 = vlaneseq
    %v4823 = vshrl.u32 %v4822, 7
    %v4824 = vsub.s32 1, %v4823
    %v4825 = vrot.slane %v4816, %v4824
    %v4826 = vlaneseq
    %v4827 = vshrl.u32 %v4826, 7
    %v4828 = vsub.s32 2, %v4827
    %v4829 = vrot.slane %v4816, %v4828
    %v4830 = vlaneseq
    %v4831 = vshrl.u32 %v4830, 7
    %v4832 = vsub.s32 3, %v4831
    %v4833 = vrot.slane %v4816, %v4832
    %4838 = vmatprep.subr.mxu0 %v4689
    %4839 = vmatpush1.msra.mxu0 %v4688
    %4840 = vmatprep.subr.mxu0 %v4693
    %4841 = vmatpush1.msra.mxu0 %v4692
    %4842 = vmatprep.subr.mxu0 %v4697
    %4843 = vmatpush1.msra.mxu0 %v4696
    %4844 = vmatprep.subr.mxu0 %v4701
    %4845 = vmatpush1.msra.mxu0 %v4700
    %4846 = vmatprep.subr.mxu0 %v4705
    %4847 = vmatpush1.msra.mxu0 %v4704
    %4848 = vmatprep.subr.mxu0 %v4709
    %4849 = vmatpush1.msra.mxu0 %v4708
    %4850 = vmatprep.subr.mxu0 %v4713
    %4851 = vmatpush1.msra.mxu0 %v4712
    %4852 = vmatprep.subr.mxu0 %v4717
    %4853 = vmatpush1.msra.mxu0 %v4716
    %4854 = vmatprep.subr.mxu0 %v4721
    %4855 = vmatpush1.msra.mxu0 %v4720
    %4856 = vmatprep.subr.mxu0 %v4725
    %4857 = vmatpush1.msra.mxu0 %v4724
    %4858 = vmatprep.subr.mxu0 %v4729
    %4859 = vmatpush1.msra.mxu0 %v4728
    %4860 = vmatprep.subr.mxu0 %v4733
    %4861 = vmatpush1.msra.mxu0 %v4732
    %4862 = vmatprep.subr.mxu0 %v4737
    %4863 = vmatpush1.msra.mxu0 %v4736
    %4864 = vmatprep.subr.mxu0 %v4741
    %4865 = vmatpush1.msra.mxu0 %v4740
    %4866 = vmatprep.subr.mxu0 %v4745
    %4867 = vmatpush1.msra.mxu0 %v4744
    %4868 = vmatprep.subr.mxu0 %v4749
    %4869 = vmatpush1.msra.mxu0 %v4748
    %4870 = vmatprep.subr.mxu0 %v4753
    %4871 = vmatpush1.msra.mxu0 %v4752
    %4872 = vmatprep.subr.mxu0 %v4757
    %4873 = vmatpush1.msra.mxu0 %v4756
    %4874 = vmatprep.subr.mxu0 %v4761
    %4875 = vmatpush1.msra.mxu0 %v4760
    %4876 = vmatprep.subr.mxu0 %v4765
    %4877 = vmatpush1.msra.mxu0 %v4764
    %4878 = vmatprep.subr.mxu0 %v4769
    %4879 = vmatpush1.msra.mxu0 %v4768
    %4880 = vmatprep.subr.mxu0 %v4773
    %4881 = vmatpush1.msra.mxu0 %v4772
    %4882 = vmatprep.subr.mxu0 %v4777
    %4883 = vmatpush1.msra.mxu0 %v4776
    %4884 = vmatprep.subr.mxu0 %v4781
    %4885 = vmatpush1.msra.mxu0 %v4780
    %4886 = vmatprep.subr.mxu0 %v4785
    %4887 = vmatpush1.msra.mxu0 %v4784
    %4888 = vmatprep.subr.mxu0 %v4789
    %4889 = vmatpush1.msra.mxu0 %v4788
    %4890 = vmatprep.subr.mxu0 %v4793
    %4891 = vmatpush1.msra.mxu0 %v4792
    %4892 = vmatprep.subr.mxu0 %v4797
    %4893 = vmatpush1.msra.mxu0 %v4796
    %4894 = vmatprep.subr.mxu0 %v4801
    %4895 = vmatpush1.msra.mxu0 %v4800
    %4896 = vmatprep.subr.mxu0 %v4805
    %4897 = vmatpush1.msra.mxu0 %v4804
    %4898 = vmatprep.subr.mxu0 %v4809
    %4899 = vmatpush1.msra.mxu0 %v4808
    %4900 = vmatprep.subr.mxu0 %v4813
    %4901 = vmatpush1.msra.mxu0 %v4812
    %4902 = vmatprep.mubr.f32.mxu0 %v4687
    %4903 = vmatmul.mubr.f32.gmra.mrb[0].mxu0 %v4686
    %v4904 = vpop.f32.mrb[0].mxu0
    %v4905 = vadd.f32 %v4821, %v4904
    %v4906 = vpop.f32.mrb[0].mxu0
    %v4907 = vadd.f32 %v4825, %v4906
    %4908 = vdwg.mxu0
    %4909 = vmatprep.subr.mxu0 %v4691
    %4910 = vmatpush1.msra.mxu0 %v4690
    %4911 = vmatprep.subr.mxu0 %v4695
    %4912 = vmatpush1.msra.mxu0 %v4694
    %4913 = vmatprep.subr.mxu0 %v4699
    %4914 = vmatpush1.msra.mxu0 %v4698
    %4915 = vmatprep.subr.mxu0 %v4703
    %4916 = vmatpush1.msra.mxu0 %v4702
    %4917 = vmatprep.subr.mxu0 %v4707
    %4918 = vmatpush1.msra.mxu0 %v4706
    %4919 = vmatprep.subr.mxu0 %v4711
    %4920 = vmatpush1.msra.mxu0 %v4710
    %4921 = vmatprep.subr.mxu0 %v4715
    %4922 = vmatpush1.msra.mxu0 %v4714
    %4923 = vmatprep.subr.mxu0 %v4719
    %4924 = vmatpush1.msra.mxu0 %v4718
    %4925 = vmatprep.subr.mxu0 %v4723
    %4926 = vmatpush1.msra.mxu0 %v4722
    %4927 = vmatprep.subr.mxu0 %v4727
    %4928 = vmatpush1.msra.mxu0 %v4726
    %4929 = vmatprep.subr.mxu0 %v4731
    %4930 = vmatpush1.msra.mxu0 %v4730
    %4931 = vmatprep.subr.mxu0 %v4735
    %4932 = vmatpush1.msra.mxu0 %v4734
    %4933 = vmatprep.subr.mxu0 %v4739
    %4934 = vmatpush1.msra.mxu0 %v4738
    %4935 = vmatprep.subr.mxu0 %v4743
    %4936 = vmatpush1.msra.mxu0 %v4742
    %4937 = vmatprep.subr.mxu0 %v4747
    %4938 = vmatpush1.msra.mxu0 %v4746
    %4939 = vmatprep.subr.mxu0 %v4751
    %4940 = vmatpush1.msra.mxu0 %v4750
    %4941 = vmatprep.subr.mxu0 %v4755
    %4942 = vmatpush1.msra.mxu0 %v4754
    %4943 = vmatprep.subr.mxu0 %v4759
    %4944 = vmatpush1.msra.mxu0 %v4758
    %4945 = vmatprep.subr.mxu0 %v4763
    %4946 = vmatpush1.msra.mxu0 %v4762
    %4947 = vmatprep.subr.mxu0 %v4767
    %4948 = vmatpush1.msra.mxu0 %v4766
    %4949 = vmatprep.subr.mxu0 %v4771
    %4950 = vmatpush1.msra.mxu0 %v4770
    %4951 = vmatprep.subr.mxu0 %v4775
    %4952 = vmatpush1.msra.mxu0 %v4774
    %4953 = vmatprep.subr.mxu0 %v4779
    %4954 = vmatpush1.msra.mxu0 %v4778
    %4955 = vmatprep.subr.mxu0 %v4783
    %4956 = vmatpush1.msra.mxu0 %v4782
    %4957 = vmatprep.subr.mxu0 %v4787
    %4958 = vmatpush1.msra.mxu0 %v4786
    %4959 = vmatprep.subr.mxu0 %v4791
    %4960 = vmatpush1.msra.mxu0 %v4790
    %4961 = vmatprep.subr.mxu0 %v4795
    %4962 = vmatpush1.msra.mxu0 %v4794
    %4963 = vmatprep.subr.mxu0 %v4799
    %4964 = vmatpush1.msra.mxu0 %v4798
    %4965 = vmatprep.subr.mxu0 %v4803
    %4966 = vmatpush1.msra.mxu0 %v4802
    %4967 = vmatprep.subr.mxu0 %v4807
    %4968 = vmatpush1.msra.mxu0 %v4806
    %4969 = vmatprep.subr.mxu0 %v4811
    %4970 = vmatpush1.msra.mxu0 %v4810
    %4971 = vmatprep.subr.mxu0 %v4815
    %4972 = vmatpush1.msra.mxu0 %v4814
    %4973 = vmatprep.mubr.f32.mxu0 %v4687
    %4974 = vmatmul.mubr.f32.gmra.mrb[0].mxu0 %v4686
    %v4975 = vpop.f32.mrb[0].mxu0
    %v4976 = vadd.f32 %v4829, %v4975
    %v4977 = vpop.f32.mrb[0].mxu0
    %v4978 = vadd.f32 %v4833, %v4977
    %4979 = vdwg.mxu0
    %v4980 = vld [vmem:[#allocation4] sm:$0xff]
    %v4981 = vxor.u32 %v4905, 2147483648
    %v4982 = vxor.u32 %v4907, 2147483648
    %v4983 = vxor.u32 %v4976, 2147483648
    %v4984 = vmul.f32 %v4981, 1.442695
    %v4985 = vpow.pop %v4984
    %v4986 = vmul.f32 %v4982, 1.442695
    %v4987 = vpow.pop %v4986
    %v4988 = vmul.f32 %v4983, 1.442695
    %v4989 = vpow.pop %v4988
    %v4990 = vadd.f32 %v4985, 1.0
    %v4991 = vadd.f32 %v4987, 1.0
    %v4992 = vadd.f32 %v4989, 1.0
    %v4993 = vrcp.pop %v4990
    %v4994 = vmul.f32 1.0, %v4993
    %v4995 = vrcp.pop %v4991
    %v4996 = vmul.f32 1.0, %v4995
    %v4997 = vrcp.pop %v4992
    %v4998 = vmul.f32 1.0, %v4997
    %v4999 = vtanh.pop %v4978
    %v5000 = vmul.f32 %v4996, %v4980
    %v5001 = vmul.f32 %v4994, %v4999
    %v5002 = vadd.f32 %v5000, %v5001
    %v5003 = vtanh.pop %v5002
    %v5004 = vmul.f32 %v4998, %v5003
    %5005 = vst [vmem:[#allocation4] sm:$0xff] %v5002
    %5006 = vst [vmem:[#allocation2 + $0x8] sm:$0xff] %v5004
    %v5007 = vld [vmem:[#allocation2 + $0x8] sm:$0xff]
    %v5008 = vld [vmem:[%s6] sm:$0xff]
    %v5009 = vld [vmem:[%s6 + $0x8] sm:$0xff]
    %v5010 = vld [vmem:[%s6 + $0x10] sm:$0xff]
    %v5011 = vld [vmem:[%s6 + $0x18] sm:$0xff]
    %v5012 = vld [vmem:[%s6 + $0x20] sm:$0xff]
    %v5013 = vld [vmem:[%s6 + $0x28] sm:$0xff]
    %v5014 = vld [vmem:[%s6 + $0x30] sm:$0xff]
    %v5015 = vld [vmem:[%s6 + $0x38] sm:$0xff]
    %v5016 = vld [vmem:[%s6 + $0x40] sm:$0xff]
    %v5017 = vld [vmem:[%s6 + $0x48] sm:$0xff]
    %v5018 = vld [vmem:[%s6 + $0x50] sm:$0xff]
    %v5019 = vld [vmem:[%s6 + $0x58] sm:$0xff]
    %v5020 = vld [vmem:[%s6 + $0x60] sm:$0xff]
    %v5021 = vld [vmem:[%s6 + $0x68] sm:$0xff]
    %v5022 = vld [vmem:[%s6 + $0x70] sm:$0xff]
    %v5023 = vld [vmem:[%s6 + $0x78] sm:$0xff]
    %v5024 = vld [vmem:[%s7] sm:$0x1]
    %v5026 = vlaneseq
    %v5027 = vshrl.u32 %v5026, 7
    %v5028 = vsub.s32 0, %v5027
    %v5029 = vrot.slane %v5024, %v5028
    %5031 = vmatprep.subr.mxu0 0.0
    %5032 = vmatpush1.msra.mxu0 %v5008
    %5033 = vmatprep.subr.mxu0 0.0
    %5034 = vmatpush1.msra.mxu0 %v5009
    %5035 = vmatprep.subr.mxu0 0.0
    %5036 = vmatpush1.msra.mxu0 %v5010
    %5037 = vmatprep.subr.mxu0 0.0
    %5038 = vmatpush1.msra.mxu0 %v5011
    %5039 = vmatprep.subr.mxu0 0.0
    %5040 = vmatpush1.msra.mxu0 %v5012
    %5041 = vmatprep.subr.mxu0 0.0
    %5042 = vmatpush1.msra.mxu0 %v5013
    %5043 = vmatprep.subr.mxu0 0.0
    %5044 = vmatpush1.msra.mxu0 %v5014
    %5045 = vmatprep.subr.mxu0 0.0
    %5046 = vmatpush1.msra.mxu0 %v5015
    %5047 = vmatprep.subr.mxu0 0.0
    %5048 = vmatpush1.msra.mxu0 %v5016
    %5049 = vmatprep.subr.mxu0 0.0
    %5050 = vmatpush1.msra.mxu0 %v5017
    %5051 = vmatprep.subr.mxu0 0.0
    %5052 = vmatpush1.msra.mxu0 %v5018
    %5053 = vmatprep.subr.mxu0 0.0
    %5054 = vmatpush1.msra.mxu0 %v5019
    %5055 = vmatprep.subr.mxu0 0.0
    %5056 = vmatpush1.msra.mxu0 %v5020
    %5057 = vmatprep.subr.mxu0 0.0
    %5058 = vmatpush1.msra.mxu0 %v5021
    %5059 = vmatprep.subr.mxu0 0.0
    %5060 = vmatpush1.msra.mxu0 %v5022
    %5061 = vmatprep.subr.mxu0 0.0
    %5062 = vmatpush1.msra.mxu0 %v5023
    %5063 = vmatprep.subr.mxu0 0.0
    %5064 = vmatpush1.msra.mxu0 0.0
    %5065 = vmatprep.subr.mxu0 0.0
    %5066 = vmatpush1.msra.mxu0 0.0
    %5067 = vmatprep.subr.mxu0 0.0
    %5068 = vmatpush1.msra.mxu0 0.0
    %5069 = vmatprep.subr.mxu0 0.0
    %5070 = vmatpush1.msra.mxu0 0.0
    %5071 = vmatprep.subr.mxu0 0.0
    %5072 = vmatpush1.msra.mxu0 0.0
    %5073 = vmatprep.subr.mxu0 0.0
    %5074 = vmatpush1.msra.mxu0 0.0
    %5075 = vmatprep.subr.mxu0 0.0
    %5076 = vmatpush1.msra.mxu0 0.0
    %5077 = vmatprep.subr.mxu0 0.0
    %5078 = vmatpush1.msra.mxu0 0.0
    %5079 = vmatprep.subr.mxu0 0.0
    %5080 = vmatpush1.msra.mxu0 0.0
    %5081 = vmatprep.subr.mxu0 0.0
    %5082 = vmatpush1.msra.mxu0 0.0
    %5083 = vmatprep.subr.mxu0 0.0
    %5084 = vmatpush1.msra.mxu0 0.0
    %5085 = vmatprep.subr.mxu0 0.0
    %5086 = vmatpush1.msra.mxu0 0.0
    %5087 = vmatprep.subr.mxu0 0.0
    %5088 = vmatpush1.msra.mxu0 0.0
    %5089 = vmatprep.subr.mxu0 0.0
    %5090 = vmatpush1.msra.mxu0 0.0
    %5091 = vmatprep.subr.mxu0 0.0
    %5092 = vmatpush1.msra.mxu0 0.0
    %5093 = vmatprep.subr.mxu0 0.0
    %5094 = vmatpush1.msra.mxu0 0.0
    %5095 = vmatprep.mubr.f32.mxu0 0.0
    %5096 = vmatmul.mubr.f32.gmra.mrb[0].mxu0 %v5007
    %v5097 = vpop.f32.mrb[0].mxu0
    %v5098 = vadd.f32 %v5029, %v5097
    %v5099 = vpop.f32.mrb[0].mxu0
    %5100 = vdwg.mxu0
    %vm5101 = vcmp.gt.f32.partialorder %v5098, 0.0
    %v5102 = vmul.f32 %v5098, 0.1
    %v5103 = vsel %vm5101, %v5098, %v5102
    %v5104 = vld [vmem:[%s8] sm:$0xff]
    %v5105 = vld [vmem:[%s8 + $0x8] sm:$0xff]
    %v5106 = vld [vmem:[%s8 + $0x10] sm:$0xff]
    %v5107 = vld [vmem:[%s8 + $0x18] sm:$0xff]
    %v5108 = vld [vmem:[%s8 + $0x20] sm:$0xff]
    %v5109 = vld [vmem:[%s8 + $0x28] sm:$0xff]
    %v5110 = vld [vmem:[%s8 + $0x30] sm:$0xff]
    %v5111 = vld [vmem:[%s8 + $0x38] sm:$0xff]
    %v5112 = vld [vmem:[%s9] sm:$0x1]
    %v5114 = vlaneseq
    %v5115 = vshrl.u32 %v5114, 7
    %v5116 = vsub.s32 0, %v5115
    %v5117 = vrot.slane %v5112, %v5116
    %vm5119 = vcmask 523264
    %v5121 = vsel %vm5119, %v5103, 0
    %5123 = vmatprep.subr.mxu0 0.0
    %5124 = vmatpush1.msra.mxu0 %v5104
    %5125 = vmatprep.subr.mxu0 0.0
    %5126 = vmatpush1.msra.mxu0 %v5105
    %5127 = vmatprep.subr.mxu0 0.0
    %5128 = vmatpush1.msra.mxu0 %v5106
    %5129 = vmatprep.subr.mxu0 0.0
    %5130 = vmatpush1.msra.mxu0 %v5107
    %5131 = vmatprep.subr.mxu0 0.0
    %5132 = vmatpush1.msra.mxu0 %v5108
    %5133 = vmatprep.subr.mxu0 0.0
    %5134 = vmatpush1.msra.mxu0 %v5109
    %5135 = vmatprep.subr.mxu0 0.0
    %5136 = vmatpush1.msra.mxu0 %v5110
    %5137 = vmatprep.subr.mxu0 0.0
    %5138 = vmatpush1.msra.mxu0 %v5111
    %5139 = vmatprep.subr.mxu0 0.0
    %5140 = vmatpush1.msra.mxu0 0.0
    %5141 = vmatprep.subr.mxu0 0.0
    %5142 = vmatpush1.msra.mxu0 0.0
    %5143 = vmatprep.subr.mxu0 0.0
    %5144 = vmatpush1.msra.mxu0 0.0
    %5145 = vmatprep.subr.mxu0 0.0
    %5146 = vmatpush1.msra.mxu0 0.0
    %5147 = vmatprep.subr.mxu0 0.0
    %5148 = vmatpush1.msra.mxu0 0.0
    %5149 = vmatprep.subr.mxu0 0.0
    %5150 = vmatpush1.msra.mxu0 0.0
    %5151 = vmatprep.subr.mxu0 0.0
    %5152 = vmatpush1.msra.mxu0 0.0
    %5153 = vmatprep.subr.mxu0 0.0
    %5154 = vmatpush1.msra.mxu0 0.0
    %5155 = vmatprep.subr.mxu0 0.0
    %5156 = vmatpush1.msra.mxu0 0.0
    %5157 = vmatprep.subr.mxu0 0.0
    %5158 = vmatpush1.msra.mxu0 0.0
    %5159 = vmatprep.subr.mxu0 0.0
    %5160 = vmatpush1.msra.mxu0 0.0
    %5161 = vmatprep.subr.mxu0 0.0
    %5162 = vmatpush1.msra.mxu0 0.0
    %5163 = vmatprep.subr.mxu0 0.0
    %5164 = vmatpush1.msra.mxu0 0.0
    %5165 = vmatprep.subr.mxu0 0.0
    %5166 = vmatpush1.msra.mxu0 0.0
    %5167 = vmatprep.subr.mxu0 0.0
    %5168 = vmatpush1.msra.mxu0 0.0
    %5169 = vmatprep.subr.mxu0 0.0
    %5170 = vmatpush1.msra.mxu0 0.0
    %5171 = vmatprep.subr.mxu0 0.0
    %5172 = vmatpush1.msra.mxu0 0.0
    %5173 = vmatprep.subr.mxu0 0.0
    %5174 = vmatpush1.msra.mxu0 0.0
    %5175 = vmatprep.subr.mxu0 0.0
    %5176 = vmatpush1.msra.mxu0 0.0
    %5177 = vmatprep.subr.mxu0 0.0
    %5178 = vmatpush1.msra.mxu0 0.0
    %5179 = vmatprep.subr.mxu0 0.0
    %5180 = vmatpush1.msra.mxu0 0.0
    %5181 = vmatprep.subr.mxu0 0.0
    %5182 = vmatpush1.msra.mxu0 0.0
    %5183 = vmatprep.subr.mxu0 0.0
    %5184 = vmatpush1.msra.mxu0 0.0
    %5185 = vmatprep.subr.mxu0 0.0
    %5186 = vmatpush1.msra.mxu0 0.0
    %5187 = vmatprep.mubr.f32.mxu0 0.0
    %5188 = vmatmul.mubr.f32.gmra.mrb[0].mxu0 %v5121
    %v5189 = vpop.f32.mrb[0].mxu0
    %v5190 = vadd.f32 %v5117, %v5189
    %v5191 = vpop.f32.mrb[0].mxu0
    %5192 = vdwg.mxu0
    %vm5193 = vcmp.gt.f32.partialorder %v5190, 0.0
    %v5194 = vmul.f32 %v5190, 0.1
    %v5195 = vsel %vm5193, %v5190, %v5194
    %v5196 = vld [vmem:[%s10] sm:$0xff]
    %v5197 = vld [vmem:[%s10 + $0x8] sm:$0xff]
    %v5198 = vld [vmem:[%s10 + $0x10] sm:$0xff]
    %v5199 = vld [vmem:[%s10 + $0x18] sm:$0xff]
    %v5200 = vld [vmem:[#allocation5] sm:$0x1]
    %v5202 = vlaneseq
    %v5203 = vshrl.u32 %v5202, 7
    %v5204 = vsub.s32 0, %v5203
    %v5205 = vrot.slane %v5200, %v5204
    %vm5207 = vcmask 261120
    %v5209 = vsel %vm5207, %v5195, 0
    %5211 = vmatprep.subr.mxu0 0.0
    %5212 = vmatpush1.msra.mxu0 %v5196
    %5213 = vmatprep.subr.mxu0 0.0
    %5214 = vmatpush1.msra.mxu0 %v5197
    %5215 = vmatprep.subr.mxu0 0.0
    %5216 = vmatpush1.msra.mxu0 %v5198
    %5217 = vmatprep.subr.mxu0 0.0
    %5218 = vmatpush1.msra.mxu0 %v5199
    %5219 = vmatprep.subr.mxu0 0.0
    %5220 = vmatpush1.msra.mxu0 0.0
    %5221 = vmatprep.subr.mxu0 0.0
    %5222 = vmatpush1.msra.mxu0 0.0
    %5223 = vmatprep.subr.mxu0 0.0
    %5224 = vmatpush1.msra.mxu0 0.0
    %5225 = vmatprep.subr.mxu0 0.0
    %5226 = vmatpush1.msra.mxu0 0.0
    %5227 = vmatprep.subr.mxu0 0.0
    %5228 = vmatpush1.msra.mxu0 0.0
    %5229 = vmatprep.subr.mxu0 0.0
    %5230 = vmatpush1.msra.mxu0 0.0
    %5231 = vmatprep.subr.mxu0 0.0
    %5232 = vmatpush1.msra.mxu0 0.0
    %5233 = vmatprep.subr.mxu0 0.0
    %5234 = vmatpush1.msra.mxu0 0.0
    %5235 = vmatprep.subr.mxu0 0.0
    %5236 = vmatpush1.msra.mxu0 0.0
    %5237 = vmatprep.subr.mxu0 0.0
    %5238 = vmatpush1.msra.mxu0 0.0
    %5239 = vmatprep.subr.mxu0 0.0
    %5240 = vmatpush1.msra.mxu0 0.0
    %5241 = vmatprep.subr.mxu0 0.0
    %5242 = vmatpush1.msra.mxu0 0.0
    %5243 = vmatprep.subr.mxu0 0.0
    %5244 = vmatpush1.msra.mxu0 0.0
    %5245 = vmatprep.subr.mxu0 0.0
    %5246 = vmatpush1.msra.mxu0 0.0
    %5247 = vmatprep.subr.mxu0 0.0
    %5248 = vmatpush1.msra.mxu0 0.0
    %5249 = vmatprep.subr.mxu0 0.0
    %5250 = vmatpush1.msra.mxu0 0.0
    %5251 = vmatprep.subr.mxu0 0.0
    %5252 = vmatpush1.msra.mxu0 0.0
    %5253 = vmatprep.subr.mxu0 0.0
    %5254 = vmatpush1.msra.mxu0 0.0
    %5255 = vmatprep.subr.mxu0 0.0
    %5256 = vmatpush1.msra.mxu0 0.0
    %5257 = vmatprep.subr.mxu0 0.0
    %5258 = vmatpush1.msra.mxu0 0.0
    %5259 = vmatprep.subr.mxu0 0.0
    %5260 = vmatpush1.msra.mxu0 0.0
    %5261 = vmatprep.subr.mxu0 0.0
    %5262 = vmatpush1.msra.mxu0 0.0
    %5263 = vmatprep.subr.mxu0 0.0
    %5264 = vmatpush1.msra.mxu0 0.0
    %5265 = vmatprep.subr.mxu0 0.0
    %5266 = vmatpush1.msra.mxu0 0.0
    %5267 = vmatprep.subr.mxu0 0.0
    %5268 = vmatpush1.msra.mxu0 0.0
    %5269 = vmatprep.subr.mxu0 0.0
    %5270 = vmatpush1.msra.mxu0 0.0
    %5271 = vmatprep.subr.mxu0 0.0
    %5272 = vmatpush1.msra.mxu0 0.0
    %5273 = vmatprep.subr.mxu0 0.0
    %5274 = vmatpush1.msra.mxu0 0.0
    %5275 = vmatprep.mubr.f32.mxu0 0.0
    %5276 = vmatmul.mubr.f32.gmra.mrb[0].mxu0 %v5209
    %v5277 = vpop.f32.mrb[0].mxu0
    %v5278 = vadd.f32 %v5205, %v5277
    %v5279 = vpop.f32.mrb[0].mxu0
    %5280 = vdwg.mxu0
    %vm5281 = vcmask 7168
    %5282 = vst.msk [vmem:[%s12] sm:$0xff] %vm5281, %v5278
    // Predicated region
    $region58: #{tpu_custom_call.1} parent=1 // pred_check
      _
    $region59: #{tpu_custom_call.1} parent=1 // pred_check_branch
      %5284 = sbr.rel (0) target = $region61
    $region60: #{tpu_custom_call.1} parent=1 // pred_region
      _
    $region61: #{tpu_custom_call.1} parent=1 // pred_fallthru
      _
    // Predicated region
    $region62: #{tpu_custom_call.1} parent=1 // pred_check
      _
    $region63: #{tpu_custom_call.1} parent=1 // pred_check_branch
      %5286 = sbr.rel (0) target = $region65
    $region64: #{tpu_custom_call.1} parent=1 // pred_region
      _
    $region65: #{tpu_custom_call.1} parent=1 // pred_fallthru
      _
    %5287 = vsyncpa [#allocation7], 1
    %5288 = vsyncpa [#allocation9], 1

</llo_original>
